<compile_context>
chip_gen: v7x
topology: tpu7x:2x2x1
jax: 0.10.0
libtpu: 0.0.40
codegen_flags: <defaults>
</compile_context>

<pallas_src>
import functools

import jax
import jax.numpy as jnp
from jax.experimental import pallas as pl
from jax.experimental.pallas import tpu as pltpu

NUM_CLASSES = 40          # DATASET_NUM_CLASS['modelnet40']
C_PAD = 128               # lane-dense padded logit width
K_PAD = 8                 # xyz (3) zero-padded to 8 so the layer-1 K is aligned
H1, H2, H3, H4 = 64, 128, 256, 128


def _rpc_kernel(pc_ref,
                w1_ref, b1_ref, w2_ref, b2_ref, w3_ref, b3_ref,
                w4_ref, b4_ref, w5_ref, b5_ref,
                out_ref, *, bf16_act):
    # pc_ref block: (Bt, N, K_PAD) bf16 -> Bt point clouds per grid step.
    bf = jnp.bfloat16
    act = bf if bf16_act else jnp.float32   # v5e has no bf16 VALU -> keep f32
    Bt, N, _ = pc_ref.shape
    M = Bt * N

    # All per-point layers (including the zero-padded K=3->8 first layer) run
    # on the MXU with f32 accumulation.
    x = pc_ref[...].reshape(M, K_PAD)                                 # bf16

    def dense(h_bf, w_ref, b_ref, relu):
        y = jnp.dot(h_bf, w_ref[...], preferred_element_type=jnp.float32)
        y = y.astype(act) + b_ref[...]
        if relu:
            y = jnp.maximum(y, 0)
        return y

    h = dense(x, w1_ref, b1_ref, True).astype(bf)                     # (M, H1)
    h = dense(h, w2_ref, b2_ref, True).astype(bf)                     # (M, H2)
    h = dense(h, w3_ref, b3_ref, False)                               # (M, H3)

    # Global max pool over the point axis (permutation-invariant feature).
    g = jnp.max(h.astype(jnp.float32).reshape(Bt, N, H3), axis=1)     # (Bt, H3)

    # Classification head; logits padded to 128 lanes -> unmasked stores.
    f = dense(g.astype(bf), w4_ref, b4_ref, True).astype(bf)          # (Bt, H4)
    logit = jnp.dot(f, w5_ref[...],
                    preferred_element_type=jnp.float32) + b5_ref[...]  # (Bt, C_PAD)

    out_ref[...] = logit.astype(out_ref.dtype)


def _const_spec(shape):
    # Weight / bias tensors: whole array, same block every grid step.
    return pl.BlockSpec(shape, lambda b: tuple(0 for _ in shape))


def _vmem_bytes_estimate(bt, n, bf16_act):
    """Rough per-step VMEM footprint (double-buffered pc/out, intermediates)."""
    m = bt * n
    act_b = 2 if bf16_act else 4
    pc_buf = 2 * bt * n * 128 * 2               # last-dim 8 lane-padded to 128
    inter = m * (H1 + H2) * (act_b + 2) + m * H3 * (act_b + 4)
    weights = 2 * ((K_PAD * H1 + H1 * H2 + H2 * H3 + H3 * H4 + H4 * C_PAD) * 2
                   + (H1 + H2 + H3 + H4) * act_b + C_PAD * 4)
    out_buf = 2 * bt * C_PAD * 4
    return pc_buf + inter + weights + out_buf


def rpc_forward(pc, params, *, block_b=None, bf16_act=None, vmem_limit_bytes=None):
    """pc: (B, N, 3) float32 -> logit: (B, NUM_CLASSES) float32."""
    B, N, c_in = pc.shape
    assert c_in == 3
    (w1, b1, w2, b2, w3, b3, w4, b4, w5, b5) = params

    kind = jax.devices()[0].device_kind.lower()
    is_v7 = "v7" in kind
    if bf16_act is None:
        bf16_act = ("v6" in kind) or is_v7          # bf16 VALU on v6e/v7x only
    if vmem_limit_bytes is None:
        if is_v7:
            vmem_limit_bytes = 48 << 20             # 64 MiB physical on v7x
        elif ("v6" in kind) or ("v5" in kind):
            vmem_limit_bytes = 64 << 20             # 128 MiB physical
        else:
            vmem_limit_bytes = 32 << 20

    if block_b is None:
        # v7x: 2 TensorCores/chip -> keep a 2-step "parallel" grid.
        # Single-TC chips: one big step minimizes fixed per-step overhead.
        n_steps = 2 if (is_v7 and B >= 2) else 1
        Bt = pl.cdiv(B, n_steps)
    else:
        Bt = min(block_b, B)
    # Explicit VMEM budget: shrink the batch tile until the footprint fits.
    while Bt > 1 and _vmem_bytes_estimate(Bt, N, bf16_act) > vmem_limit_bytes:
        Bt = pl.cdiv(Bt, 2)

    B_pad = pl.cdiv(B, Bt) * Bt

    bf = jnp.bfloat16
    act = bf if bf16_act else jnp.float32

    # bf16 weights / input (f32 MXU accumulation); xyz zero-padded K 3 -> 8;
    # head padded to 128 output lanes; biases in the activation dtype.
    pc_p = jnp.pad(pc, ((0, B_pad - B), (0, 0), (0, K_PAD - 3))).astype(bf)
    w1p = jnp.pad(w1, ((0, K_PAD - 3), (0, 0))).astype(bf)
    w2b, w3b, w4b = (w.astype(bf) for w in (w2, w3, w4))
    w5p = jnp.zeros((H4, C_PAD), jnp.float32).at[:, :NUM_CLASSES].set(w5).astype(bf)
    b1a, b2a, b3a, b4a = (b.astype(act) for b in (b1, b2, b3, b4))
    b5p = jnp.zeros((1, C_PAD), jnp.float32).at[:, :NUM_CLASSES].set(b5)

    kernel = functools.partial(_rpc_kernel, bf16_act=bf16_act)

    out = pl.pallas_call(
        kernel,
        out_shape=jax.ShapeDtypeStruct((B_pad, C_PAD), jnp.float32),
        grid_spec=pltpu.PrefetchScalarGridSpec(
            num_scalar_prefetch=0,
            grid=(B_pad // Bt,),
            in_specs=[
                pl.BlockSpec((Bt, N, K_PAD), lambda b: (b, 0, 0)),
                _const_spec(w1p.shape), _const_spec(b1a.shape),
                _const_spec(w2b.shape), _const_spec(b2a.shape),
                _const_spec(w3b.shape), _const_spec(b3a.shape),
                _const_spec(w4b.shape), _const_spec(b4a.shape),
                _const_spec(w5p.shape), _const_spec(b5p.shape),
            ],
            out_specs=pl.BlockSpec((Bt, C_PAD), lambda b: (b, 0)),
        ),
        compiler_params=pltpu.CompilerParams(
            dimension_semantics=("parallel",),
            vmem_limit_bytes=vmem_limit_bytes),
    )(pc_p, w1p, b1a, w2b, b2a, w3b, b3a, w4b, b4a, w5p, b5p)

    return out[:B, :NUM_CLASSES]


def init_params(key):
    """Deterministic synthetic parameters (shapes implied by the backbone)."""
    ks = jax.random.split(key, 10)

    def dense(kw, cin, cout):
        w = jax.random.normal(kw, (cin, cout), jnp.float32) * (1.0 / jnp.sqrt(cin))
        b = jnp.zeros((1, cout), jnp.float32)
        return w, b

    w1, b1 = dense(ks[0], 3, H1)
    w2, b2 = dense(ks[1], H1, H2)
    w3, b3 = dense(ks[2], H2, H3)
    w4, b4 = dense(ks[3], H3, H4)
    w5, b5 = dense(ks[4], H4, NUM_CLASSES)
    return (w1, b1, w2, b2, w3, b3, w4, b4, w5, b5)


def rpc_forward_ref(pc, params, *, bf16_act):
    """Pure-JAX reference with the same casting discipline as the kernel."""
    (w1, b1, w2, b2, w3, b3, w4, b4, w5, b5) = params
    bf = jnp.bfloat16
    act = bf if bf16_act else jnp.float32

    def dense(h, w, b, relu):
        y = jnp.dot(h.astype(bf), w.astype(bf), preferred_element_type=jnp.float32)
        y = y.astype(act) + b.astype(act)
        if relu:
            y = jnp.maximum(y, 0)
        return y

    h = dense(pc, w1, b1, True)                       # (B, N, H1)
    h = dense(h, w2, b2, True)                        # (B, N, H2)
    h = dense(h, w3, b3, False)                       # (B, N, H3)
    g = jnp.max(h.astype(jnp.float32), axis=1)        # (B, H3)
    f = dense(g, w4, b4, True)                        # (B, H4)
    return jnp.dot(f.astype(bf), w5.astype(bf),
                   preferred_element_type=jnp.float32) + b5


if __name__ == "__main__":
    key = jax.random.PRNGKey(0)
    kp, kx = jax.random.split(key)

    B, N = 16, 128                         # small shapes: 16 clouds of 128 xyz points
    pc = jax.random.normal(kx, (B, N, 3), jnp.float32)
    params = init_params(kp)

    kind = jax.devices()[0].device_kind.lower()
    bf16_act = ("v6" in kind) or ("v7" in kind)

    # RPC.forward(**data): data = {'pc': pc, 'normal': None}; task == 'cls' -> logit.
    logit = rpc_forward(pc, params, bf16_act=bf16_act)
    logit = jax.block_until_ready(logit)

    ref = rpc_forward_ref(pc, params, bf16_act=bf16_act)
    assert logit.shape == (B, NUM_CLASSES)
    assert jnp.allclose(logit, ref, atol=1e-2, rtol=1e-2), "mismatch vs JAX reference"

    out = {"logit": logit}                 # mirrors the PyTorch module's output dict
    print("KERNEL_OK")
</pallas_src>

<mosaic_0001>
module attributes {stable_mosaic.version = 11 : i64} {
  func.func @_rpc_kernel(%arg0: i32, %arg1: memref<16x128x8xbf16, #tpu.memory_space<vmem>>, %arg2: memref<8x64xbf16, #tpu.memory_space<vmem>>, %arg3: memref<1x64xf32, #tpu.memory_space<vmem>>, %arg4: memref<64x128xbf16, #tpu.memory_space<vmem>>, %arg5: memref<1x128xf32, #tpu.memory_space<vmem>>, %arg6: memref<128x256xbf16, #tpu.memory_space<vmem>>, %arg7: memref<1x256xf32, #tpu.memory_space<vmem>>, %arg8: memref<256x128xbf16, #tpu.memory_space<vmem>>, %arg9: memref<1x128xf32, #tpu.memory_space<vmem>>, %arg10: memref<128x128xbf16, #tpu.memory_space<vmem>>, %arg11: memref<1x128xf32, #tpu.memory_space<vmem>>, %arg12: memref<16x128xf32, #tpu.memory_space<vmem>>) attributes {dimension_semantics = [#tpu.dimension_semantics<parallel>], iteration_bounds = array<i64: 1>, scalar_prefetch = 0 : i64, scratch_operands = 0 : i64, tpu.core_type = #tpu.core_type<tc>, window_params = [{transform_indices = @transform_0, window_bounds = array<i64: 16, 128, 8>}, {pipeline_mode = #tpu.pipeline_mode<synchronous>, transform_indices = @transform_1, window_bounds = array<i64: 8, 64>}, {pipeline_mode = #tpu.pipeline_mode<synchronous>, transform_indices = @transform_2, window_bounds = array<i64: 1, 64>}, {pipeline_mode = #tpu.pipeline_mode<synchronous>, transform_indices = @transform_3, window_bounds = array<i64: 64, 128>}, {pipeline_mode = #tpu.pipeline_mode<synchronous>, transform_indices = @transform_4, window_bounds = array<i64: 1, 128>}, {pipeline_mode = #tpu.pipeline_mode<synchronous>, transform_indices = @transform_5, window_bounds = array<i64: 128, 256>}, {pipeline_mode = #tpu.pipeline_mode<synchronous>, transform_indices = @transform_6, window_bounds = array<i64: 1, 256>}, {pipeline_mode = #tpu.pipeline_mode<synchronous>, transform_indices = @transform_7, window_bounds = array<i64: 256, 128>}, {pipeline_mode = #tpu.pipeline_mode<synchronous>, transform_indices = @transform_8, window_bounds = array<i64: 1, 128>}, {pipeline_mode = #tpu.pipeline_mode<synchronous>, transform_indices = @transform_9, window_bounds = array<i64: 128, 128>}, {pipeline_mode = #tpu.pipeline_mode<synchronous>, transform_indices = @transform_10, window_bounds = array<i64: 1, 128>}, {transform_indices = @transform_11, window_bounds = array<i64: 16, 128>}]} {
    %c0 = arith.constant 0 : index
    %c0_0 = arith.constant 0 : index
    %c0_1 = arith.constant 0 : index
    %0 = vector.load %arg1[%c0, %c0_0, %c0_1] : memref<16x128x8xbf16, #tpu.memory_space<vmem>>, vector<16x128x8xbf16>
    %1 = vector.shape_cast %0 : vector<16x128x8xbf16> to vector<2048x8xbf16>
    %c0_2 = arith.constant 0 : index
    %c0_3 = arith.constant 0 : index
    %2 = vector.load %arg2[%c0_2, %c0_3] : memref<8x64xbf16, #tpu.memory_space<vmem>>, vector<8x64xbf16>
    %cst = arith.constant dense<0.000000e+00> : vector<2048x64xf32>
    %3 = tpu.matmul %1, %2, %cst {dimension_numbers = #tpu.dot_dimension_numbers<[1], [0], [0], [1], [0, 0, 1, 1], [], []>} : vector<2048x8xbf16>, vector<8x64xbf16>, vector<2048x64xf32> -> vector<2048x64xf32>
    %c0_4 = arith.constant 0 : index
    %c0_5 = arith.constant 0 : index
    %4 = vector.load %arg3[%c0_4, %c0_5] : memref<1x64xf32, #tpu.memory_space<vmem>>, vector<1x64xf32>
    %5 = vector.broadcast %4 : vector<1x64xf32> to vector<2048x64xf32>
    %6 = arith.addf %3, %5 : vector<2048x64xf32>
    %cst_6 = arith.constant 0.000000e+00 : f32
    %7 = vector.broadcast %cst_6 : f32 to vector<2048x64xf32>
    %8 = arith.maximumf %6, %7 : vector<2048x64xf32>
    %9 = arith.truncf %8 : vector<2048x64xf32> to vector<2048x64xbf16>
    %c0_7 = arith.constant 0 : index
    %c0_8 = arith.constant 0 : index
    %10 = vector.load %arg4[%c0_7, %c0_8] : memref<64x128xbf16, #tpu.memory_space<vmem>>, vector<64x128xbf16>
    %cst_9 = arith.constant dense<0.000000e+00> : vector<2048x128xf32>
    %11 = tpu.matmul %9, %10, %cst_9 {dimension_numbers = #tpu.dot_dimension_numbers<[1], [0], [0], [1], [0, 0, 1, 1], [], []>} : vector<2048x64xbf16>, vector<64x128xbf16>, vector<2048x128xf32> -> vector<2048x128xf32>
    %c0_10 = arith.constant 0 : index
    %c0_11 = arith.constant 0 : index
    %12 = vector.load %arg5[%c0_10, %c0_11] : memref<1x128xf32, #tpu.memory_space<vmem>>, vector<1x128xf32>
    %13 = vector.broadcast %12 : vector<1x128xf32> to vector<2048x128xf32>
    %14 = arith.addf %11, %13 : vector<2048x128xf32>
    %cst_12 = arith.constant 0.000000e+00 : f32
    %15 = vector.broadcast %cst_12 : f32 to vector<2048x128xf32>
    %16 = arith.maximumf %14, %15 : vector<2048x128xf32>
    %17 = arith.truncf %16 : vector<2048x128xf32> to vector<2048x128xbf16>
    %c0_13 = arith.constant 0 : index
    %c0_14 = arith.constant 0 : index
    %18 = vector.load %arg6[%c0_13, %c0_14] : memref<128x256xbf16, #tpu.memory_space<vmem>>, vector<128x256xbf16>
    %cst_15 = arith.constant dense<0.000000e+00> : vector<2048x256xf32>
    %19 = tpu.matmul %17, %18, %cst_15 {dimension_numbers = #tpu.dot_dimension_numbers<[1], [0], [0], [1], [0, 0, 1, 1], [], []>} : vector<2048x128xbf16>, vector<128x256xbf16>, vector<2048x256xf32> -> vector<2048x256xf32>
    %c0_16 = arith.constant 0 : index
    %c0_17 = arith.constant 0 : index
    %20 = vector.load %arg7[%c0_16, %c0_17] : memref<1x256xf32, #tpu.memory_space<vmem>>, vector<1x256xf32>
    %21 = vector.broadcast %20 : vector<1x256xf32> to vector<2048x256xf32>
    %22 = arith.addf %19, %21 : vector<2048x256xf32>
    %23 = vector.shape_cast %22 : vector<2048x256xf32> to vector<16x128x256xf32>
    %cst_18 = arith.constant dense<0xFF800000> : vector<16x256xf32>
    %24 = vector.multi_reduction <maximumf>, %23, %cst_18 [1] : vector<16x128x256xf32> to vector<16x256xf32>
    %25 = arith.truncf %24 : vector<16x256xf32> to vector<16x256xbf16>
    %c0_19 = arith.constant 0 : index
    %c0_20 = arith.constant 0 : index
    %26 = vector.load %arg8[%c0_19, %c0_20] : memref<256x128xbf16, #tpu.memory_space<vmem>>, vector<256x128xbf16>
    %cst_21 = arith.constant dense<0.000000e+00> : vector<16x128xf32>
    %27 = tpu.matmul %25, %26, %cst_21 {dimension_numbers = #tpu.dot_dimension_numbers<[1], [0], [0], [1], [0, 0, 1, 1], [], []>} : vector<16x256xbf16>, vector<256x128xbf16>, vector<16x128xf32> -> vector<16x128xf32>
    %c0_22 = arith.constant 0 : index
    %c0_23 = arith.constant 0 : index
    %28 = vector.load %arg9[%c0_22, %c0_23] : memref<1x128xf32, #tpu.memory_space<vmem>>, vector<1x128xf32>
    %29 = vector.broadcast %28 : vector<1x128xf32> to vector<16x128xf32>
    %30 = arith.addf %27, %29 : vector<16x128xf32>
    %cst_24 = arith.constant 0.000000e+00 : f32
    %31 = vector.broadcast %cst_24 : f32 to vector<16x128xf32>
    %32 = arith.maximumf %30, %31 : vector<16x128xf32>
    %33 = arith.truncf %32 : vector<16x128xf32> to vector<16x128xbf16>
    %c0_25 = arith.constant 0 : index
    %c0_26 = arith.constant 0 : index
    %34 = vector.load %arg10[%c0_25, %c0_26] : memref<128x128xbf16, #tpu.memory_space<vmem>>, vector<128x128xbf16>
    %cst_27 = arith.constant dense<0.000000e+00> : vector<16x128xf32>
    %35 = tpu.matmul %33, %34, %cst_27 {dimension_numbers = #tpu.dot_dimension_numbers<[1], [0], [0], [1], [0, 0, 1, 1], [], []>} : vector<16x128xbf16>, vector<128x128xbf16>, vector<16x128xf32> -> vector<16x128xf32>
    %c0_28 = arith.constant 0 : index
    %c0_29 = arith.constant 0 : index
    %36 = vector.load %arg11[%c0_28, %c0_29] : memref<1x128xf32, #tpu.memory_space<vmem>>, vector<1x128xf32>
    %37 = vector.broadcast %36 : vector<1x128xf32> to vector<16x128xf32>
    %38 = arith.addf %35, %37 : vector<16x128xf32>
    %c0_30 = arith.constant 0 : index
    %c0_31 = arith.constant 0 : index
    %39 = vector.load %arg12[%c0_30, %c0_31] : memref<16x128xf32, #tpu.memory_space<vmem>>, vector<16x128xf32>
    tpu.vector_store %arg12[%c0_30, %c0_31], %38 {strides = array<i32>} : memref<16x128xf32, #tpu.memory_space<vmem>>, vector<16x128xf32>,
    return
  }
  func.func @transform_0(%arg0: i32) -> (i32, i32, i32) {
    %c0_i32 = arith.constant 0 : i32
    %c0_i32_0 = arith.constant 0 : i32
    %c0_i32_1 = arith.constant 0 : i32
    return %arg0, %c0_i32, %c0_i32_0 : i32, i32, i32
  }
  func.func @transform_1(%arg0: i32) -> (i32, i32) {
    %c0_i32 = arith.constant 0 : i32
    %c0_i32_0 = arith.constant 0 : i32
    %c0_i32_1 = arith.constant 0 : i32
    return %c0_i32, %c0_i32_0 : i32, i32
  }
  func.func @transform_2(%arg0: i32) -> (i32, i32) {
    %c0_i32 = arith.constant 0 : i32
    %c0_i32_0 = arith.constant 0 : i32
    %c0_i32_1 = arith.constant 0 : i32
    return %c0_i32, %c0_i32_0 : i32, i32
  }
  func.func @transform_3(%arg0: i32) -> (i32, i32) {
    %c0_i32 = arith.constant 0 : i32
    %c0_i32_0 = arith.constant 0 : i32
    %c0_i32_1 = arith.constant 0 : i32
    return %c0_i32, %c0_i32_0 : i32, i32
  }
  func.func @transform_4(%arg0: i32) -> (i32, i32) {
    %c0_i32 = arith.constant 0 : i32
    %c0_i32_0 = arith.constant 0 : i32
    %c0_i32_1 = arith.constant 0 : i32
    return %c0_i32, %c0_i32_0 : i32, i32
  }
  func.func @transform_5(%arg0: i32) -> (i32, i32) {
    %c0_i32 = arith.constant 0 : i32
    %c0_i32_0 = arith.constant 0 : i32
    %c0_i32_1 = arith.constant 0 : i32
    return %c0_i32, %c0_i32_0 : i32, i32
  }
  func.func @transform_6(%arg0: i32) -> (i32, i32) {
    %c0_i32 = arith.constant 0 : i32
    %c0_i32_0 = arith.constant 0 : i32
    %c0_i32_1 = arith.constant 0 : i32
    return %c0_i32, %c0_i32_0 : i32, i32
  }
  func.func @transform_7(%arg0: i32) -> (i32, i32) {
    %c0_i32 = arith.constant 0 : i32
    %c0_i32_0 = arith.constant 0 : i32
    %c0_i32_1 = arith.constant 0 : i32
    return %c0_i32, %c0_i32_0 : i32, i32
  }
  func.func @transform_8(%arg0: i32) -> (i32, i32) {
    %c0_i32 = arith.constant 0 : i32
    %c0_i32_0 = arith.constant 0 : i32
    %c0_i32_1 = arith.constant 0 : i32
    return %c0_i32, %c0_i32_0 : i32, i32
  }
  func.func @transform_9(%arg0: i32) -> (i32, i32) {
    %c0_i32 = arith.constant 0 : i32
    %c0_i32_0 = arith.constant 0 : i32
    %c0_i32_1 = arith.constant 0 : i32
    return %c0_i32, %c0_i32_0 : i32, i32
  }
  func.func @transform_10(%arg0: i32) -> (i32, i32) {
    %c0_i32 = arith.constant 0 : i32
    %c0_i32_0 = arith.constant 0 : i32
    %c0_i32_1 = arith.constant 0 : i32
    return %c0_i32, %c0_i32_0 : i32, i32
  }
  func.func @transform_11(%arg0: i32) -> (i32, i32) {
    %c0_i32 = arith.constant 0 : i32
    %c0_i32_0 = arith.constant 0 : i32
    return %arg0, %c0_i32 : i32, i32
  }
}

</mosaic_0001>

<llo_original>
// kernel: tpu_custom_call.1
$region0: #{tpu_custom_call.1}
  #allocation0 [shape = 'u32[]', space=smem, size = 0x4, offset = 0x4, fixed_abs, tag = 'smem constant byte address 0x4 - core index']
  #allocation1 [shape = 'u32[144,128]{1,0:T(1,128)}', space=vmem, size = 0x12000, scoped, tag = 'internal scratch']
  %s0 = inlined_call_operand.vmem [shape: bf16[16,128,8], index: 0, kind: input, shape index: {}]
  %s1 = inlined_call_operand.vmem [shape: bf16[8,64], index: 1, kind: input, shape index: {}]
  %s2 = inlined_call_operand.vmem [shape: f32[1,64], index: 2, kind: input, shape index: {}]
  %s3 = inlined_call_operand.vmem [shape: bf16[64,128], index: 3, kind: input, shape index: {}]
  %s4 = inlined_call_operand.vmem [shape: f32[1,128], index: 4, kind: input, shape index: {}]
  %s5 = inlined_call_operand.vmem [shape: bf16[128,256], index: 5, kind: input, shape index: {}]
  %s6 = inlined_call_operand.vmem [shape: f32[1,256], index: 6, kind: input, shape index: {}]
  %s7 = inlined_call_operand.vmem [shape: bf16[256,128], index: 7, kind: input, shape index: {}]
  %s8 = inlined_call_operand.vmem [shape: f32[1,128], index: 8, kind: input, shape index: {}]
  %s9 = inlined_call_operand.vmem [shape: bf16[128,128], index: 9, kind: input, shape index: {}]
  %s10 = inlined_call_operand.vmem [shape: f32[1,128], index: 10, kind: input, shape index: {}]
  %s11 = inlined_call_operand.hbm [shape: f32[16,128], index: 11, kind: output, shape index: {}]
  %s12 = sld [smem:[#allocation0]]
  $region54: #{tpu_custom_call.1} parent=0
    _
  %s14 = ssub.s32 1, %s12
  %s15 = scalar_select 0, %s14, %s12
  $region1: #{tpu_custom_call.1} parent=0
    #allocation2 [shape = 'u8[8192]{0}', space=vmem, size = 0x2000, scoped, tag = 'output window, operand 0, single buffered']
    #allocation3 [shape = 's32[1]{0}', space=sflag, size = 0x4, scoped, tag = 'scoped memory for tpu_custom_call.1']
    %16 = vsyncpa [#allocation3], 0
    // Predicated region
    $region2: #{tpu_custom_call.1} parent=1 // pred_check
      _
    $region3: #{tpu_custom_call.1} parent=1 // pred_check_branch
      %18 = sbr.rel (0) target = $region5
    $region4: #{tpu_custom_call.1} parent=1 // pred_region
      _
    $region5: #{tpu_custom_call.1} parent=1 // pred_fallthru
      _
    // Predicated region
    $region6: #{tpu_custom_call.1} parent=1 // pred_check
      _
    $region7: #{tpu_custom_call.1} parent=1 // pred_check_branch
      %20 = sbr.rel (0) target = $region9
    $region8: #{tpu_custom_call.1} parent=1 // pred_region
      _
    $region9: #{tpu_custom_call.1} parent=1 // pred_fallthru
      _
    // Predicated region
    $region10: #{tpu_custom_call.1} parent=1 // pred_check
      _
    $region11: #{tpu_custom_call.1} parent=1 // pred_check_branch
      %22 = sbr.rel (0) target = $region13
    $region12: #{tpu_custom_call.1} parent=1 // pred_region
      _
    $region13: #{tpu_custom_call.1} parent=1 // pred_fallthru
      _
    // Predicated region
    $region14: #{tpu_custom_call.1} parent=1 // pred_check
      _
    $region15: #{tpu_custom_call.1} parent=1 // pred_check_branch
      %24 = sbr.rel (0) target = $region17
    $region16: #{tpu_custom_call.1} parent=1 // pred_region
      _
    $region17: #{tpu_custom_call.1} parent=1 // pred_fallthru
      _
    // Predicated region
    $region18: #{tpu_custom_call.1} parent=1 // pred_check
      _
    $region19: #{tpu_custom_call.1} parent=1 // pred_check_branch
      %26 = sbr.rel (0) target = $region21
    $region20: #{tpu_custom_call.1} parent=1 // pred_region
      _
    $region21: #{tpu_custom_call.1} parent=1 // pred_fallthru
      _
    // Predicated region
    $region22: #{tpu_custom_call.1} parent=1 // pred_check
      _
    $region23: #{tpu_custom_call.1} parent=1 // pred_check_branch
      %28 = sbr.rel (0) target = $region25
    $region24: #{tpu_custom_call.1} parent=1 // pred_region
      _
    $region25: #{tpu_custom_call.1} parent=1 // pred_fallthru
      _
    // Predicated region
    $region26: #{tpu_custom_call.1} parent=1 // pred_check
      _
    $region27: #{tpu_custom_call.1} parent=1 // pred_check_branch
      %30 = sbr.rel (0) target = $region29
    $region28: #{tpu_custom_call.1} parent=1 // pred_region
      _
    $region29: #{tpu_custom_call.1} parent=1 // pred_fallthru
      _
    // Predicated region
    $region30: #{tpu_custom_call.1} parent=1 // pred_check
      _
    $region31: #{tpu_custom_call.1} parent=1 // pred_check_branch
      %32 = sbr.rel (0) target = $region33
    $region32: #{tpu_custom_call.1} parent=1 // pred_region
      _
    $region33: #{tpu_custom_call.1} parent=1 // pred_fallthru
      _
    // Predicated region
    $region34: #{tpu_custom_call.1} parent=1 // pred_check
      _
    $region35: #{tpu_custom_call.1} parent=1 // pred_check_branch
      %34 = sbr.rel (0) target = $region37
    $region36: #{tpu_custom_call.1} parent=1 // pred_region
      _
    $region37: #{tpu_custom_call.1} parent=1 // pred_fallthru
      _
    // Predicated region
    $region38: #{tpu_custom_call.1} parent=1 // pred_check
      _
    $region39: #{tpu_custom_call.1} parent=1 // pred_check_branch
      %36 = sbr.rel (0) target = $region41
    $region40: #{tpu_custom_call.1} parent=1 // pred_region
      _
    $region41: #{tpu_custom_call.1} parent=1 // pred_fallthru
      _
    // Predicated region
    $region42: #{tpu_custom_call.1} parent=1 // pred_check
      _
    $region43: #{tpu_custom_call.1} parent=1 // pred_check_branch
      %38 = sbr.rel (0) target = $region45
    $region44: #{tpu_custom_call.1} parent=1 // pred_region
      _
    $region45: #{tpu_custom_call.1} parent=1 // pred_fallthru
      _
    %v40 = vld [vmem:[%s0] sm:$0xf]
    %v41 = vld [vmem:[%s0 + $0x4] sm:$0xf]
    %v42 = vld [vmem:[%s0 + $0x8] sm:$0xf]
    %v43 = vld [vmem:[%s0 + $0xc] sm:$0xf]
    %v44 = vld [vmem:[%s0 + $0x10] sm:$0xf]
    %v45 = vld [vmem:[%s0 + $0x14] sm:$0xf]
    %v46 = vld [vmem:[%s0 + $0x18] sm:$0xf]
    %v47 = vld [vmem:[%s0 + $0x1c] sm:$0xf]
    %v48 = vld [vmem:[%s0 + $0x20] sm:$0xf]
    %v49 = vld [vmem:[%s0 + $0x24] sm:$0xf]
    %v50 = vld [vmem:[%s0 + $0x28] sm:$0xf]
    %v51 = vld [vmem:[%s0 + $0x2c] sm:$0xf]
    %v52 = vld [vmem:[%s0 + $0x30] sm:$0xf]
    %v53 = vld [vmem:[%s0 + $0x34] sm:$0xf]
    %v54 = vld [vmem:[%s0 + $0x38] sm:$0xf]
    %v55 = vld [vmem:[%s0 + $0x3c] sm:$0xf]
    %v56 = vld [vmem:[%s0 + $0x40] sm:$0xf]
    %v57 = vld [vmem:[%s0 + $0x44] sm:$0xf]
    %v58 = vld [vmem:[%s0 + $0x48] sm:$0xf]
    %v59 = vld [vmem:[%s0 + $0x4c] sm:$0xf]
    %v60 = vld [vmem:[%s0 + $0x50] sm:$0xf]
    %v61 = vld [vmem:[%s0 + $0x54] sm:$0xf]
    %v62 = vld [vmem:[%s0 + $0x58] sm:$0xf]
    %v63 = vld [vmem:[%s0 + $0x5c] sm:$0xf]
    %v64 = vld [vmem:[%s0 + $0x60] sm:$0xf]
    %v65 = vld [vmem:[%s0 + $0x64] sm:$0xf]
    %v66 = vld [vmem:[%s0 + $0x68] sm:$0xf]
    %v67 = vld [vmem:[%s0 + $0x6c] sm:$0xf]
    %v68 = vld [vmem:[%s0 + $0x70] sm:$0xf]
    %v69 = vld [vmem:[%s0 + $0x74] sm:$0xf]
    %v70 = vld [vmem:[%s0 + $0x78] sm:$0xf]
    %v71 = vld [vmem:[%s0 + $0x7c] sm:$0xf]
    %v72 = vld [vmem:[%s0 + $0x80] sm:$0xf]
    %v73 = vld [vmem:[%s0 + $0x84] sm:$0xf]
    %v74 = vld [vmem:[%s0 + $0x88] sm:$0xf]
    %v75 = vld [vmem:[%s0 + $0x8c] sm:$0xf]
    %v76 = vld [vmem:[%s0 + $0x90] sm:$0xf]
    %v77 = vld [vmem:[%s0 + $0x94] sm:$0xf]
    %v78 = vld [vmem:[%s0 + $0x98] sm:$0xf]
    %v79 = vld [vmem:[%s0 + $0x9c] sm:$0xf]
    %v80 = vld [vmem:[%s0 + $0xa0] sm:$0xf]
    %v81 = vld [vmem:[%s0 + $0xa4] sm:$0xf]
    %v82 = vld [vmem:[%s0 + $0xa8] sm:$0xf]
    %v83 = vld [vmem:[%s0 + $0xac] sm:$0xf]
    %v84 = vld [vmem:[%s0 + $0xb0] sm:$0xf]
    %v85 = vld [vmem:[%s0 + $0xb4] sm:$0xf]
    %v86 = vld [vmem:[%s0 + $0xb8] sm:$0xf]
    %v87 = vld [vmem:[%s0 + $0xbc] sm:$0xf]
    %v88 = vld [vmem:[%s0 + $0xc0] sm:$0xf]
    %v89 = vld [vmem:[%s0 + $0xc4] sm:$0xf]
    %v90 = vld [vmem:[%s0 + $0xc8] sm:$0xf]
    %v91 = vld [vmem:[%s0 + $0xcc] sm:$0xf]
    %v92 = vld [vmem:[%s0 + $0xd0] sm:$0xf]
    %v93 = vld [vmem:[%s0 + $0xd4] sm:$0xf]
    %v94 = vld [vmem:[%s0 + $0xd8] sm:$0xf]
    %v95 = vld [vmem:[%s0 + $0xdc] sm:$0xf]
    %v96 = vld [vmem:[%s0 + $0xe0] sm:$0xf]
    %v97 = vld [vmem:[%s0 + $0xe4] sm:$0xf]
    %v98 = vld [vmem:[%s0 + $0xe8] sm:$0xf]
    %v99 = vld [vmem:[%s0 + $0xec] sm:$0xf]
    %v100 = vld [vmem:[%s0 + $0xf0] sm:$0xf]
    %v101 = vld [vmem:[%s0 + $0xf4] sm:$0xf]
    %v102 = vld [vmem:[%s0 + $0xf8] sm:$0xf]
    %v103 = vld [vmem:[%s0 + $0xfc] sm:$0xf]
    %v104 = vld [vmem:[%s0 + $0x100] sm:$0xf]
    %v105 = vld [vmem:[%s0 + $0x104] sm:$0xf]
    %v106 = vld [vmem:[%s0 + $0x108] sm:$0xf]
    %v107 = vld [vmem:[%s0 + $0x10c] sm:$0xf]
    %v108 = vld [vmem:[%s0 + $0x110] sm:$0xf]
    %v109 = vld [vmem:[%s0 + $0x114] sm:$0xf]
    %v110 = vld [vmem:[%s0 + $0x118] sm:$0xf]
    %v111 = vld [vmem:[%s0 + $0x11c] sm:$0xf]
    %v112 = vld [vmem:[%s0 + $0x120] sm:$0xf]
    %v113 = vld [vmem:[%s0 + $0x124] sm:$0xf]
    %v114 = vld [vmem:[%s0 + $0x128] sm:$0xf]
    %v115 = vld [vmem:[%s0 + $0x12c] sm:$0xf]
    %v116 = vld [vmem:[%s0 + $0x130] sm:$0xf]
    %v117 = vld [vmem:[%s0 + $0x134] sm:$0xf]
    %v118 = vld [vmem:[%s0 + $0x138] sm:$0xf]
    %v119 = vld [vmem:[%s0 + $0x13c] sm:$0xf]
    %v120 = vld [vmem:[%s0 + $0x140] sm:$0xf]
    %v121 = vld [vmem:[%s0 + $0x144] sm:$0xf]
    %v122 = vld [vmem:[%s0 + $0x148] sm:$0xf]
    %v123 = vld [vmem:[%s0 + $0x14c] sm:$0xf]
    %v124 = vld [vmem:[%s0 + $0x150] sm:$0xf]
    %v125 = vld [vmem:[%s0 + $0x154] sm:$0xf]
    %v126 = vld [vmem:[%s0 + $0x158] sm:$0xf]
    %v127 = vld [vmem:[%s0 + $0x15c] sm:$0xf]
    %v128 = vld [vmem:[%s0 + $0x160] sm:$0xf]
    %v129 = vld [vmem:[%s0 + $0x164] sm:$0xf]
    %v130 = vld [vmem:[%s0 + $0x168] sm:$0xf]
    %v131 = vld [vmem:[%s0 + $0x16c] sm:$0xf]
    %v132 = vld [vmem:[%s0 + $0x170] sm:$0xf]
    %v133 = vld [vmem:[%s0 + $0x174] sm:$0xf]
    %v134 = vld [vmem:[%s0 + $0x178] sm:$0xf]
    %v135 = vld [vmem:[%s0 + $0x17c] sm:$0xf]
    %v136 = vld [vmem:[%s0 + $0x180] sm:$0xf]
    %v137 = vld [vmem:[%s0 + $0x184] sm:$0xf]
    %v138 = vld [vmem:[%s0 + $0x188] sm:$0xf]
    %v139 = vld [vmem:[%s0 + $0x18c] sm:$0xf]
    %v140 = vld [vmem:[%s0 + $0x190] sm:$0xf]
    %v141 = vld [vmem:[%s0 + $0x194] sm:$0xf]
    %v142 = vld [vmem:[%s0 + $0x198] sm:$0xf]
    %v143 = vld [vmem:[%s0 + $0x19c] sm:$0xf]
    %v144 = vld [vmem:[%s0 + $0x1a0] sm:$0xf]
    %v145 = vld [vmem:[%s0 + $0x1a4] sm:$0xf]
    %v146 = vld [vmem:[%s0 + $0x1a8] sm:$0xf]
    %v147 = vld [vmem:[%s0 + $0x1ac] sm:$0xf]
    %v148 = vld [vmem:[%s0 + $0x1b0] sm:$0xf]
    %v149 = vld [vmem:[%s0 + $0x1b4] sm:$0xf]
    %v150 = vld [vmem:[%s0 + $0x1b8] sm:$0xf]
    %v151 = vld [vmem:[%s0 + $0x1bc] sm:$0xf]
    %v152 = vld [vmem:[%s0 + $0x1c0] sm:$0xf]
    %v153 = vld [vmem:[%s0 + $0x1c4] sm:$0xf]
    %v154 = vld [vmem:[%s0 + $0x1c8] sm:$0xf]
    %v155 = vld [vmem:[%s0 + $0x1cc] sm:$0xf]
    %v156 = vld [vmem:[%s0 + $0x1d0] sm:$0xf]
    %v157 = vld [vmem:[%s0 + $0x1d4] sm:$0xf]
    %v158 = vld [vmem:[%s0 + $0x1d8] sm:$0xf]
    %v159 = vld [vmem:[%s0 + $0x1dc] sm:$0xf]
    %v160 = vld [vmem:[%s0 + $0x1e0] sm:$0xf]
    %v161 = vld [vmem:[%s0 + $0x1e4] sm:$0xf]
    %v162 = vld [vmem:[%s0 + $0x1e8] sm:$0xf]
    %v163 = vld [vmem:[%s0 + $0x1ec] sm:$0xf]
    %v164 = vld [vmem:[%s0 + $0x1f0] sm:$0xf]
    %v165 = vld [vmem:[%s0 + $0x1f4] sm:$0xf]
    %v166 = vld [vmem:[%s0 + $0x1f8] sm:$0xf]
    %v167 = vld [vmem:[%s0 + $0x1fc] sm:$0xf]
    %v168 = vld [vmem:[%s0 + $0x200] sm:$0xf]
    %v169 = vld [vmem:[%s0 + $0x204] sm:$0xf]
    %v170 = vld [vmem:[%s0 + $0x208] sm:$0xf]
    %v171 = vld [vmem:[%s0 + $0x20c] sm:$0xf]
    %v172 = vld [vmem:[%s0 + $0x210] sm:$0xf]
    %v173 = vld [vmem:[%s0 + $0x214] sm:$0xf]
    %v174 = vld [vmem:[%s0 + $0x218] sm:$0xf]
    %v175 = vld [vmem:[%s0 + $0x21c] sm:$0xf]
    %v176 = vld [vmem:[%s0 + $0x220] sm:$0xf]
    %v177 = vld [vmem:[%s0 + $0x224] sm:$0xf]
    %v178 = vld [vmem:[%s0 + $0x228] sm:$0xf]
    %v179 = vld [vmem:[%s0 + $0x22c] sm:$0xf]
    %v180 = vld [vmem:[%s0 + $0x230] sm:$0xf]
    %v181 = vld [vmem:[%s0 + $0x234] sm:$0xf]
    %v182 = vld [vmem:[%s0 + $0x238] sm:$0xf]
    %v183 = vld [vmem:[%s0 + $0x23c] sm:$0xf]
    %v184 = vld [vmem:[%s0 + $0x240] sm:$0xf]
    %v185 = vld [vmem:[%s0 + $0x244] sm:$0xf]
    %v186 = vld [vmem:[%s0 + $0x248] sm:$0xf]
    %v187 = vld [vmem:[%s0 + $0x24c] sm:$0xf]
    %v188 = vld [vmem:[%s0 + $0x250] sm:$0xf]
    %v189 = vld [vmem:[%s0 + $0x254] sm:$0xf]
    %v190 = vld [vmem:[%s0 + $0x258] sm:$0xf]
    %v191 = vld [vmem:[%s0 + $0x25c] sm:$0xf]
    %v192 = vld [vmem:[%s0 + $0x260] sm:$0xf]
    %v193 = vld [vmem:[%s0 + $0x264] sm:$0xf]
    %v194 = vld [vmem:[%s0 + $0x268] sm:$0xf]
    %v195 = vld [vmem:[%s0 + $0x26c] sm:$0xf]
    %v196 = vld [vmem:[%s0 + $0x270] sm:$0xf]
    %v197 = vld [vmem:[%s0 + $0x274] sm:$0xf]
    %v198 = vld [vmem:[%s0 + $0x278] sm:$0xf]
    %v199 = vld [vmem:[%s0 + $0x27c] sm:$0xf]
    %v200 = vld [vmem:[%s0 + $0x280] sm:$0xf]
    %v201 = vld [vmem:[%s0 + $0x284] sm:$0xf]
    %v202 = vld [vmem:[%s0 + $0x288] sm:$0xf]
    %v203 = vld [vmem:[%s0 + $0x28c] sm:$0xf]
    %v204 = vld [vmem:[%s0 + $0x290] sm:$0xf]
    %v205 = vld [vmem:[%s0 + $0x294] sm:$0xf]
    %v206 = vld [vmem:[%s0 + $0x298] sm:$0xf]
    %v207 = vld [vmem:[%s0 + $0x29c] sm:$0xf]
    %v208 = vld [vmem:[%s0 + $0x2a0] sm:$0xf]
    %v209 = vld [vmem:[%s0 + $0x2a4] sm:$0xf]
    %v210 = vld [vmem:[%s0 + $0x2a8] sm:$0xf]
    %v211 = vld [vmem:[%s0 + $0x2ac] sm:$0xf]
    %v212 = vld [vmem:[%s0 + $0x2b0] sm:$0xf]
    %v213 = vld [vmem:[%s0 + $0x2b4] sm:$0xf]
    %v214 = vld [vmem:[%s0 + $0x2b8] sm:$0xf]
    %v215 = vld [vmem:[%s0 + $0x2bc] sm:$0xf]
    %v216 = vld [vmem:[%s0 + $0x2c0] sm:$0xf]
    %v217 = vld [vmem:[%s0 + $0x2c4] sm:$0xf]
    %v218 = vld [vmem:[%s0 + $0x2c8] sm:$0xf]
    %v219 = vld [vmem:[%s0 + $0x2cc] sm:$0xf]
    %v220 = vld [vmem:[%s0 + $0x2d0] sm:$0xf]
    %v221 = vld [vmem:[%s0 + $0x2d4] sm:$0xf]
    %v222 = vld [vmem:[%s0 + $0x2d8] sm:$0xf]
    %v223 = vld [vmem:[%s0 + $0x2dc] sm:$0xf]
    %v224 = vld [vmem:[%s0 + $0x2e0] sm:$0xf]
    %v225 = vld [vmem:[%s0 + $0x2e4] sm:$0xf]
    %v226 = vld [vmem:[%s0 + $0x2e8] sm:$0xf]
    %v227 = vld [vmem:[%s0 + $0x2ec] sm:$0xf]
    %v228 = vld [vmem:[%s0 + $0x2f0] sm:$0xf]
    %v229 = vld [vmem:[%s0 + $0x2f4] sm:$0xf]
    %v230 = vld [vmem:[%s0 + $0x2f8] sm:$0xf]
    %v231 = vld [vmem:[%s0 + $0x2fc] sm:$0xf]
    %v232 = vld [vmem:[%s0 + $0x300] sm:$0xf]
    %v233 = vld [vmem:[%s0 + $0x304] sm:$0xf]
    %v234 = vld [vmem:[%s0 + $0x308] sm:$0xf]
    %v235 = vld [vmem:[%s0 + $0x30c] sm:$0xf]
    %v236 = vld [vmem:[%s0 + $0x310] sm:$0xf]
    %v237 = vld [vmem:[%s0 + $0x314] sm:$0xf]
    %v238 = vld [vmem:[%s0 + $0x318] sm:$0xf]
    %v239 = vld [vmem:[%s0 + $0x31c] sm:$0xf]
    %v240 = vld [vmem:[%s0 + $0x320] sm:$0xf]
    %v241 = vld [vmem:[%s0 + $0x324] sm:$0xf]
    %v242 = vld [vmem:[%s0 + $0x328] sm:$0xf]
    %v243 = vld [vmem:[%s0 + $0x32c] sm:$0xf]
    %v244 = vld [vmem:[%s0 + $0x330] sm:$0xf]
    %v245 = vld [vmem:[%s0 + $0x334] sm:$0xf]
    %v246 = vld [vmem:[%s0 + $0x338] sm:$0xf]
    %v247 = vld [vmem:[%s0 + $0x33c] sm:$0xf]
    %v248 = vld [vmem:[%s0 + $0x340] sm:$0xf]
    %v249 = vld [vmem:[%s0 + $0x344] sm:$0xf]
    %v250 = vld [vmem:[%s0 + $0x348] sm:$0xf]
    %v251 = vld [vmem:[%s0 + $0x34c] sm:$0xf]
    %v252 = vld [vmem:[%s0 + $0x350] sm:$0xf]
    %v253 = vld [vmem:[%s0 + $0x354] sm:$0xf]
    %v254 = vld [vmem:[%s0 + $0x358] sm:$0xf]
    %v255 = vld [vmem:[%s0 + $0x35c] sm:$0xf]
    %v256 = vld [vmem:[%s0 + $0x360] sm:$0xf]
    %v257 = vld [vmem:[%s0 + $0x364] sm:$0xf]
    %v258 = vld [vmem:[%s0 + $0x368] sm:$0xf]
    %v259 = vld [vmem:[%s0 + $0x36c] sm:$0xf]
    %v260 = vld [vmem:[%s0 + $0x370] sm:$0xf]
    %v261 = vld [vmem:[%s0 + $0x374] sm:$0xf]
    %v262 = vld [vmem:[%s0 + $0x378] sm:$0xf]
    %v263 = vld [vmem:[%s0 + $0x37c] sm:$0xf]
    %v264 = vld [vmem:[%s0 + $0x380] sm:$0xf]
    %v265 = vld [vmem:[%s0 + $0x384] sm:$0xf]
    %v266 = vld [vmem:[%s0 + $0x388] sm:$0xf]
    %v267 = vld [vmem:[%s0 + $0x38c] sm:$0xf]
    %v268 = vld [vmem:[%s0 + $0x390] sm:$0xf]
    %v269 = vld [vmem:[%s0 + $0x394] sm:$0xf]
    %v270 = vld [vmem:[%s0 + $0x398] sm:$0xf]
    %v271 = vld [vmem:[%s0 + $0x39c] sm:$0xf]
    %v272 = vld [vmem:[%s0 + $0x3a0] sm:$0xf]
    %v273 = vld [vmem:[%s0 + $0x3a4] sm:$0xf]
    %v274 = vld [vmem:[%s0 + $0x3a8] sm:$0xf]
    %v275 = vld [vmem:[%s0 + $0x3ac] sm:$0xf]
    %v276 = vld [vmem:[%s0 + $0x3b0] sm:$0xf]
    %v277 = vld [vmem:[%s0 + $0x3b4] sm:$0xf]
    %v278 = vld [vmem:[%s0 + $0x3b8] sm:$0xf]
    %v279 = vld [vmem:[%s0 + $0x3bc] sm:$0xf]
    %v280 = vld [vmem:[%s0 + $0x3c0] sm:$0xf]
    %v281 = vld [vmem:[%s0 + $0x3c4] sm:$0xf]
    %v282 = vld [vmem:[%s0 + $0x3c8] sm:$0xf]
    %v283 = vld [vmem:[%s0 + $0x3cc] sm:$0xf]
    %v284 = vld [vmem:[%s0 + $0x3d0] sm:$0xf]
    %v285 = vld [vmem:[%s0 + $0x3d4] sm:$0xf]
    %v286 = vld [vmem:[%s0 + $0x3d8] sm:$0xf]
    %v287 = vld [vmem:[%s0 + $0x3dc] sm:$0xf]
    %v288 = vld [vmem:[%s0 + $0x3e0] sm:$0xf]
    %v289 = vld [vmem:[%s0 + $0x3e4] sm:$0xf]
    %v290 = vld [vmem:[%s0 + $0x3e8] sm:$0xf]
    %v291 = vld [vmem:[%s0 + $0x3ec] sm:$0xf]
    %v292 = vld [vmem:[%s0 + $0x3f0] sm:$0xf]
    %v293 = vld [vmem:[%s0 + $0x3f4] sm:$0xf]
    %v294 = vld [vmem:[%s0 + $0x3f8] sm:$0xf]
    %v295 = vld [vmem:[%s0 + $0x3fc] sm:$0xf]
    %v296 = vld [vmem:[%s1] sm:$0xf]
    %v297 = vld [vmem:[%s2] sm:$0x1]
    %v299 = vlaneseq
    %v300 = vshrl.u32 %v299, 7
    %v301 = vsub.s32 0, %v300
    %v302 = vrot.slane %v297, %v301
    %v560 = vunpack.c.l.b16 %v40
    %v561 = vunpack.c.l.b16 %v41
    %v562 = vunpack.c.l.b16 %v42
    %v563 = vunpack.c.l.b16 %v43
    %v564 = vunpack.c.l.b16 %v44
    %v565 = vunpack.c.l.b16 %v45
    %v566 = vunpack.c.l.b16 %v46
    %v567 = vunpack.c.l.b16 %v47
    %v568 = vunpack.c.l.b16 %v48
    %v569 = vunpack.c.l.b16 %v49
    %v570 = vunpack.c.l.b16 %v50
    %v571 = vunpack.c.l.b16 %v51
    %v572 = vunpack.c.l.b16 %v52
    %v573 = vunpack.c.l.b16 %v53
    %v574 = vunpack.c.l.b16 %v54
    %v575 = vunpack.c.l.b16 %v55
    %v576 = vunpack.c.l.b16 %v56
    %v577 = vunpack.c.l.b16 %v57
    %v578 = vunpack.c.l.b16 %v58
    %v579 = vunpack.c.l.b16 %v59
    %v580 = vunpack.c.l.b16 %v60
    %v581 = vunpack.c.l.b16 %v61
    %v582 = vunpack.c.l.b16 %v62
    %v583 = vunpack.c.l.b16 %v63
    %v584 = vunpack.c.l.b16 %v64
    %v585 = vunpack.c.l.b16 %v65
    %v586 = vunpack.c.l.b16 %v66
    %v587 = vunpack.c.l.b16 %v67
    %v588 = vunpack.c.l.b16 %v68
    %v589 = vunpack.c.l.b16 %v69
    %v590 = vunpack.c.l.b16 %v70
    %v591 = vunpack.c.l.b16 %v71
    %v592 = vunpack.c.l.b16 %v72
    %v593 = vunpack.c.l.b16 %v73
    %v594 = vunpack.c.l.b16 %v74
    %v595 = vunpack.c.l.b16 %v75
    %v596 = vunpack.c.l.b16 %v76
    %v597 = vunpack.c.l.b16 %v77
    %v598 = vunpack.c.l.b16 %v78
    %v599 = vunpack.c.l.b16 %v79
    %v600 = vunpack.c.l.b16 %v80
    %v601 = vunpack.c.l.b16 %v81
    %v602 = vunpack.c.l.b16 %v82
    %v603 = vunpack.c.l.b16 %v83
    %v604 = vunpack.c.l.b16 %v84
    %v605 = vunpack.c.l.b16 %v85
    %v606 = vunpack.c.l.b16 %v86
    %v607 = vunpack.c.l.b16 %v87
    %v608 = vunpack.c.l.b16 %v88
    %v609 = vunpack.c.l.b16 %v89
    %v610 = vunpack.c.l.b16 %v90
    %v611 = vunpack.c.l.b16 %v91
    %v612 = vunpack.c.l.b16 %v92
    %v613 = vunpack.c.l.b16 %v93
    %v614 = vunpack.c.l.b16 %v94
    %v615 = vunpack.c.l.b16 %v95
    %v616 = vunpack.c.l.b16 %v96
    %v617 = vunpack.c.l.b16 %v97
    %v618 = vunpack.c.l.b16 %v98
    %v619 = vunpack.c.l.b16 %v99
    %v620 = vunpack.c.l.b16 %v100
    %v621 = vunpack.c.l.b16 %v101
    %v622 = vunpack.c.l.b16 %v102
    %v623 = vunpack.c.l.b16 %v103
    %v624 = vunpack.c.l.b16 %v104
    %v625 = vunpack.c.l.b16 %v105
    %v626 = vunpack.c.l.b16 %v106
    %v627 = vunpack.c.l.b16 %v107
    %v628 = vunpack.c.l.b16 %v108
    %v629 = vunpack.c.l.b16 %v109
    %v630 = vunpack.c.l.b16 %v110
    %v631 = vunpack.c.l.b16 %v111
    %v632 = vunpack.c.l.b16 %v112
    %v633 = vunpack.c.l.b16 %v113
    %v634 = vunpack.c.l.b16 %v114
    %v635 = vunpack.c.l.b16 %v115
    %v636 = vunpack.c.l.b16 %v116
    %v637 = vunpack.c.l.b16 %v117
    %v638 = vunpack.c.l.b16 %v118
    %v639 = vunpack.c.l.b16 %v119
    %v640 = vunpack.c.l.b16 %v120
    %v641 = vunpack.c.l.b16 %v121
    %v642 = vunpack.c.l.b16 %v122
    %v643 = vunpack.c.l.b16 %v123
    %v644 = vunpack.c.l.b16 %v124
    %v645 = vunpack.c.l.b16 %v125
    %v646 = vunpack.c.l.b16 %v126
    %v647 = vunpack.c.l.b16 %v127
    %v648 = vunpack.c.l.b16 %v128
    %v649 = vunpack.c.l.b16 %v129
    %v650 = vunpack.c.l.b16 %v130
    %v651 = vunpack.c.l.b16 %v131
    %v652 = vunpack.c.l.b16 %v132
    %v653 = vunpack.c.l.b16 %v133
    %v654 = vunpack.c.l.b16 %v134
    %v655 = vunpack.c.l.b16 %v135
    %v656 = vunpack.c.l.b16 %v136
    %v657 = vunpack.c.l.b16 %v137
    %v658 = vunpack.c.l.b16 %v138
    %v659 = vunpack.c.l.b16 %v139
    %v660 = vunpack.c.l.b16 %v140
    %v661 = vunpack.c.l.b16 %v141
    %v662 = vunpack.c.l.b16 %v142
    %v663 = vunpack.c.l.b16 %v143
    %v664 = vunpack.c.l.b16 %v144
    %v665 = vunpack.c.l.b16 %v145
    %v666 = vunpack.c.l.b16 %v146
    %v667 = vunpack.c.l.b16 %v147
    %v668 = vunpack.c.l.b16 %v148
    %v669 = vunpack.c.l.b16 %v149
    %v670 = vunpack.c.l.b16 %v150
    %v671 = vunpack.c.l.b16 %v151
    %v672 = vunpack.c.l.b16 %v152
    %v673 = vunpack.c.l.b16 %v153
    %v674 = vunpack.c.l.b16 %v154
    %v675 = vunpack.c.l.b16 %v155
    %v676 = vunpack.c.l.b16 %v156
    %v677 = vunpack.c.l.b16 %v157
    %v678 = vunpack.c.l.b16 %v158
    %v679 = vunpack.c.l.b16 %v159
    %v680 = vunpack.c.l.b16 %v160
    %v681 = vunpack.c.l.b16 %v161
    %v682 = vunpack.c.l.b16 %v162
    %v683 = vunpack.c.l.b16 %v163
    %v684 = vunpack.c.l.b16 %v164
    %v685 = vunpack.c.l.b16 %v165
    %v686 = vunpack.c.l.b16 %v166
    %v687 = vunpack.c.l.b16 %v167
    %v688 = vunpack.c.l.b16 %v168
    %v689 = vunpack.c.l.b16 %v169
    %v690 = vunpack.c.l.b16 %v170
    %v691 = vunpack.c.l.b16 %v171
    %v692 = vunpack.c.l.b16 %v172
    %v693 = vunpack.c.l.b16 %v173
    %v694 = vunpack.c.l.b16 %v174
    %v695 = vunpack.c.l.b16 %v175
    %v696 = vunpack.c.l.b16 %v176
    %v697 = vunpack.c.l.b16 %v177
    %v698 = vunpack.c.l.b16 %v178
    %v699 = vunpack.c.l.b16 %v179
    %v700 = vunpack.c.l.b16 %v180
    %v701 = vunpack.c.l.b16 %v181
    %v702 = vunpack.c.l.b16 %v182
    %v703 = vunpack.c.l.b16 %v183
    %v704 = vunpack.c.l.b16 %v184
    %v705 = vunpack.c.l.b16 %v185
    %v706 = vunpack.c.l.b16 %v186
    %v707 = vunpack.c.l.b16 %v187
    %v708 = vunpack.c.l.b16 %v188
    %v709 = vunpack.c.l.b16 %v189
    %v710 = vunpack.c.l.b16 %v190
    %v711 = vunpack.c.l.b16 %v191
    %v712 = vunpack.c.l.b16 %v192
    %v713 = vunpack.c.l.b16 %v193
    %v714 = vunpack.c.l.b16 %v194
    %v715 = vunpack.c.l.b16 %v195
    %v716 = vunpack.c.l.b16 %v196
    %v717 = vunpack.c.l.b16 %v197
    %v718 = vunpack.c.l.b16 %v198
    %v719 = vunpack.c.l.b16 %v199
    %v720 = vunpack.c.l.b16 %v200
    %v721 = vunpack.c.l.b16 %v201
    %v722 = vunpack.c.l.b16 %v202
    %v723 = vunpack.c.l.b16 %v203
    %v724 = vunpack.c.l.b16 %v204
    %v725 = vunpack.c.l.b16 %v205
    %v726 = vunpack.c.l.b16 %v206
    %v727 = vunpack.c.l.b16 %v207
    %v728 = vunpack.c.l.b16 %v208
    %v729 = vunpack.c.l.b16 %v209
    %v730 = vunpack.c.l.b16 %v210
    %v731 = vunpack.c.l.b16 %v211
    %v732 = vunpack.c.l.b16 %v212
    %v733 = vunpack.c.l.b16 %v213
    %v734 = vunpack.c.l.b16 %v214
    %v735 = vunpack.c.l.b16 %v215
    %v736 = vunpack.c.l.b16 %v216
    %v737 = vunpack.c.l.b16 %v217
    %v738 = vunpack.c.l.b16 %v218
    %v739 = vunpack.c.l.b16 %v219
    %v740 = vunpack.c.l.b16 %v220
    %v741 = vunpack.c.l.b16 %v221
    %v742 = vunpack.c.l.b16 %v222
    %v743 = vunpack.c.l.b16 %v223
    %v744 = vunpack.c.l.b16 %v224
    %v745 = vunpack.c.l.b16 %v225
    %v746 = vunpack.c.l.b16 %v226
    %v747 = vunpack.c.l.b16 %v227
    %v748 = vunpack.c.l.b16 %v228
    %v749 = vunpack.c.l.b16 %v229
    %v750 = vunpack.c.l.b16 %v230
    %v751 = vunpack.c.l.b16 %v231
    %v752 = vunpack.c.l.b16 %v232
    %v753 = vunpack.c.l.b16 %v233
    %v754 = vunpack.c.l.b16 %v234
    %v755 = vunpack.c.l.b16 %v235
    %v756 = vunpack.c.l.b16 %v236
    %v757 = vunpack.c.l.b16 %v237
    %v758 = vunpack.c.l.b16 %v238
    %v759 = vunpack.c.l.b16 %v239
    %v760 = vunpack.c.l.b16 %v240
    %v761 = vunpack.c.l.b16 %v241
    %v762 = vunpack.c.l.b16 %v242
    %v763 = vunpack.c.l.b16 %v243
    %v764 = vunpack.c.l.b16 %v244
    %v765 = vunpack.c.l.b16 %v245
    %v766 = vunpack.c.l.b16 %v246
    %v767 = vunpack.c.l.b16 %v247
    %v768 = vunpack.c.l.b16 %v248
    %v769 = vunpack.c.l.b16 %v249
    %v770 = vunpack.c.l.b16 %v250
    %v771 = vunpack.c.l.b16 %v251
    %v772 = vunpack.c.l.b16 %v252
    %v773 = vunpack.c.l.b16 %v253
    %v774 = vunpack.c.l.b16 %v254
    %v775 = vunpack.c.l.b16 %v255
    %v776 = vunpack.c.l.b16 %v256
    %v777 = vunpack.c.l.b16 %v257
    %v778 = vunpack.c.l.b16 %v258
    %v779 = vunpack.c.l.b16 %v259
    %v780 = vunpack.c.l.b16 %v260
    %v781 = vunpack.c.l.b16 %v261
    %v782 = vunpack.c.l.b16 %v262
    %v783 = vunpack.c.l.b16 %v263
    %v784 = vunpack.c.l.b16 %v264
    %v785 = vunpack.c.l.b16 %v265
    %v786 = vunpack.c.l.b16 %v266
    %v787 = vunpack.c.l.b16 %v267
    %v788 = vunpack.c.l.b16 %v268
    %v789 = vunpack.c.l.b16 %v269
    %v790 = vunpack.c.l.b16 %v270
    %v791 = vunpack.c.l.b16 %v271
    %v792 = vunpack.c.l.b16 %v272
    %v793 = vunpack.c.l.b16 %v273
    %v794 = vunpack.c.l.b16 %v274
    %v795 = vunpack.c.l.b16 %v275
    %v796 = vunpack.c.l.b16 %v276
    %v797 = vunpack.c.l.b16 %v277
    %v798 = vunpack.c.l.b16 %v278
    %v799 = vunpack.c.l.b16 %v279
    %v800 = vunpack.c.l.b16 %v280
    %v801 = vunpack.c.l.b16 %v281
    %v802 = vunpack.c.l.b16 %v282
    %v803 = vunpack.c.l.b16 %v283
    %v804 = vunpack.c.l.b16 %v284
    %v805 = vunpack.c.l.b16 %v285
    %v806 = vunpack.c.l.b16 %v286
    %v807 = vunpack.c.l.b16 %v287
    %v808 = vunpack.c.l.b16 %v288
    %v809 = vunpack.c.l.b16 %v289
    %v810 = vunpack.c.l.b16 %v290
    %v811 = vunpack.c.l.b16 %v291
    %v812 = vunpack.c.l.b16 %v292
    %v813 = vunpack.c.l.b16 %v293
    %v814 = vunpack.c.l.b16 %v294
    %v815 = vunpack.c.l.b16 %v295
    %v816 = vpack.c.b16 %v561, %v560
    %v817 = vpack.c.b16 %v563, %v562
    %v818 = vpack.c.b16 %v565, %v564
    %v819 = vpack.c.b16 %v567, %v566
    %v820 = vpack.c.b16 %v569, %v568
    %v821 = vpack.c.b16 %v571, %v570
    %v822 = vpack.c.b16 %v573, %v572
    %v823 = vpack.c.b16 %v575, %v574
    %v824 = vpack.c.b16 %v577, %v576
    %v825 = vpack.c.b16 %v579, %v578
    %v826 = vpack.c.b16 %v581, %v580
    %v827 = vpack.c.b16 %v583, %v582
    %v828 = vpack.c.b16 %v585, %v584
    %v829 = vpack.c.b16 %v587, %v586
    %v830 = vpack.c.b16 %v589, %v588
    %v831 = vpack.c.b16 %v591, %v590
    %v832 = vpack.c.b16 %v593, %v592
    %v833 = vpack.c.b16 %v595, %v594
    %v834 = vpack.c.b16 %v597, %v596
    %v835 = vpack.c.b16 %v599, %v598
    %v836 = vpack.c.b16 %v601, %v600
    %v837 = vpack.c.b16 %v603, %v602
    %v838 = vpack.c.b16 %v605, %v604
    %v839 = vpack.c.b16 %v607, %v606
    %v840 = vpack.c.b16 %v609, %v608
    %v841 = vpack.c.b16 %v611, %v610
    %v842 = vpack.c.b16 %v613, %v612
    %v843 = vpack.c.b16 %v615, %v614
    %v844 = vpack.c.b16 %v617, %v616
    %v845 = vpack.c.b16 %v619, %v618
    %v846 = vpack.c.b16 %v621, %v620
    %v847 = vpack.c.b16 %v623, %v622
    %v848 = vpack.c.b16 %v625, %v624
    %v849 = vpack.c.b16 %v627, %v626
    %v850 = vpack.c.b16 %v629, %v628
    %v851 = vpack.c.b16 %v631, %v630
    %v852 = vpack.c.b16 %v633, %v632
    %v853 = vpack.c.b16 %v635, %v634
    %v854 = vpack.c.b16 %v637, %v636
    %v855 = vpack.c.b16 %v639, %v638
    %v856 = vpack.c.b16 %v641, %v640
    %v857 = vpack.c.b16 %v643, %v642
    %v858 = vpack.c.b16 %v645, %v644
    %v859 = vpack.c.b16 %v647, %v646
    %v860 = vpack.c.b16 %v649, %v648
    %v861 = vpack.c.b16 %v651, %v650
    %v862 = vpack.c.b16 %v653, %v652
    %v863 = vpack.c.b16 %v655, %v654
    %v864 = vpack.c.b16 %v657, %v656
    %v865 = vpack.c.b16 %v659, %v658
    %v866 = vpack.c.b16 %v661, %v660
    %v867 = vpack.c.b16 %v663, %v662
    %v868 = vpack.c.b16 %v665, %v664
    %v869 = vpack.c.b16 %v667, %v666
    %v870 = vpack.c.b16 %v669, %v668
    %v871 = vpack.c.b16 %v671, %v670
    %v872 = vpack.c.b16 %v673, %v672
    %v873 = vpack.c.b16 %v675, %v674
    %v874 = vpack.c.b16 %v677, %v676
    %v875 = vpack.c.b16 %v679, %v678
    %v876 = vpack.c.b16 %v681, %v680
    %v877 = vpack.c.b16 %v683, %v682
    %v878 = vpack.c.b16 %v685, %v684
    %v879 = vpack.c.b16 %v687, %v686
    %v880 = vpack.c.b16 %v689, %v688
    %v881 = vpack.c.b16 %v691, %v690
    %v882 = vpack.c.b16 %v693, %v692
    %v883 = vpack.c.b16 %v695, %v694
    %v884 = vpack.c.b16 %v697, %v696
    %v885 = vpack.c.b16 %v699, %v698
    %v886 = vpack.c.b16 %v701, %v700
    %v887 = vpack.c.b16 %v703, %v702
    %v888 = vpack.c.b16 %v705, %v704
    %v889 = vpack.c.b16 %v707, %v706
    %v890 = vpack.c.b16 %v709, %v708
    %v891 = vpack.c.b16 %v711, %v710
    %v892 = vpack.c.b16 %v713, %v712
    %v893 = vpack.c.b16 %v715, %v714
    %v894 = vpack.c.b16 %v717, %v716
    %v895 = vpack.c.b16 %v719, %v718
    %v896 = vpack.c.b16 %v721, %v720
    %v897 = vpack.c.b16 %v723, %v722
    %v898 = vpack.c.b16 %v725, %v724
    %v899 = vpack.c.b16 %v727, %v726
    %v900 = vpack.c.b16 %v729, %v728
    %v901 = vpack.c.b16 %v731, %v730
    %v902 = vpack.c.b16 %v733, %v732
    %v903 = vpack.c.b16 %v735, %v734
    %v904 = vpack.c.b16 %v737, %v736
    %v905 = vpack.c.b16 %v739, %v738
    %v906 = vpack.c.b16 %v741, %v740
    %v907 = vpack.c.b16 %v743, %v742
    %v908 = vpack.c.b16 %v745, %v744
    %v909 = vpack.c.b16 %v747, %v746
    %v910 = vpack.c.b16 %v749, %v748
    %v911 = vpack.c.b16 %v751, %v750
    %v912 = vpack.c.b16 %v753, %v752
    %v913 = vpack.c.b16 %v755, %v754
    %v914 = vpack.c.b16 %v757, %v756
    %v915 = vpack.c.b16 %v759, %v758
    %v916 = vpack.c.b16 %v761, %v760
    %v917 = vpack.c.b16 %v763, %v762
    %v918 = vpack.c.b16 %v765, %v764
    %v919 = vpack.c.b16 %v767, %v766
    %v920 = vpack.c.b16 %v769, %v768
    %v921 = vpack.c.b16 %v771, %v770
    %v922 = vpack.c.b16 %v773, %v772
    %v923 = vpack.c.b16 %v775, %v774
    %v924 = vpack.c.b16 %v777, %v776
    %v925 = vpack.c.b16 %v779, %v778
    %v926 = vpack.c.b16 %v781, %v780
    %v927 = vpack.c.b16 %v783, %v782
    %v928 = vpack.c.b16 %v785, %v784
    %v929 = vpack.c.b16 %v787, %v786
    %v930 = vpack.c.b16 %v789, %v788
    %v931 = vpack.c.b16 %v791, %v790
    %v932 = vpack.c.b16 %v793, %v792
    %v933 = vpack.c.b16 %v795, %v794
    %v934 = vpack.c.b16 %v797, %v796
    %v935 = vpack.c.b16 %v799, %v798
    %v936 = vpack.c.b16 %v801, %v800
    %v937 = vpack.c.b16 %v803, %v802
    %v938 = vpack.c.b16 %v805, %v804
    %v939 = vpack.c.b16 %v807, %v806
    %v940 = vpack.c.b16 %v809, %v808
    %v941 = vpack.c.b16 %v811, %v810
    %v942 = vpack.c.b16 %v813, %v812
    %v943 = vpack.c.b16 %v815, %v814
    %vm944 = vcmask 64512
    %v946 = vsel %vm944, %v816, 0
    %v949 = vsel %vm944, %v817, 0
    %v952 = vsel %vm944, %v818, 0
    %v955 = vsel %vm944, %v819, 0
    %v958 = vsel %vm944, %v820, 0
    %v961 = vsel %vm944, %v821, 0
    %v964 = vsel %vm944, %v822, 0
    %v967 = vsel %vm944, %v823, 0
    %v970 = vsel %vm944, %v824, 0
    %v973 = vsel %vm944, %v825, 0
    %v976 = vsel %vm944, %v826, 0
    %v979 = vsel %vm944, %v827, 0
    %v982 = vsel %vm944, %v828, 0
    %v985 = vsel %vm944, %v829, 0
    %v988 = vsel %vm944, %v830, 0
    %v991 = vsel %vm944, %v831, 0
    %v994 = vsel %vm944, %v832, 0
    %v997 = vsel %vm944, %v833, 0
    %v1000 = vsel %vm944, %v834, 0
    %v1003 = vsel %vm944, %v835, 0
    %v1006 = vsel %vm944, %v836, 0
    %v1009 = vsel %vm944, %v837, 0
    %v1012 = vsel %vm944, %v838, 0
    %v1015 = vsel %vm944, %v839, 0
    %v1018 = vsel %vm944, %v840, 0
    %v1021 = vsel %vm944, %v841, 0
    %v1024 = vsel %vm944, %v842, 0
    %v1027 = vsel %vm944, %v843, 0
    %v1030 = vsel %vm944, %v844, 0
    %v1033 = vsel %vm944, %v845, 0
    %v1036 = vsel %vm944, %v846, 0
    %v1039 = vsel %vm944, %v847, 0
    %v1042 = vsel %vm944, %v848, 0
    %v1045 = vsel %vm944, %v849, 0
    %v1048 = vsel %vm944, %v850, 0
    %v1051 = vsel %vm944, %v851, 0
    %v1054 = vsel %vm944, %v852, 0
    %v1057 = vsel %vm944, %v853, 0
    %v1060 = vsel %vm944, %v854, 0
    %v1063 = vsel %vm944, %v855, 0
    %v1066 = vsel %vm944, %v856, 0
    %v1069 = vsel %vm944, %v857, 0
    %v1072 = vsel %vm944, %v858, 0
    %v1075 = vsel %vm944, %v859, 0
    %v1078 = vsel %vm944, %v860, 0
    %v1081 = vsel %vm944, %v861, 0
    %v1084 = vsel %vm944, %v862, 0
    %v1087 = vsel %vm944, %v863, 0
    %v1090 = vsel %vm944, %v864, 0
    %v1093 = vsel %vm944, %v865, 0
    %v1096 = vsel %vm944, %v866, 0
    %v1099 = vsel %vm944, %v867, 0
    %v1102 = vsel %vm944, %v868, 0
    %v1105 = vsel %vm944, %v869, 0
    %v1108 = vsel %vm944, %v870, 0
    %v1111 = vsel %vm944, %v871, 0
    %v1114 = vsel %vm944, %v872, 0
    %v1117 = vsel %vm944, %v873, 0
    %v1120 = vsel %vm944, %v874, 0
    %v1123 = vsel %vm944, %v875, 0
    %v1126 = vsel %vm944, %v876, 0
    %v1129 = vsel %vm944, %v877, 0
    %v1132 = vsel %vm944, %v878, 0
    %v1135 = vsel %vm944, %v879, 0
    %v1138 = vsel %vm944, %v880, 0
    %v1141 = vsel %vm944, %v881, 0
    %v1144 = vsel %vm944, %v882, 0
    %v1147 = vsel %vm944, %v883, 0
    %v1150 = vsel %vm944, %v884, 0
    %v1153 = vsel %vm944, %v885, 0
    %v1156 = vsel %vm944, %v886, 0
    %v1159 = vsel %vm944, %v887, 0
    %v1162 = vsel %vm944, %v888, 0
    %v1165 = vsel %vm944, %v889, 0
    %v1168 = vsel %vm944, %v890, 0
    %v1171 = vsel %vm944, %v891, 0
    %v1174 = vsel %vm944, %v892, 0
    %v1177 = vsel %vm944, %v893, 0
    %v1180 = vsel %vm944, %v894, 0
    %v1183 = vsel %vm944, %v895, 0
    %v1186 = vsel %vm944, %v896, 0
    %v1189 = vsel %vm944, %v897, 0
    %v1192 = vsel %vm944, %v898, 0
    %v1195 = vsel %vm944, %v899, 0
    %v1198 = vsel %vm944, %v900, 0
    %v1201 = vsel %vm944, %v901, 0
    %v1204 = vsel %vm944, %v902, 0
    %v1207 = vsel %vm944, %v903, 0
    %v1210 = vsel %vm944, %v904, 0
    %v1213 = vsel %vm944, %v905, 0
    %v1216 = vsel %vm944, %v906, 0
    %v1219 = vsel %vm944, %v907, 0
    %v1222 = vsel %vm944, %v908, 0
    %v1225 = vsel %vm944, %v909, 0
    %v1228 = vsel %vm944, %v910, 0
    %v1231 = vsel %vm944, %v911, 0
    %v1234 = vsel %vm944, %v912, 0
    %v1237 = vsel %vm944, %v913, 0
    %v1240 = vsel %vm944, %v914, 0
    %v1243 = vsel %vm944, %v915, 0
    %v1246 = vsel %vm944, %v916, 0
    %v1249 = vsel %vm944, %v917, 0
    %v1252 = vsel %vm944, %v918, 0
    %v1255 = vsel %vm944, %v919, 0
    %v1258 = vsel %vm944, %v920, 0
    %v1261 = vsel %vm944, %v921, 0
    %v1264 = vsel %vm944, %v922, 0
    %v1267 = vsel %vm944, %v923, 0
    %v1270 = vsel %vm944, %v924, 0
    %v1273 = vsel %vm944, %v925, 0
    %v1276 = vsel %vm944, %v926, 0
    %v1279 = vsel %vm944, %v927, 0
    %v1282 = vsel %vm944, %v928, 0
    %v1285 = vsel %vm944, %v929, 0
    %v1288 = vsel %vm944, %v930, 0
    %v1291 = vsel %vm944, %v931, 0
    %v1294 = vsel %vm944, %v932, 0
    %v1297 = vsel %vm944, %v933, 0
    %v1300 = vsel %vm944, %v934, 0
    %v1303 = vsel %vm944, %v935, 0
    %v1306 = vsel %vm944, %v936, 0
    %v1309 = vsel %vm944, %v937, 0
    %v1312 = vsel %vm944, %v938, 0
    %v1315 = vsel %vm944, %v939, 0
    %v1318 = vsel %vm944, %v940, 0
    %v1321 = vsel %vm944, %v941, 0
    %v1324 = vsel %vm944, %v942, 0
    %v1327 = vsel %vm944, %v943, 0
    %vm1329 = vcmask 1043456
    %v1331 = vsel %vm1329, %v296, 0
    %1333 = vmatprep.subr.bf16.mxu0 0
    %1334 = vmatpush1.bf16.msra.mxu0 %v1331
    %1335 = vmatprep.subr.bf16.mxu0 0
    %1336 = vmatpush1.bf16.msra.mxu0 0
    %1337 = vmatprep.subr.bf16.mxu0 0
    %1338 = vmatpush1.bf16.msra.mxu0 0
    %1339 = vmatprep.subr.bf16.mxu0 0
    %1340 = vmatpush1.bf16.msra.mxu0 0
    %1341 = vmatprep.subr.bf16.mxu0 0
    %1342 = vmatpush1.bf16.msra.mxu0 0
    %1343 = vmatprep.subr.bf16.mxu0 0
    %1344 = vmatpush1.bf16.msra.mxu0 0
    %1345 = vmatprep.subr.bf16.mxu0 0
    %1346 = vmatpush1.bf16.msra.mxu0 0
    %1347 = vmatprep.subr.bf16.mxu0 0
    %1348 = vmatpush1.bf16.msra.mxu0 0
    %1349 = vmatprep.subr.bf16.mxu0 0
    %1350 = vmatpush1.bf16.msra.mxu0 0
    %1351 = vmatprep.subr.bf16.mxu0 0
    %1352 = vmatpush1.bf16.msra.mxu0 0
    %1353 = vmatprep.subr.bf16.mxu0 0
    %1354 = vmatpush1.bf16.msra.mxu0 0
    %1355 = vmatprep.subr.bf16.mxu0 0
    %1356 = vmatpush1.bf16.msra.mxu0 0
    %1357 = vmatprep.subr.bf16.mxu0 0
    %1358 = vmatpush1.bf16.msra.mxu0 0
    %1359 = vmatprep.subr.bf16.mxu0 0
    %1360 = vmatpush1.bf16.msra.mxu0 0
    %1361 = vmatprep.subr.bf16.mxu0 0
    %1362 = vmatpush1.bf16.msra.mxu0 0
    %1363 = vmatprep.subr.bf16.mxu0 0
    %1364 = vmatpush1.bf16.msra.mxu0 0
    %1365 = vmatprep.mubr.bf16.mxu0 0
    %1366 = vmatmul.mubr.bf16.gmra.mrb[0].mxu0 %v946
    %v1367 = vpop.f32.mrb[0].mxu0
    %v1368 = vadd.f32 %v302, %v1367
    %v1369 = vpop.f32.mrb[0].mxu0
    %v1370 = vpop.f32.mrb[0].mxu0
    %v1371 = vadd.f32 %v302, %v1370
    %v1372 = vpop.f32.mrb[0].mxu0
    %1373 = vmatprep.mubr.bf16.mxu0 0
    %1374 = vmatmul.mubr.bf16.gmra.mrb[0].mxu0 %v949
    %v1375 = vpop.f32.mrb[0].mxu0
    %v1376 = vadd.f32 %v302, %v1375
    %v1377 = vpop.f32.mrb[0].mxu0
    %v1378 = vpop.f32.mrb[0].mxu0
    %v1379 = vadd.f32 %v302, %v1378
    %v1380 = vpop.f32.mrb[0].mxu0
    %1381 = vmatprep.mubr.bf16.mxu0 0
    %1382 = vmatmul.mubr.bf16.gmra.mrb[0].mxu0 %v952
    %v1383 = vpop.f32.mrb[0].mxu0
    %v1384 = vadd.f32 %v302, %v1383
    %v1385 = vpop.f32.mrb[0].mxu0
    %v1386 = vpop.f32.mrb[0].mxu0
    %v1387 = vadd.f32 %v302, %v1386
    %v1388 = vpop.f32.mrb[0].mxu0
    %1389 = vmatprep.mubr.bf16.mxu0 0
    %1390 = vmatmul.mubr.bf16.gmra.mrb[0].mxu0 %v955
    %v1391 = vpop.f32.mrb[0].mxu0
    %v1392 = vadd.f32 %v302, %v1391
    %v1393 = vpop.f32.mrb[0].mxu0
    %v1394 = vpop.f32.mrb[0].mxu0
    %v1395 = vadd.f32 %v302, %v1394
    %v1396 = vpop.f32.mrb[0].mxu0
    %1397 = vmatprep.mubr.bf16.mxu0 0
    %1398 = vmatmul.mubr.bf16.gmra.mrb[0].mxu0 %v958
    %v1399 = vpop.f32.mrb[0].mxu0
    %v1400 = vadd.f32 %v302, %v1399
    %v1401 = vpop.f32.mrb[0].mxu0
    %v1402 = vpop.f32.mrb[0].mxu0
    %v1403 = vadd.f32 %v302, %v1402
    %v1404 = vpop.f32.mrb[0].mxu0
    %1405 = vmatprep.mubr.bf16.mxu0 0
    %1406 = vmatmul.mubr.bf16.gmra.mrb[0].mxu0 %v961
    %v1407 = vpop.f32.mrb[0].mxu0
    %v1408 = vadd.f32 %v302, %v1407
    %v1409 = vpop.f32.mrb[0].mxu0
    %v1410 = vpop.f32.mrb[0].mxu0
    %v1411 = vadd.f32 %v302, %v1410
    %v1412 = vpop.f32.mrb[0].mxu0
    %1413 = vmatprep.mubr.bf16.mxu0 0
    %1414 = vmatmul.mubr.bf16.gmra.mrb[0].mxu0 %v964
    %v1415 = vpop.f32.mrb[0].mxu0
    %v1416 = vadd.f32 %v302, %v1415
    %v1417 = vpop.f32.mrb[0].mxu0
    %v1418 = vpop.f32.mrb[0].mxu0
    %v1419 = vadd.f32 %v302, %v1418
    %v1420 = vpop.f32.mrb[0].mxu0
    %1421 = vmatprep.mubr.bf16.mxu0 0
    %1422 = vmatmul.mubr.bf16.gmra.mrb[0].mxu0 %v967
    %v1423 = vpop.f32.mrb[0].mxu0
    %v1424 = vadd.f32 %v302, %v1423
    %v1425 = vpop.f32.mrb[0].mxu0
    %v1426 = vpop.f32.mrb[0].mxu0
    %v1427 = vadd.f32 %v302, %v1426
    %v1428 = vpop.f32.mrb[0].mxu0
    %1429 = vmatprep.mubr.bf16.mxu0 0
    %1430 = vmatmul.mubr.bf16.gmra.mrb[0].mxu0 %v970
    %v1431 = vpop.f32.mrb[0].mxu0
    %v1432 = vadd.f32 %v302, %v1431
    %v1433 = vpop.f32.mrb[0].mxu0
    %v1434 = vpop.f32.mrb[0].mxu0
    %v1435 = vadd.f32 %v302, %v1434
    %v1436 = vpop.f32.mrb[0].mxu0
    %1437 = vmatprep.mubr.bf16.mxu0 0
    %1438 = vmatmul.mubr.bf16.gmra.mrb[0].mxu0 %v973
    %v1439 = vpop.f32.mrb[0].mxu0
    %v1440 = vadd.f32 %v302, %v1439
    %v1441 = vpop.f32.mrb[0].mxu0
    %v1442 = vpop.f32.mrb[0].mxu0
    %v1443 = vadd.f32 %v302, %v1442
    %v1444 = vpop.f32.mrb[0].mxu0
    %1445 = vmatprep.mubr.bf16.mxu0 0
    %1446 = vmatmul.mubr.bf16.gmra.mrb[0].mxu0 %v976
    %v1447 = vpop.f32.mrb[0].mxu0
    %v1448 = vadd.f32 %v302, %v1447
    %v1449 = vpop.f32.mrb[0].mxu0
    %v1450 = vpop.f32.mrb[0].mxu0
    %v1451 = vadd.f32 %v302, %v1450
    %v1452 = vpop.f32.mrb[0].mxu0
    %1453 = vmatprep.mubr.bf16.mxu0 0
    %1454 = vmatmul.mubr.bf16.gmra.mrb[0].mxu0 %v979
    %v1455 = vpop.f32.mrb[0].mxu0
    %v1456 = vadd.f32 %v302, %v1455
    %v1457 = vpop.f32.mrb[0].mxu0
    %v1458 = vpop.f32.mrb[0].mxu0
    %v1459 = vadd.f32 %v302, %v1458
    %v1460 = vpop.f32.mrb[0].mxu0
    %1461 = vmatprep.mubr.bf16.mxu0 0
    %1462 = vmatmul.mubr.bf16.gmra.mrb[0].mxu0 %v982
    %v1463 = vpop.f32.mrb[0].mxu0
    %v1464 = vadd.f32 %v302, %v1463
    %v1465 = vpop.f32.mrb[0].mxu0
    %v1466 = vpop.f32.mrb[0].mxu0
    %v1467 = vadd.f32 %v302, %v1466
    %v1468 = vpop.f32.mrb[0].mxu0
    %1469 = vmatprep.mubr.bf16.mxu0 0
    %1470 = vmatmul.mubr.bf16.gmra.mrb[0].mxu0 %v985
    %v1471 = vpop.f32.mrb[0].mxu0
    %v1472 = vadd.f32 %v302, %v1471
    %v1473 = vpop.f32.mrb[0].mxu0
    %v1474 = vpop.f32.mrb[0].mxu0
    %v1475 = vadd.f32 %v302, %v1474
    %v1476 = vpop.f32.mrb[0].mxu0
    %1477 = vmatprep.mubr.bf16.mxu0 0
    %1478 = vmatmul.mubr.bf16.gmra.mrb[0].mxu0 %v988
    %v1479 = vpop.f32.mrb[0].mxu0
    %v1480 = vadd.f32 %v302, %v1479
    %v1481 = vpop.f32.mrb[0].mxu0
    %v1482 = vpop.f32.mrb[0].mxu0
    %v1483 = vadd.f32 %v302, %v1482
    %v1484 = vpop.f32.mrb[0].mxu0
    %1485 = vmatprep.mubr.bf16.mxu0 0
    %1486 = vmatmul.mubr.bf16.gmra.mrb[0].mxu0 %v991
    %v1487 = vpop.f32.mrb[0].mxu0
    %v1488 = vadd.f32 %v302, %v1487
    %v1489 = vpop.f32.mrb[0].mxu0
    %v1490 = vpop.f32.mrb[0].mxu0
    %v1491 = vadd.f32 %v302, %v1490
    %v1492 = vpop.f32.mrb[0].mxu0
    %1493 = vmatprep.mubr.bf16.mxu0 0
    %1494 = vmatmul.mubr.bf16.gmra.mrb[0].mxu0 %v994
    %v1495 = vpop.f32.mrb[0].mxu0
    %v1496 = vadd.f32 %v302, %v1495
    %v1497 = vpop.f32.mrb[0].mxu0
    %v1498 = vpop.f32.mrb[0].mxu0
    %v1499 = vadd.f32 %v302, %v1498
    %v1500 = vpop.f32.mrb[0].mxu0
    %1501 = vmatprep.mubr.bf16.mxu0 0
    %1502 = vmatmul.mubr.bf16.gmra.mrb[0].mxu0 %v997
    %v1503 = vpop.f32.mrb[0].mxu0
    %v1504 = vadd.f32 %v302, %v1503
    %v1505 = vpop.f32.mrb[0].mxu0
    %v1506 = vpop.f32.mrb[0].mxu0
    %v1507 = vadd.f32 %v302, %v1506
    %v1508 = vpop.f32.mrb[0].mxu0
    %1509 = vmatprep.mubr.bf16.mxu0 0
    %1510 = vmatmul.mubr.bf16.gmra.mrb[0].mxu0 %v1000
    %v1511 = vpop.f32.mrb[0].mxu0
    %v1512 = vadd.f32 %v302, %v1511
    %v1513 = vpop.f32.mrb[0].mxu0
    %v1514 = vpop.f32.mrb[0].mxu0
    %v1515 = vadd.f32 %v302, %v1514
    %v1516 = vpop.f32.mrb[0].mxu0
    %1517 = vmatprep.mubr.bf16.mxu0 0
    %1518 = vmatmul.mubr.bf16.gmra.mrb[0].mxu0 %v1003
    %v1519 = vpop.f32.mrb[0].mxu0
    %v1520 = vadd.f32 %v302, %v1519
    %v1521 = vpop.f32.mrb[0].mxu0
    %v1522 = vpop.f32.mrb[0].mxu0
    %v1523 = vadd.f32 %v302, %v1522
    %v1524 = vpop.f32.mrb[0].mxu0
    %1525 = vmatprep.mubr.bf16.mxu0 0
    %1526 = vmatmul.mubr.bf16.gmra.mrb[0].mxu0 %v1006
    %v1527 = vpop.f32.mrb[0].mxu0
    %v1528 = vadd.f32 %v302, %v1527
    %v1529 = vpop.f32.mrb[0].mxu0
    %v1530 = vpop.f32.mrb[0].mxu0
    %v1531 = vadd.f32 %v302, %v1530
    %v1532 = vpop.f32.mrb[0].mxu0
    %1533 = vmatprep.mubr.bf16.mxu0 0
    %1534 = vmatmul.mubr.bf16.gmra.mrb[0].mxu0 %v1009
    %v1535 = vpop.f32.mrb[0].mxu0
    %v1536 = vadd.f32 %v302, %v1535
    %v1537 = vpop.f32.mrb[0].mxu0
    %v1538 = vpop.f32.mrb[0].mxu0
    %v1539 = vadd.f32 %v302, %v1538
    %v1540 = vpop.f32.mrb[0].mxu0
    %1541 = vmatprep.mubr.bf16.mxu0 0
    %1542 = vmatmul.mubr.bf16.gmra.mrb[0].mxu0 %v1012
    %v1543 = vpop.f32.mrb[0].mxu0
    %v1544 = vadd.f32 %v302, %v1543
    %v1545 = vpop.f32.mrb[0].mxu0
    %v1546 = vpop.f32.mrb[0].mxu0
    %v1547 = vadd.f32 %v302, %v1546
    %v1548 = vpop.f32.mrb[0].mxu0
    %1549 = vmatprep.mubr.bf16.mxu0 0
    %1550 = vmatmul.mubr.bf16.gmra.mrb[0].mxu0 %v1015
    %v1551 = vpop.f32.mrb[0].mxu0
    %v1552 = vadd.f32 %v302, %v1551
    %v1553 = vpop.f32.mrb[0].mxu0
    %v1554 = vpop.f32.mrb[0].mxu0
    %v1555 = vadd.f32 %v302, %v1554
    %v1556 = vpop.f32.mrb[0].mxu0
    %1557 = vmatprep.mubr.bf16.mxu0 0
    %1558 = vmatmul.mubr.bf16.gmra.mrb[0].mxu0 %v1018
    %v1559 = vpop.f32.mrb[0].mxu0
    %v1560 = vadd.f32 %v302, %v1559
    %v1561 = vpop.f32.mrb[0].mxu0
    %v1562 = vpop.f32.mrb[0].mxu0
    %v1563 = vadd.f32 %v302, %v1562
    %v1564 = vpop.f32.mrb[0].mxu0
    %1565 = vmatprep.mubr.bf16.mxu0 0
    %1566 = vmatmul.mubr.bf16.gmra.mrb[0].mxu0 %v1021
    %v1567 = vpop.f32.mrb[0].mxu0
    %v1568 = vadd.f32 %v302, %v1567
    %v1569 = vpop.f32.mrb[0].mxu0
    %v1570 = vpop.f32.mrb[0].mxu0
    %v1571 = vadd.f32 %v302, %v1570
    %v1572 = vpop.f32.mrb[0].mxu0
    %1573 = vmatprep.mubr.bf16.mxu0 0
    %1574 = vmatmul.mubr.bf16.gmra.mrb[0].mxu0 %v1024
    %v1575 = vpop.f32.mrb[0].mxu0
    %v1576 = vadd.f32 %v302, %v1575
    %v1577 = vpop.f32.mrb[0].mxu0
    %v1578 = vpop.f32.mrb[0].mxu0
    %v1579 = vadd.f32 %v302, %v1578
    %v1580 = vpop.f32.mrb[0].mxu0
    %1581 = vmatprep.mubr.bf16.mxu0 0
    %1582 = vmatmul.mubr.bf16.gmra.mrb[0].mxu0 %v1027
    %v1583 = vpop.f32.mrb[0].mxu0
    %v1584 = vadd.f32 %v302, %v1583
    %v1585 = vpop.f32.mrb[0].mxu0
    %v1586 = vpop.f32.mrb[0].mxu0
    %v1587 = vadd.f32 %v302, %v1586
    %v1588 = vpop.f32.mrb[0].mxu0
    %1589 = vmatprep.mubr.bf16.mxu0 0
    %1590 = vmatmul.mubr.bf16.gmra.mrb[0].mxu0 %v1030
    %v1591 = vpop.f32.mrb[0].mxu0
    %v1592 = vadd.f32 %v302, %v1591
    %v1593 = vpop.f32.mrb[0].mxu0
    %v1594 = vpop.f32.mrb[0].mxu0
    %v1595 = vadd.f32 %v302, %v1594
    %v1596 = vpop.f32.mrb[0].mxu0
    %1597 = vmatprep.mubr.bf16.mxu0 0
    %1598 = vmatmul.mubr.bf16.gmra.mrb[0].mxu0 %v1033
    %v1599 = vpop.f32.mrb[0].mxu0
    %v1600 = vadd.f32 %v302, %v1599
    %v1601 = vpop.f32.mrb[0].mxu0
    %v1602 = vpop.f32.mrb[0].mxu0
    %v1603 = vadd.f32 %v302, %v1602
    %v1604 = vpop.f32.mrb[0].mxu0
    %1605 = vmatprep.mubr.bf16.mxu0 0
    %1606 = vmatmul.mubr.bf16.gmra.mrb[0].mxu0 %v1036
    %v1607 = vpop.f32.mrb[0].mxu0
    %v1608 = vadd.f32 %v302, %v1607
    %v1609 = vpop.f32.mrb[0].mxu0
    %v1610 = vpop.f32.mrb[0].mxu0
    %v1611 = vadd.f32 %v302, %v1610
    %v1612 = vpop.f32.mrb[0].mxu0
    %1613 = vmatprep.mubr.bf16.mxu0 0
    %1614 = vmatmul.mubr.bf16.gmra.mrb[0].mxu0 %v1039
    %v1615 = vpop.f32.mrb[0].mxu0
    %v1616 = vadd.f32 %v302, %v1615
    %v1617 = vpop.f32.mrb[0].mxu0
    %v1618 = vpop.f32.mrb[0].mxu0
    %v1619 = vadd.f32 %v302, %v1618
    %v1620 = vpop.f32.mrb[0].mxu0
    %1621 = vmatprep.mubr.bf16.mxu0 0
    %1622 = vmatmul.mubr.bf16.gmra.mrb[0].mxu0 %v1042
    %v1623 = vpop.f32.mrb[0].mxu0
    %v1624 = vadd.f32 %v302, %v1623
    %v1625 = vpop.f32.mrb[0].mxu0
    %v1626 = vpop.f32.mrb[0].mxu0
    %v1627 = vadd.f32 %v302, %v1626
    %v1628 = vpop.f32.mrb[0].mxu0
    %1629 = vmatprep.mubr.bf16.mxu0 0
    %1630 = vmatmul.mubr.bf16.gmra.mrb[0].mxu0 %v1045
    %v1631 = vpop.f32.mrb[0].mxu0
    %v1632 = vadd.f32 %v302, %v1631
    %v1633 = vpop.f32.mrb[0].mxu0
    %v1634 = vpop.f32.mrb[0].mxu0
    %v1635 = vadd.f32 %v302, %v1634
    %v1636 = vpop.f32.mrb[0].mxu0
    %1637 = vmatprep.mubr.bf16.mxu0 0
    %1638 = vmatmul.mubr.bf16.gmra.mrb[0].mxu0 %v1048
    %v1639 = vpop.f32.mrb[0].mxu0
    %v1640 = vadd.f32 %v302, %v1639
    %v1641 = vpop.f32.mrb[0].mxu0
    %v1642 = vpop.f32.mrb[0].mxu0
    %v1643 = vadd.f32 %v302, %v1642
    %v1644 = vpop.f32.mrb[0].mxu0
    %1645 = vmatprep.mubr.bf16.mxu0 0
    %1646 = vmatmul.mubr.bf16.gmra.mrb[0].mxu0 %v1051
    %v1647 = vpop.f32.mrb[0].mxu0
    %v1648 = vadd.f32 %v302, %v1647
    %v1649 = vpop.f32.mrb[0].mxu0
    %v1650 = vpop.f32.mrb[0].mxu0
    %v1651 = vadd.f32 %v302, %v1650
    %v1652 = vpop.f32.mrb[0].mxu0
    %1653 = vmatprep.mubr.bf16.mxu0 0
    %1654 = vmatmul.mubr.bf16.gmra.mrb[0].mxu0 %v1054
    %v1655 = vpop.f32.mrb[0].mxu0
    %v1656 = vadd.f32 %v302, %v1655
    %v1657 = vpop.f32.mrb[0].mxu0
    %v1658 = vpop.f32.mrb[0].mxu0
    %v1659 = vadd.f32 %v302, %v1658
    %v1660 = vpop.f32.mrb[0].mxu0
    %1661 = vmatprep.mubr.bf16.mxu0 0
    %1662 = vmatmul.mubr.bf16.gmra.mrb[0].mxu0 %v1057
    %v1663 = vpop.f32.mrb[0].mxu0
    %v1664 = vadd.f32 %v302, %v1663
    %v1665 = vpop.f32.mrb[0].mxu0
    %v1666 = vpop.f32.mrb[0].mxu0
    %v1667 = vadd.f32 %v302, %v1666
    %v1668 = vpop.f32.mrb[0].mxu0
    %1669 = vmatprep.mubr.bf16.mxu0 0
    %1670 = vmatmul.mubr.bf16.gmra.mrb[0].mxu0 %v1060
    %v1671 = vpop.f32.mrb[0].mxu0
    %v1672 = vadd.f32 %v302, %v1671
    %v1673 = vpop.f32.mrb[0].mxu0
    %v1674 = vpop.f32.mrb[0].mxu0
    %v1675 = vadd.f32 %v302, %v1674
    %v1676 = vpop.f32.mrb[0].mxu0
    %1677 = vmatprep.mubr.bf16.mxu0 0
    %1678 = vmatmul.mubr.bf16.gmra.mrb[0].mxu0 %v1063
    %v1679 = vpop.f32.mrb[0].mxu0
    %v1680 = vadd.f32 %v302, %v1679
    %v1681 = vpop.f32.mrb[0].mxu0
    %v1682 = vpop.f32.mrb[0].mxu0
    %v1683 = vadd.f32 %v302, %v1682
    %v1684 = vpop.f32.mrb[0].mxu0
    %1685 = vmatprep.mubr.bf16.mxu0 0
    %1686 = vmatmul.mubr.bf16.gmra.mrb[0].mxu0 %v1066
    %v1687 = vpop.f32.mrb[0].mxu0
    %v1688 = vadd.f32 %v302, %v1687
    %v1689 = vpop.f32.mrb[0].mxu0
    %v1690 = vpop.f32.mrb[0].mxu0
    %v1691 = vadd.f32 %v302, %v1690
    %v1692 = vpop.f32.mrb[0].mxu0
    %1693 = vmatprep.mubr.bf16.mxu0 0
    %1694 = vmatmul.mubr.bf16.gmra.mrb[0].mxu0 %v1069
    %v1695 = vpop.f32.mrb[0].mxu0
    %v1696 = vadd.f32 %v302, %v1695
    %v1697 = vpop.f32.mrb[0].mxu0
    %v1698 = vpop.f32.mrb[0].mxu0
    %v1699 = vadd.f32 %v302, %v1698
    %v1700 = vpop.f32.mrb[0].mxu0
    %1701 = vmatprep.mubr.bf16.mxu0 0
    %1702 = vmatmul.mubr.bf16.gmra.mrb[0].mxu0 %v1072
    %v1703 = vpop.f32.mrb[0].mxu0
    %v1704 = vadd.f32 %v302, %v1703
    %v1705 = vpop.f32.mrb[0].mxu0
    %v1706 = vpop.f32.mrb[0].mxu0
    %v1707 = vadd.f32 %v302, %v1706
    %v1708 = vpop.f32.mrb[0].mxu0
    %1709 = vmatprep.mubr.bf16.mxu0 0
    %1710 = vmatmul.mubr.bf16.gmra.mrb[0].mxu0 %v1075
    %v1711 = vpop.f32.mrb[0].mxu0
    %v1712 = vadd.f32 %v302, %v1711
    %v1713 = vpop.f32.mrb[0].mxu0
    %v1714 = vpop.f32.mrb[0].mxu0
    %v1715 = vadd.f32 %v302, %v1714
    %v1716 = vpop.f32.mrb[0].mxu0
    %1717 = vmatprep.mubr.bf16.mxu0 0
    %1718 = vmatmul.mubr.bf16.gmra.mrb[0].mxu0 %v1078
    %v1719 = vpop.f32.mrb[0].mxu0
    %v1720 = vadd.f32 %v302, %v1719
    %v1721 = vpop.f32.mrb[0].mxu0
    %v1722 = vpop.f32.mrb[0].mxu0
    %v1723 = vadd.f32 %v302, %v1722
    %v1724 = vpop.f32.mrb[0].mxu0
    %1725 = vmatprep.mubr.bf16.mxu0 0
    %1726 = vmatmul.mubr.bf16.gmra.mrb[0].mxu0 %v1081
    %v1727 = vpop.f32.mrb[0].mxu0
    %v1728 = vadd.f32 %v302, %v1727
    %v1729 = vpop.f32.mrb[0].mxu0
    %v1730 = vpop.f32.mrb[0].mxu0
    %v1731 = vadd.f32 %v302, %v1730
    %v1732 = vpop.f32.mrb[0].mxu0
    %1733 = vmatprep.mubr.bf16.mxu0 0
    %1734 = vmatmul.mubr.bf16.gmra.mrb[0].mxu0 %v1084
    %v1735 = vpop.f32.mrb[0].mxu0
    %v1736 = vadd.f32 %v302, %v1735
    %v1737 = vpop.f32.mrb[0].mxu0
    %v1738 = vpop.f32.mrb[0].mxu0
    %v1739 = vadd.f32 %v302, %v1738
    %v1740 = vpop.f32.mrb[0].mxu0
    %1741 = vmatprep.mubr.bf16.mxu0 0
    %1742 = vmatmul.mubr.bf16.gmra.mrb[0].mxu0 %v1087
    %v1743 = vpop.f32.mrb[0].mxu0
    %v1744 = vadd.f32 %v302, %v1743
    %v1745 = vpop.f32.mrb[0].mxu0
    %v1746 = vpop.f32.mrb[0].mxu0
    %v1747 = vadd.f32 %v302, %v1746
    %v1748 = vpop.f32.mrb[0].mxu0
    %1749 = vmatprep.mubr.bf16.mxu0 0
    %1750 = vmatmul.mubr.bf16.gmra.mrb[0].mxu0 %v1090
    %v1751 = vpop.f32.mrb[0].mxu0
    %v1752 = vadd.f32 %v302, %v1751
    %v1753 = vpop.f32.mrb[0].mxu0
    %v1754 = vpop.f32.mrb[0].mxu0
    %v1755 = vadd.f32 %v302, %v1754
    %v1756 = vpop.f32.mrb[0].mxu0
    %1757 = vmatprep.mubr.bf16.mxu0 0
    %1758 = vmatmul.mubr.bf16.gmra.mrb[0].mxu0 %v1093
    %v1759 = vpop.f32.mrb[0].mxu0
    %v1760 = vadd.f32 %v302, %v1759
    %v1761 = vpop.f32.mrb[0].mxu0
    %v1762 = vpop.f32.mrb[0].mxu0
    %v1763 = vadd.f32 %v302, %v1762
    %v1764 = vpop.f32.mrb[0].mxu0
    %1765 = vmatprep.mubr.bf16.mxu0 0
    %1766 = vmatmul.mubr.bf16.gmra.mrb[0].mxu0 %v1096
    %v1767 = vpop.f32.mrb[0].mxu0
    %v1768 = vadd.f32 %v302, %v1767
    %v1769 = vpop.f32.mrb[0].mxu0
    %v1770 = vpop.f32.mrb[0].mxu0
    %v1771 = vadd.f32 %v302, %v1770
    %v1772 = vpop.f32.mrb[0].mxu0
    %1773 = vmatprep.mubr.bf16.mxu0 0
    %1774 = vmatmul.mubr.bf16.gmra.mrb[0].mxu0 %v1099
    %v1775 = vpop.f32.mrb[0].mxu0
    %v1776 = vadd.f32 %v302, %v1775
    %v1777 = vpop.f32.mrb[0].mxu0
    %v1778 = vpop.f32.mrb[0].mxu0
    %v1779 = vadd.f32 %v302, %v1778
    %v1780 = vpop.f32.mrb[0].mxu0
    %1781 = vmatprep.mubr.bf16.mxu0 0
    %1782 = vmatmul.mubr.bf16.gmra.mrb[0].mxu0 %v1102
    %v1783 = vpop.f32.mrb[0].mxu0
    %v1784 = vadd.f32 %v302, %v1783
    %v1785 = vpop.f32.mrb[0].mxu0
    %v1786 = vpop.f32.mrb[0].mxu0
    %v1787 = vadd.f32 %v302, %v1786
    %v1788 = vpop.f32.mrb[0].mxu0
    %1789 = vmatprep.mubr.bf16.mxu0 0
    %1790 = vmatmul.mubr.bf16.gmra.mrb[0].mxu0 %v1105
    %v1791 = vpop.f32.mrb[0].mxu0
    %v1792 = vadd.f32 %v302, %v1791
    %v1793 = vpop.f32.mrb[0].mxu0
    %v1794 = vpop.f32.mrb[0].mxu0
    %v1795 = vadd.f32 %v302, %v1794
    %v1796 = vpop.f32.mrb[0].mxu0
    %1797 = vmatprep.mubr.bf16.mxu0 0
    %1798 = vmatmul.mubr.bf16.gmra.mrb[0].mxu0 %v1108
    %v1799 = vpop.f32.mrb[0].mxu0
    %v1800 = vadd.f32 %v302, %v1799
    %v1801 = vpop.f32.mrb[0].mxu0
    %v1802 = vpop.f32.mrb[0].mxu0
    %v1803 = vadd.f32 %v302, %v1802
    %v1804 = vpop.f32.mrb[0].mxu0
    %1805 = vmatprep.mubr.bf16.mxu0 0
    %1806 = vmatmul.mubr.bf16.gmra.mrb[0].mxu0 %v1111
    %v1807 = vpop.f32.mrb[0].mxu0
    %v1808 = vadd.f32 %v302, %v1807
    %v1809 = vpop.f32.mrb[0].mxu0
    %v1810 = vpop.f32.mrb[0].mxu0
    %v1811 = vadd.f32 %v302, %v1810
    %v1812 = vpop.f32.mrb[0].mxu0
    %1813 = vmatprep.mubr.bf16.mxu0 0
    %1814 = vmatmul.mubr.bf16.gmra.mrb[0].mxu0 %v1114
    %v1815 = vpop.f32.mrb[0].mxu0
    %v1816 = vadd.f32 %v302, %v1815
    %v1817 = vpop.f32.mrb[0].mxu0
    %v1818 = vpop.f32.mrb[0].mxu0
    %v1819 = vadd.f32 %v302, %v1818
    %v1820 = vpop.f32.mrb[0].mxu0
    %1821 = vmatprep.mubr.bf16.mxu0 0
    %1822 = vmatmul.mubr.bf16.gmra.mrb[0].mxu0 %v1117
    %v1823 = vpop.f32.mrb[0].mxu0
    %v1824 = vadd.f32 %v302, %v1823
    %v1825 = vpop.f32.mrb[0].mxu0
    %v1826 = vpop.f32.mrb[0].mxu0
    %v1827 = vadd.f32 %v302, %v1826
    %v1828 = vpop.f32.mrb[0].mxu0
    %1829 = vmatprep.mubr.bf16.mxu0 0
    %1830 = vmatmul.mubr.bf16.gmra.mrb[0].mxu0 %v1120
    %v1831 = vpop.f32.mrb[0].mxu0
    %v1832 = vadd.f32 %v302, %v1831
    %v1833 = vpop.f32.mrb[0].mxu0
    %v1834 = vpop.f32.mrb[0].mxu0
    %v1835 = vadd.f32 %v302, %v1834
    %v1836 = vpop.f32.mrb[0].mxu0
    %1837 = vmatprep.mubr.bf16.mxu0 0
    %1838 = vmatmul.mubr.bf16.gmra.mrb[0].mxu0 %v1123
    %v1839 = vpop.f32.mrb[0].mxu0
    %v1840 = vadd.f32 %v302, %v1839
    %v1841 = vpop.f32.mrb[0].mxu0
    %v1842 = vpop.f32.mrb[0].mxu0
    %v1843 = vadd.f32 %v302, %v1842
    %v1844 = vpop.f32.mrb[0].mxu0
    %1845 = vmatprep.mubr.bf16.mxu0 0
    %1846 = vmatmul.mubr.bf16.gmra.mrb[0].mxu0 %v1126
    %v1847 = vpop.f32.mrb[0].mxu0
    %v1848 = vadd.f32 %v302, %v1847
    %v1849 = vpop.f32.mrb[0].mxu0
    %v1850 = vpop.f32.mrb[0].mxu0
    %v1851 = vadd.f32 %v302, %v1850
    %v1852 = vpop.f32.mrb[0].mxu0
    %1853 = vmatprep.mubr.bf16.mxu0 0
    %1854 = vmatmul.mubr.bf16.gmra.mrb[0].mxu0 %v1129
    %v1855 = vpop.f32.mrb[0].mxu0
    %v1856 = vadd.f32 %v302, %v1855
    %v1857 = vpop.f32.mrb[0].mxu0
    %v1858 = vpop.f32.mrb[0].mxu0
    %v1859 = vadd.f32 %v302, %v1858
    %v1860 = vpop.f32.mrb[0].mxu0
    %1861 = vmatprep.mubr.bf16.mxu0 0
    %1862 = vmatmul.mubr.bf16.gmra.mrb[0].mxu0 %v1132
    %v1863 = vpop.f32.mrb[0].mxu0
    %v1864 = vadd.f32 %v302, %v1863
    %v1865 = vpop.f32.mrb[0].mxu0
    %v1866 = vpop.f32.mrb[0].mxu0
    %v1867 = vadd.f32 %v302, %v1866
    %v1868 = vpop.f32.mrb[0].mxu0
    %1869 = vmatprep.mubr.bf16.mxu0 0
    %1870 = vmatmul.mubr.bf16.gmra.mrb[0].mxu0 %v1135
    %v1871 = vpop.f32.mrb[0].mxu0
    %v1872 = vadd.f32 %v302, %v1871
    %v1873 = vpop.f32.mrb[0].mxu0
    %v1874 = vpop.f32.mrb[0].mxu0
    %v1875 = vadd.f32 %v302, %v1874
    %v1876 = vpop.f32.mrb[0].mxu0
    %1877 = vmatprep.mubr.bf16.mxu0 0
    %1878 = vmatmul.mubr.bf16.gmra.mrb[0].mxu0 %v1138
    %v1879 = vpop.f32.mrb[0].mxu0
    %v1880 = vadd.f32 %v302, %v1879
    %v1881 = vpop.f32.mrb[0].mxu0
    %v1882 = vpop.f32.mrb[0].mxu0
    %v1883 = vadd.f32 %v302, %v1882
    %v1884 = vpop.f32.mrb[0].mxu0
    %1885 = vmatprep.mubr.bf16.mxu0 0
    %1886 = vmatmul.mubr.bf16.gmra.mrb[0].mxu0 %v1141
    %v1887 = vpop.f32.mrb[0].mxu0
    %v1888 = vadd.f32 %v302, %v1887
    %v1889 = vpop.f32.mrb[0].mxu0
    %v1890 = vpop.f32.mrb[0].mxu0
    %v1891 = vadd.f32 %v302, %v1890
    %v1892 = vpop.f32.mrb[0].mxu0
    %1893 = vmatprep.mubr.bf16.mxu0 0
    %1894 = vmatmul.mubr.bf16.gmra.mrb[0].mxu0 %v1144
    %v1895 = vpop.f32.mrb[0].mxu0
    %v1896 = vadd.f32 %v302, %v1895
    %v1897 = vpop.f32.mrb[0].mxu0
    %v1898 = vpop.f32.mrb[0].mxu0
    %v1899 = vadd.f32 %v302, %v1898
    %v1900 = vpop.f32.mrb[0].mxu0
    %1901 = vmatprep.mubr.bf16.mxu0 0
    %1902 = vmatmul.mubr.bf16.gmra.mrb[0].mxu0 %v1147
    %v1903 = vpop.f32.mrb[0].mxu0
    %v1904 = vadd.f32 %v302, %v1903
    %v1905 = vpop.f32.mrb[0].mxu0
    %v1906 = vpop.f32.mrb[0].mxu0
    %v1907 = vadd.f32 %v302, %v1906
    %v1908 = vpop.f32.mrb[0].mxu0
    %1909 = vmatprep.mubr.bf16.mxu0 0
    %1910 = vmatmul.mubr.bf16.gmra.mrb[0].mxu0 %v1150
    %v1911 = vpop.f32.mrb[0].mxu0
    %v1912 = vadd.f32 %v302, %v1911
    %v1913 = vpop.f32.mrb[0].mxu0
    %v1914 = vpop.f32.mrb[0].mxu0
    %v1915 = vadd.f32 %v302, %v1914
    %v1916 = vpop.f32.mrb[0].mxu0
    %1917 = vmatprep.mubr.bf16.mxu0 0
    %1918 = vmatmul.mubr.bf16.gmra.mrb[0].mxu0 %v1153
    %v1919 = vpop.f32.mrb[0].mxu0
    %v1920 = vadd.f32 %v302, %v1919
    %v1921 = vpop.f32.mrb[0].mxu0
    %v1922 = vpop.f32.mrb[0].mxu0
    %v1923 = vadd.f32 %v302, %v1922
    %v1924 = vpop.f32.mrb[0].mxu0
    %1925 = vmatprep.mubr.bf16.mxu0 0
    %1926 = vmatmul.mubr.bf16.gmra.mrb[0].mxu0 %v1156
    %v1927 = vpop.f32.mrb[0].mxu0
    %v1928 = vadd.f32 %v302, %v1927
    %v1929 = vpop.f32.mrb[0].mxu0
    %v1930 = vpop.f32.mrb[0].mxu0
    %v1931 = vadd.f32 %v302, %v1930
    %v1932 = vpop.f32.mrb[0].mxu0
    %1933 = vmatprep.mubr.bf16.mxu0 0
    %1934 = vmatmul.mubr.bf16.gmra.mrb[0].mxu0 %v1159
    %v1935 = vpop.f32.mrb[0].mxu0
    %v1936 = vadd.f32 %v302, %v1935
    %v1937 = vpop.f32.mrb[0].mxu0
    %v1938 = vpop.f32.mrb[0].mxu0
    %v1939 = vadd.f32 %v302, %v1938
    %v1940 = vpop.f32.mrb[0].mxu0
    %1941 = vmatprep.mubr.bf16.mxu0 0
    %1942 = vmatmul.mubr.bf16.gmra.mrb[0].mxu0 %v1162
    %v1943 = vpop.f32.mrb[0].mxu0
    %v1944 = vadd.f32 %v302, %v1943
    %v1945 = vpop.f32.mrb[0].mxu0
    %v1946 = vpop.f32.mrb[0].mxu0
    %v1947 = vadd.f32 %v302, %v1946
    %v1948 = vpop.f32.mrb[0].mxu0
    %1949 = vmatprep.mubr.bf16.mxu0 0
    %1950 = vmatmul.mubr.bf16.gmra.mrb[0].mxu0 %v1165
    %v1951 = vpop.f32.mrb[0].mxu0
    %v1952 = vadd.f32 %v302, %v1951
    %v1953 = vpop.f32.mrb[0].mxu0
    %v1954 = vpop.f32.mrb[0].mxu0
    %v1955 = vadd.f32 %v302, %v1954
    %v1956 = vpop.f32.mrb[0].mxu0
    %1957 = vmatprep.mubr.bf16.mxu0 0
    %1958 = vmatmul.mubr.bf16.gmra.mrb[0].mxu0 %v1168
    %v1959 = vpop.f32.mrb[0].mxu0
    %v1960 = vadd.f32 %v302, %v1959
    %v1961 = vpop.f32.mrb[0].mxu0
    %v1962 = vpop.f32.mrb[0].mxu0
    %v1963 = vadd.f32 %v302, %v1962
    %v1964 = vpop.f32.mrb[0].mxu0
    %1965 = vmatprep.mubr.bf16.mxu0 0
    %1966 = vmatmul.mubr.bf16.gmra.mrb[0].mxu0 %v1171
    %v1967 = vpop.f32.mrb[0].mxu0
    %v1968 = vadd.f32 %v302, %v1967
    %v1969 = vpop.f32.mrb[0].mxu0
    %v1970 = vpop.f32.mrb[0].mxu0
    %v1971 = vadd.f32 %v302, %v1970
    %v1972 = vpop.f32.mrb[0].mxu0
    %1973 = vmatprep.mubr.bf16.mxu0 0
    %1974 = vmatmul.mubr.bf16.gmra.mrb[0].mxu0 %v1174
    %v1975 = vpop.f32.mrb[0].mxu0
    %v1976 = vadd.f32 %v302, %v1975
    %v1977 = vpop.f32.mrb[0].mxu0
    %v1978 = vpop.f32.mrb[0].mxu0
    %v1979 = vadd.f32 %v302, %v1978
    %v1980 = vpop.f32.mrb[0].mxu0
    %1981 = vmatprep.mubr.bf16.mxu0 0
    %1982 = vmatmul.mubr.bf16.gmra.mrb[0].mxu0 %v1177
    %v1983 = vpop.f32.mrb[0].mxu0
    %v1984 = vadd.f32 %v302, %v1983
    %v1985 = vpop.f32.mrb[0].mxu0
    %v1986 = vpop.f32.mrb[0].mxu0
    %v1987 = vadd.f32 %v302, %v1986
    %v1988 = vpop.f32.mrb[0].mxu0
    %1989 = vmatprep.mubr.bf16.mxu0 0
    %1990 = vmatmul.mubr.bf16.gmra.mrb[0].mxu0 %v1180
    %v1991 = vpop.f32.mrb[0].mxu0
    %v1992 = vadd.f32 %v302, %v1991
    %v1993 = vpop.f32.mrb[0].mxu0
    %v1994 = vpop.f32.mrb[0].mxu0
    %v1995 = vadd.f32 %v302, %v1994
    %v1996 = vpop.f32.mrb[0].mxu0
    %1997 = vmatprep.mubr.bf16.mxu0 0
    %1998 = vmatmul.mubr.bf16.gmra.mrb[0].mxu0 %v1183
    %v1999 = vpop.f32.mrb[0].mxu0
    %v2000 = vadd.f32 %v302, %v1999
    %v2001 = vpop.f32.mrb[0].mxu0
    %v2002 = vpop.f32.mrb[0].mxu0
    %v2003 = vadd.f32 %v302, %v2002
    %v2004 = vpop.f32.mrb[0].mxu0
    %2005 = vmatprep.mubr.bf16.mxu0 0
    %2006 = vmatmul.mubr.bf16.gmra.mrb[0].mxu0 %v1186
    %v2007 = vpop.f32.mrb[0].mxu0
    %v2008 = vadd.f32 %v302, %v2007
    %v2009 = vpop.f32.mrb[0].mxu0
    %v2010 = vpop.f32.mrb[0].mxu0
    %v2011 = vadd.f32 %v302, %v2010
    %v2012 = vpop.f32.mrb[0].mxu0
    %2013 = vmatprep.mubr.bf16.mxu0 0
    %2014 = vmatmul.mubr.bf16.gmra.mrb[0].mxu0 %v1189
    %v2015 = vpop.f32.mrb[0].mxu0
    %v2016 = vadd.f32 %v302, %v2015
    %v2017 = vpop.f32.mrb[0].mxu0
    %v2018 = vpop.f32.mrb[0].mxu0
    %v2019 = vadd.f32 %v302, %v2018
    %v2020 = vpop.f32.mrb[0].mxu0
    %2021 = vmatprep.mubr.bf16.mxu0 0
    %2022 = vmatmul.mubr.bf16.gmra.mrb[0].mxu0 %v1192
    %v2023 = vpop.f32.mrb[0].mxu0
    %v2024 = vadd.f32 %v302, %v2023
    %v2025 = vpop.f32.mrb[0].mxu0
    %v2026 = vpop.f32.mrb[0].mxu0
    %v2027 = vadd.f32 %v302, %v2026
    %v2028 = vpop.f32.mrb[0].mxu0
    %2029 = vmatprep.mubr.bf16.mxu0 0
    %2030 = vmatmul.mubr.bf16.gmra.mrb[0].mxu0 %v1195
    %v2031 = vpop.f32.mrb[0].mxu0
    %v2032 = vadd.f32 %v302, %v2031
    %v2033 = vpop.f32.mrb[0].mxu0
    %v2034 = vpop.f32.mrb[0].mxu0
    %v2035 = vadd.f32 %v302, %v2034
    %v2036 = vpop.f32.mrb[0].mxu0
    %2037 = vmatprep.mubr.bf16.mxu0 0
    %2038 = vmatmul.mubr.bf16.gmra.mrb[0].mxu0 %v1198
    %v2039 = vpop.f32.mrb[0].mxu0
    %v2040 = vadd.f32 %v302, %v2039
    %v2041 = vpop.f32.mrb[0].mxu0
    %v2042 = vpop.f32.mrb[0].mxu0
    %v2043 = vadd.f32 %v302, %v2042
    %v2044 = vpop.f32.mrb[0].mxu0
    %2045 = vmatprep.mubr.bf16.mxu0 0
    %2046 = vmatmul.mubr.bf16.gmra.mrb[0].mxu0 %v1201
    %v2047 = vpop.f32.mrb[0].mxu0
    %v2048 = vadd.f32 %v302, %v2047
    %v2049 = vpop.f32.mrb[0].mxu0
    %v2050 = vpop.f32.mrb[0].mxu0
    %v2051 = vadd.f32 %v302, %v2050
    %v2052 = vpop.f32.mrb[0].mxu0
    %2053 = vmatprep.mubr.bf16.mxu0 0
    %2054 = vmatmul.mubr.bf16.gmra.mrb[0].mxu0 %v1204
    %v2055 = vpop.f32.mrb[0].mxu0
    %v2056 = vadd.f32 %v302, %v2055
    %v2057 = vpop.f32.mrb[0].mxu0
    %v2058 = vpop.f32.mrb[0].mxu0
    %v2059 = vadd.f32 %v302, %v2058
    %v2060 = vpop.f32.mrb[0].mxu0
    %2061 = vmatprep.mubr.bf16.mxu0 0
    %2062 = vmatmul.mubr.bf16.gmra.mrb[0].mxu0 %v1207
    %v2063 = vpop.f32.mrb[0].mxu0
    %v2064 = vadd.f32 %v302, %v2063
    %v2065 = vpop.f32.mrb[0].mxu0
    %v2066 = vpop.f32.mrb[0].mxu0
    %v2067 = vadd.f32 %v302, %v2066
    %v2068 = vpop.f32.mrb[0].mxu0
    %2069 = vmatprep.mubr.bf16.mxu0 0
    %2070 = vmatmul.mubr.bf16.gmra.mrb[0].mxu0 %v1210
    %v2071 = vpop.f32.mrb[0].mxu0
    %v2072 = vadd.f32 %v302, %v2071
    %v2073 = vpop.f32.mrb[0].mxu0
    %v2074 = vpop.f32.mrb[0].mxu0
    %v2075 = vadd.f32 %v302, %v2074
    %v2076 = vpop.f32.mrb[0].mxu0
    %2077 = vmatprep.mubr.bf16.mxu0 0
    %2078 = vmatmul.mubr.bf16.gmra.mrb[0].mxu0 %v1213
    %v2079 = vpop.f32.mrb[0].mxu0
    %v2080 = vadd.f32 %v302, %v2079
    %v2081 = vpop.f32.mrb[0].mxu0
    %v2082 = vpop.f32.mrb[0].mxu0
    %v2083 = vadd.f32 %v302, %v2082
    %v2084 = vpop.f32.mrb[0].mxu0
    %2085 = vmatprep.mubr.bf16.mxu0 0
    %2086 = vmatmul.mubr.bf16.gmra.mrb[0].mxu0 %v1216
    %v2087 = vpop.f32.mrb[0].mxu0
    %v2088 = vadd.f32 %v302, %v2087
    %v2089 = vpop.f32.mrb[0].mxu0
    %v2090 = vpop.f32.mrb[0].mxu0
    %v2091 = vadd.f32 %v302, %v2090
    %v2092 = vpop.f32.mrb[0].mxu0
    %2093 = vmatprep.mubr.bf16.mxu0 0
    %2094 = vmatmul.mubr.bf16.gmra.mrb[0].mxu0 %v1219
    %v2095 = vpop.f32.mrb[0].mxu0
    %v2096 = vadd.f32 %v302, %v2095
    %v2097 = vpop.f32.mrb[0].mxu0
    %v2098 = vpop.f32.mrb[0].mxu0
    %v2099 = vadd.f32 %v302, %v2098
    %v2100 = vpop.f32.mrb[0].mxu0
    %2101 = vmatprep.mubr.bf16.mxu0 0
    %2102 = vmatmul.mubr.bf16.gmra.mrb[0].mxu0 %v1222
    %v2103 = vpop.f32.mrb[0].mxu0
    %v2104 = vadd.f32 %v302, %v2103
    %v2105 = vpop.f32.mrb[0].mxu0
    %v2106 = vpop.f32.mrb[0].mxu0
    %v2107 = vadd.f32 %v302, %v2106
    %v2108 = vpop.f32.mrb[0].mxu0
    %2109 = vmatprep.mubr.bf16.mxu0 0
    %2110 = vmatmul.mubr.bf16.gmra.mrb[0].mxu0 %v1225
    %v2111 = vpop.f32.mrb[0].mxu0
    %v2112 = vadd.f32 %v302, %v2111
    %v2113 = vpop.f32.mrb[0].mxu0
    %v2114 = vpop.f32.mrb[0].mxu0
    %v2115 = vadd.f32 %v302, %v2114
    %v2116 = vpop.f32.mrb[0].mxu0
    %2117 = vmatprep.mubr.bf16.mxu0 0
    %2118 = vmatmul.mubr.bf16.gmra.mrb[0].mxu0 %v1228
    %v2119 = vpop.f32.mrb[0].mxu0
    %v2120 = vadd.f32 %v302, %v2119
    %v2121 = vpop.f32.mrb[0].mxu0
    %v2122 = vpop.f32.mrb[0].mxu0
    %v2123 = vadd.f32 %v302, %v2122
    %v2124 = vpop.f32.mrb[0].mxu0
    %2125 = vmatprep.mubr.bf16.mxu0 0
    %2126 = vmatmul.mubr.bf16.gmra.mrb[0].mxu0 %v1231
    %v2127 = vpop.f32.mrb[0].mxu0
    %v2128 = vadd.f32 %v302, %v2127
    %v2129 = vpop.f32.mrb[0].mxu0
    %v2130 = vpop.f32.mrb[0].mxu0
    %v2131 = vadd.f32 %v302, %v2130
    %v2132 = vpop.f32.mrb[0].mxu0
    %2133 = vmatprep.mubr.bf16.mxu0 0
    %2134 = vmatmul.mubr.bf16.gmra.mrb[0].mxu0 %v1234
    %v2135 = vpop.f32.mrb[0].mxu0
    %v2136 = vadd.f32 %v302, %v2135
    %v2137 = vpop.f32.mrb[0].mxu0
    %v2138 = vpop.f32.mrb[0].mxu0
    %v2139 = vadd.f32 %v302, %v2138
    %v2140 = vpop.f32.mrb[0].mxu0
    %2141 = vmatprep.mubr.bf16.mxu0 0
    %2142 = vmatmul.mubr.bf16.gmra.mrb[0].mxu0 %v1237
    %v2143 = vpop.f32.mrb[0].mxu0
    %v2144 = vadd.f32 %v302, %v2143
    %v2145 = vpop.f32.mrb[0].mxu0
    %v2146 = vpop.f32.mrb[0].mxu0
    %v2147 = vadd.f32 %v302, %v2146
    %v2148 = vpop.f32.mrb[0].mxu0
    %2149 = vmatprep.mubr.bf16.mxu0 0
    %2150 = vmatmul.mubr.bf16.gmra.mrb[0].mxu0 %v1240
    %v2151 = vpop.f32.mrb[0].mxu0
    %v2152 = vadd.f32 %v302, %v2151
    %v2153 = vpop.f32.mrb[0].mxu0
    %v2154 = vpop.f32.mrb[0].mxu0
    %v2155 = vadd.f32 %v302, %v2154
    %v2156 = vpop.f32.mrb[0].mxu0
    %2157 = vmatprep.mubr.bf16.mxu0 0
    %2158 = vmatmul.mubr.bf16.gmra.mrb[0].mxu0 %v1243
    %v2159 = vpop.f32.mrb[0].mxu0
    %v2160 = vadd.f32 %v302, %v2159
    %v2161 = vpop.f32.mrb[0].mxu0
    %v2162 = vpop.f32.mrb[0].mxu0
    %v2163 = vadd.f32 %v302, %v2162
    %v2164 = vpop.f32.mrb[0].mxu0
    %2165 = vmatprep.mubr.bf16.mxu0 0
    %2166 = vmatmul.mubr.bf16.gmra.mrb[0].mxu0 %v1246
    %v2167 = vpop.f32.mrb[0].mxu0
    %v2168 = vadd.f32 %v302, %v2167
    %v2169 = vpop.f32.mrb[0].mxu0
    %v2170 = vpop.f32.mrb[0].mxu0
    %v2171 = vadd.f32 %v302, %v2170
    %v2172 = vpop.f32.mrb[0].mxu0
    %2173 = vmatprep.mubr.bf16.mxu0 0
    %2174 = vmatmul.mubr.bf16.gmra.mrb[0].mxu0 %v1249
    %v2175 = vpop.f32.mrb[0].mxu0
    %v2176 = vadd.f32 %v302, %v2175
    %v2177 = vpop.f32.mrb[0].mxu0
    %v2178 = vpop.f32.mrb[0].mxu0
    %v2179 = vadd.f32 %v302, %v2178
    %v2180 = vpop.f32.mrb[0].mxu0
    %2181 = vmatprep.mubr.bf16.mxu0 0
    %2182 = vmatmul.mubr.bf16.gmra.mrb[0].mxu0 %v1252
    %v2183 = vpop.f32.mrb[0].mxu0
    %v2184 = vadd.f32 %v302, %v2183
    %v2185 = vpop.f32.mrb[0].mxu0
    %v2186 = vpop.f32.mrb[0].mxu0
    %v2187 = vadd.f32 %v302, %v2186
    %v2188 = vpop.f32.mrb[0].mxu0
    %2189 = vmatprep.mubr.bf16.mxu0 0
    %2190 = vmatmul.mubr.bf16.gmra.mrb[0].mxu0 %v1255
    %v2191 = vpop.f32.mrb[0].mxu0
    %v2192 = vadd.f32 %v302, %v2191
    %v2193 = vpop.f32.mrb[0].mxu0
    %v2194 = vpop.f32.mrb[0].mxu0
    %v2195 = vadd.f32 %v302, %v2194
    %v2196 = vpop.f32.mrb[0].mxu0
    %2197 = vmatprep.mubr.bf16.mxu0 0
    %2198 = vmatmul.mubr.bf16.gmra.mrb[0].mxu0 %v1258
    %v2199 = vpop.f32.mrb[0].mxu0
    %v2200 = vadd.f32 %v302, %v2199
    %v2201 = vpop.f32.mrb[0].mxu0
    %v2202 = vpop.f32.mrb[0].mxu0
    %v2203 = vadd.f32 %v302, %v2202
    %v2204 = vpop.f32.mrb[0].mxu0
    %2205 = vmatprep.mubr.bf16.mxu0 0
    %2206 = vmatmul.mubr.bf16.gmra.mrb[0].mxu0 %v1261
    %v2207 = vpop.f32.mrb[0].mxu0
    %v2208 = vadd.f32 %v302, %v2207
    %v2209 = vpop.f32.mrb[0].mxu0
    %v2210 = vpop.f32.mrb[0].mxu0
    %v2211 = vadd.f32 %v302, %v2210
    %v2212 = vpop.f32.mrb[0].mxu0
    %2213 = vmatprep.mubr.bf16.mxu0 0
    %2214 = vmatmul.mubr.bf16.gmra.mrb[0].mxu0 %v1264
    %v2215 = vpop.f32.mrb[0].mxu0
    %v2216 = vadd.f32 %v302, %v2215
    %v2217 = vpop.f32.mrb[0].mxu0
    %v2218 = vpop.f32.mrb[0].mxu0
    %v2219 = vadd.f32 %v302, %v2218
    %v2220 = vpop.f32.mrb[0].mxu0
    %2221 = vmatprep.mubr.bf16.mxu0 0
    %2222 = vmatmul.mubr.bf16.gmra.mrb[0].mxu0 %v1267
    %v2223 = vpop.f32.mrb[0].mxu0
    %v2224 = vadd.f32 %v302, %v2223
    %v2225 = vpop.f32.mrb[0].mxu0
    %v2226 = vpop.f32.mrb[0].mxu0
    %v2227 = vadd.f32 %v302, %v2226
    %v2228 = vpop.f32.mrb[0].mxu0
    %2229 = vmatprep.mubr.bf16.mxu0 0
    %2230 = vmatmul.mubr.bf16.gmra.mrb[0].mxu0 %v1270
    %v2231 = vpop.f32.mrb[0].mxu0
    %v2232 = vadd.f32 %v302, %v2231
    %v2233 = vpop.f32.mrb[0].mxu0
    %v2234 = vpop.f32.mrb[0].mxu0
    %v2235 = vadd.f32 %v302, %v2234
    %v2236 = vpop.f32.mrb[0].mxu0
    %2237 = vmatprep.mubr.bf16.mxu0 0
    %2238 = vmatmul.mubr.bf16.gmra.mrb[0].mxu0 %v1273
    %v2239 = vpop.f32.mrb[0].mxu0
    %v2240 = vadd.f32 %v302, %v2239
    %v2241 = vpop.f32.mrb[0].mxu0
    %v2242 = vpop.f32.mrb[0].mxu0
    %v2243 = vadd.f32 %v302, %v2242
    %v2244 = vpop.f32.mrb[0].mxu0
    %2245 = vmatprep.mubr.bf16.mxu0 0
    %2246 = vmatmul.mubr.bf16.gmra.mrb[0].mxu0 %v1276
    %v2247 = vpop.f32.mrb[0].mxu0
    %v2248 = vadd.f32 %v302, %v2247
    %v2249 = vpop.f32.mrb[0].mxu0
    %v2250 = vpop.f32.mrb[0].mxu0
    %v2251 = vadd.f32 %v302, %v2250
    %v2252 = vpop.f32.mrb[0].mxu0
    %2253 = vmatprep.mubr.bf16.mxu0 0
    %2254 = vmatmul.mubr.bf16.gmra.mrb[0].mxu0 %v1279
    %v2255 = vpop.f32.mrb[0].mxu0
    %v2256 = vadd.f32 %v302, %v2255
    %v2257 = vpop.f32.mrb[0].mxu0
    %v2258 = vpop.f32.mrb[0].mxu0
    %v2259 = vadd.f32 %v302, %v2258
    %v2260 = vpop.f32.mrb[0].mxu0
    %2261 = vmatprep.mubr.bf16.mxu0 0
    %2262 = vmatmul.mubr.bf16.gmra.mrb[0].mxu0 %v1282
    %v2263 = vpop.f32.mrb[0].mxu0
    %v2264 = vadd.f32 %v302, %v2263
    %v2265 = vpop.f32.mrb[0].mxu0
    %v2266 = vpop.f32.mrb[0].mxu0
    %v2267 = vadd.f32 %v302, %v2266
    %v2268 = vpop.f32.mrb[0].mxu0
    %2269 = vmatprep.mubr.bf16.mxu0 0
    %2270 = vmatmul.mubr.bf16.gmra.mrb[0].mxu0 %v1285
    %v2271 = vpop.f32.mrb[0].mxu0
    %v2272 = vadd.f32 %v302, %v2271
    %v2273 = vpop.f32.mrb[0].mxu0
    %v2274 = vpop.f32.mrb[0].mxu0
    %v2275 = vadd.f32 %v302, %v2274
    %v2276 = vpop.f32.mrb[0].mxu0
    %2277 = vmatprep.mubr.bf16.mxu0 0
    %2278 = vmatmul.mubr.bf16.gmra.mrb[0].mxu0 %v1288
    %v2279 = vpop.f32.mrb[0].mxu0
    %v2280 = vadd.f32 %v302, %v2279
    %v2281 = vpop.f32.mrb[0].mxu0
    %v2282 = vpop.f32.mrb[0].mxu0
    %v2283 = vadd.f32 %v302, %v2282
    %v2284 = vpop.f32.mrb[0].mxu0
    %2285 = vmatprep.mubr.bf16.mxu0 0
    %2286 = vmatmul.mubr.bf16.gmra.mrb[0].mxu0 %v1291
    %v2287 = vpop.f32.mrb[0].mxu0
    %v2288 = vadd.f32 %v302, %v2287
    %v2289 = vpop.f32.mrb[0].mxu0
    %v2290 = vpop.f32.mrb[0].mxu0
    %v2291 = vadd.f32 %v302, %v2290
    %v2292 = vpop.f32.mrb[0].mxu0
    %2293 = vmatprep.mubr.bf16.mxu0 0
    %2294 = vmatmul.mubr.bf16.gmra.mrb[0].mxu0 %v1294
    %v2295 = vpop.f32.mrb[0].mxu0
    %v2296 = vadd.f32 %v302, %v2295
    %v2297 = vpop.f32.mrb[0].mxu0
    %v2298 = vpop.f32.mrb[0].mxu0
    %v2299 = vadd.f32 %v302, %v2298
    %v2300 = vpop.f32.mrb[0].mxu0
    %2301 = vmatprep.mubr.bf16.mxu0 0
    %2302 = vmatmul.mubr.bf16.gmra.mrb[0].mxu0 %v1297
    %v2303 = vpop.f32.mrb[0].mxu0
    %v2304 = vadd.f32 %v302, %v2303
    %v2305 = vpop.f32.mrb[0].mxu0
    %v2306 = vpop.f32.mrb[0].mxu0
    %v2307 = vadd.f32 %v302, %v2306
    %v2308 = vpop.f32.mrb[0].mxu0
    %2309 = vmatprep.mubr.bf16.mxu0 0
    %2310 = vmatmul.mubr.bf16.gmra.mrb[0].mxu0 %v1300
    %v2311 = vpop.f32.mrb[0].mxu0
    %v2312 = vadd.f32 %v302, %v2311
    %v2313 = vpop.f32.mrb[0].mxu0
    %v2314 = vpop.f32.mrb[0].mxu0
    %v2315 = vadd.f32 %v302, %v2314
    %v2316 = vpop.f32.mrb[0].mxu0
    %2317 = vmatprep.mubr.bf16.mxu0 0
    %2318 = vmatmul.mubr.bf16.gmra.mrb[0].mxu0 %v1303
    %v2319 = vpop.f32.mrb[0].mxu0
    %v2320 = vadd.f32 %v302, %v2319
    %v2321 = vpop.f32.mrb[0].mxu0
    %v2322 = vpop.f32.mrb[0].mxu0
    %v2323 = vadd.f32 %v302, %v2322
    %v2324 = vpop.f32.mrb[0].mxu0
    %2325 = vmatprep.mubr.bf16.mxu0 0
    %2326 = vmatmul.mubr.bf16.gmra.mrb[0].mxu0 %v1306
    %v2327 = vpop.f32.mrb[0].mxu0
    %v2328 = vadd.f32 %v302, %v2327
    %v2329 = vpop.f32.mrb[0].mxu0
    %v2330 = vpop.f32.mrb[0].mxu0
    %v2331 = vadd.f32 %v302, %v2330
    %v2332 = vpop.f32.mrb[0].mxu0
    %2333 = vmatprep.mubr.bf16.mxu0 0
    %2334 = vmatmul.mubr.bf16.gmra.mrb[0].mxu0 %v1309
    %v2335 = vpop.f32.mrb[0].mxu0
    %v2336 = vadd.f32 %v302, %v2335
    %v2337 = vpop.f32.mrb[0].mxu0
    %v2338 = vpop.f32.mrb[0].mxu0
    %v2339 = vadd.f32 %v302, %v2338
    %v2340 = vpop.f32.mrb[0].mxu0
    %2341 = vmatprep.mubr.bf16.mxu0 0
    %2342 = vmatmul.mubr.bf16.gmra.mrb[0].mxu0 %v1312
    %v2343 = vpop.f32.mrb[0].mxu0
    %v2344 = vadd.f32 %v302, %v2343
    %v2345 = vpop.f32.mrb[0].mxu0
    %v2346 = vpop.f32.mrb[0].mxu0
    %v2347 = vadd.f32 %v302, %v2346
    %v2348 = vpop.f32.mrb[0].mxu0
    %2349 = vmatprep.mubr.bf16.mxu0 0
    %2350 = vmatmul.mubr.bf16.gmra.mrb[0].mxu0 %v1315
    %v2351 = vpop.f32.mrb[0].mxu0
    %v2352 = vadd.f32 %v302, %v2351
    %v2353 = vpop.f32.mrb[0].mxu0
    %v2354 = vpop.f32.mrb[0].mxu0
    %v2355 = vadd.f32 %v302, %v2354
    %v2356 = vpop.f32.mrb[0].mxu0
    %2357 = vmatprep.mubr.bf16.mxu0 0
    %2358 = vmatmul.mubr.bf16.gmra.mrb[0].mxu0 %v1318
    %v2359 = vpop.f32.mrb[0].mxu0
    %v2360 = vadd.f32 %v302, %v2359
    %v2361 = vpop.f32.mrb[0].mxu0
    %v2362 = vpop.f32.mrb[0].mxu0
    %v2363 = vadd.f32 %v302, %v2362
    %v2364 = vpop.f32.mrb[0].mxu0
    %2365 = vmatprep.mubr.bf16.mxu0 0
    %2366 = vmatmul.mubr.bf16.gmra.mrb[0].mxu0 %v1321
    %v2367 = vpop.f32.mrb[0].mxu0
    %v2368 = vadd.f32 %v302, %v2367
    %v2369 = vpop.f32.mrb[0].mxu0
    %v2370 = vpop.f32.mrb[0].mxu0
    %v2371 = vadd.f32 %v302, %v2370
    %v2372 = vpop.f32.mrb[0].mxu0
    %2373 = vmatprep.mubr.bf16.mxu0 0
    %2374 = vmatmul.mubr.bf16.gmra.mrb[0].mxu0 %v1324
    %v2375 = vpop.f32.mrb[0].mxu0
    %v2376 = vadd.f32 %v302, %v2375
    %v2377 = vpop.f32.mrb[0].mxu0
    %v2378 = vpop.f32.mrb[0].mxu0
    %v2379 = vadd.f32 %v302, %v2378
    %v2380 = vpop.f32.mrb[0].mxu0
    %2381 = vmatprep.mubr.bf16.mxu0 0
    %2382 = vmatmul.mubr.bf16.gmra.mrb[0].mxu0 %v1327
    %v2383 = vpop.f32.mrb[0].mxu0
    %v2384 = vadd.f32 %v302, %v2383
    %v2385 = vpop.f32.mrb[0].mxu0
    %v2386 = vpop.f32.mrb[0].mxu0
    %v2387 = vadd.f32 %v302, %v2386
    %v2388 = vpop.f32.mrb[0].mxu0
    %2389 = vdwg.mxu0
    %v2390 = vmax.f32 %v1368, 0.0
    %v2391 = vmax.f32 %v1371, 0.0
    %v2392 = vmax.f32 %v1376, 0.0
    %v2393 = vmax.f32 %v1379, 0.0
    %v2394 = vmax.f32 %v1384, 0.0
    %v2395 = vmax.f32 %v1387, 0.0
    %v2396 = vmax.f32 %v1392, 0.0
    %v2397 = vmax.f32 %v1395, 0.0
    %v2398 = vmax.f32 %v1400, 0.0
    %v2399 = vmax.f32 %v1403, 0.0
    %v2400 = vmax.f32 %v1408, 0.0
    %v2401 = vmax.f32 %v1411, 0.0
    %v2402 = vmax.f32 %v1416, 0.0
    %v2403 = vmax.f32 %v1419, 0.0
    %v2404 = vmax.f32 %v1424, 0.0
    %v2405 = vmax.f32 %v1427, 0.0
    %v2406 = vmax.f32 %v1432, 0.0
    %v2407 = vmax.f32 %v1435, 0.0
    %v2408 = vmax.f32 %v1440, 0.0
    %v2409 = vmax.f32 %v1443, 0.0
    %v2410 = vmax.f32 %v1448, 0.0
    %v2411 = vmax.f32 %v1451, 0.0
    %v2412 = vmax.f32 %v1456, 0.0
    %v2413 = vmax.f32 %v1459, 0.0
    %v2414 = vmax.f32 %v1464, 0.0
    %v2415 = vmax.f32 %v1467, 0.0
    %v2416 = vmax.f32 %v1472, 0.0
    %v2417 = vmax.f32 %v1475, 0.0
    %v2418 = vmax.f32 %v1480, 0.0
    %v2419 = vmax.f32 %v1483, 0.0
    %v2420 = vmax.f32 %v1488, 0.0
    %v2421 = vmax.f32 %v1491, 0.0
    %v2422 = vmax.f32 %v1496, 0.0
    %v2423 = vmax.f32 %v1499, 0.0
    %v2424 = vmax.f32 %v1504, 0.0
    %v2425 = vmax.f32 %v1507, 0.0
    %v2426 = vmax.f32 %v1512, 0.0
    %v2427 = vmax.f32 %v1515, 0.0
    %v2428 = vmax.f32 %v1520, 0.0
    %v2429 = vmax.f32 %v1523, 0.0
    %v2430 = vmax.f32 %v1528, 0.0
    %v2431 = vmax.f32 %v1531, 0.0
    %v2432 = vmax.f32 %v1536, 0.0
    %v2433 = vmax.f32 %v1539, 0.0
    %v2434 = vmax.f32 %v1544, 0.0
    %v2435 = vmax.f32 %v1547, 0.0
    %v2436 = vmax.f32 %v1552, 0.0
    %v2437 = vmax.f32 %v1555, 0.0
    %v2438 = vmax.f32 %v1560, 0.0
    %v2439 = vmax.f32 %v1563, 0.0
    %v2440 = vmax.f32 %v1568, 0.0
    %v2441 = vmax.f32 %v1571, 0.0
    %v2442 = vmax.f32 %v1576, 0.0
    %v2443 = vmax.f32 %v1579, 0.0
    %v2444 = vmax.f32 %v1584, 0.0
    %v2445 = vmax.f32 %v1587, 0.0
    %v2446 = vmax.f32 %v1592, 0.0
    %v2447 = vmax.f32 %v1595, 0.0
    %v2448 = vmax.f32 %v1600, 0.0
    %v2449 = vmax.f32 %v1603, 0.0
    %v2450 = vmax.f32 %v1608, 0.0
    %v2451 = vmax.f32 %v1611, 0.0
    %v2452 = vmax.f32 %v1616, 0.0
    %v2453 = vmax.f32 %v1619, 0.0
    %v2454 = vmax.f32 %v1624, 0.0
    %v2455 = vmax.f32 %v1627, 0.0
    %v2456 = vmax.f32 %v1632, 0.0
    %v2457 = vmax.f32 %v1635, 0.0
    %v2458 = vmax.f32 %v1640, 0.0
    %v2459 = vmax.f32 %v1643, 0.0
    %v2460 = vmax.f32 %v1648, 0.0
    %v2461 = vmax.f32 %v1651, 0.0
    %v2462 = vmax.f32 %v1656, 0.0
    %v2463 = vmax.f32 %v1659, 0.0
    %v2464 = vmax.f32 %v1664, 0.0
    %v2465 = vmax.f32 %v1667, 0.0
    %v2466 = vmax.f32 %v1672, 0.0
    %v2467 = vmax.f32 %v1675, 0.0
    %v2468 = vmax.f32 %v1680, 0.0
    %v2469 = vmax.f32 %v1683, 0.0
    %v2470 = vmax.f32 %v1688, 0.0
    %v2471 = vmax.f32 %v1691, 0.0
    %v2472 = vmax.f32 %v1696, 0.0
    %v2473 = vmax.f32 %v1699, 0.0
    %v2474 = vmax.f32 %v1704, 0.0
    %v2475 = vmax.f32 %v1707, 0.0
    %v2476 = vmax.f32 %v1712, 0.0
    %v2477 = vmax.f32 %v1715, 0.0
    %v2478 = vmax.f32 %v1720, 0.0
    %v2479 = vmax.f32 %v1723, 0.0
    %v2480 = vmax.f32 %v1728, 0.0
    %v2481 = vmax.f32 %v1731, 0.0
    %v2482 = vmax.f32 %v1736, 0.0
    %v2483 = vmax.f32 %v1739, 0.0
    %v2484 = vmax.f32 %v1744, 0.0
    %v2485 = vmax.f32 %v1747, 0.0
    %v2486 = vmax.f32 %v1752, 0.0
    %v2487 = vmax.f32 %v1755, 0.0
    %v2488 = vmax.f32 %v1760, 0.0
    %v2489 = vmax.f32 %v1763, 0.0
    %v2490 = vmax.f32 %v1768, 0.0
    %v2491 = vmax.f32 %v1771, 0.0
    %v2492 = vmax.f32 %v1776, 0.0
    %v2493 = vmax.f32 %v1779, 0.0
    %v2494 = vmax.f32 %v1784, 0.0
    %v2495 = vmax.f32 %v1787, 0.0
    %v2496 = vmax.f32 %v1792, 0.0
    %v2497 = vmax.f32 %v1795, 0.0
    %v2498 = vmax.f32 %v1800, 0.0
    %v2499 = vmax.f32 %v1803, 0.0
    %v2500 = vmax.f32 %v1808, 0.0
    %v2501 = vmax.f32 %v1811, 0.0
    %v2502 = vmax.f32 %v1816, 0.0
    %v2503 = vmax.f32 %v1819, 0.0
    %v2504 = vmax.f32 %v1824, 0.0
    %v2505 = vmax.f32 %v1827, 0.0
    %v2506 = vmax.f32 %v1832, 0.0
    %v2507 = vmax.f32 %v1835, 0.0
    %v2508 = vmax.f32 %v1840, 0.0
    %v2509 = vmax.f32 %v1843, 0.0
    %v2510 = vmax.f32 %v1848, 0.0
    %v2511 = vmax.f32 %v1851, 0.0
    %v2512 = vmax.f32 %v1856, 0.0
    %v2513 = vmax.f32 %v1859, 0.0
    %v2514 = vmax.f32 %v1864, 0.0
    %v2515 = vmax.f32 %v1867, 0.0
    %v2516 = vmax.f32 %v1872, 0.0
    %v2517 = vmax.f32 %v1875, 0.0
    %v2518 = vmax.f32 %v1880, 0.0
    %v2519 = vmax.f32 %v1883, 0.0
    %v2520 = vmax.f32 %v1888, 0.0
    %v2521 = vmax.f32 %v1891, 0.0
    %v2522 = vmax.f32 %v1896, 0.0
    %v2523 = vmax.f32 %v1899, 0.0
    %v2524 = vmax.f32 %v1904, 0.0
    %v2525 = vmax.f32 %v1907, 0.0
    %v2526 = vmax.f32 %v1912, 0.0
    %v2527 = vmax.f32 %v1915, 0.0
    %v2528 = vmax.f32 %v1920, 0.0
    %v2529 = vmax.f32 %v1923, 0.0
    %v2530 = vmax.f32 %v1928, 0.0
    %v2531 = vmax.f32 %v1931, 0.0
    %v2532 = vmax.f32 %v1936, 0.0
    %v2533 = vmax.f32 %v1939, 0.0
    %v2534 = vmax.f32 %v1944, 0.0
    %v2535 = vmax.f32 %v1947, 0.0
    %v2536 = vmax.f32 %v1952, 0.0
    %v2537 = vmax.f32 %v1955, 0.0
    %v2538 = vmax.f32 %v1960, 0.0
    %v2539 = vmax.f32 %v1963, 0.0
    %v2540 = vmax.f32 %v1968, 0.0
    %v2541 = vmax.f32 %v1971, 0.0
    %v2542 = vmax.f32 %v1976, 0.0
    %v2543 = vmax.f32 %v1979, 0.0
    %v2544 = vmax.f32 %v1984, 0.0
    %v2545 = vmax.f32 %v1987, 0.0
    %v2546 = vmax.f32 %v1992, 0.0
    %v2547 = vmax.f32 %v1995, 0.0
    %v2548 = vmax.f32 %v2000, 0.0
    %v2549 = vmax.f32 %v2003, 0.0
    %v2550 = vmax.f32 %v2008, 0.0
    %v2551 = vmax.f32 %v2011, 0.0
    %v2552 = vmax.f32 %v2016, 0.0
    %v2553 = vmax.f32 %v2019, 0.0
    %v2554 = vmax.f32 %v2024, 0.0
    %v2555 = vmax.f32 %v2027, 0.0
    %v2556 = vmax.f32 %v2032, 0.0
    %v2557 = vmax.f32 %v2035, 0.0
    %v2558 = vmax.f32 %v2040, 0.0
    %v2559 = vmax.f32 %v2043, 0.0
    %v2560 = vmax.f32 %v2048, 0.0
    %v2561 = vmax.f32 %v2051, 0.0
    %v2562 = vmax.f32 %v2056, 0.0
    %v2563 = vmax.f32 %v2059, 0.0
    %v2564 = vmax.f32 %v2064, 0.0
    %v2565 = vmax.f32 %v2067, 0.0
    %v2566 = vmax.f32 %v2072, 0.0
    %v2567 = vmax.f32 %v2075, 0.0
    %v2568 = vmax.f32 %v2080, 0.0
    %v2569 = vmax.f32 %v2083, 0.0
    %v2570 = vmax.f32 %v2088, 0.0
    %v2571 = vmax.f32 %v2091, 0.0
    %v2572 = vmax.f32 %v2096, 0.0
    %v2573 = vmax.f32 %v2099, 0.0
    %v2574 = vmax.f32 %v2104, 0.0
    %v2575 = vmax.f32 %v2107, 0.0
    %v2576 = vmax.f32 %v2112, 0.0
    %v2577 = vmax.f32 %v2115, 0.0
    %v2578 = vmax.f32 %v2120, 0.0
    %v2579 = vmax.f32 %v2123, 0.0
    %v2580 = vmax.f32 %v2128, 0.0
    %v2581 = vmax.f32 %v2131, 0.0
    %v2582 = vmax.f32 %v2136, 0.0
    %v2583 = vmax.f32 %v2139, 0.0
    %v2584 = vmax.f32 %v2144, 0.0
    %v2585 = vmax.f32 %v2147, 0.0
    %v2586 = vmax.f32 %v2152, 0.0
    %v2587 = vmax.f32 %v2155, 0.0
    %v2588 = vmax.f32 %v2160, 0.0
    %v2589 = vmax.f32 %v2163, 0.0
    %v2590 = vmax.f32 %v2168, 0.0
    %v2591 = vmax.f32 %v2171, 0.0
    %v2592 = vmax.f32 %v2176, 0.0
    %v2593 = vmax.f32 %v2179, 0.0
    %v2594 = vmax.f32 %v2184, 0.0
    %v2595 = vmax.f32 %v2187, 0.0
    %v2596 = vmax.f32 %v2192, 0.0
    %v2597 = vmax.f32 %v2195, 0.0
    %v2598 = vmax.f32 %v2200, 0.0
    %v2599 = vmax.f32 %v2203, 0.0
    %v2600 = vmax.f32 %v2208, 0.0
    %v2601 = vmax.f32 %v2211, 0.0
    %v2602 = vmax.f32 %v2216, 0.0
    %v2603 = vmax.f32 %v2219, 0.0
    %v2604 = vmax.f32 %v2224, 0.0
    %v2605 = vmax.f32 %v2227, 0.0
    %v2606 = vmax.f32 %v2232, 0.0
    %v2607 = vmax.f32 %v2235, 0.0
    %v2608 = vmax.f32 %v2240, 0.0
    %v2609 = vmax.f32 %v2243, 0.0
    %v2610 = vmax.f32 %v2248, 0.0
    %v2611 = vmax.f32 %v2251, 0.0
    %v2612 = vmax.f32 %v2256, 0.0
    %v2613 = vmax.f32 %v2259, 0.0
    %v2614 = vmax.f32 %v2264, 0.0
    %v2615 = vmax.f32 %v2267, 0.0
    %v2616 = vmax.f32 %v2272, 0.0
    %v2617 = vmax.f32 %v2275, 0.0
    %v2618 = vmax.f32 %v2280, 0.0
    %v2619 = vmax.f32 %v2283, 0.0
    %v2620 = vmax.f32 %v2288, 0.0
    %v2621 = vmax.f32 %v2291, 0.0
    %v2622 = vmax.f32 %v2296, 0.0
    %v2623 = vmax.f32 %v2299, 0.0
    %v2624 = vmax.f32 %v2304, 0.0
    %v2625 = vmax.f32 %v2307, 0.0
    %v2626 = vmax.f32 %v2312, 0.0
    %v2627 = vmax.f32 %v2315, 0.0
    %v2628 = vmax.f32 %v2320, 0.0
    %v2629 = vmax.f32 %v2323, 0.0
    %v2630 = vmax.f32 %v2328, 0.0
    %v2631 = vmax.f32 %v2331, 0.0
    %v2632 = vmax.f32 %v2336, 0.0
    %v2633 = vmax.f32 %v2339, 0.0
    %v2634 = vmax.f32 %v2344, 0.0
    %v2635 = vmax.f32 %v2347, 0.0
    %v2636 = vmax.f32 %v2352, 0.0
    %v2637 = vmax.f32 %v2355, 0.0
    %v2638 = vmax.f32 %v2360, 0.0
    %v2639 = vmax.f32 %v2363, 0.0
    %v2640 = vmax.f32 %v2368, 0.0
    %v2641 = vmax.f32 %v2371, 0.0
    %v2642 = vmax.f32 %v2376, 0.0
    %v2643 = vmax.f32 %v2379, 0.0
    %v2644 = vmax.f32 %v2384, 0.0
    %v2645 = vmax.f32 %v2387, 0.0
    %v2646 = vpack.c.bf16 %v2391, %v2390
    %v2647 = vpack.c.bf16 %v2393, %v2392
    %v2648 = vpack.c.bf16 %v2395, %v2394
    %v2649 = vpack.c.bf16 %v2397, %v2396
    %v2650 = vpack.c.bf16 %v2399, %v2398
    %v2651 = vpack.c.bf16 %v2401, %v2400
    %v2652 = vpack.c.bf16 %v2403, %v2402
    %v2653 = vpack.c.bf16 %v2405, %v2404
    %v2654 = vpack.c.bf16 %v2407, %v2406
    %v2655 = vpack.c.bf16 %v2409, %v2408
    %v2656 = vpack.c.bf16 %v2411, %v2410
    %v2657 = vpack.c.bf16 %v2413, %v2412
    %v2658 = vpack.c.bf16 %v2415, %v2414
    %v2659 = vpack.c.bf16 %v2417, %v2416
    %v2660 = vpack.c.bf16 %v2419, %v2418
    %v2661 = vpack.c.bf16 %v2421, %v2420
    %v2662 = vpack.c.bf16 %v2423, %v2422
    %v2663 = vpack.c.bf16 %v2425, %v2424
    %v2664 = vpack.c.bf16 %v2427, %v2426
    %v2665 = vpack.c.bf16 %v2429, %v2428
    %v2666 = vpack.c.bf16 %v2431, %v2430
    %v2667 = vpack.c.bf16 %v2433, %v2432
    %v2668 = vpack.c.bf16 %v2435, %v2434
    %v2669 = vpack.c.bf16 %v2437, %v2436
    %v2670 = vpack.c.bf16 %v2439, %v2438
    %v2671 = vpack.c.bf16 %v2441, %v2440
    %v2672 = vpack.c.bf16 %v2443, %v2442
    %v2673 = vpack.c.bf16 %v2445, %v2444
    %v2674 = vpack.c.bf16 %v2447, %v2446
    %v2675 = vpack.c.bf16 %v2449, %v2448
    %v2676 = vpack.c.bf16 %v2451, %v2450
    %v2677 = vpack.c.bf16 %v2453, %v2452
    %v2678 = vpack.c.bf16 %v2455, %v2454
    %v2679 = vpack.c.bf16 %v2457, %v2456
    %v2680 = vpack.c.bf16 %v2459, %v2458
    %v2681 = vpack.c.bf16 %v2461, %v2460
    %v2682 = vpack.c.bf16 %v2463, %v2462
    %v2683 = vpack.c.bf16 %v2465, %v2464
    %v2684 = vpack.c.bf16 %v2467, %v2466
    %v2685 = vpack.c.bf16 %v2469, %v2468
    %v2686 = vpack.c.bf16 %v2471, %v2470
    %v2687 = vpack.c.bf16 %v2473, %v2472
    %v2688 = vpack.c.bf16 %v2475, %v2474
    %v2689 = vpack.c.bf16 %v2477, %v2476
    %v2690 = vpack.c.bf16 %v2479, %v2478
    %v2691 = vpack.c.bf16 %v2481, %v2480
    %v2692 = vpack.c.bf16 %v2483, %v2482
    %v2693 = vpack.c.bf16 %v2485, %v2484
    %v2694 = vpack.c.bf16 %v2487, %v2486
    %v2695 = vpack.c.bf16 %v2489, %v2488
    %v2696 = vpack.c.bf16 %v2491, %v2490
    %v2697 = vpack.c.bf16 %v2493, %v2492
    %v2698 = vpack.c.bf16 %v2495, %v2494
    %v2699 = vpack.c.bf16 %v2497, %v2496
    %v2700 = vpack.c.bf16 %v2499, %v2498
    %v2701 = vpack.c.bf16 %v2501, %v2500
    %v2702 = vpack.c.bf16 %v2503, %v2502
    %v2703 = vpack.c.bf16 %v2505, %v2504
    %v2704 = vpack.c.bf16 %v2507, %v2506
    %v2705 = vpack.c.bf16 %v2509, %v2508
    %v2706 = vpack.c.bf16 %v2511, %v2510
    %v2707 = vpack.c.bf16 %v2513, %v2512
    %v2708 = vpack.c.bf16 %v2515, %v2514
    %v2709 = vpack.c.bf16 %v2517, %v2516
    %v2710 = vpack.c.bf16 %v2519, %v2518
    %v2711 = vpack.c.bf16 %v2521, %v2520
    %v2712 = vpack.c.bf16 %v2523, %v2522
    %v2713 = vpack.c.bf16 %v2525, %v2524
    %v2714 = vpack.c.bf16 %v2527, %v2526
    %v2715 = vpack.c.bf16 %v2529, %v2528
    %v2716 = vpack.c.bf16 %v2531, %v2530
    %v2717 = vpack.c.bf16 %v2533, %v2532
    %v2718 = vpack.c.bf16 %v2535, %v2534
    %v2719 = vpack.c.bf16 %v2537, %v2536
    %v2720 = vpack.c.bf16 %v2539, %v2538
    %v2721 = vpack.c.bf16 %v2541, %v2540
    %v2722 = vpack.c.bf16 %v2543, %v2542
    %v2723 = vpack.c.bf16 %v2545, %v2544
    %v2724 = vpack.c.bf16 %v2547, %v2546
    %v2725 = vpack.c.bf16 %v2549, %v2548
    %v2726 = vpack.c.bf16 %v2551, %v2550
    %v2727 = vpack.c.bf16 %v2553, %v2552
    %v2728 = vpack.c.bf16 %v2555, %v2554
    %v2729 = vpack.c.bf16 %v2557, %v2556
    %v2730 = vpack.c.bf16 %v2559, %v2558
    %v2731 = vpack.c.bf16 %v2561, %v2560
    %v2732 = vpack.c.bf16 %v2563, %v2562
    %v2733 = vpack.c.bf16 %v2565, %v2564
    %v2734 = vpack.c.bf16 %v2567, %v2566
    %v2735 = vpack.c.bf16 %v2569, %v2568
    %v2736 = vpack.c.bf16 %v2571, %v2570
    %v2737 = vpack.c.bf16 %v2573, %v2572
    %v2738 = vpack.c.bf16 %v2575, %v2574
    %v2739 = vpack.c.bf16 %v2577, %v2576
    %v2740 = vpack.c.bf16 %v2579, %v2578
    %v2741 = vpack.c.bf16 %v2581, %v2580
    %v2742 = vpack.c.bf16 %v2583, %v2582
    %v2743 = vpack.c.bf16 %v2585, %v2584
    %v2744 = vpack.c.bf16 %v2587, %v2586
    %v2745 = vpack.c.bf16 %v2589, %v2588
    %v2746 = vpack.c.bf16 %v2591, %v2590
    %v2747 = vpack.c.bf16 %v2593, %v2592
    %v2748 = vpack.c.bf16 %v2595, %v2594
    %v2749 = vpack.c.bf16 %v2597, %v2596
    %v2750 = vpack.c.bf16 %v2599, %v2598
    %v2751 = vpack.c.bf16 %v2601, %v2600
    %v2752 = vpack.c.bf16 %v2603, %v2602
    %v2753 = vpack.c.bf16 %v2605, %v2604
    %v2754 = vpack.c.bf16 %v2607, %v2606
    %v2755 = vpack.c.bf16 %v2609, %v2608
    %v2756 = vpack.c.bf16 %v2611, %v2610
    %v2757 = vpack.c.bf16 %v2613, %v2612
    %v2758 = vpack.c.bf16 %v2615, %v2614
    %v2759 = vpack.c.bf16 %v2617, %v2616
    %v2760 = vpack.c.bf16 %v2619, %v2618
    %v2761 = vpack.c.bf16 %v2621, %v2620
    %v2762 = vpack.c.bf16 %v2623, %v2622
    %v2763 = vpack.c.bf16 %v2625, %v2624
    %v2764 = vpack.c.bf16 %v2627, %v2626
    %v2765 = vpack.c.bf16 %v2629, %v2628
    %v2766 = vpack.c.bf16 %v2631, %v2630
    %v2767 = vpack.c.bf16 %v2633, %v2632
    %v2768 = vpack.c.bf16 %v2635, %v2634
    %v2769 = vpack.c.bf16 %v2637, %v2636
    %v2770 = vpack.c.bf16 %v2639, %v2638
    %v2771 = vpack.c.bf16 %v2641, %v2640
    %v2772 = vpack.c.bf16 %v2643, %v2642
    %v2773 = vpack.c.bf16 %v2645, %v2644
    %v2774 = vld [vmem:[%s3] sm:$0xf]
    %v2775 = vld [vmem:[%s3 + $0x4] sm:$0xf]
    %v2776 = vld [vmem:[%s3 + $0x8] sm:$0xf]
    %v2777 = vld [vmem:[%s3 + $0xc] sm:$0xf]
    %v2778 = vld [vmem:[%s3 + $0x10] sm:$0xf]
    %v2779 = vld [vmem:[%s3 + $0x14] sm:$0xf]
    %v2780 = vld [vmem:[%s3 + $0x18] sm:$0xf]
    %v2781 = vld [vmem:[%s3 + $0x1c] sm:$0xf]
    %v2782 = vld [vmem:[%s4] sm:$0x1]
    %v2784 = vlaneseq
    %v2785 = vshrl.u32 %v2784, 7
    %v2786 = vsub.s32 0, %v2785
    %v2787 = vrot.slane %v2782, %v2786
    %v2797 = vunpack.c.l.b16 %v2774
    %v2798 = vunpack.c.l.b16 %v2775
    %v2799 = vunpack.c.l.b16 %v2776
    %v2800 = vunpack.c.l.b16 %v2777
    %v2801 = vunpack.c.l.b16 %v2778
    %v2802 = vunpack.c.l.b16 %v2779
    %v2803 = vunpack.c.l.b16 %v2780
    %v2804 = vunpack.c.l.b16 %v2781
    %v2805 = vpack.c.b16 %v2798, %v2797
    %v2806 = vpack.c.b16 %v2800, %v2799
    %v2807 = vpack.c.b16 %v2802, %v2801
    %v2808 = vpack.c.b16 %v2804, %v2803
    %vm2813 = vcmask 523264
    %v2815 = vsel %vm2813, %v2646, 0
    %v2818 = vsel %vm2813, %v2647, 0
    %v2821 = vsel %vm2813, %v2648, 0
    %v2824 = vsel %vm2813, %v2649, 0
    %v2827 = vsel %vm2813, %v2650, 0
    %v2830 = vsel %vm2813, %v2651, 0
    %v2833 = vsel %vm2813, %v2652, 0
    %v2836 = vsel %vm2813, %v2653, 0
    %v2839 = vsel %vm2813, %v2654, 0
    %v2842 = vsel %vm2813, %v2655, 0
    %v2845 = vsel %vm2813, %v2656, 0
    %v2848 = vsel %vm2813, %v2657, 0
    %v2851 = vsel %vm2813, %v2658, 0
    %v2854 = vsel %vm2813, %v2659, 0
    %v2857 = vsel %vm2813, %v2660, 0
    %v2860 = vsel %vm2813, %v2661, 0
    %v2863 = vsel %vm2813, %v2662, 0
    %v2866 = vsel %vm2813, %v2663, 0
    %v2869 = vsel %vm2813, %v2664, 0
    %v2872 = vsel %vm2813, %v2665, 0
    %v2875 = vsel %vm2813, %v2666, 0
    %v2878 = vsel %vm2813, %v2667, 0
    %v2881 = vsel %vm2813, %v2668, 0
    %v2884 = vsel %vm2813, %v2669, 0
    %v2887 = vsel %vm2813, %v2670, 0
    %v2890 = vsel %vm2813, %v2671, 0
    %v2893 = vsel %vm2813, %v2672, 0
    %v2896 = vsel %vm2813, %v2673, 0
    %v2899 = vsel %vm2813, %v2674, 0
    %v2902 = vsel %vm2813, %v2675, 0
    %v2905 = vsel %vm2813, %v2676, 0
    %v2908 = vsel %vm2813, %v2677, 0
    %v2911 = vsel %vm2813, %v2678, 0
    %v2914 = vsel %vm2813, %v2679, 0
    %v2917 = vsel %vm2813, %v2680, 0
    %v2920 = vsel %vm2813, %v2681, 0
    %v2923 = vsel %vm2813, %v2682, 0
    %v2926 = vsel %vm2813, %v2683, 0
    %v2929 = vsel %vm2813, %v2684, 0
    %v2932 = vsel %vm2813, %v2685, 0
    %v2935 = vsel %vm2813, %v2686, 0
    %v2938 = vsel %vm2813, %v2687, 0
    %v2941 = vsel %vm2813, %v2688, 0
    %v2944 = vsel %vm2813, %v2689, 0
    %v2947 = vsel %vm2813, %v2690, 0
    %v2950 = vsel %vm2813, %v2691, 0
    %v2953 = vsel %vm2813, %v2692, 0
    %v2956 = vsel %vm2813, %v2693, 0
    %v2959 = vsel %vm2813, %v2694, 0
    %v2962 = vsel %vm2813, %v2695, 0
    %v2965 = vsel %vm2813, %v2696, 0
    %v2968 = vsel %vm2813, %v2697, 0
    %v2971 = vsel %vm2813, %v2698, 0
    %v2974 = vsel %vm2813, %v2699, 0
    %v2977 = vsel %vm2813, %v2700, 0
    %v2980 = vsel %vm2813, %v2701, 0
    %v2983 = vsel %vm2813, %v2702, 0
    %v2986 = vsel %vm2813, %v2703, 0
    %v2989 = vsel %vm2813, %v2704, 0
    %v2992 = vsel %vm2813, %v2705, 0
    %v2995 = vsel %vm2813, %v2706, 0
    %v2998 = vsel %vm2813, %v2707, 0
    %v3001 = vsel %vm2813, %v2708, 0
    %v3004 = vsel %vm2813, %v2709, 0
    %v3007 = vsel %vm2813, %v2710, 0
    %v3010 = vsel %vm2813, %v2711, 0
    %v3013 = vsel %vm2813, %v2712, 0
    %v3016 = vsel %vm2813, %v2713, 0
    %v3019 = vsel %vm2813, %v2714, 0
    %v3022 = vsel %vm2813, %v2715, 0
    %v3025 = vsel %vm2813, %v2716, 0
    %v3028 = vsel %vm2813, %v2717, 0
    %v3031 = vsel %vm2813, %v2718, 0
    %v3034 = vsel %vm2813, %v2719, 0
    %v3037 = vsel %vm2813, %v2720, 0
    %v3040 = vsel %vm2813, %v2721, 0
    %v3043 = vsel %vm2813, %v2722, 0
    %v3046 = vsel %vm2813, %v2723, 0
    %v3049 = vsel %vm2813, %v2724, 0
    %v3052 = vsel %vm2813, %v2725, 0
    %v3055 = vsel %vm2813, %v2726, 0
    %v3058 = vsel %vm2813, %v2727, 0
    %v3061 = vsel %vm2813, %v2728, 0
    %v3064 = vsel %vm2813, %v2729, 0
    %v3067 = vsel %vm2813, %v2730, 0
    %v3070 = vsel %vm2813, %v2731, 0
    %v3073 = vsel %vm2813, %v2732, 0
    %v3076 = vsel %vm2813, %v2733, 0
    %v3079 = vsel %vm2813, %v2734, 0
    %v3082 = vsel %vm2813, %v2735, 0
    %v3085 = vsel %vm2813, %v2736, 0
    %v3088 = vsel %vm2813, %v2737, 0
    %v3091 = vsel %vm2813, %v2738, 0
    %v3094 = vsel %vm2813, %v2739, 0
    %v3097 = vsel %vm2813, %v2740, 0
    %v3100 = vsel %vm2813, %v2741, 0
    %v3103 = vsel %vm2813, %v2742, 0
    %v3106 = vsel %vm2813, %v2743, 0
    %v3109 = vsel %vm2813, %v2744, 0
    %v3112 = vsel %vm2813, %v2745, 0
    %v3115 = vsel %vm2813, %v2746, 0
    %v3118 = vsel %vm2813, %v2747, 0
    %v3121 = vsel %vm2813, %v2748, 0
    %v3124 = vsel %vm2813, %v2749, 0
    %v3127 = vsel %vm2813, %v2750, 0
    %v3130 = vsel %vm2813, %v2751, 0
    %v3133 = vsel %vm2813, %v2752, 0
    %v3136 = vsel %vm2813, %v2753, 0
    %v3139 = vsel %vm2813, %v2754, 0
    %v3142 = vsel %vm2813, %v2755, 0
    %v3145 = vsel %vm2813, %v2756, 0
    %v3148 = vsel %vm2813, %v2757, 0
    %v3151 = vsel %vm2813, %v2758, 0
    %v3154 = vsel %vm2813, %v2759, 0
    %v3157 = vsel %vm2813, %v2760, 0
    %v3160 = vsel %vm2813, %v2761, 0
    %v3163 = vsel %vm2813, %v2762, 0
    %v3166 = vsel %vm2813, %v2763, 0
    %v3169 = vsel %vm2813, %v2764, 0
    %v3172 = vsel %vm2813, %v2765, 0
    %v3175 = vsel %vm2813, %v2766, 0
    %v3178 = vsel %vm2813, %v2767, 0
    %v3181 = vsel %vm2813, %v2768, 0
    %v3184 = vsel %vm2813, %v2769, 0
    %v3187 = vsel %vm2813, %v2770, 0
    %v3190 = vsel %vm2813, %v2771, 0
    %v3193 = vsel %vm2813, %v2772, 0
    %v3196 = vsel %vm2813, %v2773, 0
    %3198 = vmatprep.subr.bf16.mxu0 0
    %3199 = vmatpush1.bf16.msra.mxu0 %v2805
    %3200 = vmatprep.subr.bf16.mxu0 0
    %3201 = vmatpush1.bf16.msra.mxu0 %v2806
    %3202 = vmatprep.subr.bf16.mxu0 0
    %3203 = vmatpush1.bf16.msra.mxu0 %v2807
    %3204 = vmatprep.subr.bf16.mxu0 0
    %3205 = vmatpush1.bf16.msra.mxu0 %v2808
    %3206 = vmatprep.subr.bf16.mxu0 0
    %3207 = vmatpush1.bf16.msra.mxu0 0
    %3208 = vmatprep.subr.bf16.mxu0 0
    %3209 = vmatpush1.bf16.msra.mxu0 0
    %3210 = vmatprep.subr.bf16.mxu0 0
    %3211 = vmatpush1.bf16.msra.mxu0 0
    %3212 = vmatprep.subr.bf16.mxu0 0
    %3213 = vmatpush1.bf16.msra.mxu0 0
    %3214 = vmatprep.subr.bf16.mxu0 0
    %3215 = vmatpush1.bf16.msra.mxu0 0
    %3216 = vmatprep.subr.bf16.mxu0 0
    %3217 = vmatpush1.bf16.msra.mxu0 0
    %3218 = vmatprep.subr.bf16.mxu0 0
    %3219 = vmatpush1.bf16.msra.mxu0 0
    %3220 = vmatprep.subr.bf16.mxu0 0
    %3221 = vmatpush1.bf16.msra.mxu0 0
    %3222 = vmatprep.subr.bf16.mxu0 0
    %3223 = vmatpush1.bf16.msra.mxu0 0
    %3224 = vmatprep.subr.bf16.mxu0 0
    %3225 = vmatpush1.bf16.msra.mxu0 0
    %3226 = vmatprep.subr.bf16.mxu0 0
    %3227 = vmatpush1.bf16.msra.mxu0 0
    %3228 = vmatprep.subr.bf16.mxu0 0
    %3229 = vmatpush1.bf16.msra.mxu0 0
    %3230 = vmatprep.mubr.bf16.mxu0 0
    %3231 = vmatmul.mubr.bf16.gmra.mrb[0].mxu0 %v2815
    %v3232 = vpop.f32.mrb[0].mxu0
    %v3233 = vadd.f32 %v2787, %v3232
    %v3234 = vpop.f32.mrb[0].mxu0
    %v3235 = vpop.f32.mrb[0].mxu0
    %v3236 = vadd.f32 %v2787, %v3235
    %v3237 = vpop.f32.mrb[0].mxu0
    %3238 = vmatprep.mubr.bf16.mxu0 0
    %3239 = vmatmul.mubr.bf16.gmra.mrb[0].mxu0 %v2818
    %v3240 = vpop.f32.mrb[0].mxu0
    %v3241 = vadd.f32 %v2787, %v3240
    %v3242 = vpop.f32.mrb[0].mxu0
    %v3243 = vpop.f32.mrb[0].mxu0
    %v3244 = vadd.f32 %v2787, %v3243
    %v3245 = vpop.f32.mrb[0].mxu0
    %3246 = vmatprep.mubr.bf16.mxu0 0
    %3247 = vmatmul.mubr.bf16.gmra.mrb[0].mxu0 %v2821
    %v3248 = vpop.f32.mrb[0].mxu0
    %v3249 = vadd.f32 %v2787, %v3248
    %v3250 = vpop.f32.mrb[0].mxu0
    %v3251 = vpop.f32.mrb[0].mxu0
    %v3252 = vadd.f32 %v2787, %v3251
    %v3253 = vpop.f32.mrb[0].mxu0
    %3254 = vmatprep.mubr.bf16.mxu0 0
    %3255 = vmatmul.mubr.bf16.gmra.mrb[0].mxu0 %v2824
    %v3256 = vpop.f32.mrb[0].mxu0
    %v3257 = vadd.f32 %v2787, %v3256
    %v3258 = vpop.f32.mrb[0].mxu0
    %v3259 = vpop.f32.mrb[0].mxu0
    %v3260 = vadd.f32 %v2787, %v3259
    %v3261 = vpop.f32.mrb[0].mxu0
    %3262 = vmatprep.mubr.bf16.mxu0 0
    %3263 = vmatmul.mubr.bf16.gmra.mrb[0].mxu0 %v2827
    %v3264 = vpop.f32.mrb[0].mxu0
    %v3265 = vadd.f32 %v2787, %v3264
    %v3266 = vpop.f32.mrb[0].mxu0
    %v3267 = vpop.f32.mrb[0].mxu0
    %v3268 = vadd.f32 %v2787, %v3267
    %v3269 = vpop.f32.mrb[0].mxu0
    %3270 = vmatprep.mubr.bf16.mxu0 0
    %3271 = vmatmul.mubr.bf16.gmra.mrb[0].mxu0 %v2830
    %v3272 = vpop.f32.mrb[0].mxu0
    %v3273 = vadd.f32 %v2787, %v3272
    %v3274 = vpop.f32.mrb[0].mxu0
    %v3275 = vpop.f32.mrb[0].mxu0
    %v3276 = vadd.f32 %v2787, %v3275
    %v3277 = vpop.f32.mrb[0].mxu0
    %3278 = vmatprep.mubr.bf16.mxu0 0
    %3279 = vmatmul.mubr.bf16.gmra.mrb[0].mxu0 %v2833
    %v3280 = vpop.f32.mrb[0].mxu0
    %v3281 = vadd.f32 %v2787, %v3280
    %v3282 = vpop.f32.mrb[0].mxu0
    %v3283 = vpop.f32.mrb[0].mxu0
    %v3284 = vadd.f32 %v2787, %v3283
    %v3285 = vpop.f32.mrb[0].mxu0
    %3286 = vmatprep.mubr.bf16.mxu0 0
    %3287 = vmatmul.mubr.bf16.gmra.mrb[0].mxu0 %v2836
    %v3288 = vpop.f32.mrb[0].mxu0
    %v3289 = vadd.f32 %v2787, %v3288
    %v3290 = vpop.f32.mrb[0].mxu0
    %v3291 = vpop.f32.mrb[0].mxu0
    %v3292 = vadd.f32 %v2787, %v3291
    %v3293 = vpop.f32.mrb[0].mxu0
    %3294 = vmatprep.mubr.bf16.mxu0 0
    %3295 = vmatmul.mubr.bf16.gmra.mrb[0].mxu0 %v2839
    %v3296 = vpop.f32.mrb[0].mxu0
    %v3297 = vadd.f32 %v2787, %v3296
    %v3298 = vpop.f32.mrb[0].mxu0
    %v3299 = vpop.f32.mrb[0].mxu0
    %v3300 = vadd.f32 %v2787, %v3299
    %v3301 = vpop.f32.mrb[0].mxu0
    %3302 = vmatprep.mubr.bf16.mxu0 0
    %3303 = vmatmul.mubr.bf16.gmra.mrb[0].mxu0 %v2842
    %v3304 = vpop.f32.mrb[0].mxu0
    %v3305 = vadd.f32 %v2787, %v3304
    %v3306 = vpop.f32.mrb[0].mxu0
    %v3307 = vpop.f32.mrb[0].mxu0
    %v3308 = vadd.f32 %v2787, %v3307
    %v3309 = vpop.f32.mrb[0].mxu0
    %3310 = vmatprep.mubr.bf16.mxu0 0
    %3311 = vmatmul.mubr.bf16.gmra.mrb[0].mxu0 %v2845
    %v3312 = vpop.f32.mrb[0].mxu0
    %v3313 = vadd.f32 %v2787, %v3312
    %v3314 = vpop.f32.mrb[0].mxu0
    %v3315 = vpop.f32.mrb[0].mxu0
    %v3316 = vadd.f32 %v2787, %v3315
    %v3317 = vpop.f32.mrb[0].mxu0
    %3318 = vmatprep.mubr.bf16.mxu0 0
    %3319 = vmatmul.mubr.bf16.gmra.mrb[0].mxu0 %v2848
    %v3320 = vpop.f32.mrb[0].mxu0
    %v3321 = vadd.f32 %v2787, %v3320
    %v3322 = vpop.f32.mrb[0].mxu0
    %v3323 = vpop.f32.mrb[0].mxu0
    %v3324 = vadd.f32 %v2787, %v3323
    %v3325 = vpop.f32.mrb[0].mxu0
    %3326 = vmatprep.mubr.bf16.mxu0 0
    %3327 = vmatmul.mubr.bf16.gmra.mrb[0].mxu0 %v2851
    %v3328 = vpop.f32.mrb[0].mxu0
    %v3329 = vadd.f32 %v2787, %v3328
    %v3330 = vpop.f32.mrb[0].mxu0
    %v3331 = vpop.f32.mrb[0].mxu0
    %v3332 = vadd.f32 %v2787, %v3331
    %v3333 = vpop.f32.mrb[0].mxu0
    %3334 = vmatprep.mubr.bf16.mxu0 0
    %3335 = vmatmul.mubr.bf16.gmra.mrb[0].mxu0 %v2854
    %v3336 = vpop.f32.mrb[0].mxu0
    %v3337 = vadd.f32 %v2787, %v3336
    %v3338 = vpop.f32.mrb[0].mxu0
    %v3339 = vpop.f32.mrb[0].mxu0
    %v3340 = vadd.f32 %v2787, %v3339
    %v3341 = vpop.f32.mrb[0].mxu0
    %3342 = vmatprep.mubr.bf16.mxu0 0
    %3343 = vmatmul.mubr.bf16.gmra.mrb[0].mxu0 %v2857
    %v3344 = vpop.f32.mrb[0].mxu0
    %v3345 = vadd.f32 %v2787, %v3344
    %v3346 = vpop.f32.mrb[0].mxu0
    %v3347 = vpop.f32.mrb[0].mxu0
    %v3348 = vadd.f32 %v2787, %v3347
    %v3349 = vpop.f32.mrb[0].mxu0
    %3350 = vmatprep.mubr.bf16.mxu0 0
    %3351 = vmatmul.mubr.bf16.gmra.mrb[0].mxu0 %v2860
    %v3352 = vpop.f32.mrb[0].mxu0
    %v3353 = vadd.f32 %v2787, %v3352
    %v3354 = vpop.f32.mrb[0].mxu0
    %v3355 = vpop.f32.mrb[0].mxu0
    %v3356 = vadd.f32 %v2787, %v3355
    %v3357 = vpop.f32.mrb[0].mxu0
    %3358 = vmatprep.mubr.bf16.mxu0 0
    %3359 = vmatmul.mubr.bf16.gmra.mrb[0].mxu0 %v2863
    %v3360 = vpop.f32.mrb[0].mxu0
    %v3361 = vadd.f32 %v2787, %v3360
    %v3362 = vpop.f32.mrb[0].mxu0
    %v3363 = vpop.f32.mrb[0].mxu0
    %v3364 = vadd.f32 %v2787, %v3363
    %v3365 = vpop.f32.mrb[0].mxu0
    %3366 = vmatprep.mubr.bf16.mxu0 0
    %3367 = vmatmul.mubr.bf16.gmra.mrb[0].mxu0 %v2866
    %v3368 = vpop.f32.mrb[0].mxu0
    %v3369 = vadd.f32 %v2787, %v3368
    %v3370 = vpop.f32.mrb[0].mxu0
    %v3371 = vpop.f32.mrb[0].mxu0
    %v3372 = vadd.f32 %v2787, %v3371
    %v3373 = vpop.f32.mrb[0].mxu0
    %3374 = vmatprep.mubr.bf16.mxu0 0
    %3375 = vmatmul.mubr.bf16.gmra.mrb[0].mxu0 %v2869
    %v3376 = vpop.f32.mrb[0].mxu0
    %v3377 = vadd.f32 %v2787, %v3376
    %v3378 = vpop.f32.mrb[0].mxu0
    %v3379 = vpop.f32.mrb[0].mxu0
    %v3380 = vadd.f32 %v2787, %v3379
    %v3381 = vpop.f32.mrb[0].mxu0
    %3382 = vmatprep.mubr.bf16.mxu0 0
    %3383 = vmatmul.mubr.bf16.gmra.mrb[0].mxu0 %v2872
    %v3384 = vpop.f32.mrb[0].mxu0
    %v3385 = vadd.f32 %v2787, %v3384
    %v3386 = vpop.f32.mrb[0].mxu0
    %v3387 = vpop.f32.mrb[0].mxu0
    %v3388 = vadd.f32 %v2787, %v3387
    %v3389 = vpop.f32.mrb[0].mxu0
    %3390 = vmatprep.mubr.bf16.mxu0 0
    %3391 = vmatmul.mubr.bf16.gmra.mrb[0].mxu0 %v2875
    %v3392 = vpop.f32.mrb[0].mxu0
    %v3393 = vadd.f32 %v2787, %v3392
    %v3394 = vpop.f32.mrb[0].mxu0
    %v3395 = vpop.f32.mrb[0].mxu0
    %v3396 = vadd.f32 %v2787, %v3395
    %v3397 = vpop.f32.mrb[0].mxu0
    %3398 = vmatprep.mubr.bf16.mxu0 0
    %3399 = vmatmul.mubr.bf16.gmra.mrb[0].mxu0 %v2878
    %v3400 = vpop.f32.mrb[0].mxu0
    %v3401 = vadd.f32 %v2787, %v3400
    %v3402 = vpop.f32.mrb[0].mxu0
    %v3403 = vpop.f32.mrb[0].mxu0
    %v3404 = vadd.f32 %v2787, %v3403
    %v3405 = vpop.f32.mrb[0].mxu0
    %3406 = vmatprep.mubr.bf16.mxu0 0
    %3407 = vmatmul.mubr.bf16.gmra.mrb[0].mxu0 %v2881
    %v3408 = vpop.f32.mrb[0].mxu0
    %v3409 = vadd.f32 %v2787, %v3408
    %v3410 = vpop.f32.mrb[0].mxu0
    %v3411 = vpop.f32.mrb[0].mxu0
    %v3412 = vadd.f32 %v2787, %v3411
    %v3413 = vpop.f32.mrb[0].mxu0
    %3414 = vmatprep.mubr.bf16.mxu0 0
    %3415 = vmatmul.mubr.bf16.gmra.mrb[0].mxu0 %v2884
    %v3416 = vpop.f32.mrb[0].mxu0
    %v3417 = vadd.f32 %v2787, %v3416
    %v3418 = vpop.f32.mrb[0].mxu0
    %v3419 = vpop.f32.mrb[0].mxu0
    %v3420 = vadd.f32 %v2787, %v3419
    %v3421 = vpop.f32.mrb[0].mxu0
    %3422 = vmatprep.mubr.bf16.mxu0 0
    %3423 = vmatmul.mubr.bf16.gmra.mrb[0].mxu0 %v2887
    %v3424 = vpop.f32.mrb[0].mxu0
    %v3425 = vadd.f32 %v2787, %v3424
    %v3426 = vpop.f32.mrb[0].mxu0
    %v3427 = vpop.f32.mrb[0].mxu0
    %v3428 = vadd.f32 %v2787, %v3427
    %v3429 = vpop.f32.mrb[0].mxu0
    %3430 = vmatprep.mubr.bf16.mxu0 0
    %3431 = vmatmul.mubr.bf16.gmra.mrb[0].mxu0 %v2890
    %v3432 = vpop.f32.mrb[0].mxu0
    %v3433 = vadd.f32 %v2787, %v3432
    %v3434 = vpop.f32.mrb[0].mxu0
    %v3435 = vpop.f32.mrb[0].mxu0
    %v3436 = vadd.f32 %v2787, %v3435
    %v3437 = vpop.f32.mrb[0].mxu0
    %3438 = vmatprep.mubr.bf16.mxu0 0
    %3439 = vmatmul.mubr.bf16.gmra.mrb[0].mxu0 %v2893
    %v3440 = vpop.f32.mrb[0].mxu0
    %v3441 = vadd.f32 %v2787, %v3440
    %v3442 = vpop.f32.mrb[0].mxu0
    %v3443 = vpop.f32.mrb[0].mxu0
    %v3444 = vadd.f32 %v2787, %v3443
    %v3445 = vpop.f32.mrb[0].mxu0
    %3446 = vmatprep.mubr.bf16.mxu0 0
    %3447 = vmatmul.mubr.bf16.gmra.mrb[0].mxu0 %v2896
    %v3448 = vpop.f32.mrb[0].mxu0
    %v3449 = vadd.f32 %v2787, %v3448
    %v3450 = vpop.f32.mrb[0].mxu0
    %v3451 = vpop.f32.mrb[0].mxu0
    %v3452 = vadd.f32 %v2787, %v3451
    %v3453 = vpop.f32.mrb[0].mxu0
    %3454 = vmatprep.mubr.bf16.mxu0 0
    %3455 = vmatmul.mubr.bf16.gmra.mrb[0].mxu0 %v2899
    %v3456 = vpop.f32.mrb[0].mxu0
    %v3457 = vadd.f32 %v2787, %v3456
    %v3458 = vpop.f32.mrb[0].mxu0
    %v3459 = vpop.f32.mrb[0].mxu0
    %v3460 = vadd.f32 %v2787, %v3459
    %v3461 = vpop.f32.mrb[0].mxu0
    %3462 = vmatprep.mubr.bf16.mxu0 0
    %3463 = vmatmul.mubr.bf16.gmra.mrb[0].mxu0 %v2902
    %v3464 = vpop.f32.mrb[0].mxu0
    %v3465 = vadd.f32 %v2787, %v3464
    %v3466 = vpop.f32.mrb[0].mxu0
    %v3467 = vpop.f32.mrb[0].mxu0
    %v3468 = vadd.f32 %v2787, %v3467
    %v3469 = vpop.f32.mrb[0].mxu0
    %3470 = vmatprep.mubr.bf16.mxu0 0
    %3471 = vmatmul.mubr.bf16.gmra.mrb[0].mxu0 %v2905
    %v3472 = vpop.f32.mrb[0].mxu0
    %v3473 = vadd.f32 %v2787, %v3472
    %v3474 = vpop.f32.mrb[0].mxu0
    %v3475 = vpop.f32.mrb[0].mxu0
    %v3476 = vadd.f32 %v2787, %v3475
    %v3477 = vpop.f32.mrb[0].mxu0
    %3478 = vmatprep.mubr.bf16.mxu0 0
    %3479 = vmatmul.mubr.bf16.gmra.mrb[0].mxu0 %v2908
    %v3480 = vpop.f32.mrb[0].mxu0
    %v3481 = vadd.f32 %v2787, %v3480
    %v3482 = vpop.f32.mrb[0].mxu0
    %v3483 = vpop.f32.mrb[0].mxu0
    %v3484 = vadd.f32 %v2787, %v3483
    %v3485 = vpop.f32.mrb[0].mxu0
    %3486 = vmatprep.mubr.bf16.mxu0 0
    %3487 = vmatmul.mubr.bf16.gmra.mrb[0].mxu0 %v2911
    %v3488 = vpop.f32.mrb[0].mxu0
    %v3489 = vadd.f32 %v2787, %v3488
    %v3490 = vpop.f32.mrb[0].mxu0
    %v3491 = vpop.f32.mrb[0].mxu0
    %v3492 = vadd.f32 %v2787, %v3491
    %v3493 = vpop.f32.mrb[0].mxu0
    %3494 = vmatprep.mubr.bf16.mxu0 0
    %3495 = vmatmul.mubr.bf16.gmra.mrb[0].mxu0 %v2914
    %v3496 = vpop.f32.mrb[0].mxu0
    %v3497 = vadd.f32 %v2787, %v3496
    %v3498 = vpop.f32.mrb[0].mxu0
    %v3499 = vpop.f32.mrb[0].mxu0
    %v3500 = vadd.f32 %v2787, %v3499
    %v3501 = vpop.f32.mrb[0].mxu0
    %3502 = vmatprep.mubr.bf16.mxu0 0
    %3503 = vmatmul.mubr.bf16.gmra.mrb[0].mxu0 %v2917
    %v3504 = vpop.f32.mrb[0].mxu0
    %v3505 = vadd.f32 %v2787, %v3504
    %v3506 = vpop.f32.mrb[0].mxu0
    %v3507 = vpop.f32.mrb[0].mxu0
    %v3508 = vadd.f32 %v2787, %v3507
    %v3509 = vpop.f32.mrb[0].mxu0
    %3510 = vmatprep.mubr.bf16.mxu0 0
    %3511 = vmatmul.mubr.bf16.gmra.mrb[0].mxu0 %v2920
    %v3512 = vpop.f32.mrb[0].mxu0
    %v3513 = vadd.f32 %v2787, %v3512
    %v3514 = vpop.f32.mrb[0].mxu0
    %v3515 = vpop.f32.mrb[0].mxu0
    %v3516 = vadd.f32 %v2787, %v3515
    %v3517 = vpop.f32.mrb[0].mxu0
    %3518 = vmatprep.mubr.bf16.mxu0 0
    %3519 = vmatmul.mubr.bf16.gmra.mrb[0].mxu0 %v2923
    %v3520 = vpop.f32.mrb[0].mxu0
    %v3521 = vadd.f32 %v2787, %v3520
    %v3522 = vpop.f32.mrb[0].mxu0
    %v3523 = vpop.f32.mrb[0].mxu0
    %v3524 = vadd.f32 %v2787, %v3523
    %v3525 = vpop.f32.mrb[0].mxu0
    %3526 = vmatprep.mubr.bf16.mxu0 0
    %3527 = vmatmul.mubr.bf16.gmra.mrb[0].mxu0 %v2926
    %v3528 = vpop.f32.mrb[0].mxu0
    %v3529 = vadd.f32 %v2787, %v3528
    %v3530 = vpop.f32.mrb[0].mxu0
    %v3531 = vpop.f32.mrb[0].mxu0
    %v3532 = vadd.f32 %v2787, %v3531
    %v3533 = vpop.f32.mrb[0].mxu0
    %3534 = vmatprep.mubr.bf16.mxu0 0
    %3535 = vmatmul.mubr.bf16.gmra.mrb[0].mxu0 %v2929
    %v3536 = vpop.f32.mrb[0].mxu0
    %v3537 = vadd.f32 %v2787, %v3536
    %v3538 = vpop.f32.mrb[0].mxu0
    %v3539 = vpop.f32.mrb[0].mxu0
    %v3540 = vadd.f32 %v2787, %v3539
    %v3541 = vpop.f32.mrb[0].mxu0
    %3542 = vmatprep.mubr.bf16.mxu0 0
    %3543 = vmatmul.mubr.bf16.gmra.mrb[0].mxu0 %v2932
    %v3544 = vpop.f32.mrb[0].mxu0
    %v3545 = vadd.f32 %v2787, %v3544
    %v3546 = vpop.f32.mrb[0].mxu0
    %v3547 = vpop.f32.mrb[0].mxu0
    %v3548 = vadd.f32 %v2787, %v3547
    %v3549 = vpop.f32.mrb[0].mxu0
    %3550 = vmatprep.mubr.bf16.mxu0 0
    %3551 = vmatmul.mubr.bf16.gmra.mrb[0].mxu0 %v2935
    %v3552 = vpop.f32.mrb[0].mxu0
    %v3553 = vadd.f32 %v2787, %v3552
    %v3554 = vpop.f32.mrb[0].mxu0
    %v3555 = vpop.f32.mrb[0].mxu0
    %v3556 = vadd.f32 %v2787, %v3555
    %v3557 = vpop.f32.mrb[0].mxu0
    %3558 = vmatprep.mubr.bf16.mxu0 0
    %3559 = vmatmul.mubr.bf16.gmra.mrb[0].mxu0 %v2938
    %v3560 = vpop.f32.mrb[0].mxu0
    %v3561 = vadd.f32 %v2787, %v3560
    %v3562 = vpop.f32.mrb[0].mxu0
    %v3563 = vpop.f32.mrb[0].mxu0
    %v3564 = vadd.f32 %v2787, %v3563
    %v3565 = vpop.f32.mrb[0].mxu0
    %3566 = vmatprep.mubr.bf16.mxu0 0
    %3567 = vmatmul.mubr.bf16.gmra.mrb[0].mxu0 %v2941
    %v3568 = vpop.f32.mrb[0].mxu0
    %v3569 = vadd.f32 %v2787, %v3568
    %v3570 = vpop.f32.mrb[0].mxu0
    %v3571 = vpop.f32.mrb[0].mxu0
    %v3572 = vadd.f32 %v2787, %v3571
    %v3573 = vpop.f32.mrb[0].mxu0
    %3574 = vmatprep.mubr.bf16.mxu0 0
    %3575 = vmatmul.mubr.bf16.gmra.mrb[0].mxu0 %v2944
    %v3576 = vpop.f32.mrb[0].mxu0
    %v3577 = vadd.f32 %v2787, %v3576
    %v3578 = vpop.f32.mrb[0].mxu0
    %v3579 = vpop.f32.mrb[0].mxu0
    %v3580 = vadd.f32 %v2787, %v3579
    %v3581 = vpop.f32.mrb[0].mxu0
    %3582 = vmatprep.mubr.bf16.mxu0 0
    %3583 = vmatmul.mubr.bf16.gmra.mrb[0].mxu0 %v2947
    %v3584 = vpop.f32.mrb[0].mxu0
    %v3585 = vadd.f32 %v2787, %v3584
    %v3586 = vpop.f32.mrb[0].mxu0
    %v3587 = vpop.f32.mrb[0].mxu0
    %v3588 = vadd.f32 %v2787, %v3587
    %v3589 = vpop.f32.mrb[0].mxu0
    %3590 = vmatprep.mubr.bf16.mxu0 0
    %3591 = vmatmul.mubr.bf16.gmra.mrb[0].mxu0 %v2950
    %v3592 = vpop.f32.mrb[0].mxu0
    %v3593 = vadd.f32 %v2787, %v3592
    %v3594 = vpop.f32.mrb[0].mxu0
    %v3595 = vpop.f32.mrb[0].mxu0
    %v3596 = vadd.f32 %v2787, %v3595
    %v3597 = vpop.f32.mrb[0].mxu0
    %3598 = vmatprep.mubr.bf16.mxu0 0
    %3599 = vmatmul.mubr.bf16.gmra.mrb[0].mxu0 %v2953
    %v3600 = vpop.f32.mrb[0].mxu0
    %v3601 = vadd.f32 %v2787, %v3600
    %v3602 = vpop.f32.mrb[0].mxu0
    %v3603 = vpop.f32.mrb[0].mxu0
    %v3604 = vadd.f32 %v2787, %v3603
    %v3605 = vpop.f32.mrb[0].mxu0
    %3606 = vmatprep.mubr.bf16.mxu0 0
    %3607 = vmatmul.mubr.bf16.gmra.mrb[0].mxu0 %v2956
    %v3608 = vpop.f32.mrb[0].mxu0
    %v3609 = vadd.f32 %v2787, %v3608
    %v3610 = vpop.f32.mrb[0].mxu0
    %v3611 = vpop.f32.mrb[0].mxu0
    %v3612 = vadd.f32 %v2787, %v3611
    %v3613 = vpop.f32.mrb[0].mxu0
    %3614 = vmatprep.mubr.bf16.mxu0 0
    %3615 = vmatmul.mubr.bf16.gmra.mrb[0].mxu0 %v2959
    %v3616 = vpop.f32.mrb[0].mxu0
    %v3617 = vadd.f32 %v2787, %v3616
    %v3618 = vpop.f32.mrb[0].mxu0
    %v3619 = vpop.f32.mrb[0].mxu0
    %v3620 = vadd.f32 %v2787, %v3619
    %v3621 = vpop.f32.mrb[0].mxu0
    %3622 = vmatprep.mubr.bf16.mxu0 0
    %3623 = vmatmul.mubr.bf16.gmra.mrb[0].mxu0 %v2962
    %v3624 = vpop.f32.mrb[0].mxu0
    %v3625 = vadd.f32 %v2787, %v3624
    %v3626 = vpop.f32.mrb[0].mxu0
    %v3627 = vpop.f32.mrb[0].mxu0
    %v3628 = vadd.f32 %v2787, %v3627
    %v3629 = vpop.f32.mrb[0].mxu0
    %3630 = vmatprep.mubr.bf16.mxu0 0
    %3631 = vmatmul.mubr.bf16.gmra.mrb[0].mxu0 %v2965
    %v3632 = vpop.f32.mrb[0].mxu0
    %v3633 = vadd.f32 %v2787, %v3632
    %v3634 = vpop.f32.mrb[0].mxu0
    %v3635 = vpop.f32.mrb[0].mxu0
    %v3636 = vadd.f32 %v2787, %v3635
    %v3637 = vpop.f32.mrb[0].mxu0
    %3638 = vmatprep.mubr.bf16.mxu0 0
    %3639 = vmatmul.mubr.bf16.gmra.mrb[0].mxu0 %v2968
    %v3640 = vpop.f32.mrb[0].mxu0
    %v3641 = vadd.f32 %v2787, %v3640
    %v3642 = vpop.f32.mrb[0].mxu0
    %v3643 = vpop.f32.mrb[0].mxu0
    %v3644 = vadd.f32 %v2787, %v3643
    %v3645 = vpop.f32.mrb[0].mxu0
    %3646 = vmatprep.mubr.bf16.mxu0 0
    %3647 = vmatmul.mubr.bf16.gmra.mrb[0].mxu0 %v2971
    %v3648 = vpop.f32.mrb[0].mxu0
    %v3649 = vadd.f32 %v2787, %v3648
    %v3650 = vpop.f32.mrb[0].mxu0
    %v3651 = vpop.f32.mrb[0].mxu0
    %v3652 = vadd.f32 %v2787, %v3651
    %v3653 = vpop.f32.mrb[0].mxu0
    %3654 = vmatprep.mubr.bf16.mxu0 0
    %3655 = vmatmul.mubr.bf16.gmra.mrb[0].mxu0 %v2974
    %v3656 = vpop.f32.mrb[0].mxu0
    %v3657 = vadd.f32 %v2787, %v3656
    %v3658 = vpop.f32.mrb[0].mxu0
    %v3659 = vpop.f32.mrb[0].mxu0
    %v3660 = vadd.f32 %v2787, %v3659
    %v3661 = vpop.f32.mrb[0].mxu0
    %3662 = vmatprep.mubr.bf16.mxu0 0
    %3663 = vmatmul.mubr.bf16.gmra.mrb[0].mxu0 %v2977
    %v3664 = vpop.f32.mrb[0].mxu0
    %v3665 = vadd.f32 %v2787, %v3664
    %v3666 = vpop.f32.mrb[0].mxu0
    %v3667 = vpop.f32.mrb[0].mxu0
    %v3668 = vadd.f32 %v2787, %v3667
    %v3669 = vpop.f32.mrb[0].mxu0
    %3670 = vmatprep.mubr.bf16.mxu0 0
    %3671 = vmatmul.mubr.bf16.gmra.mrb[0].mxu0 %v2980
    %v3672 = vpop.f32.mrb[0].mxu0
    %v3673 = vadd.f32 %v2787, %v3672
    %v3674 = vpop.f32.mrb[0].mxu0
    %v3675 = vpop.f32.mrb[0].mxu0
    %v3676 = vadd.f32 %v2787, %v3675
    %v3677 = vpop.f32.mrb[0].mxu0
    %3678 = vmatprep.mubr.bf16.mxu0 0
    %3679 = vmatmul.mubr.bf16.gmra.mrb[0].mxu0 %v2983
    %v3680 = vpop.f32.mrb[0].mxu0
    %v3681 = vadd.f32 %v2787, %v3680
    %v3682 = vpop.f32.mrb[0].mxu0
    %v3683 = vpop.f32.mrb[0].mxu0
    %v3684 = vadd.f32 %v2787, %v3683
    %v3685 = vpop.f32.mrb[0].mxu0
    %3686 = vmatprep.mubr.bf16.mxu0 0
    %3687 = vmatmul.mubr.bf16.gmra.mrb[0].mxu0 %v2986
    %v3688 = vpop.f32.mrb[0].mxu0
    %v3689 = vadd.f32 %v2787, %v3688
    %v3690 = vpop.f32.mrb[0].mxu0
    %v3691 = vpop.f32.mrb[0].mxu0
    %v3692 = vadd.f32 %v2787, %v3691
    %v3693 = vpop.f32.mrb[0].mxu0
    %3694 = vmatprep.mubr.bf16.mxu0 0
    %3695 = vmatmul.mubr.bf16.gmra.mrb[0].mxu0 %v2989
    %v3696 = vpop.f32.mrb[0].mxu0
    %v3697 = vadd.f32 %v2787, %v3696
    %v3698 = vpop.f32.mrb[0].mxu0
    %v3699 = vpop.f32.mrb[0].mxu0
    %v3700 = vadd.f32 %v2787, %v3699
    %v3701 = vpop.f32.mrb[0].mxu0
    %3702 = vmatprep.mubr.bf16.mxu0 0
    %3703 = vmatmul.mubr.bf16.gmra.mrb[0].mxu0 %v2992
    %v3704 = vpop.f32.mrb[0].mxu0
    %v3705 = vadd.f32 %v2787, %v3704
    %v3706 = vpop.f32.mrb[0].mxu0
    %v3707 = vpop.f32.mrb[0].mxu0
    %v3708 = vadd.f32 %v2787, %v3707
    %v3709 = vpop.f32.mrb[0].mxu0
    %3710 = vmatprep.mubr.bf16.mxu0 0
    %3711 = vmatmul.mubr.bf16.gmra.mrb[0].mxu0 %v2995
    %v3712 = vpop.f32.mrb[0].mxu0
    %v3713 = vadd.f32 %v2787, %v3712
    %v3714 = vpop.f32.mrb[0].mxu0
    %v3715 = vpop.f32.mrb[0].mxu0
    %v3716 = vadd.f32 %v2787, %v3715
    %v3717 = vpop.f32.mrb[0].mxu0
    %3718 = vmatprep.mubr.bf16.mxu0 0
    %3719 = vmatmul.mubr.bf16.gmra.mrb[0].mxu0 %v2998
    %v3720 = vpop.f32.mrb[0].mxu0
    %v3721 = vadd.f32 %v2787, %v3720
    %v3722 = vpop.f32.mrb[0].mxu0
    %v3723 = vpop.f32.mrb[0].mxu0
    %v3724 = vadd.f32 %v2787, %v3723
    %v3725 = vpop.f32.mrb[0].mxu0
    %3726 = vmatprep.mubr.bf16.mxu0 0
    %3727 = vmatmul.mubr.bf16.gmra.mrb[0].mxu0 %v3001
    %v3728 = vpop.f32.mrb[0].mxu0
    %v3729 = vadd.f32 %v2787, %v3728
    %v3730 = vpop.f32.mrb[0].mxu0
    %v3731 = vpop.f32.mrb[0].mxu0
    %v3732 = vadd.f32 %v2787, %v3731
    %v3733 = vpop.f32.mrb[0].mxu0
    %3734 = vmatprep.mubr.bf16.mxu0 0
    %3735 = vmatmul.mubr.bf16.gmra.mrb[0].mxu0 %v3004
    %v3736 = vpop.f32.mrb[0].mxu0
    %v3737 = vadd.f32 %v2787, %v3736
    %v3738 = vpop.f32.mrb[0].mxu0
    %v3739 = vpop.f32.mrb[0].mxu0
    %v3740 = vadd.f32 %v2787, %v3739
    %v3741 = vpop.f32.mrb[0].mxu0
    %3742 = vmatprep.mubr.bf16.mxu0 0
    %3743 = vmatmul.mubr.bf16.gmra.mrb[0].mxu0 %v3007
    %v3744 = vpop.f32.mrb[0].mxu0
    %v3745 = vadd.f32 %v2787, %v3744
    %v3746 = vpop.f32.mrb[0].mxu0
    %v3747 = vpop.f32.mrb[0].mxu0
    %v3748 = vadd.f32 %v2787, %v3747
    %v3749 = vpop.f32.mrb[0].mxu0
    %3750 = vmatprep.mubr.bf16.mxu0 0
    %3751 = vmatmul.mubr.bf16.gmra.mrb[0].mxu0 %v3010
    %v3752 = vpop.f32.mrb[0].mxu0
    %v3753 = vadd.f32 %v2787, %v3752
    %v3754 = vpop.f32.mrb[0].mxu0
    %v3755 = vpop.f32.mrb[0].mxu0
    %v3756 = vadd.f32 %v2787, %v3755
    %v3757 = vpop.f32.mrb[0].mxu0
    %3758 = vmatprep.mubr.bf16.mxu0 0
    %3759 = vmatmul.mubr.bf16.gmra.mrb[0].mxu0 %v3013
    %v3760 = vpop.f32.mrb[0].mxu0
    %v3761 = vadd.f32 %v2787, %v3760
    %v3762 = vpop.f32.mrb[0].mxu0
    %v3763 = vpop.f32.mrb[0].mxu0
    %v3764 = vadd.f32 %v2787, %v3763
    %v3765 = vpop.f32.mrb[0].mxu0
    %3766 = vmatprep.mubr.bf16.mxu0 0
    %3767 = vmatmul.mubr.bf16.gmra.mrb[0].mxu0 %v3016
    %v3768 = vpop.f32.mrb[0].mxu0
    %v3769 = vadd.f32 %v2787, %v3768
    %v3770 = vpop.f32.mrb[0].mxu0
    %v3771 = vpop.f32.mrb[0].mxu0
    %v3772 = vadd.f32 %v2787, %v3771
    %v3773 = vpop.f32.mrb[0].mxu0
    %3774 = vmatprep.mubr.bf16.mxu0 0
    %3775 = vmatmul.mubr.bf16.gmra.mrb[0].mxu0 %v3019
    %v3776 = vpop.f32.mrb[0].mxu0
    %v3777 = vadd.f32 %v2787, %v3776
    %v3778 = vpop.f32.mrb[0].mxu0
    %v3779 = vpop.f32.mrb[0].mxu0
    %v3780 = vadd.f32 %v2787, %v3779
    %v3781 = vpop.f32.mrb[0].mxu0
    %3782 = vmatprep.mubr.bf16.mxu0 0
    %3783 = vmatmul.mubr.bf16.gmra.mrb[0].mxu0 %v3022
    %v3784 = vpop.f32.mrb[0].mxu0
    %v3785 = vadd.f32 %v2787, %v3784
    %v3786 = vpop.f32.mrb[0].mxu0
    %v3787 = vpop.f32.mrb[0].mxu0
    %v3788 = vadd.f32 %v2787, %v3787
    %v3789 = vpop.f32.mrb[0].mxu0
    %3790 = vmatprep.mubr.bf16.mxu0 0
    %3791 = vmatmul.mubr.bf16.gmra.mrb[0].mxu0 %v3025
    %v3792 = vpop.f32.mrb[0].mxu0
    %v3793 = vadd.f32 %v2787, %v3792
    %v3794 = vpop.f32.mrb[0].mxu0
    %v3795 = vpop.f32.mrb[0].mxu0
    %v3796 = vadd.f32 %v2787, %v3795
    %v3797 = vpop.f32.mrb[0].mxu0
    %3798 = vmatprep.mubr.bf16.mxu0 0
    %3799 = vmatmul.mubr.bf16.gmra.mrb[0].mxu0 %v3028
    %v3800 = vpop.f32.mrb[0].mxu0
    %v3801 = vadd.f32 %v2787, %v3800
    %v3802 = vpop.f32.mrb[0].mxu0
    %v3803 = vpop.f32.mrb[0].mxu0
    %v3804 = vadd.f32 %v2787, %v3803
    %v3805 = vpop.f32.mrb[0].mxu0
    %3806 = vmatprep.mubr.bf16.mxu0 0
    %3807 = vmatmul.mubr.bf16.gmra.mrb[0].mxu0 %v3031
    %v3808 = vpop.f32.mrb[0].mxu0
    %v3809 = vadd.f32 %v2787, %v3808
    %v3810 = vpop.f32.mrb[0].mxu0
    %v3811 = vpop.f32.mrb[0].mxu0
    %v3812 = vadd.f32 %v2787, %v3811
    %v3813 = vpop.f32.mrb[0].mxu0
    %3814 = vmatprep.mubr.bf16.mxu0 0
    %3815 = vmatmul.mubr.bf16.gmra.mrb[0].mxu0 %v3034
    %v3816 = vpop.f32.mrb[0].mxu0
    %v3817 = vadd.f32 %v2787, %v3816
    %v3818 = vpop.f32.mrb[0].mxu0
    %v3819 = vpop.f32.mrb[0].mxu0
    %v3820 = vadd.f32 %v2787, %v3819
    %v3821 = vpop.f32.mrb[0].mxu0
    %3822 = vmatprep.mubr.bf16.mxu0 0
    %3823 = vmatmul.mubr.bf16.gmra.mrb[0].mxu0 %v3037
    %v3824 = vpop.f32.mrb[0].mxu0
    %v3825 = vadd.f32 %v2787, %v3824
    %v3826 = vpop.f32.mrb[0].mxu0
    %v3827 = vpop.f32.mrb[0].mxu0
    %v3828 = vadd.f32 %v2787, %v3827
    %v3829 = vpop.f32.mrb[0].mxu0
    %3830 = vmatprep.mubr.bf16.mxu0 0
    %3831 = vmatmul.mubr.bf16.gmra.mrb[0].mxu0 %v3040
    %v3832 = vpop.f32.mrb[0].mxu0
    %v3833 = vadd.f32 %v2787, %v3832
    %v3834 = vpop.f32.mrb[0].mxu0
    %v3835 = vpop.f32.mrb[0].mxu0
    %v3836 = vadd.f32 %v2787, %v3835
    %v3837 = vpop.f32.mrb[0].mxu0
    %3838 = vmatprep.mubr.bf16.mxu0 0
    %3839 = vmatmul.mubr.bf16.gmra.mrb[0].mxu0 %v3043
    %v3840 = vpop.f32.mrb[0].mxu0
    %v3841 = vadd.f32 %v2787, %v3840
    %v3842 = vpop.f32.mrb[0].mxu0
    %v3843 = vpop.f32.mrb[0].mxu0
    %v3844 = vadd.f32 %v2787, %v3843
    %v3845 = vpop.f32.mrb[0].mxu0
    %3846 = vmatprep.mubr.bf16.mxu0 0
    %3847 = vmatmul.mubr.bf16.gmra.mrb[0].mxu0 %v3046
    %v3848 = vpop.f32.mrb[0].mxu0
    %v3849 = vadd.f32 %v2787, %v3848
    %v3850 = vpop.f32.mrb[0].mxu0
    %v3851 = vpop.f32.mrb[0].mxu0
    %v3852 = vadd.f32 %v2787, %v3851
    %v3853 = vpop.f32.mrb[0].mxu0
    %3854 = vmatprep.mubr.bf16.mxu0 0
    %3855 = vmatmul.mubr.bf16.gmra.mrb[0].mxu0 %v3049
    %v3856 = vpop.f32.mrb[0].mxu0
    %v3857 = vadd.f32 %v2787, %v3856
    %v3858 = vpop.f32.mrb[0].mxu0
    %v3859 = vpop.f32.mrb[0].mxu0
    %v3860 = vadd.f32 %v2787, %v3859
    %v3861 = vpop.f32.mrb[0].mxu0
    %3862 = vmatprep.mubr.bf16.mxu0 0
    %3863 = vmatmul.mubr.bf16.gmra.mrb[0].mxu0 %v3052
    %v3864 = vpop.f32.mrb[0].mxu0
    %v3865 = vadd.f32 %v2787, %v3864
    %v3866 = vpop.f32.mrb[0].mxu0
    %v3867 = vpop.f32.mrb[0].mxu0
    %v3868 = vadd.f32 %v2787, %v3867
    %v3869 = vpop.f32.mrb[0].mxu0
    %3870 = vmatprep.mubr.bf16.mxu0 0
    %3871 = vmatmul.mubr.bf16.gmra.mrb[0].mxu0 %v3055
    %v3872 = vpop.f32.mrb[0].mxu0
    %v3873 = vadd.f32 %v2787, %v3872
    %v3874 = vpop.f32.mrb[0].mxu0
    %v3875 = vpop.f32.mrb[0].mxu0
    %v3876 = vadd.f32 %v2787, %v3875
    %v3877 = vpop.f32.mrb[0].mxu0
    %3878 = vmatprep.mubr.bf16.mxu0 0
    %3879 = vmatmul.mubr.bf16.gmra.mrb[0].mxu0 %v3058
    %v3880 = vpop.f32.mrb[0].mxu0
    %v3881 = vadd.f32 %v2787, %v3880
    %v3882 = vpop.f32.mrb[0].mxu0
    %v3883 = vpop.f32.mrb[0].mxu0
    %v3884 = vadd.f32 %v2787, %v3883
    %v3885 = vpop.f32.mrb[0].mxu0
    %3886 = vmatprep.mubr.bf16.mxu0 0
    %3887 = vmatmul.mubr.bf16.gmra.mrb[0].mxu0 %v3061
    %v3888 = vpop.f32.mrb[0].mxu0
    %v3889 = vadd.f32 %v2787, %v3888
    %v3890 = vpop.f32.mrb[0].mxu0
    %v3891 = vpop.f32.mrb[0].mxu0
    %v3892 = vadd.f32 %v2787, %v3891
    %v3893 = vpop.f32.mrb[0].mxu0
    %3894 = vmatprep.mubr.bf16.mxu0 0
    %3895 = vmatmul.mubr.bf16.gmra.mrb[0].mxu0 %v3064
    %v3896 = vpop.f32.mrb[0].mxu0
    %v3897 = vadd.f32 %v2787, %v3896
    %v3898 = vpop.f32.mrb[0].mxu0
    %v3899 = vpop.f32.mrb[0].mxu0
    %v3900 = vadd.f32 %v2787, %v3899
    %v3901 = vpop.f32.mrb[0].mxu0
    %3902 = vmatprep.mubr.bf16.mxu0 0
    %3903 = vmatmul.mubr.bf16.gmra.mrb[0].mxu0 %v3067
    %v3904 = vpop.f32.mrb[0].mxu0
    %v3905 = vadd.f32 %v2787, %v3904
    %v3906 = vpop.f32.mrb[0].mxu0
    %v3907 = vpop.f32.mrb[0].mxu0
    %v3908 = vadd.f32 %v2787, %v3907
    %v3909 = vpop.f32.mrb[0].mxu0
    %3910 = vmatprep.mubr.bf16.mxu0 0
    %3911 = vmatmul.mubr.bf16.gmra.mrb[0].mxu0 %v3070
    %v3912 = vpop.f32.mrb[0].mxu0
    %v3913 = vadd.f32 %v2787, %v3912
    %v3914 = vpop.f32.mrb[0].mxu0
    %v3915 = vpop.f32.mrb[0].mxu0
    %v3916 = vadd.f32 %v2787, %v3915
    %v3917 = vpop.f32.mrb[0].mxu0
    %3918 = vmatprep.mubr.bf16.mxu0 0
    %3919 = vmatmul.mubr.bf16.gmra.mrb[0].mxu0 %v3073
    %v3920 = vpop.f32.mrb[0].mxu0
    %v3921 = vadd.f32 %v2787, %v3920
    %v3922 = vpop.f32.mrb[0].mxu0
    %v3923 = vpop.f32.mrb[0].mxu0
    %v3924 = vadd.f32 %v2787, %v3923
    %v3925 = vpop.f32.mrb[0].mxu0
    %3926 = vmatprep.mubr.bf16.mxu0 0
    %3927 = vmatmul.mubr.bf16.gmra.mrb[0].mxu0 %v3076
    %v3928 = vpop.f32.mrb[0].mxu0
    %v3929 = vadd.f32 %v2787, %v3928
    %v3930 = vpop.f32.mrb[0].mxu0
    %v3931 = vpop.f32.mrb[0].mxu0
    %v3932 = vadd.f32 %v2787, %v3931
    %v3933 = vpop.f32.mrb[0].mxu0
    %3934 = vmatprep.mubr.bf16.mxu0 0
    %3935 = vmatmul.mubr.bf16.gmra.mrb[0].mxu0 %v3079
    %v3936 = vpop.f32.mrb[0].mxu0
    %v3937 = vadd.f32 %v2787, %v3936
    %v3938 = vpop.f32.mrb[0].mxu0
    %v3939 = vpop.f32.mrb[0].mxu0
    %v3940 = vadd.f32 %v2787, %v3939
    %v3941 = vpop.f32.mrb[0].mxu0
    %3942 = vmatprep.mubr.bf16.mxu0 0
    %3943 = vmatmul.mubr.bf16.gmra.mrb[0].mxu0 %v3082
    %v3944 = vpop.f32.mrb[0].mxu0
    %v3945 = vadd.f32 %v2787, %v3944
    %v3946 = vpop.f32.mrb[0].mxu0
    %v3947 = vpop.f32.mrb[0].mxu0
    %v3948 = vadd.f32 %v2787, %v3947
    %v3949 = vpop.f32.mrb[0].mxu0
    %3950 = vmatprep.mubr.bf16.mxu0 0
    %3951 = vmatmul.mubr.bf16.gmra.mrb[0].mxu0 %v3085
    %v3952 = vpop.f32.mrb[0].mxu0
    %v3953 = vadd.f32 %v2787, %v3952
    %v3954 = vpop.f32.mrb[0].mxu0
    %v3955 = vpop.f32.mrb[0].mxu0
    %v3956 = vadd.f32 %v2787, %v3955
    %v3957 = vpop.f32.mrb[0].mxu0
    %3958 = vmatprep.mubr.bf16.mxu0 0
    %3959 = vmatmul.mubr.bf16.gmra.mrb[0].mxu0 %v3088
    %v3960 = vpop.f32.mrb[0].mxu0
    %v3961 = vadd.f32 %v2787, %v3960
    %v3962 = vpop.f32.mrb[0].mxu0
    %v3963 = vpop.f32.mrb[0].mxu0
    %v3964 = vadd.f32 %v2787, %v3963
    %v3965 = vpop.f32.mrb[0].mxu0
    %3966 = vmatprep.mubr.bf16.mxu0 0
    %3967 = vmatmul.mubr.bf16.gmra.mrb[0].mxu0 %v3091
    %v3968 = vpop.f32.mrb[0].mxu0
    %v3969 = vadd.f32 %v2787, %v3968
    %v3970 = vpop.f32.mrb[0].mxu0
    %v3971 = vpop.f32.mrb[0].mxu0
    %v3972 = vadd.f32 %v2787, %v3971
    %v3973 = vpop.f32.mrb[0].mxu0
    %3974 = vmatprep.mubr.bf16.mxu0 0
    %3975 = vmatmul.mubr.bf16.gmra.mrb[0].mxu0 %v3094
    %v3976 = vpop.f32.mrb[0].mxu0
    %v3977 = vadd.f32 %v2787, %v3976
    %v3978 = vpop.f32.mrb[0].mxu0
    %v3979 = vpop.f32.mrb[0].mxu0
    %v3980 = vadd.f32 %v2787, %v3979
    %v3981 = vpop.f32.mrb[0].mxu0
    %3982 = vmatprep.mubr.bf16.mxu0 0
    %3983 = vmatmul.mubr.bf16.gmra.mrb[0].mxu0 %v3097
    %v3984 = vpop.f32.mrb[0].mxu0
    %v3985 = vadd.f32 %v2787, %v3984
    %v3986 = vpop.f32.mrb[0].mxu0
    %v3987 = vpop.f32.mrb[0].mxu0
    %v3988 = vadd.f32 %v2787, %v3987
    %v3989 = vpop.f32.mrb[0].mxu0
    %3990 = vmatprep.mubr.bf16.mxu0 0
    %3991 = vmatmul.mubr.bf16.gmra.mrb[0].mxu0 %v3100
    %v3992 = vpop.f32.mrb[0].mxu0
    %v3993 = vadd.f32 %v2787, %v3992
    %v3994 = vpop.f32.mrb[0].mxu0
    %v3995 = vpop.f32.mrb[0].mxu0
    %v3996 = vadd.f32 %v2787, %v3995
    %v3997 = vpop.f32.mrb[0].mxu0
    %3998 = vmatprep.mubr.bf16.mxu0 0
    %3999 = vmatmul.mubr.bf16.gmra.mrb[0].mxu0 %v3103
    %v4000 = vpop.f32.mrb[0].mxu0
    %v4001 = vadd.f32 %v2787, %v4000
    %v4002 = vpop.f32.mrb[0].mxu0
    %v4003 = vpop.f32.mrb[0].mxu0
    %v4004 = vadd.f32 %v2787, %v4003
    %v4005 = vpop.f32.mrb[0].mxu0
    %4006 = vmatprep.mubr.bf16.mxu0 0
    %4007 = vmatmul.mubr.bf16.gmra.mrb[0].mxu0 %v3106
    %v4008 = vpop.f32.mrb[0].mxu0
    %v4009 = vadd.f32 %v2787, %v4008
    %v4010 = vpop.f32.mrb[0].mxu0
    %v4011 = vpop.f32.mrb[0].mxu0
    %v4012 = vadd.f32 %v2787, %v4011
    %v4013 = vpop.f32.mrb[0].mxu0
    %4014 = vmatprep.mubr.bf16.mxu0 0
    %4015 = vmatmul.mubr.bf16.gmra.mrb[0].mxu0 %v3109
    %v4016 = vpop.f32.mrb[0].mxu0
    %v4017 = vadd.f32 %v2787, %v4016
    %v4018 = vpop.f32.mrb[0].mxu0
    %v4019 = vpop.f32.mrb[0].mxu0
    %v4020 = vadd.f32 %v2787, %v4019
    %v4021 = vpop.f32.mrb[0].mxu0
    %4022 = vmatprep.mubr.bf16.mxu0 0
    %4023 = vmatmul.mubr.bf16.gmra.mrb[0].mxu0 %v3112
    %v4024 = vpop.f32.mrb[0].mxu0
    %v4025 = vadd.f32 %v2787, %v4024
    %v4026 = vpop.f32.mrb[0].mxu0
    %v4027 = vpop.f32.mrb[0].mxu0
    %v4028 = vadd.f32 %v2787, %v4027
    %v4029 = vpop.f32.mrb[0].mxu0
    %4030 = vmatprep.mubr.bf16.mxu0 0
    %4031 = vmatmul.mubr.bf16.gmra.mrb[0].mxu0 %v3115
    %v4032 = vpop.f32.mrb[0].mxu0
    %v4033 = vadd.f32 %v2787, %v4032
    %v4034 = vpop.f32.mrb[0].mxu0
    %v4035 = vpop.f32.mrb[0].mxu0
    %v4036 = vadd.f32 %v2787, %v4035
    %v4037 = vpop.f32.mrb[0].mxu0
    %4038 = vmatprep.mubr.bf16.mxu0 0
    %4039 = vmatmul.mubr.bf16.gmra.mrb[0].mxu0 %v3118
    %v4040 = vpop.f32.mrb[0].mxu0
    %v4041 = vadd.f32 %v2787, %v4040
    %v4042 = vpop.f32.mrb[0].mxu0
    %v4043 = vpop.f32.mrb[0].mxu0
    %v4044 = vadd.f32 %v2787, %v4043
    %v4045 = vpop.f32.mrb[0].mxu0
    %4046 = vmatprep.mubr.bf16.mxu0 0
    %4047 = vmatmul.mubr.bf16.gmra.mrb[0].mxu0 %v3121
    %v4048 = vpop.f32.mrb[0].mxu0
    %v4049 = vadd.f32 %v2787, %v4048
    %v4050 = vpop.f32.mrb[0].mxu0
    %v4051 = vpop.f32.mrb[0].mxu0
    %v4052 = vadd.f32 %v2787, %v4051
    %v4053 = vpop.f32.mrb[0].mxu0
    %4054 = vmatprep.mubr.bf16.mxu0 0
    %4055 = vmatmul.mubr.bf16.gmra.mrb[0].mxu0 %v3124
    %v4056 = vpop.f32.mrb[0].mxu0
    %v4057 = vadd.f32 %v2787, %v4056
    %v4058 = vpop.f32.mrb[0].mxu0
    %v4059 = vpop.f32.mrb[0].mxu0
    %v4060 = vadd.f32 %v2787, %v4059
    %v4061 = vpop.f32.mrb[0].mxu0
    %4062 = vmatprep.mubr.bf16.mxu0 0
    %4063 = vmatmul.mubr.bf16.gmra.mrb[0].mxu0 %v3127
    %v4064 = vpop.f32.mrb[0].mxu0
    %v4065 = vadd.f32 %v2787, %v4064
    %v4066 = vpop.f32.mrb[0].mxu0
    %v4067 = vpop.f32.mrb[0].mxu0
    %v4068 = vadd.f32 %v2787, %v4067
    %v4069 = vpop.f32.mrb[0].mxu0
    %4070 = vmatprep.mubr.bf16.mxu0 0
    %4071 = vmatmul.mubr.bf16.gmra.mrb[0].mxu0 %v3130
    %v4072 = vpop.f32.mrb[0].mxu0
    %v4073 = vadd.f32 %v2787, %v4072
    %v4074 = vpop.f32.mrb[0].mxu0
    %v4075 = vpop.f32.mrb[0].mxu0
    %v4076 = vadd.f32 %v2787, %v4075
    %v4077 = vpop.f32.mrb[0].mxu0
    %4078 = vmatprep.mubr.bf16.mxu0 0
    %4079 = vmatmul.mubr.bf16.gmra.mrb[0].mxu0 %v3133
    %v4080 = vpop.f32.mrb[0].mxu0
    %v4081 = vadd.f32 %v2787, %v4080
    %v4082 = vpop.f32.mrb[0].mxu0
    %v4083 = vpop.f32.mrb[0].mxu0
    %v4084 = vadd.f32 %v2787, %v4083
    %v4085 = vpop.f32.mrb[0].mxu0
    %4086 = vmatprep.mubr.bf16.mxu0 0
    %4087 = vmatmul.mubr.bf16.gmra.mrb[0].mxu0 %v3136
    %v4088 = vpop.f32.mrb[0].mxu0
    %v4089 = vadd.f32 %v2787, %v4088
    %v4090 = vpop.f32.mrb[0].mxu0
    %v4091 = vpop.f32.mrb[0].mxu0
    %v4092 = vadd.f32 %v2787, %v4091
    %v4093 = vpop.f32.mrb[0].mxu0
    %4094 = vmatprep.mubr.bf16.mxu0 0
    %4095 = vmatmul.mubr.bf16.gmra.mrb[0].mxu0 %v3139
    %v4096 = vpop.f32.mrb[0].mxu0
    %v4097 = vadd.f32 %v2787, %v4096
    %v4098 = vpop.f32.mrb[0].mxu0
    %v4099 = vpop.f32.mrb[0].mxu0
    %v4100 = vadd.f32 %v2787, %v4099
    %v4101 = vpop.f32.mrb[0].mxu0
    %4102 = vmatprep.mubr.bf16.mxu0 0
    %4103 = vmatmul.mubr.bf16.gmra.mrb[0].mxu0 %v3142
    %v4104 = vpop.f32.mrb[0].mxu0
    %v4105 = vadd.f32 %v2787, %v4104
    %v4106 = vpop.f32.mrb[0].mxu0
    %v4107 = vpop.f32.mrb[0].mxu0
    %v4108 = vadd.f32 %v2787, %v4107
    %v4109 = vpop.f32.mrb[0].mxu0
    %4110 = vmatprep.mubr.bf16.mxu0 0
    %4111 = vmatmul.mubr.bf16.gmra.mrb[0].mxu0 %v3145
    %v4112 = vpop.f32.mrb[0].mxu0
    %v4113 = vadd.f32 %v2787, %v4112
    %v4114 = vpop.f32.mrb[0].mxu0
    %v4115 = vpop.f32.mrb[0].mxu0
    %v4116 = vadd.f32 %v2787, %v4115
    %v4117 = vpop.f32.mrb[0].mxu0
    %4118 = vmatprep.mubr.bf16.mxu0 0
    %4119 = vmatmul.mubr.bf16.gmra.mrb[0].mxu0 %v3148
    %v4120 = vpop.f32.mrb[0].mxu0
    %v4121 = vadd.f32 %v2787, %v4120
    %v4122 = vpop.f32.mrb[0].mxu0
    %v4123 = vpop.f32.mrb[0].mxu0
    %v4124 = vadd.f32 %v2787, %v4123
    %v4125 = vpop.f32.mrb[0].mxu0
    %4126 = vmatprep.mubr.bf16.mxu0 0
    %4127 = vmatmul.mubr.bf16.gmra.mrb[0].mxu0 %v3151
    %v4128 = vpop.f32.mrb[0].mxu0
    %v4129 = vadd.f32 %v2787, %v4128
    %v4130 = vpop.f32.mrb[0].mxu0
    %v4131 = vpop.f32.mrb[0].mxu0
    %v4132 = vadd.f32 %v2787, %v4131
    %v4133 = vpop.f32.mrb[0].mxu0
    %4134 = vmatprep.mubr.bf16.mxu0 0
    %4135 = vmatmul.mubr.bf16.gmra.mrb[0].mxu0 %v3154
    %v4136 = vpop.f32.mrb[0].mxu0
    %v4137 = vadd.f32 %v2787, %v4136
    %v4138 = vpop.f32.mrb[0].mxu0
    %v4139 = vpop.f32.mrb[0].mxu0
    %v4140 = vadd.f32 %v2787, %v4139
    %v4141 = vpop.f32.mrb[0].mxu0
    %4142 = vmatprep.mubr.bf16.mxu0 0
    %4143 = vmatmul.mubr.bf16.gmra.mrb[0].mxu0 %v3157
    %v4144 = vpop.f32.mrb[0].mxu0
    %v4145 = vadd.f32 %v2787, %v4144
    %v4146 = vpop.f32.mrb[0].mxu0
    %v4147 = vpop.f32.mrb[0].mxu0
    %v4148 = vadd.f32 %v2787, %v4147
    %v4149 = vpop.f32.mrb[0].mxu0
    %4150 = vmatprep.mubr.bf16.mxu0 0
    %4151 = vmatmul.mubr.bf16.gmra.mrb[0].mxu0 %v3160
    %v4152 = vpop.f32.mrb[0].mxu0
    %v4153 = vadd.f32 %v2787, %v4152
    %v4154 = vpop.f32.mrb[0].mxu0
    %v4155 = vpop.f32.mrb[0].mxu0
    %v4156 = vadd.f32 %v2787, %v4155
    %v4157 = vpop.f32.mrb[0].mxu0
    %4158 = vmatprep.mubr.bf16.mxu0 0
    %4159 = vmatmul.mubr.bf16.gmra.mrb[0].mxu0 %v3163
    %v4160 = vpop.f32.mrb[0].mxu0
    %v4161 = vadd.f32 %v2787, %v4160
    %v4162 = vpop.f32.mrb[0].mxu0
    %v4163 = vpop.f32.mrb[0].mxu0
    %v4164 = vadd.f32 %v2787, %v4163
    %v4165 = vpop.f32.mrb[0].mxu0
    %4166 = vmatprep.mubr.bf16.mxu0 0
    %4167 = vmatmul.mubr.bf16.gmra.mrb[0].mxu0 %v3166
    %v4168 = vpop.f32.mrb[0].mxu0
    %v4169 = vadd.f32 %v2787, %v4168
    %v4170 = vpop.f32.mrb[0].mxu0
    %v4171 = vpop.f32.mrb[0].mxu0
    %v4172 = vadd.f32 %v2787, %v4171
    %v4173 = vpop.f32.mrb[0].mxu0
    %4174 = vmatprep.mubr.bf16.mxu0 0
    %4175 = vmatmul.mubr.bf16.gmra.mrb[0].mxu0 %v3169
    %v4176 = vpop.f32.mrb[0].mxu0
    %v4177 = vadd.f32 %v2787, %v4176
    %v4178 = vpop.f32.mrb[0].mxu0
    %v4179 = vpop.f32.mrb[0].mxu0
    %v4180 = vadd.f32 %v2787, %v4179
    %v4181 = vpop.f32.mrb[0].mxu0
    %4182 = vmatprep.mubr.bf16.mxu0 0
    %4183 = vmatmul.mubr.bf16.gmra.mrb[0].mxu0 %v3172
    %v4184 = vpop.f32.mrb[0].mxu0
    %v4185 = vadd.f32 %v2787, %v4184
    %v4186 = vpop.f32.mrb[0].mxu0
    %v4187 = vpop.f32.mrb[0].mxu0
    %v4188 = vadd.f32 %v2787, %v4187
    %v4189 = vpop.f32.mrb[0].mxu0
    %4190 = vmatprep.mubr.bf16.mxu0 0
    %4191 = vmatmul.mubr.bf16.gmra.mrb[0].mxu0 %v3175
    %v4192 = vpop.f32.mrb[0].mxu0
    %v4193 = vadd.f32 %v2787, %v4192
    %v4194 = vpop.f32.mrb[0].mxu0
    %v4195 = vpop.f32.mrb[0].mxu0
    %v4196 = vadd.f32 %v2787, %v4195
    %v4197 = vpop.f32.mrb[0].mxu0
    %4198 = vmatprep.mubr.bf16.mxu0 0
    %4199 = vmatmul.mubr.bf16.gmra.mrb[0].mxu0 %v3178
    %v4200 = vpop.f32.mrb[0].mxu0
    %v4201 = vadd.f32 %v2787, %v4200
    %v4202 = vpop.f32.mrb[0].mxu0
    %v4203 = vpop.f32.mrb[0].mxu0
    %v4204 = vadd.f32 %v2787, %v4203
    %v4205 = vpop.f32.mrb[0].mxu0
    %4206 = vmatprep.mubr.bf16.mxu0 0
    %4207 = vmatmul.mubr.bf16.gmra.mrb[0].mxu0 %v3181
    %v4208 = vpop.f32.mrb[0].mxu0
    %v4209 = vadd.f32 %v2787, %v4208
    %v4210 = vpop.f32.mrb[0].mxu0
    %v4211 = vpop.f32.mrb[0].mxu0
    %v4212 = vadd.f32 %v2787, %v4211
    %v4213 = vpop.f32.mrb[0].mxu0
    %4214 = vmatprep.mubr.bf16.mxu0 0
    %4215 = vmatmul.mubr.bf16.gmra.mrb[0].mxu0 %v3184
    %v4216 = vpop.f32.mrb[0].mxu0
    %v4217 = vadd.f32 %v2787, %v4216
    %v4218 = vpop.f32.mrb[0].mxu0
    %v4219 = vpop.f32.mrb[0].mxu0
    %v4220 = vadd.f32 %v2787, %v4219
    %v4221 = vpop.f32.mrb[0].mxu0
    %4222 = vmatprep.mubr.bf16.mxu0 0
    %4223 = vmatmul.mubr.bf16.gmra.mrb[0].mxu0 %v3187
    %v4224 = vpop.f32.mrb[0].mxu0
    %v4225 = vadd.f32 %v2787, %v4224
    %v4226 = vpop.f32.mrb[0].mxu0
    %v4227 = vpop.f32.mrb[0].mxu0
    %v4228 = vadd.f32 %v2787, %v4227
    %v4229 = vpop.f32.mrb[0].mxu0
    %4230 = vmatprep.mubr.bf16.mxu0 0
    %4231 = vmatmul.mubr.bf16.gmra.mrb[0].mxu0 %v3190
    %v4232 = vpop.f32.mrb[0].mxu0
    %v4233 = vadd.f32 %v2787, %v4232
    %v4234 = vpop.f32.mrb[0].mxu0
    %v4235 = vpop.f32.mrb[0].mxu0
    %v4236 = vadd.f32 %v2787, %v4235
    %v4237 = vpop.f32.mrb[0].mxu0
    %4238 = vmatprep.mubr.bf16.mxu0 0
    %4239 = vmatmul.mubr.bf16.gmra.mrb[0].mxu0 %v3193
    %v4240 = vpop.f32.mrb[0].mxu0
    %v4241 = vadd.f32 %v2787, %v4240
    %v4242 = vpop.f32.mrb[0].mxu0
    %v4243 = vpop.f32.mrb[0].mxu0
    %v4244 = vadd.f32 %v2787, %v4243
    %v4245 = vpop.f32.mrb[0].mxu0
    %4246 = vmatprep.mubr.bf16.mxu0 0
    %4247 = vmatmul.mubr.bf16.gmra.mrb[0].mxu0 %v3196
    %v4248 = vpop.f32.mrb[0].mxu0
    %v4249 = vadd.f32 %v2787, %v4248
    %v4250 = vpop.f32.mrb[0].mxu0
    %v4251 = vpop.f32.mrb[0].mxu0
    %v4252 = vadd.f32 %v2787, %v4251
    %v4253 = vpop.f32.mrb[0].mxu0
    %4254 = vdwg.mxu0
    %v4255 = vmax.f32 %v3233, 0.0
    %v4256 = vmax.f32 %v3236, 0.0
    %v4257 = vmax.f32 %v3241, 0.0
    %v4258 = vmax.f32 %v3244, 0.0
    %v4259 = vmax.f32 %v3249, 0.0
    %v4260 = vmax.f32 %v3252, 0.0
    %v4261 = vmax.f32 %v3257, 0.0
    %v4262 = vmax.f32 %v3260, 0.0
    %v4263 = vmax.f32 %v3265, 0.0
    %v4264 = vmax.f32 %v3268, 0.0
    %v4265 = vmax.f32 %v3273, 0.0
    %v4266 = vmax.f32 %v3276, 0.0
    %v4267 = vmax.f32 %v3281, 0.0
    %v4268 = vmax.f32 %v3284, 0.0
    %v4269 = vmax.f32 %v3289, 0.0
    %v4270 = vmax.f32 %v3292, 0.0
    %v4271 = vmax.f32 %v3297, 0.0
    %v4272 = vmax.f32 %v3300, 0.0
    %v4273 = vmax.f32 %v3305, 0.0
    %v4274 = vmax.f32 %v3308, 0.0
    %v4275 = vmax.f32 %v3313, 0.0
    %v4276 = vmax.f32 %v3316, 0.0
    %v4277 = vmax.f32 %v3321, 0.0
    %v4278 = vmax.f32 %v3324, 0.0
    %v4279 = vmax.f32 %v3329, 0.0
    %v4280 = vmax.f32 %v3332, 0.0
    %v4281 = vmax.f32 %v3337, 0.0
    %v4282 = vmax.f32 %v3340, 0.0
    %v4283 = vmax.f32 %v3345, 0.0
    %v4284 = vmax.f32 %v3348, 0.0
    %v4285 = vmax.f32 %v3353, 0.0
    %v4286 = vmax.f32 %v3356, 0.0
    %v4287 = vmax.f32 %v3361, 0.0
    %v4288 = vmax.f32 %v3364, 0.0
    %v4289 = vmax.f32 %v3369, 0.0
    %v4290 = vmax.f32 %v3372, 0.0
    %v4291 = vmax.f32 %v3377, 0.0
    %v4292 = vmax.f32 %v3380, 0.0
    %v4293 = vmax.f32 %v3385, 0.0
    %v4294 = vmax.f32 %v3388, 0.0
    %v4295 = vmax.f32 %v3393, 0.0
    %v4296 = vmax.f32 %v3396, 0.0
    %v4297 = vmax.f32 %v3401, 0.0
    %v4298 = vmax.f32 %v3404, 0.0
    %v4299 = vmax.f32 %v3409, 0.0
    %v4300 = vmax.f32 %v3412, 0.0
    %v4301 = vmax.f32 %v3417, 0.0
    %v4302 = vmax.f32 %v3420, 0.0
    %v4303 = vmax.f32 %v3425, 0.0
    %v4304 = vmax.f32 %v3428, 0.0
    %v4305 = vmax.f32 %v3433, 0.0
    %v4306 = vmax.f32 %v3436, 0.0
    %v4307 = vmax.f32 %v3441, 0.0
    %v4308 = vmax.f32 %v3444, 0.0
    %v4309 = vmax.f32 %v3449, 0.0
    %v4310 = vmax.f32 %v3452, 0.0
    %v4311 = vmax.f32 %v3457, 0.0
    %v4312 = vmax.f32 %v3460, 0.0
    %v4313 = vmax.f32 %v3465, 0.0
    %v4314 = vmax.f32 %v3468, 0.0
    %v4315 = vmax.f32 %v3473, 0.0
    %v4316 = vmax.f32 %v3476, 0.0
    %v4317 = vmax.f32 %v3481, 0.0
    %v4318 = vmax.f32 %v3484, 0.0
    %v4319 = vmax.f32 %v3489, 0.0
    %v4320 = vmax.f32 %v3492, 0.0
    %v4321 = vmax.f32 %v3497, 0.0
    %v4322 = vmax.f32 %v3500, 0.0
    %v4323 = vmax.f32 %v3505, 0.0
    %v4324 = vmax.f32 %v3508, 0.0
    %v4325 = vmax.f32 %v3513, 0.0
    %v4326 = vmax.f32 %v3516, 0.0
    %v4327 = vmax.f32 %v3521, 0.0
    %v4328 = vmax.f32 %v3524, 0.0
    %v4329 = vmax.f32 %v3529, 0.0
    %v4330 = vmax.f32 %v3532, 0.0
    %v4331 = vmax.f32 %v3537, 0.0
    %v4332 = vmax.f32 %v3540, 0.0
    %v4333 = vmax.f32 %v3545, 0.0
    %v4334 = vmax.f32 %v3548, 0.0
    %v4335 = vmax.f32 %v3553, 0.0
    %v4336 = vmax.f32 %v3556, 0.0
    %v4337 = vmax.f32 %v3561, 0.0
    %v4338 = vmax.f32 %v3564, 0.0
    %v4339 = vmax.f32 %v3569, 0.0
    %v4340 = vmax.f32 %v3572, 0.0
    %v4341 = vmax.f32 %v3577, 0.0
    %v4342 = vmax.f32 %v3580, 0.0
    %v4343 = vmax.f32 %v3585, 0.0
    %v4344 = vmax.f32 %v3588, 0.0
    %v4345 = vmax.f32 %v3593, 0.0
    %v4346 = vmax.f32 %v3596, 0.0
    %v4347 = vmax.f32 %v3601, 0.0
    %v4348 = vmax.f32 %v3604, 0.0
    %v4349 = vmax.f32 %v3609, 0.0
    %v4350 = vmax.f32 %v3612, 0.0
    %v4351 = vmax.f32 %v3617, 0.0
    %v4352 = vmax.f32 %v3620, 0.0
    %v4353 = vmax.f32 %v3625, 0.0
    %v4354 = vmax.f32 %v3628, 0.0
    %v4355 = vmax.f32 %v3633, 0.0
    %v4356 = vmax.f32 %v3636, 0.0
    %v4357 = vmax.f32 %v3641, 0.0
    %v4358 = vmax.f32 %v3644, 0.0
    %v4359 = vmax.f32 %v3649, 0.0
    %v4360 = vmax.f32 %v3652, 0.0
    %v4361 = vmax.f32 %v3657, 0.0
    %v4362 = vmax.f32 %v3660, 0.0
    %v4363 = vmax.f32 %v3665, 0.0
    %v4364 = vmax.f32 %v3668, 0.0
    %v4365 = vmax.f32 %v3673, 0.0
    %v4366 = vmax.f32 %v3676, 0.0
    %v4367 = vmax.f32 %v3681, 0.0
    %v4368 = vmax.f32 %v3684, 0.0
    %v4369 = vmax.f32 %v3689, 0.0
    %v4370 = vmax.f32 %v3692, 0.0
    %v4371 = vmax.f32 %v3697, 0.0
    %v4372 = vmax.f32 %v3700, 0.0
    %v4373 = vmax.f32 %v3705, 0.0
    %v4374 = vmax.f32 %v3708, 0.0
    %v4375 = vmax.f32 %v3713, 0.0
    %v4376 = vmax.f32 %v3716, 0.0
    %v4377 = vmax.f32 %v3721, 0.0
    %v4378 = vmax.f32 %v3724, 0.0
    %v4379 = vmax.f32 %v3729, 0.0
    %v4380 = vmax.f32 %v3732, 0.0
    %v4381 = vmax.f32 %v3737, 0.0
    %v4382 = vmax.f32 %v3740, 0.0
    %v4383 = vmax.f32 %v3745, 0.0
    %v4384 = vmax.f32 %v3748, 0.0
    %v4385 = vmax.f32 %v3753, 0.0
    %v4386 = vmax.f32 %v3756, 0.0
    %v4387 = vmax.f32 %v3761, 0.0
    %v4388 = vmax.f32 %v3764, 0.0
    %v4389 = vmax.f32 %v3769, 0.0
    %v4390 = vmax.f32 %v3772, 0.0
    %v4391 = vmax.f32 %v3777, 0.0
    %v4392 = vmax.f32 %v3780, 0.0
    %v4393 = vmax.f32 %v3785, 0.0
    %v4394 = vmax.f32 %v3788, 0.0
    %v4395 = vmax.f32 %v3793, 0.0
    %v4396 = vmax.f32 %v3796, 0.0
    %v4397 = vmax.f32 %v3801, 0.0
    %v4398 = vmax.f32 %v3804, 0.0
    %v4399 = vmax.f32 %v3809, 0.0
    %v4400 = vmax.f32 %v3812, 0.0
    %v4401 = vmax.f32 %v3817, 0.0
    %v4402 = vmax.f32 %v3820, 0.0
    %v4403 = vmax.f32 %v3825, 0.0
    %v4404 = vmax.f32 %v3828, 0.0
    %v4405 = vmax.f32 %v3833, 0.0
    %v4406 = vmax.f32 %v3836, 0.0
    %v4407 = vmax.f32 %v3841, 0.0
    %v4408 = vmax.f32 %v3844, 0.0
    %v4409 = vmax.f32 %v3849, 0.0
    %v4410 = vmax.f32 %v3852, 0.0
    %v4411 = vmax.f32 %v3857, 0.0
    %v4412 = vmax.f32 %v3860, 0.0
    %v4413 = vmax.f32 %v3865, 0.0
    %v4414 = vmax.f32 %v3868, 0.0
    %v4415 = vmax.f32 %v3873, 0.0
    %v4416 = vmax.f32 %v3876, 0.0
    %v4417 = vmax.f32 %v3881, 0.0
    %v4418 = vmax.f32 %v3884, 0.0
    %v4419 = vmax.f32 %v3889, 0.0
    %v4420 = vmax.f32 %v3892, 0.0
    %v4421 = vmax.f32 %v3897, 0.0
    %v4422 = vmax.f32 %v3900, 0.0
    %v4423 = vmax.f32 %v3905, 0.0
    %v4424 = vmax.f32 %v3908, 0.0
    %v4425 = vmax.f32 %v3913, 0.0
    %v4426 = vmax.f32 %v3916, 0.0
    %v4427 = vmax.f32 %v3921, 0.0
    %v4428 = vmax.f32 %v3924, 0.0
    %v4429 = vmax.f32 %v3929, 0.0
    %v4430 = vmax.f32 %v3932, 0.0
    %v4431 = vmax.f32 %v3937, 0.0
    %v4432 = vmax.f32 %v3940, 0.0
    %v4433 = vmax.f32 %v3945, 0.0
    %v4434 = vmax.f32 %v3948, 0.0
    %v4435 = vmax.f32 %v3953, 0.0
    %v4436 = vmax.f32 %v3956, 0.0
    %v4437 = vmax.f32 %v3961, 0.0
    %v4438 = vmax.f32 %v3964, 0.0
    %v4439 = vmax.f32 %v3969, 0.0
    %v4440 = vmax.f32 %v3972, 0.0
    %v4441 = vmax.f32 %v3977, 0.0
    %v4442 = vmax.f32 %v3980, 0.0
    %v4443 = vmax.f32 %v3985, 0.0
    %v4444 = vmax.f32 %v3988, 0.0
    %v4445 = vmax.f32 %v3993, 0.0
    %v4446 = vmax.f32 %v3996, 0.0
    %v4447 = vmax.f32 %v4001, 0.0
    %v4448 = vmax.f32 %v4004, 0.0
    %v4449 = vmax.f32 %v4009, 0.0
    %v4450 = vmax.f32 %v4012, 0.0
    %v4451 = vmax.f32 %v4017, 0.0
    %v4452 = vmax.f32 %v4020, 0.0
    %v4453 = vmax.f32 %v4025, 0.0
    %v4454 = vmax.f32 %v4028, 0.0
    %v4455 = vmax.f32 %v4033, 0.0
    %v4456 = vmax.f32 %v4036, 0.0
    %v4457 = vmax.f32 %v4041, 0.0
    %v4458 = vmax.f32 %v4044, 0.0
    %v4459 = vmax.f32 %v4049, 0.0
    %v4460 = vmax.f32 %v4052, 0.0
    %v4461 = vmax.f32 %v4057, 0.0
    %v4462 = vmax.f32 %v4060, 0.0
    %v4463 = vmax.f32 %v4065, 0.0
    %v4464 = vmax.f32 %v4068, 0.0
    %v4465 = vmax.f32 %v4073, 0.0
    %v4466 = vmax.f32 %v4076, 0.0
    %v4467 = vmax.f32 %v4081, 0.0
    %v4468 = vmax.f32 %v4084, 0.0
    %v4469 = vmax.f32 %v4089, 0.0
    %v4470 = vmax.f32 %v4092, 0.0
    %v4471 = vmax.f32 %v4097, 0.0
    %v4472 = vmax.f32 %v4100, 0.0
    %v4473 = vmax.f32 %v4105, 0.0
    %v4474 = vmax.f32 %v4108, 0.0
    %v4475 = vmax.f32 %v4113, 0.0
    %v4476 = vmax.f32 %v4116, 0.0
    %v4477 = vmax.f32 %v4121, 0.0
    %v4478 = vmax.f32 %v4124, 0.0
    %v4479 = vmax.f32 %v4129, 0.0
    %v4480 = vmax.f32 %v4132, 0.0
    %v4481 = vmax.f32 %v4137, 0.0
    %v4482 = vmax.f32 %v4140, 0.0
    %v4483 = vmax.f32 %v4145, 0.0
    %v4484 = vmax.f32 %v4148, 0.0
    %v4485 = vmax.f32 %v4153, 0.0
    %v4486 = vmax.f32 %v4156, 0.0
    %v4487 = vmax.f32 %v4161, 0.0
    %v4488 = vmax.f32 %v4164, 0.0
    %v4489 = vmax.f32 %v4169, 0.0
    %v4490 = vmax.f32 %v4172, 0.0
    %v4491 = vmax.f32 %v4177, 0.0
    %v4492 = vmax.f32 %v4180, 0.0
    %v4493 = vmax.f32 %v4185, 0.0
    %v4494 = vmax.f32 %v4188, 0.0
    %v4495 = vmax.f32 %v4193, 0.0
    %v4496 = vmax.f32 %v4196, 0.0
    %v4497 = vmax.f32 %v4201, 0.0
    %v4498 = vmax.f32 %v4204, 0.0
    %v4499 = vmax.f32 %v4209, 0.0
    %v4500 = vmax.f32 %v4212, 0.0
    %v4501 = vmax.f32 %v4217, 0.0
    %v4502 = vmax.f32 %v4220, 0.0
    %v4503 = vmax.f32 %v4225, 0.0
    %v4504 = vmax.f32 %v4228, 0.0
    %v4505 = vmax.f32 %v4233, 0.0
    %v4506 = vmax.f32 %v4236, 0.0
    %v4507 = vmax.f32 %v4241, 0.0
    %v4508 = vmax.f32 %v4244, 0.0
    %v4509 = vmax.f32 %v4249, 0.0
    %v4510 = vmax.f32 %v4252, 0.0
    %v4511 = vpack.c.bf16 %v4256, %v4255
    %v4512 = vpack.c.bf16 %v4258, %v4257
    %v4513 = vpack.c.bf16 %v4260, %v4259
    %v4514 = vpack.c.bf16 %v4262, %v4261
    %v4515 = vpack.c.bf16 %v4264, %v4263
    %v4516 = vpack.c.bf16 %v4266, %v4265
    %v4517 = vpack.c.bf16 %v4268, %v4267
    %v4518 = vpack.c.bf16 %v4270, %v4269
    %v4519 = vpack.c.bf16 %v4272, %v4271
    %v4520 = vpack.c.bf16 %v4274, %v4273
    %v4521 = vpack.c.bf16 %v4276, %v4275
    %v4522 = vpack.c.bf16 %v4278, %v4277
    %v4523 = vpack.c.bf16 %v4280, %v4279
    %v4524 = vpack.c.bf16 %v4282, %v4281
    %v4525 = vpack.c.bf16 %v4284, %v4283
    %v4526 = vpack.c.bf16 %v4286, %v4285
    %v4527 = vpack.c.bf16 %v4288, %v4287
    %v4528 = vpack.c.bf16 %v4290, %v4289
    %v4529 = vpack.c.bf16 %v4292, %v4291
    %v4530 = vpack.c.bf16 %v4294, %v4293
    %v4531 = vpack.c.bf16 %v4296, %v4295
    %v4532 = vpack.c.bf16 %v4298, %v4297
    %v4533 = vpack.c.bf16 %v4300, %v4299
    %v4534 = vpack.c.bf16 %v4302, %v4301
    %v4535 = vpack.c.bf16 %v4304, %v4303
    %v4536 = vpack.c.bf16 %v4306, %v4305
    %v4537 = vpack.c.bf16 %v4308, %v4307
    %v4538 = vpack.c.bf16 %v4310, %v4309
    %v4539 = vpack.c.bf16 %v4312, %v4311
    %v4540 = vpack.c.bf16 %v4314, %v4313
    %v4541 = vpack.c.bf16 %v4316, %v4315
    %v4542 = vpack.c.bf16 %v4318, %v4317
    %v4543 = vpack.c.bf16 %v4320, %v4319
    %v4544 = vpack.c.bf16 %v4322, %v4321
    %v4545 = vpack.c.bf16 %v4324, %v4323
    %v4546 = vpack.c.bf16 %v4326, %v4325
    %v4547 = vpack.c.bf16 %v4328, %v4327
    %v4548 = vpack.c.bf16 %v4330, %v4329
    %v4549 = vpack.c.bf16 %v4332, %v4331
    %v4550 = vpack.c.bf16 %v4334, %v4333
    %v4551 = vpack.c.bf16 %v4336, %v4335
    %v4552 = vpack.c.bf16 %v4338, %v4337
    %v4553 = vpack.c.bf16 %v4340, %v4339
    %v4554 = vpack.c.bf16 %v4342, %v4341
    %v4555 = vpack.c.bf16 %v4344, %v4343
    %v4556 = vpack.c.bf16 %v4346, %v4345
    %v4557 = vpack.c.bf16 %v4348, %v4347
    %v4558 = vpack.c.bf16 %v4350, %v4349
    %v4559 = vpack.c.bf16 %v4352, %v4351
    %v4560 = vpack.c.bf16 %v4354, %v4353
    %v4561 = vpack.c.bf16 %v4356, %v4355
    %v4562 = vpack.c.bf16 %v4358, %v4357
    %v4563 = vpack.c.bf16 %v4360, %v4359
    %v4564 = vpack.c.bf16 %v4362, %v4361
    %v4565 = vpack.c.bf16 %v4364, %v4363
    %v4566 = vpack.c.bf16 %v4366, %v4365
    %v4567 = vpack.c.bf16 %v4368, %v4367
    %v4568 = vpack.c.bf16 %v4370, %v4369
    %v4569 = vpack.c.bf16 %v4372, %v4371
    %v4570 = vpack.c.bf16 %v4374, %v4373
    %v4571 = vpack.c.bf16 %v4376, %v4375
    %v4572 = vpack.c.bf16 %v4378, %v4377
    %v4573 = vpack.c.bf16 %v4380, %v4379
    %v4574 = vpack.c.bf16 %v4382, %v4381
    %v4575 = vpack.c.bf16 %v4384, %v4383
    %v4576 = vpack.c.bf16 %v4386, %v4385
    %v4577 = vpack.c.bf16 %v4388, %v4387
    %v4578 = vpack.c.bf16 %v4390, %v4389
    %v4579 = vpack.c.bf16 %v4392, %v4391
    %v4580 = vpack.c.bf16 %v4394, %v4393
    %v4581 = vpack.c.bf16 %v4396, %v4395
    %v4582 = vpack.c.bf16 %v4398, %v4397
    %v4583 = vpack.c.bf16 %v4400, %v4399
    %v4584 = vpack.c.bf16 %v4402, %v4401
    %v4585 = vpack.c.bf16 %v4404, %v4403
    %v4586 = vpack.c.bf16 %v4406, %v4405
    %v4587 = vpack.c.bf16 %v4408, %v4407
    %v4588 = vpack.c.bf16 %v4410, %v4409
    %v4589 = vpack.c.bf16 %v4412, %v4411
    %v4590 = vpack.c.bf16 %v4414, %v4413
    %v4591 = vpack.c.bf16 %v4416, %v4415
    %v4592 = vpack.c.bf16 %v4418, %v4417
    %v4593 = vpack.c.bf16 %v4420, %v4419
    %v4594 = vpack.c.bf16 %v4422, %v4421
    %v4595 = vpack.c.bf16 %v4424, %v4423
    %v4596 = vpack.c.bf16 %v4426, %v4425
    %v4597 = vpack.c.bf16 %v4428, %v4427
    %v4598 = vpack.c.bf16 %v4430, %v4429
    %v4599 = vpack.c.bf16 %v4432, %v4431
    %v4600 = vpack.c.bf16 %v4434, %v4433
    %v4601 = vpack.c.bf16 %v4436, %v4435
    %v4602 = vpack.c.bf16 %v4438, %v4437
    %v4603 = vpack.c.bf16 %v4440, %v4439
    %v4604 = vpack.c.bf16 %v4442, %v4441
    %v4605 = vpack.c.bf16 %v4444, %v4443
    %v4606 = vpack.c.bf16 %v4446, %v4445
    %v4607 = vpack.c.bf16 %v4448, %v4447
    %v4608 = vpack.c.bf16 %v4450, %v4449
    %v4609 = vpack.c.bf16 %v4452, %v4451
    %v4610 = vpack.c.bf16 %v4454, %v4453
    %v4611 = vpack.c.bf16 %v4456, %v4455
    %v4612 = vpack.c.bf16 %v4458, %v4457
    %v4613 = vpack.c.bf16 %v4460, %v4459
    %v4614 = vpack.c.bf16 %v4462, %v4461
    %v4615 = vpack.c.bf16 %v4464, %v4463
    %v4616 = vpack.c.bf16 %v4466, %v4465
    %v4617 = vpack.c.bf16 %v4468, %v4467
    %v4618 = vpack.c.bf16 %v4470, %v4469
    %v4619 = vpack.c.bf16 %v4472, %v4471
    %v4620 = vpack.c.bf16 %v4474, %v4473
    %v4621 = vpack.c.bf16 %v4476, %v4475
    %v4622 = vpack.c.bf16 %v4478, %v4477
    %v4623 = vpack.c.bf16 %v4480, %v4479
    %v4624 = vpack.c.bf16 %v4482, %v4481
    %v4625 = vpack.c.bf16 %v4484, %v4483
    %v4626 = vpack.c.bf16 %v4486, %v4485
    %v4627 = vpack.c.bf16 %v4488, %v4487
    %v4628 = vpack.c.bf16 %v4490, %v4489
    %v4629 = vpack.c.bf16 %v4492, %v4491
    %v4630 = vpack.c.bf16 %v4494, %v4493
    %v4631 = vpack.c.bf16 %v4496, %v4495
    %v4632 = vpack.c.bf16 %v4498, %v4497
    %v4633 = vpack.c.bf16 %v4500, %v4499
    %v4634 = vpack.c.bf16 %v4502, %v4501
    %v4635 = vpack.c.bf16 %v4504, %v4503
    %v4636 = vpack.c.bf16 %v4506, %v4505
    %v4637 = vpack.c.bf16 %v4508, %v4507
    %v4638 = vpack.c.bf16 %v4510, %v4509
    %v4639 = vld [vmem:[%s5] sm:$0xff]
    %v4640 = vld [vmem:[%s5 + $0x8] sm:$0xff]
    %v4641 = vld [vmem:[%s5 + $0x10] sm:$0xff]
    %v4642 = vld [vmem:[%s5 + $0x18] sm:$0xff]
    %v4643 = vld [vmem:[%s5 + $0x20] sm:$0xff]
    %v4644 = vld [vmem:[%s5 + $0x28] sm:$0xff]
    %v4645 = vld [vmem:[%s5 + $0x30] sm:$0xff]
    %v4646 = vld [vmem:[%s5 + $0x38] sm:$0xff]
    %v4647 = vld [vmem:[%s5 + $0x40] sm:$0xff]
    %v4648 = vld [vmem:[%s5 + $0x48] sm:$0xff]
    %v4649 = vld [vmem:[%s5 + $0x50] sm:$0xff]
    %v4650 = vld [vmem:[%s5 + $0x58] sm:$0xff]
    %v4651 = vld [vmem:[%s5 + $0x60] sm:$0xff]
    %v4652 = vld [vmem:[%s5 + $0x68] sm:$0xff]
    %v4653 = vld [vmem:[%s5 + $0x70] sm:$0xff]
    %v4654 = vld [vmem:[%s5 + $0x78] sm:$0xff]
    %v4655 = vld [vmem:[%s6] sm:$0x3]
    %v4657 = vlaneseq
    %v4658 = vshrl.u32 %v4657, 7
    %v4659 = vsub.s32 0, %v4658
    %v4660 = vrot.slane %v4655, %v4659
    %v4661 = vlaneseq
    %v4662 = vshrl.u32 %v4661, 7
    %v4663 = vsub.s32 1, %v4662
    %v4664 = vrot.slane %v4655, %v4663
    %v4683 = vunpack.c.l.b16 %v4639
    %v4684 = vunpack.c.h.b16 %v4639
    %v4685 = vunpack.c.l.b16 %v4640
    %v4686 = vunpack.c.h.b16 %v4640
    %v4687 = vunpack.c.l.b16 %v4641
    %v4688 = vunpack.c.h.b16 %v4641
    %v4689 = vunpack.c.l.b16 %v4642
    %v4690 = vunpack.c.h.b16 %v4642
    %v4691 = vunpack.c.l.b16 %v4643
    %v4692 = vunpack.c.h.b16 %v4643
    %v4693 = vunpack.c.l.b16 %v4644
    %v4694 = vunpack.c.h.b16 %v4644
    %v4695 = vunpack.c.l.b16 %v4645
    %v4696 = vunpack.c.h.b16 %v4645
    %v4697 = vunpack.c.l.b16 %v4646
    %v4698 = vunpack.c.h.b16 %v4646
    %v4699 = vunpack.c.l.b16 %v4647
    %v4700 = vunpack.c.h.b16 %v4647
    %v4701 = vunpack.c.l.b16 %v4648
    %v4702 = vunpack.c.h.b16 %v4648
    %v4703 = vunpack.c.l.b16 %v4649
    %v4704 = vunpack.c.h.b16 %v4649
    %v4705 = vunpack.c.l.b16 %v4650
    %v4706 = vunpack.c.h.b16 %v4650
    %v4707 = vunpack.c.l.b16 %v4651
    %v4708 = vunpack.c.h.b16 %v4651
    %v4709 = vunpack.c.l.b16 %v4652
    %v4710 = vunpack.c.h.b16 %v4652
    %v4711 = vunpack.c.l.b16 %v4653
    %v4712 = vunpack.c.h.b16 %v4653
    %v4713 = vunpack.c.l.b16 %v4654
    %v4714 = vunpack.c.h.b16 %v4654
    %v4715 = vpack.c.b16 %v4685, %v4683
    %v4716 = vpack.c.b16 %v4686, %v4684
    %v4717 = vpack.c.b16 %v4689, %v4687
    %v4718 = vpack.c.b16 %v4690, %v4688
    %v4719 = vpack.c.b16 %v4693, %v4691
    %v4720 = vpack.c.b16 %v4694, %v4692
    %v4721 = vpack.c.b16 %v4697, %v4695
    %v4722 = vpack.c.b16 %v4698, %v4696
    %v4723 = vpack.c.b16 %v4701, %v4699
    %v4724 = vpack.c.b16 %v4702, %v4700
    %v4725 = vpack.c.b16 %v4705, %v4703
    %v4726 = vpack.c.b16 %v4706, %v4704
    %v4727 = vpack.c.b16 %v4709, %v4707
    %v4728 = vpack.c.b16 %v4710, %v4708
    %v4729 = vpack.c.b16 %v4713, %v4711
    %v4730 = vpack.c.b16 %v4714, %v4712
    %4747 = vmatprep.subr.bf16.mxu0 %v4716
    %4748 = vmatpush1.bf16.msra.mxu0 %v4715
    %4749 = vmatprep.subr.bf16.mxu0 %v4718
    %4750 = vmatpush1.bf16.msra.mxu0 %v4717
    %4751 = vmatprep.subr.bf16.mxu0 %v4720
    %4752 = vmatpush1.bf16.msra.mxu0 %v4719
    %4753 = vmatprep.subr.bf16.mxu0 %v4722
    %4754 = vmatpush1.bf16.msra.mxu0 %v4721
    %4755 = vmatprep.subr.bf16.mxu0 %v4724
    %4756 = vmatpush1.bf16.msra.mxu0 %v4723
    %4757 = vmatprep.subr.bf16.mxu0 %v4726
    %4758 = vmatpush1.bf16.msra.mxu0 %v4725
    %4759 = vmatprep.subr.bf16.mxu0 %v4728
    %4760 = vmatpush1.bf16.msra.mxu0 %v4727
    %4761 = vmatprep.subr.bf16.mxu0 %v4730
    %4762 = vmatpush1.bf16.msra.mxu0 %v4729
    %4763 = vmatprep.subr.bf16.mxu0 0
    %4764 = vmatpush1.bf16.msra.mxu0 0
    %4765 = vmatprep.subr.bf16.mxu0 0
    %4766 = vmatpush1.bf16.msra.mxu0 0
    %4767 = vmatprep.subr.bf16.mxu0 0
    %4768 = vmatpush1.bf16.msra.mxu0 0
    %4769 = vmatprep.subr.bf16.mxu0 0
    %4770 = vmatpush1.bf16.msra.mxu0 0
    %4771 = vmatprep.subr.bf16.mxu0 0
    %4772 = vmatpush1.bf16.msra.mxu0 0
    %4773 = vmatprep.subr.bf16.mxu0 0
    %4774 = vmatpush1.bf16.msra.mxu0 0
    %4775 = vmatprep.subr.bf16.mxu0 0
    %4776 = vmatpush1.bf16.msra.mxu0 0
    %4777 = vmatprep.subr.bf16.mxu0 0
    %4778 = vmatpush1.bf16.msra.mxu0 0
    %4779 = vmatprep.mubr.bf16.mxu0 0
    %4780 = vmatmul.mubr.bf16.gmra.mrb[0].mxu0 %v4511
    %v4781 = vpop.f32.mrb[0].mxu0
    %v4782 = vadd.f32 %v4660, %v4781
    %v4783 = vpop.f32.mrb[0].mxu0
    %v4784 = vadd.f32 %v4664, %v4783
    %v4785 = vpop.f32.mrb[0].mxu0
    %v4786 = vadd.f32 %v4660, %v4785
    %v4787 = vpop.f32.mrb[0].mxu0
    %v4788 = vadd.f32 %v4664, %v4787
    %4789 = vmatprep.mubr.bf16.mxu0 0
    %4790 = vmatmul.mubr.bf16.gmra.mrb[0].mxu0 %v4512
    %v4791 = vpop.f32.mrb[0].mxu0
    %v4792 = vadd.f32 %v4660, %v4791
    %v4793 = vpop.f32.mrb[0].mxu0
    %v4794 = vadd.f32 %v4664, %v4793
    %v4795 = vpop.f32.mrb[0].mxu0
    %v4796 = vadd.f32 %v4660, %v4795
    %v4797 = vpop.f32.mrb[0].mxu0
    %v4798 = vadd.f32 %v4664, %v4797
    %4799 = vmatprep.mubr.bf16.mxu0 0
    %4800 = vmatmul.mubr.bf16.gmra.mrb[0].mxu0 %v4513
    %v4801 = vpop.f32.mrb[0].mxu0
    %v4802 = vadd.f32 %v4660, %v4801
    %v4803 = vpop.f32.mrb[0].mxu0
    %v4804 = vadd.f32 %v4664, %v4803
    %v4805 = vpop.f32.mrb[0].mxu0
    %v4806 = vadd.f32 %v4660, %v4805
    %v4807 = vpop.f32.mrb[0].mxu0
    %v4808 = vadd.f32 %v4664, %v4807
    %4809 = vmatprep.mubr.bf16.mxu0 0
    %4810 = vmatmul.mubr.bf16.gmra.mrb[0].mxu0 %v4514
    %v4811 = vpop.f32.mrb[0].mxu0
    %v4812 = vadd.f32 %v4660, %v4811
    %v4813 = vpop.f32.mrb[0].mxu0
    %v4814 = vadd.f32 %v4664, %v4813
    %v4815 = vpop.f32.mrb[0].mxu0
    %v4816 = vadd.f32 %v4660, %v4815
    %v4817 = vpop.f32.mrb[0].mxu0
    %v4818 = vadd.f32 %v4664, %v4817
    %4819 = vmatprep.mubr.bf16.mxu0 0
    %4820 = vmatmul.mubr.bf16.gmra.mrb[0].mxu0 %v4515
    %v4821 = vpop.f32.mrb[0].mxu0
    %v4822 = vadd.f32 %v4660, %v4821
    %v4823 = vpop.f32.mrb[0].mxu0
    %v4824 = vadd.f32 %v4664, %v4823
    %v4825 = vpop.f32.mrb[0].mxu0
    %v4826 = vadd.f32 %v4660, %v4825
    %v4827 = vpop.f32.mrb[0].mxu0
    %v4828 = vadd.f32 %v4664, %v4827
    %4829 = vmatprep.mubr.bf16.mxu0 0
    %4830 = vmatmul.mubr.bf16.gmra.mrb[0].mxu0 %v4516
    %v4831 = vpop.f32.mrb[0].mxu0
    %v4832 = vadd.f32 %v4660, %v4831
    %v4833 = vpop.f32.mrb[0].mxu0
    %v4834 = vadd.f32 %v4664, %v4833
    %v4835 = vpop.f32.mrb[0].mxu0
    %v4836 = vadd.f32 %v4660, %v4835
    %v4837 = vpop.f32.mrb[0].mxu0
    %v4838 = vadd.f32 %v4664, %v4837
    %4839 = vmatprep.mubr.bf16.mxu0 0
    %4840 = vmatmul.mubr.bf16.gmra.mrb[0].mxu0 %v4517
    %v4841 = vpop.f32.mrb[0].mxu0
    %v4842 = vadd.f32 %v4660, %v4841
    %v4843 = vpop.f32.mrb[0].mxu0
    %v4844 = vadd.f32 %v4664, %v4843
    %v4845 = vpop.f32.mrb[0].mxu0
    %v4846 = vadd.f32 %v4660, %v4845
    %v4847 = vpop.f32.mrb[0].mxu0
    %v4848 = vadd.f32 %v4664, %v4847
    %4849 = vmatprep.mubr.bf16.mxu0 0
    %4850 = vmatmul.mubr.bf16.gmra.mrb[0].mxu0 %v4518
    %v4851 = vpop.f32.mrb[0].mxu0
    %v4852 = vadd.f32 %v4660, %v4851
    %v4853 = vpop.f32.mrb[0].mxu0
    %v4854 = vadd.f32 %v4664, %v4853
    %v4855 = vpop.f32.mrb[0].mxu0
    %v4856 = vadd.f32 %v4660, %v4855
    %v4857 = vpop.f32.mrb[0].mxu0
    %v4858 = vadd.f32 %v4664, %v4857
    %4859 = vmatprep.mubr.bf16.mxu0 0
    %4860 = vmatmul.mubr.bf16.gmra.mrb[0].mxu0 %v4519
    %v4861 = vpop.f32.mrb[0].mxu0
    %v4862 = vadd.f32 %v4660, %v4861
    %v4863 = vpop.f32.mrb[0].mxu0
    %v4864 = vadd.f32 %v4664, %v4863
    %v4865 = vpop.f32.mrb[0].mxu0
    %v4866 = vadd.f32 %v4660, %v4865
    %v4867 = vpop.f32.mrb[0].mxu0
    %v4868 = vadd.f32 %v4664, %v4867
    %4869 = vmatprep.mubr.bf16.mxu0 0
    %4870 = vmatmul.mubr.bf16.gmra.mrb[0].mxu0 %v4520
    %v4871 = vpop.f32.mrb[0].mxu0
    %v4872 = vadd.f32 %v4660, %v4871
    %v4873 = vpop.f32.mrb[0].mxu0
    %v4874 = vadd.f32 %v4664, %v4873
    %v4875 = vpop.f32.mrb[0].mxu0
    %v4876 = vadd.f32 %v4660, %v4875
    %v4877 = vpop.f32.mrb[0].mxu0
    %v4878 = vadd.f32 %v4664, %v4877
    %4879 = vmatprep.mubr.bf16.mxu0 0
    %4880 = vmatmul.mubr.bf16.gmra.mrb[0].mxu0 %v4521
    %v4881 = vpop.f32.mrb[0].mxu0
    %v4882 = vadd.f32 %v4660, %v4881
    %v4883 = vpop.f32.mrb[0].mxu0
    %v4884 = vadd.f32 %v4664, %v4883
    %v4885 = vpop.f32.mrb[0].mxu0
    %v4886 = vadd.f32 %v4660, %v4885
    %v4887 = vpop.f32.mrb[0].mxu0
    %v4888 = vadd.f32 %v4664, %v4887
    %4889 = vmatprep.mubr.bf16.mxu0 0
    %4890 = vmatmul.mubr.bf16.gmra.mrb[0].mxu0 %v4522
    %v4891 = vpop.f32.mrb[0].mxu0
    %v4892 = vadd.f32 %v4660, %v4891
    %v4893 = vpop.f32.mrb[0].mxu0
    %v4894 = vadd.f32 %v4664, %v4893
    %v4895 = vpop.f32.mrb[0].mxu0
    %v4896 = vadd.f32 %v4660, %v4895
    %v4897 = vpop.f32.mrb[0].mxu0
    %v4898 = vadd.f32 %v4664, %v4897
    %4899 = vmatprep.mubr.bf16.mxu0 0
    %4900 = vmatmul.mubr.bf16.gmra.mrb[0].mxu0 %v4523
    %v4901 = vpop.f32.mrb[0].mxu0
    %v4902 = vadd.f32 %v4660, %v4901
    %v4903 = vpop.f32.mrb[0].mxu0
    %v4904 = vadd.f32 %v4664, %v4903
    %v4905 = vpop.f32.mrb[0].mxu0
    %v4906 = vadd.f32 %v4660, %v4905
    %v4907 = vpop.f32.mrb[0].mxu0
    %v4908 = vadd.f32 %v4664, %v4907
    %4909 = vmatprep.mubr.bf16.mxu0 0
    %4910 = vmatmul.mubr.bf16.gmra.mrb[0].mxu0 %v4524
    %v4911 = vpop.f32.mrb[0].mxu0
    %v4912 = vadd.f32 %v4660, %v4911
    %v4913 = vpop.f32.mrb[0].mxu0
    %v4914 = vadd.f32 %v4664, %v4913
    %v4915 = vpop.f32.mrb[0].mxu0
    %v4916 = vadd.f32 %v4660, %v4915
    %v4917 = vpop.f32.mrb[0].mxu0
    %v4918 = vadd.f32 %v4664, %v4917
    %4919 = vmatprep.mubr.bf16.mxu0 0
    %4920 = vmatmul.mubr.bf16.gmra.mrb[0].mxu0 %v4525
    %v4921 = vpop.f32.mrb[0].mxu0
    %v4922 = vadd.f32 %v4660, %v4921
    %v4923 = vpop.f32.mrb[0].mxu0
    %v4924 = vadd.f32 %v4664, %v4923
    %v4925 = vpop.f32.mrb[0].mxu0
    %v4926 = vadd.f32 %v4660, %v4925
    %v4927 = vpop.f32.mrb[0].mxu0
    %v4928 = vadd.f32 %v4664, %v4927
    %4929 = vmatprep.mubr.bf16.mxu0 0
    %4930 = vmatmul.mubr.bf16.gmra.mrb[0].mxu0 %v4526
    %v4931 = vpop.f32.mrb[0].mxu0
    %v4932 = vadd.f32 %v4660, %v4931
    %v4933 = vpop.f32.mrb[0].mxu0
    %v4934 = vadd.f32 %v4664, %v4933
    %v4935 = vpop.f32.mrb[0].mxu0
    %v4936 = vadd.f32 %v4660, %v4935
    %v4937 = vpop.f32.mrb[0].mxu0
    %v4938 = vadd.f32 %v4664, %v4937
    %4939 = vmatprep.mubr.bf16.mxu0 0
    %4940 = vmatmul.mubr.bf16.gmra.mrb[0].mxu0 %v4527
    %v4941 = vpop.f32.mrb[0].mxu0
    %v4942 = vadd.f32 %v4660, %v4941
    %v4943 = vpop.f32.mrb[0].mxu0
    %v4944 = vadd.f32 %v4664, %v4943
    %v4945 = vpop.f32.mrb[0].mxu0
    %v4946 = vadd.f32 %v4660, %v4945
    %v4947 = vpop.f32.mrb[0].mxu0
    %v4948 = vadd.f32 %v4664, %v4947
    %4949 = vmatprep.mubr.bf16.mxu0 0
    %4950 = vmatmul.mubr.bf16.gmra.mrb[0].mxu0 %v4528
    %v4951 = vpop.f32.mrb[0].mxu0
    %v4952 = vadd.f32 %v4660, %v4951
    %v4953 = vpop.f32.mrb[0].mxu0
    %v4954 = vadd.f32 %v4664, %v4953
    %v4955 = vpop.f32.mrb[0].mxu0
    %v4956 = vadd.f32 %v4660, %v4955
    %v4957 = vpop.f32.mrb[0].mxu0
    %v4958 = vadd.f32 %v4664, %v4957
    %4959 = vmatprep.mubr.bf16.mxu0 0
    %4960 = vmatmul.mubr.bf16.gmra.mrb[0].mxu0 %v4529
    %v4961 = vpop.f32.mrb[0].mxu0
    %v4962 = vadd.f32 %v4660, %v4961
    %v4963 = vpop.f32.mrb[0].mxu0
    %v4964 = vadd.f32 %v4664, %v4963
    %v4965 = vpop.f32.mrb[0].mxu0
    %v4966 = vadd.f32 %v4660, %v4965
    %v4967 = vpop.f32.mrb[0].mxu0
    %v4968 = vadd.f32 %v4664, %v4967
    %4969 = vmatprep.mubr.bf16.mxu0 0
    %4970 = vmatmul.mubr.bf16.gmra.mrb[0].mxu0 %v4530
    %v4971 = vpop.f32.mrb[0].mxu0
    %v4972 = vadd.f32 %v4660, %v4971
    %v4973 = vpop.f32.mrb[0].mxu0
    %v4974 = vadd.f32 %v4664, %v4973
    %v4975 = vpop.f32.mrb[0].mxu0
    %v4976 = vadd.f32 %v4660, %v4975
    %v4977 = vpop.f32.mrb[0].mxu0
    %v4978 = vadd.f32 %v4664, %v4977
    %4979 = vmatprep.mubr.bf16.mxu0 0
    %4980 = vmatmul.mubr.bf16.gmra.mrb[0].mxu0 %v4531
    %v4981 = vpop.f32.mrb[0].mxu0
    %v4982 = vadd.f32 %v4660, %v4981
    %v4983 = vpop.f32.mrb[0].mxu0
    %v4984 = vadd.f32 %v4664, %v4983
    %v4985 = vpop.f32.mrb[0].mxu0
    %v4986 = vadd.f32 %v4660, %v4985
    %v4987 = vpop.f32.mrb[0].mxu0
    %v4988 = vadd.f32 %v4664, %v4987
    %4989 = vmatprep.mubr.bf16.mxu0 0
    %4990 = vmatmul.mubr.bf16.gmra.mrb[0].mxu0 %v4532
    %v4991 = vpop.f32.mrb[0].mxu0
    %v4992 = vadd.f32 %v4660, %v4991
    %v4993 = vpop.f32.mrb[0].mxu0
    %v4994 = vadd.f32 %v4664, %v4993
    %v4995 = vpop.f32.mrb[0].mxu0
    %v4996 = vadd.f32 %v4660, %v4995
    %v4997 = vpop.f32.mrb[0].mxu0
    %v4998 = vadd.f32 %v4664, %v4997
    %4999 = vmatprep.mubr.bf16.mxu0 0
    %5000 = vmatmul.mubr.bf16.gmra.mrb[0].mxu0 %v4533
    %v5001 = vpop.f32.mrb[0].mxu0
    %v5002 = vadd.f32 %v4660, %v5001
    %v5003 = vpop.f32.mrb[0].mxu0
    %v5004 = vadd.f32 %v4664, %v5003
    %v5005 = vpop.f32.mrb[0].mxu0
    %v5006 = vadd.f32 %v4660, %v5005
    %v5007 = vpop.f32.mrb[0].mxu0
    %v5008 = vadd.f32 %v4664, %v5007
    %5009 = vmatprep.mubr.bf16.mxu0 0
    %5010 = vmatmul.mubr.bf16.gmra.mrb[0].mxu0 %v4534
    %v5011 = vpop.f32.mrb[0].mxu0
    %v5012 = vadd.f32 %v4660, %v5011
    %v5013 = vpop.f32.mrb[0].mxu0
    %v5014 = vadd.f32 %v4664, %v5013
    %v5015 = vpop.f32.mrb[0].mxu0
    %v5016 = vadd.f32 %v4660, %v5015
    %v5017 = vpop.f32.mrb[0].mxu0
    %v5018 = vadd.f32 %v4664, %v5017
    %5019 = vmatprep.mubr.bf16.mxu0 0
    %5020 = vmatmul.mubr.bf16.gmra.mrb[0].mxu0 %v4535
    %v5021 = vpop.f32.mrb[0].mxu0
    %v5022 = vadd.f32 %v4660, %v5021
    %v5023 = vpop.f32.mrb[0].mxu0
    %v5024 = vadd.f32 %v4664, %v5023
    %v5025 = vpop.f32.mrb[0].mxu0
    %v5026 = vadd.f32 %v4660, %v5025
    %v5027 = vpop.f32.mrb[0].mxu0
    %v5028 = vadd.f32 %v4664, %v5027
    %5029 = vmatprep.mubr.bf16.mxu0 0
    %5030 = vmatmul.mubr.bf16.gmra.mrb[0].mxu0 %v4536
    %v5031 = vpop.f32.mrb[0].mxu0
    %v5032 = vadd.f32 %v4660, %v5031
    %v5033 = vpop.f32.mrb[0].mxu0
    %v5034 = vadd.f32 %v4664, %v5033
    %v5035 = vpop.f32.mrb[0].mxu0
    %v5036 = vadd.f32 %v4660, %v5035
    %v5037 = vpop.f32.mrb[0].mxu0
    %v5038 = vadd.f32 %v4664, %v5037
    %5039 = vmatprep.mubr.bf16.mxu0 0
    %5040 = vmatmul.mubr.bf16.gmra.mrb[0].mxu0 %v4537
    %v5041 = vpop.f32.mrb[0].mxu0
    %v5042 = vadd.f32 %v4660, %v5041
    %v5043 = vpop.f32.mrb[0].mxu0
    %v5044 = vadd.f32 %v4664, %v5043
    %v5045 = vpop.f32.mrb[0].mxu0
    %v5046 = vadd.f32 %v4660, %v5045
    %v5047 = vpop.f32.mrb[0].mxu0
    %v5048 = vadd.f32 %v4664, %v5047
    %5049 = vmatprep.mubr.bf16.mxu0 0
    %5050 = vmatmul.mubr.bf16.gmra.mrb[0].mxu0 %v4538
    %v5051 = vpop.f32.mrb[0].mxu0
    %v5052 = vadd.f32 %v4660, %v5051
    %v5053 = vpop.f32.mrb[0].mxu0
    %v5054 = vadd.f32 %v4664, %v5053
    %v5055 = vpop.f32.mrb[0].mxu0
    %v5056 = vadd.f32 %v4660, %v5055
    %v5057 = vpop.f32.mrb[0].mxu0
    %v5058 = vadd.f32 %v4664, %v5057
    %5059 = vmatprep.mubr.bf16.mxu0 0
    %5060 = vmatmul.mubr.bf16.gmra.mrb[0].mxu0 %v4539
    %v5061 = vpop.f32.mrb[0].mxu0
    %v5062 = vadd.f32 %v4660, %v5061
    %v5063 = vpop.f32.mrb[0].mxu0
    %v5064 = vadd.f32 %v4664, %v5063
    %v5065 = vpop.f32.mrb[0].mxu0
    %v5066 = vadd.f32 %v4660, %v5065
    %v5067 = vpop.f32.mrb[0].mxu0
    %v5068 = vadd.f32 %v4664, %v5067
    %5069 = vmatprep.mubr.bf16.mxu0 0
    %5070 = vmatmul.mubr.bf16.gmra.mrb[0].mxu0 %v4540
    %v5071 = vpop.f32.mrb[0].mxu0
    %v5072 = vadd.f32 %v4660, %v5071
    %v5073 = vpop.f32.mrb[0].mxu0
    %v5074 = vadd.f32 %v4664, %v5073
    %v5075 = vpop.f32.mrb[0].mxu0
    %v5076 = vadd.f32 %v4660, %v5075
    %v5077 = vpop.f32.mrb[0].mxu0
    %v5078 = vadd.f32 %v4664, %v5077
    %5079 = vmatprep.mubr.bf16.mxu0 0
    %5080 = vmatmul.mubr.bf16.gmra.mrb[0].mxu0 %v4541
    %v5081 = vpop.f32.mrb[0].mxu0
    %v5082 = vadd.f32 %v4660, %v5081
    %v5083 = vpop.f32.mrb[0].mxu0
    %v5084 = vadd.f32 %v4664, %v5083
    %v5085 = vpop.f32.mrb[0].mxu0
    %v5086 = vadd.f32 %v4660, %v5085
    %v5087 = vpop.f32.mrb[0].mxu0
    %v5088 = vadd.f32 %v4664, %v5087
    %5089 = vmatprep.mubr.bf16.mxu0 0
    %5090 = vmatmul.mubr.bf16.gmra.mrb[0].mxu0 %v4542
    %v5091 = vpop.f32.mrb[0].mxu0
    %v5092 = vadd.f32 %v4660, %v5091
    %v5093 = vpop.f32.mrb[0].mxu0
    %v5094 = vadd.f32 %v4664, %v5093
    %v5095 = vpop.f32.mrb[0].mxu0
    %v5096 = vadd.f32 %v4660, %v5095
    %v5097 = vpop.f32.mrb[0].mxu0
    %v5098 = vadd.f32 %v4664, %v5097
    %5099 = vmatprep.mubr.bf16.mxu0 0
    %5100 = vmatmul.mubr.bf16.gmra.mrb[0].mxu0 %v4543
    %v5101 = vpop.f32.mrb[0].mxu0
    %v5102 = vadd.f32 %v4660, %v5101
    %v5103 = vpop.f32.mrb[0].mxu0
    %v5104 = vadd.f32 %v4664, %v5103
    %v5105 = vpop.f32.mrb[0].mxu0
    %v5106 = vadd.f32 %v4660, %v5105
    %v5107 = vpop.f32.mrb[0].mxu0
    %v5108 = vadd.f32 %v4664, %v5107
    %5109 = vmatprep.mubr.bf16.mxu0 0
    %5110 = vmatmul.mubr.bf16.gmra.mrb[0].mxu0 %v4544
    %v5111 = vpop.f32.mrb[0].mxu0
    %v5112 = vadd.f32 %v4660, %v5111
    %v5113 = vpop.f32.mrb[0].mxu0
    %v5114 = vadd.f32 %v4664, %v5113
    %v5115 = vpop.f32.mrb[0].mxu0
    %v5116 = vadd.f32 %v4660, %v5115
    %v5117 = vpop.f32.mrb[0].mxu0
    %v5118 = vadd.f32 %v4664, %v5117
    %5119 = vmatprep.mubr.bf16.mxu0 0
    %5120 = vmatmul.mubr.bf16.gmra.mrb[0].mxu0 %v4545
    %v5121 = vpop.f32.mrb[0].mxu0
    %v5122 = vadd.f32 %v4660, %v5121
    %v5123 = vpop.f32.mrb[0].mxu0
    %v5124 = vadd.f32 %v4664, %v5123
    %v5125 = vpop.f32.mrb[0].mxu0
    %v5126 = vadd.f32 %v4660, %v5125
    %v5127 = vpop.f32.mrb[0].mxu0
    %v5128 = vadd.f32 %v4664, %v5127
    %5129 = vmatprep.mubr.bf16.mxu0 0
    %5130 = vmatmul.mubr.bf16.gmra.mrb[0].mxu0 %v4546
    %v5131 = vpop.f32.mrb[0].mxu0
    %v5132 = vadd.f32 %v4660, %v5131
    %v5133 = vpop.f32.mrb[0].mxu0
    %v5134 = vadd.f32 %v4664, %v5133
    %v5135 = vpop.f32.mrb[0].mxu0
    %v5136 = vadd.f32 %v4660, %v5135
    %v5137 = vpop.f32.mrb[0].mxu0
    %v5138 = vadd.f32 %v4664, %v5137
    %5139 = vmatprep.mubr.bf16.mxu0 0
    %5140 = vmatmul.mubr.bf16.gmra.mrb[0].mxu0 %v4547
    %v5141 = vpop.f32.mrb[0].mxu0
    %v5142 = vadd.f32 %v4660, %v5141
    %v5143 = vpop.f32.mrb[0].mxu0
    %v5144 = vadd.f32 %v4664, %v5143
    %v5145 = vpop.f32.mrb[0].mxu0
    %v5146 = vadd.f32 %v4660, %v5145
    %v5147 = vpop.f32.mrb[0].mxu0
    %v5148 = vadd.f32 %v4664, %v5147
    %5149 = vmatprep.mubr.bf16.mxu0 0
    %5150 = vmatmul.mubr.bf16.gmra.mrb[0].mxu0 %v4548
    %v5151 = vpop.f32.mrb[0].mxu0
    %v5152 = vadd.f32 %v4660, %v5151
    %v5153 = vpop.f32.mrb[0].mxu0
    %v5154 = vadd.f32 %v4664, %v5153
    %v5155 = vpop.f32.mrb[0].mxu0
    %v5156 = vadd.f32 %v4660, %v5155
    %v5157 = vpop.f32.mrb[0].mxu0
    %v5158 = vadd.f32 %v4664, %v5157
    %5159 = vmatprep.mubr.bf16.mxu0 0
    %5160 = vmatmul.mubr.bf16.gmra.mrb[0].mxu0 %v4549
    %v5161 = vpop.f32.mrb[0].mxu0
    %v5162 = vadd.f32 %v4660, %v5161
    %v5163 = vpop.f32.mrb[0].mxu0
    %v5164 = vadd.f32 %v4664, %v5163
    %v5165 = vpop.f32.mrb[0].mxu0
    %v5166 = vadd.f32 %v4660, %v5165
    %v5167 = vpop.f32.mrb[0].mxu0
    %v5168 = vadd.f32 %v4664, %v5167
    %5169 = vmatprep.mubr.bf16.mxu0 0
    %5170 = vmatmul.mubr.bf16.gmra.mrb[0].mxu0 %v4550
    %v5171 = vpop.f32.mrb[0].mxu0
    %v5172 = vadd.f32 %v4660, %v5171
    %v5173 = vpop.f32.mrb[0].mxu0
    %v5174 = vadd.f32 %v4664, %v5173
    %v5175 = vpop.f32.mrb[0].mxu0
    %v5176 = vadd.f32 %v4660, %v5175
    %v5177 = vpop.f32.mrb[0].mxu0
    %v5178 = vadd.f32 %v4664, %v5177
    %5179 = vmatprep.mubr.bf16.mxu0 0
    %5180 = vmatmul.mubr.bf16.gmra.mrb[0].mxu0 %v4551
    %v5181 = vpop.f32.mrb[0].mxu0
    %v5182 = vadd.f32 %v4660, %v5181
    %v5183 = vpop.f32.mrb[0].mxu0
    %v5184 = vadd.f32 %v4664, %v5183
    %v5185 = vpop.f32.mrb[0].mxu0
    %v5186 = vadd.f32 %v4660, %v5185
    %v5187 = vpop.f32.mrb[0].mxu0
    %v5188 = vadd.f32 %v4664, %v5187
    %5189 = vmatprep.mubr.bf16.mxu0 0
    %5190 = vmatmul.mubr.bf16.gmra.mrb[0].mxu0 %v4552
    %v5191 = vpop.f32.mrb[0].mxu0
    %v5192 = vadd.f32 %v4660, %v5191
    %v5193 = vpop.f32.mrb[0].mxu0
    %v5194 = vadd.f32 %v4664, %v5193
    %v5195 = vpop.f32.mrb[0].mxu0
    %v5196 = vadd.f32 %v4660, %v5195
    %v5197 = vpop.f32.mrb[0].mxu0
    %v5198 = vadd.f32 %v4664, %v5197
    %5199 = vmatprep.mubr.bf16.mxu0 0
    %5200 = vmatmul.mubr.bf16.gmra.mrb[0].mxu0 %v4553
    %v5201 = vpop.f32.mrb[0].mxu0
    %v5202 = vadd.f32 %v4660, %v5201
    %v5203 = vpop.f32.mrb[0].mxu0
    %v5204 = vadd.f32 %v4664, %v5203
    %v5205 = vpop.f32.mrb[0].mxu0
    %v5206 = vadd.f32 %v4660, %v5205
    %v5207 = vpop.f32.mrb[0].mxu0
    %v5208 = vadd.f32 %v4664, %v5207
    %5209 = vmatprep.mubr.bf16.mxu0 0
    %5210 = vmatmul.mubr.bf16.gmra.mrb[0].mxu0 %v4554
    %v5211 = vpop.f32.mrb[0].mxu0
    %v5212 = vadd.f32 %v4660, %v5211
    %v5213 = vpop.f32.mrb[0].mxu0
    %v5214 = vadd.f32 %v4664, %v5213
    %v5215 = vpop.f32.mrb[0].mxu0
    %v5216 = vadd.f32 %v4660, %v5215
    %v5217 = vpop.f32.mrb[0].mxu0
    %v5218 = vadd.f32 %v4664, %v5217
    %5219 = vmatprep.mubr.bf16.mxu0 0
    %5220 = vmatmul.mubr.bf16.gmra.mrb[0].mxu0 %v4555
    %v5221 = vpop.f32.mrb[0].mxu0
    %v5222 = vadd.f32 %v4660, %v5221
    %v5223 = vpop.f32.mrb[0].mxu0
    %v5224 = vadd.f32 %v4664, %v5223
    %v5225 = vpop.f32.mrb[0].mxu0
    %v5226 = vadd.f32 %v4660, %v5225
    %v5227 = vpop.f32.mrb[0].mxu0
    %v5228 = vadd.f32 %v4664, %v5227
    %5229 = vmatprep.mubr.bf16.mxu0 0
    %5230 = vmatmul.mubr.bf16.gmra.mrb[0].mxu0 %v4556
    %v5231 = vpop.f32.mrb[0].mxu0
    %v5232 = vadd.f32 %v4660, %v5231
    %v5233 = vpop.f32.mrb[0].mxu0
    %v5234 = vadd.f32 %v4664, %v5233
    %v5235 = vpop.f32.mrb[0].mxu0
    %v5236 = vadd.f32 %v4660, %v5235
    %v5237 = vpop.f32.mrb[0].mxu0
    %v5238 = vadd.f32 %v4664, %v5237
    %5239 = vmatprep.mubr.bf16.mxu0 0
    %5240 = vmatmul.mubr.bf16.gmra.mrb[0].mxu0 %v4557
    %v5241 = vpop.f32.mrb[0].mxu0
    %v5242 = vadd.f32 %v4660, %v5241
    %v5243 = vpop.f32.mrb[0].mxu0
    %v5244 = vadd.f32 %v4664, %v5243
    %v5245 = vpop.f32.mrb[0].mxu0
    %v5246 = vadd.f32 %v4660, %v5245
    %v5247 = vpop.f32.mrb[0].mxu0
    %v5248 = vadd.f32 %v4664, %v5247
    %5249 = vmatprep.mubr.bf16.mxu0 0
    %5250 = vmatmul.mubr.bf16.gmra.mrb[0].mxu0 %v4558
    %v5251 = vpop.f32.mrb[0].mxu0
    %v5252 = vadd.f32 %v4660, %v5251
    %v5253 = vpop.f32.mrb[0].mxu0
    %v5254 = vadd.f32 %v4664, %v5253
    %v5255 = vpop.f32.mrb[0].mxu0
    %v5256 = vadd.f32 %v4660, %v5255
    %v5257 = vpop.f32.mrb[0].mxu0
    %v5258 = vadd.f32 %v4664, %v5257
    %5259 = vmatprep.mubr.bf16.mxu0 0
    %5260 = vmatmul.mubr.bf16.gmra.mrb[0].mxu0 %v4559
    %v5261 = vpop.f32.mrb[0].mxu0
    %v5262 = vadd.f32 %v4660, %v5261
    %v5263 = vpop.f32.mrb[0].mxu0
    %v5264 = vadd.f32 %v4664, %v5263
    %v5265 = vpop.f32.mrb[0].mxu0
    %v5266 = vadd.f32 %v4660, %v5265
    %v5267 = vpop.f32.mrb[0].mxu0
    %v5268 = vadd.f32 %v4664, %v5267
    %5269 = vmatprep.mubr.bf16.mxu0 0
    %5270 = vmatmul.mubr.bf16.gmra.mrb[0].mxu0 %v4560
    %v5271 = vpop.f32.mrb[0].mxu0
    %v5272 = vadd.f32 %v4660, %v5271
    %v5273 = vpop.f32.mrb[0].mxu0
    %v5274 = vadd.f32 %v4664, %v5273
    %v5275 = vpop.f32.mrb[0].mxu0
    %v5276 = vadd.f32 %v4660, %v5275
    %v5277 = vpop.f32.mrb[0].mxu0
    %v5278 = vadd.f32 %v4664, %v5277
    %5279 = vmatprep.mubr.bf16.mxu0 0
    %5280 = vmatmul.mubr.bf16.gmra.mrb[0].mxu0 %v4561
    %v5281 = vpop.f32.mrb[0].mxu0
    %v5282 = vadd.f32 %v4660, %v5281
    %v5283 = vpop.f32.mrb[0].mxu0
    %v5284 = vadd.f32 %v4664, %v5283
    %v5285 = vpop.f32.mrb[0].mxu0
    %v5286 = vadd.f32 %v4660, %v5285
    %v5287 = vpop.f32.mrb[0].mxu0
    %v5288 = vadd.f32 %v4664, %v5287
    %5289 = vmatprep.mubr.bf16.mxu0 0
    %5290 = vmatmul.mubr.bf16.gmra.mrb[0].mxu0 %v4562
    %v5291 = vpop.f32.mrb[0].mxu0
    %v5292 = vadd.f32 %v4660, %v5291
    %v5293 = vpop.f32.mrb[0].mxu0
    %v5294 = vadd.f32 %v4664, %v5293
    %v5295 = vpop.f32.mrb[0].mxu0
    %v5296 = vadd.f32 %v4660, %v5295
    %v5297 = vpop.f32.mrb[0].mxu0
    %v5298 = vadd.f32 %v4664, %v5297
    %5299 = vmatprep.mubr.bf16.mxu0 0
    %5300 = vmatmul.mubr.bf16.gmra.mrb[0].mxu0 %v4563
    %v5301 = vpop.f32.mrb[0].mxu0
    %v5302 = vadd.f32 %v4660, %v5301
    %v5303 = vpop.f32.mrb[0].mxu0
    %v5304 = vadd.f32 %v4664, %v5303
    %v5305 = vpop.f32.mrb[0].mxu0
    %v5306 = vadd.f32 %v4660, %v5305
    %v5307 = vpop.f32.mrb[0].mxu0
    %v5308 = vadd.f32 %v4664, %v5307
    %5309 = vmatprep.mubr.bf16.mxu0 0
    %5310 = vmatmul.mubr.bf16.gmra.mrb[0].mxu0 %v4564
    %v5311 = vpop.f32.mrb[0].mxu0
    %v5312 = vadd.f32 %v4660, %v5311
    %v5313 = vpop.f32.mrb[0].mxu0
    %v5314 = vadd.f32 %v4664, %v5313
    %v5315 = vpop.f32.mrb[0].mxu0
    %v5316 = vadd.f32 %v4660, %v5315
    %v5317 = vpop.f32.mrb[0].mxu0
    %v5318 = vadd.f32 %v4664, %v5317
    %5319 = vmatprep.mubr.bf16.mxu0 0
    %5320 = vmatmul.mubr.bf16.gmra.mrb[0].mxu0 %v4565
    %v5321 = vpop.f32.mrb[0].mxu0
    %v5322 = vadd.f32 %v4660, %v5321
    %v5323 = vpop.f32.mrb[0].mxu0
    %v5324 = vadd.f32 %v4664, %v5323
    %v5325 = vpop.f32.mrb[0].mxu0
    %v5326 = vadd.f32 %v4660, %v5325
    %v5327 = vpop.f32.mrb[0].mxu0
    %v5328 = vadd.f32 %v4664, %v5327
    %5329 = vmatprep.mubr.bf16.mxu0 0
    %5330 = vmatmul.mubr.bf16.gmra.mrb[0].mxu0 %v4566
    %v5331 = vpop.f32.mrb[0].mxu0
    %v5332 = vadd.f32 %v4660, %v5331
    %v5333 = vpop.f32.mrb[0].mxu0
    %v5334 = vadd.f32 %v4664, %v5333
    %v5335 = vpop.f32.mrb[0].mxu0
    %v5336 = vadd.f32 %v4660, %v5335
    %v5337 = vpop.f32.mrb[0].mxu0
    %v5338 = vadd.f32 %v4664, %v5337
    %5339 = vmatprep.mubr.bf16.mxu0 0
    %5340 = vmatmul.mubr.bf16.gmra.mrb[0].mxu0 %v4567
    %v5341 = vpop.f32.mrb[0].mxu0
    %v5342 = vadd.f32 %v4660, %v5341
    %v5343 = vpop.f32.mrb[0].mxu0
    %v5344 = vadd.f32 %v4664, %v5343
    %v5345 = vpop.f32.mrb[0].mxu0
    %v5346 = vadd.f32 %v4660, %v5345
    %v5347 = vpop.f32.mrb[0].mxu0
    %v5348 = vadd.f32 %v4664, %v5347
    %5349 = vmatprep.mubr.bf16.mxu0 0
    %5350 = vmatmul.mubr.bf16.gmra.mrb[0].mxu0 %v4568
    %v5351 = vpop.f32.mrb[0].mxu0
    %v5352 = vadd.f32 %v4660, %v5351
    %v5353 = vpop.f32.mrb[0].mxu0
    %v5354 = vadd.f32 %v4664, %v5353
    %v5355 = vpop.f32.mrb[0].mxu0
    %v5356 = vadd.f32 %v4660, %v5355
    %v5357 = vpop.f32.mrb[0].mxu0
    %v5358 = vadd.f32 %v4664, %v5357
    %5359 = vmatprep.mubr.bf16.mxu0 0
    %5360 = vmatmul.mubr.bf16.gmra.mrb[0].mxu0 %v4569
    %v5361 = vpop.f32.mrb[0].mxu0
    %v5362 = vadd.f32 %v4660, %v5361
    %v5363 = vpop.f32.mrb[0].mxu0
    %v5364 = vadd.f32 %v4664, %v5363
    %v5365 = vpop.f32.mrb[0].mxu0
    %v5366 = vadd.f32 %v4660, %v5365
    %v5367 = vpop.f32.mrb[0].mxu0
    %v5368 = vadd.f32 %v4664, %v5367
    %5369 = vmatprep.mubr.bf16.mxu0 0
    %5370 = vmatmul.mubr.bf16.gmra.mrb[0].mxu0 %v4570
    %v5371 = vpop.f32.mrb[0].mxu0
    %v5372 = vadd.f32 %v4660, %v5371
    %v5373 = vpop.f32.mrb[0].mxu0
    %v5374 = vadd.f32 %v4664, %v5373
    %v5375 = vpop.f32.mrb[0].mxu0
    %v5376 = vadd.f32 %v4660, %v5375
    %v5377 = vpop.f32.mrb[0].mxu0
    %v5378 = vadd.f32 %v4664, %v5377
    %5379 = vmatprep.mubr.bf16.mxu0 0
    %5380 = vmatmul.mubr.bf16.gmra.mrb[0].mxu0 %v4571
    %v5381 = vpop.f32.mrb[0].mxu0
    %v5382 = vadd.f32 %v4660, %v5381
    %v5383 = vpop.f32.mrb[0].mxu0
    %v5384 = vadd.f32 %v4664, %v5383
    %v5385 = vpop.f32.mrb[0].mxu0
    %v5386 = vadd.f32 %v4660, %v5385
    %v5387 = vpop.f32.mrb[0].mxu0
    %v5388 = vadd.f32 %v4664, %v5387
    %5389 = vmatprep.mubr.bf16.mxu0 0
    %5390 = vmatmul.mubr.bf16.gmra.mrb[0].mxu0 %v4572
    %v5391 = vpop.f32.mrb[0].mxu0
    %v5392 = vadd.f32 %v4660, %v5391
    %v5393 = vpop.f32.mrb[0].mxu0
    %v5394 = vadd.f32 %v4664, %v5393
    %v5395 = vpop.f32.mrb[0].mxu0
    %v5396 = vadd.f32 %v4660, %v5395
    %v5397 = vpop.f32.mrb[0].mxu0
    %v5398 = vadd.f32 %v4664, %v5397
    %5399 = vmatprep.mubr.bf16.mxu0 0
    %5400 = vmatmul.mubr.bf16.gmra.mrb[0].mxu0 %v4573
    %v5401 = vpop.f32.mrb[0].mxu0
    %v5402 = vadd.f32 %v4660, %v5401
    %v5403 = vpop.f32.mrb[0].mxu0
    %v5404 = vadd.f32 %v4664, %v5403
    %v5405 = vpop.f32.mrb[0].mxu0
    %v5406 = vadd.f32 %v4660, %v5405
    %v5407 = vpop.f32.mrb[0].mxu0
    %v5408 = vadd.f32 %v4664, %v5407
    %5409 = vmatprep.mubr.bf16.mxu0 0
    %5410 = vmatmul.mubr.bf16.gmra.mrb[0].mxu0 %v4574
    %v5411 = vpop.f32.mrb[0].mxu0
    %v5412 = vadd.f32 %v4660, %v5411
    %v5413 = vpop.f32.mrb[0].mxu0
    %v5414 = vadd.f32 %v4664, %v5413
    %v5415 = vpop.f32.mrb[0].mxu0
    %v5416 = vadd.f32 %v4660, %v5415
    %v5417 = vpop.f32.mrb[0].mxu0
    %v5418 = vadd.f32 %v4664, %v5417
    %5419 = vmatprep.mubr.bf16.mxu0 0
    %5420 = vmatmul.mubr.bf16.gmra.mrb[0].mxu0 %v4575
    %v5421 = vpop.f32.mrb[0].mxu0
    %v5422 = vadd.f32 %v4660, %v5421
    %v5423 = vpop.f32.mrb[0].mxu0
    %v5424 = vadd.f32 %v4664, %v5423
    %v5425 = vpop.f32.mrb[0].mxu0
    %v5426 = vadd.f32 %v4660, %v5425
    %v5427 = vpop.f32.mrb[0].mxu0
    %v5428 = vadd.f32 %v4664, %v5427
    %5429 = vmatprep.mubr.bf16.mxu0 0
    %5430 = vmatmul.mubr.bf16.gmra.mrb[0].mxu0 %v4576
    %v5431 = vpop.f32.mrb[0].mxu0
    %v5432 = vadd.f32 %v4660, %v5431
    %v5433 = vpop.f32.mrb[0].mxu0
    %v5434 = vadd.f32 %v4664, %v5433
    %v5435 = vpop.f32.mrb[0].mxu0
    %v5436 = vadd.f32 %v4660, %v5435
    %v5437 = vpop.f32.mrb[0].mxu0
    %v5438 = vadd.f32 %v4664, %v5437
    %5439 = vmatprep.mubr.bf16.mxu0 0
    %5440 = vmatmul.mubr.bf16.gmra.mrb[0].mxu0 %v4577
    %v5441 = vpop.f32.mrb[0].mxu0
    %v5442 = vadd.f32 %v4660, %v5441
    %v5443 = vpop.f32.mrb[0].mxu0
    %v5444 = vadd.f32 %v4664, %v5443
    %v5445 = vpop.f32.mrb[0].mxu0
    %v5446 = vadd.f32 %v4660, %v5445
    %v5447 = vpop.f32.mrb[0].mxu0
    %v5448 = vadd.f32 %v4664, %v5447
    %5449 = vmatprep.mubr.bf16.mxu0 0
    %5450 = vmatmul.mubr.bf16.gmra.mrb[0].mxu0 %v4578
    %v5451 = vpop.f32.mrb[0].mxu0
    %v5452 = vadd.f32 %v4660, %v5451
    %v5453 = vpop.f32.mrb[0].mxu0
    %v5454 = vadd.f32 %v4664, %v5453
    %v5455 = vpop.f32.mrb[0].mxu0
    %v5456 = vadd.f32 %v4660, %v5455
    %v5457 = vpop.f32.mrb[0].mxu0
    %v5458 = vadd.f32 %v4664, %v5457
    %5459 = vmatprep.mubr.bf16.mxu0 0
    %5460 = vmatmul.mubr.bf16.gmra.mrb[0].mxu0 %v4579
    %v5461 = vpop.f32.mrb[0].mxu0
    %v5462 = vadd.f32 %v4660, %v5461
    %v5463 = vpop.f32.mrb[0].mxu0
    %v5464 = vadd.f32 %v4664, %v5463
    %v5465 = vpop.f32.mrb[0].mxu0
    %v5466 = vadd.f32 %v4660, %v5465
    %v5467 = vpop.f32.mrb[0].mxu0
    %v5468 = vadd.f32 %v4664, %v5467
    %5469 = vmatprep.mubr.bf16.mxu0 0
    %5470 = vmatmul.mubr.bf16.gmra.mrb[0].mxu0 %v4580
    %v5471 = vpop.f32.mrb[0].mxu0
    %v5472 = vadd.f32 %v4660, %v5471
    %v5473 = vpop.f32.mrb[0].mxu0
    %v5474 = vadd.f32 %v4664, %v5473
    %v5475 = vpop.f32.mrb[0].mxu0
    %v5476 = vadd.f32 %v4660, %v5475
    %v5477 = vpop.f32.mrb[0].mxu0
    %v5478 = vadd.f32 %v4664, %v5477
    %5479 = vmatprep.mubr.bf16.mxu0 0
    %5480 = vmatmul.mubr.bf16.gmra.mrb[0].mxu0 %v4581
    %v5481 = vpop.f32.mrb[0].mxu0
    %v5482 = vadd.f32 %v4660, %v5481
    %v5483 = vpop.f32.mrb[0].mxu0
    %v5484 = vadd.f32 %v4664, %v5483
    %v5485 = vpop.f32.mrb[0].mxu0
    %v5486 = vadd.f32 %v4660, %v5485
    %v5487 = vpop.f32.mrb[0].mxu0
    %v5488 = vadd.f32 %v4664, %v5487
    %5489 = vmatprep.mubr.bf16.mxu0 0
    %5490 = vmatmul.mubr.bf16.gmra.mrb[0].mxu0 %v4582
    %v5491 = vpop.f32.mrb[0].mxu0
    %v5492 = vadd.f32 %v4660, %v5491
    %v5493 = vpop.f32.mrb[0].mxu0
    %v5494 = vadd.f32 %v4664, %v5493
    %v5495 = vpop.f32.mrb[0].mxu0
    %v5496 = vadd.f32 %v4660, %v5495
    %v5497 = vpop.f32.mrb[0].mxu0
    %v5498 = vadd.f32 %v4664, %v5497
    %5499 = vmatprep.mubr.bf16.mxu0 0
    %5500 = vmatmul.mubr.bf16.gmra.mrb[0].mxu0 %v4583
    %v5501 = vpop.f32.mrb[0].mxu0
    %v5502 = vadd.f32 %v4660, %v5501
    %v5503 = vpop.f32.mrb[0].mxu0
    %v5504 = vadd.f32 %v4664, %v5503
    %v5505 = vpop.f32.mrb[0].mxu0
    %v5506 = vadd.f32 %v4660, %v5505
    %v5507 = vpop.f32.mrb[0].mxu0
    %v5508 = vadd.f32 %v4664, %v5507
    %5509 = vmatprep.mubr.bf16.mxu0 0
    %5510 = vmatmul.mubr.bf16.gmra.mrb[0].mxu0 %v4584
    %v5511 = vpop.f32.mrb[0].mxu0
    %v5512 = vadd.f32 %v4660, %v5511
    %v5513 = vpop.f32.mrb[0].mxu0
    %v5514 = vadd.f32 %v4664, %v5513
    %v5515 = vpop.f32.mrb[0].mxu0
    %v5516 = vadd.f32 %v4660, %v5515
    %v5517 = vpop.f32.mrb[0].mxu0
    %v5518 = vadd.f32 %v4664, %v5517
    %5519 = vmatprep.mubr.bf16.mxu0 0
    %5520 = vmatmul.mubr.bf16.gmra.mrb[0].mxu0 %v4585
    %v5521 = vpop.f32.mrb[0].mxu0
    %v5522 = vadd.f32 %v4660, %v5521
    %v5523 = vpop.f32.mrb[0].mxu0
    %v5524 = vadd.f32 %v4664, %v5523
    %v5525 = vpop.f32.mrb[0].mxu0
    %v5526 = vadd.f32 %v4660, %v5525
    %v5527 = vpop.f32.mrb[0].mxu0
    %v5528 = vadd.f32 %v4664, %v5527
    %5529 = vmatprep.mubr.bf16.mxu0 0
    %5530 = vmatmul.mubr.bf16.gmra.mrb[0].mxu0 %v4586
    %v5531 = vpop.f32.mrb[0].mxu0
    %v5532 = vadd.f32 %v4660, %v5531
    %v5533 = vpop.f32.mrb[0].mxu0
    %v5534 = vadd.f32 %v4664, %v5533
    %v5535 = vpop.f32.mrb[0].mxu0
    %v5536 = vadd.f32 %v4660, %v5535
    %v5537 = vpop.f32.mrb[0].mxu0
    %v5538 = vadd.f32 %v4664, %v5537
    %5539 = vmatprep.mubr.bf16.mxu0 0
    %5540 = vmatmul.mubr.bf16.gmra.mrb[0].mxu0 %v4587
    %v5541 = vpop.f32.mrb[0].mxu0
    %v5542 = vadd.f32 %v4660, %v5541
    %v5543 = vpop.f32.mrb[0].mxu0
    %v5544 = vadd.f32 %v4664, %v5543
    %v5545 = vpop.f32.mrb[0].mxu0
    %v5546 = vadd.f32 %v4660, %v5545
    %v5547 = vpop.f32.mrb[0].mxu0
    %v5548 = vadd.f32 %v4664, %v5547
    %5549 = vmatprep.mubr.bf16.mxu0 0
    %5550 = vmatmul.mubr.bf16.gmra.mrb[0].mxu0 %v4588
    %v5551 = vpop.f32.mrb[0].mxu0
    %v5552 = vadd.f32 %v4660, %v5551
    %v5553 = vpop.f32.mrb[0].mxu0
    %v5554 = vadd.f32 %v4664, %v5553
    %v5555 = vpop.f32.mrb[0].mxu0
    %v5556 = vadd.f32 %v4660, %v5555
    %v5557 = vpop.f32.mrb[0].mxu0
    %v5558 = vadd.f32 %v4664, %v5557
    %5559 = vmatprep.mubr.bf16.mxu0 0
    %5560 = vmatmul.mubr.bf16.gmra.mrb[0].mxu0 %v4589
    %v5561 = vpop.f32.mrb[0].mxu0
    %v5562 = vadd.f32 %v4660, %v5561
    %v5563 = vpop.f32.mrb[0].mxu0
    %v5564 = vadd.f32 %v4664, %v5563
    %v5565 = vpop.f32.mrb[0].mxu0
    %v5566 = vadd.f32 %v4660, %v5565
    %v5567 = vpop.f32.mrb[0].mxu0
    %v5568 = vadd.f32 %v4664, %v5567
    %5569 = vmatprep.mubr.bf16.mxu0 0
    %5570 = vmatmul.mubr.bf16.gmra.mrb[0].mxu0 %v4590
    %v5571 = vpop.f32.mrb[0].mxu0
    %v5572 = vadd.f32 %v4660, %v5571
    %v5573 = vpop.f32.mrb[0].mxu0
    %v5574 = vadd.f32 %v4664, %v5573
    %v5575 = vpop.f32.mrb[0].mxu0
    %v5576 = vadd.f32 %v4660, %v5575
    %v5577 = vpop.f32.mrb[0].mxu0
    %v5578 = vadd.f32 %v4664, %v5577
    %5579 = vmatprep.mubr.bf16.mxu0 0
    %5580 = vmatmul.mubr.bf16.gmra.mrb[0].mxu0 %v4591
    %v5581 = vpop.f32.mrb[0].mxu0
    %v5582 = vadd.f32 %v4660, %v5581
    %v5583 = vpop.f32.mrb[0].mxu0
    %v5584 = vadd.f32 %v4664, %v5583
    %v5585 = vpop.f32.mrb[0].mxu0
    %v5586 = vadd.f32 %v4660, %v5585
    %v5587 = vpop.f32.mrb[0].mxu0
    %v5588 = vadd.f32 %v4664, %v5587
    %5589 = vmatprep.mubr.bf16.mxu0 0
    %5590 = vmatmul.mubr.bf16.gmra.mrb[0].mxu0 %v4592
    %v5591 = vpop.f32.mrb[0].mxu0
    %v5592 = vadd.f32 %v4660, %v5591
    %v5593 = vpop.f32.mrb[0].mxu0
    %v5594 = vadd.f32 %v4664, %v5593
    %v5595 = vpop.f32.mrb[0].mxu0
    %v5596 = vadd.f32 %v4660, %v5595
    %v5597 = vpop.f32.mrb[0].mxu0
    %v5598 = vadd.f32 %v4664, %v5597
    %5599 = vmatprep.mubr.bf16.mxu0 0
    %5600 = vmatmul.mubr.bf16.gmra.mrb[0].mxu0 %v4593
    %v5601 = vpop.f32.mrb[0].mxu0
    %v5602 = vadd.f32 %v4660, %v5601
    %v5603 = vpop.f32.mrb[0].mxu0
    %v5604 = vadd.f32 %v4664, %v5603
    %v5605 = vpop.f32.mrb[0].mxu0
    %v5606 = vadd.f32 %v4660, %v5605
    %v5607 = vpop.f32.mrb[0].mxu0
    %v5608 = vadd.f32 %v4664, %v5607
    %5609 = vmatprep.mubr.bf16.mxu0 0
    %5610 = vmatmul.mubr.bf16.gmra.mrb[0].mxu0 %v4594
    %v5611 = vpop.f32.mrb[0].mxu0
    %v5612 = vadd.f32 %v4660, %v5611
    %v5613 = vpop.f32.mrb[0].mxu0
    %v5614 = vadd.f32 %v4664, %v5613
    %v5615 = vpop.f32.mrb[0].mxu0
    %v5616 = vadd.f32 %v4660, %v5615
    %v5617 = vpop.f32.mrb[0].mxu0
    %v5618 = vadd.f32 %v4664, %v5617
    %5619 = vmatprep.mubr.bf16.mxu0 0
    %5620 = vmatmul.mubr.bf16.gmra.mrb[0].mxu0 %v4595
    %v5621 = vpop.f32.mrb[0].mxu0
    %v5622 = vadd.f32 %v4660, %v5621
    %v5623 = vpop.f32.mrb[0].mxu0
    %v5624 = vadd.f32 %v4664, %v5623
    %v5625 = vpop.f32.mrb[0].mxu0
    %v5626 = vadd.f32 %v4660, %v5625
    %v5627 = vpop.f32.mrb[0].mxu0
    %v5628 = vadd.f32 %v4664, %v5627
    %5629 = vmatprep.mubr.bf16.mxu0 0
    %5630 = vmatmul.mubr.bf16.gmra.mrb[0].mxu0 %v4596
    %v5631 = vpop.f32.mrb[0].mxu0
    %v5632 = vadd.f32 %v4660, %v5631
    %v5633 = vpop.f32.mrb[0].mxu0
    %v5634 = vadd.f32 %v4664, %v5633
    %v5635 = vpop.f32.mrb[0].mxu0
    %v5636 = vadd.f32 %v4660, %v5635
    %v5637 = vpop.f32.mrb[0].mxu0
    %v5638 = vadd.f32 %v4664, %v5637
    %5639 = vmatprep.mubr.bf16.mxu0 0
    %5640 = vmatmul.mubr.bf16.gmra.mrb[0].mxu0 %v4597
    %v5641 = vpop.f32.mrb[0].mxu0
    %v5642 = vadd.f32 %v4660, %v5641
    %v5643 = vpop.f32.mrb[0].mxu0
    %v5644 = vadd.f32 %v4664, %v5643
    %v5645 = vpop.f32.mrb[0].mxu0
    %v5646 = vadd.f32 %v4660, %v5645
    %v5647 = vpop.f32.mrb[0].mxu0
    %v5648 = vadd.f32 %v4664, %v5647
    %5649 = vmatprep.mubr.bf16.mxu0 0
    %5650 = vmatmul.mubr.bf16.gmra.mrb[0].mxu0 %v4598
    %v5651 = vpop.f32.mrb[0].mxu0
    %v5652 = vadd.f32 %v4660, %v5651
    %v5653 = vpop.f32.mrb[0].mxu0
    %v5654 = vadd.f32 %v4664, %v5653
    %v5655 = vpop.f32.mrb[0].mxu0
    %v5656 = vadd.f32 %v4660, %v5655
    %v5657 = vpop.f32.mrb[0].mxu0
    %v5658 = vadd.f32 %v4664, %v5657
    %5659 = vmatprep.mubr.bf16.mxu0 0
    %5660 = vmatmul.mubr.bf16.gmra.mrb[0].mxu0 %v4599
    %v5661 = vpop.f32.mrb[0].mxu0
    %v5662 = vadd.f32 %v4660, %v5661
    %v5663 = vpop.f32.mrb[0].mxu0
    %v5664 = vadd.f32 %v4664, %v5663
    %v5665 = vpop.f32.mrb[0].mxu0
    %v5666 = vadd.f32 %v4660, %v5665
    %v5667 = vpop.f32.mrb[0].mxu0
    %v5668 = vadd.f32 %v4664, %v5667
    %5669 = vmatprep.mubr.bf16.mxu0 0
    %5670 = vmatmul.mubr.bf16.gmra.mrb[0].mxu0 %v4600
    %v5671 = vpop.f32.mrb[0].mxu0
    %v5672 = vadd.f32 %v4660, %v5671
    %v5673 = vpop.f32.mrb[0].mxu0
    %v5674 = vadd.f32 %v4664, %v5673
    %v5675 = vpop.f32.mrb[0].mxu0
    %v5676 = vadd.f32 %v4660, %v5675
    %v5677 = vpop.f32.mrb[0].mxu0
    %v5678 = vadd.f32 %v4664, %v5677
    %5679 = vmatprep.mubr.bf16.mxu0 0
    %5680 = vmatmul.mubr.bf16.gmra.mrb[0].mxu0 %v4601
    %v5681 = vpop.f32.mrb[0].mxu0
    %v5682 = vadd.f32 %v4660, %v5681
    %v5683 = vpop.f32.mrb[0].mxu0
    %v5684 = vadd.f32 %v4664, %v5683
    %v5685 = vpop.f32.mrb[0].mxu0
    %v5686 = vadd.f32 %v4660, %v5685
    %v5687 = vpop.f32.mrb[0].mxu0
    %v5688 = vadd.f32 %v4664, %v5687
    %5689 = vmatprep.mubr.bf16.mxu0 0
    %5690 = vmatmul.mubr.bf16.gmra.mrb[0].mxu0 %v4602
    %v5691 = vpop.f32.mrb[0].mxu0
    %v5692 = vadd.f32 %v4660, %v5691
    %v5693 = vpop.f32.mrb[0].mxu0
    %v5694 = vadd.f32 %v4664, %v5693
    %v5695 = vpop.f32.mrb[0].mxu0
    %v5696 = vadd.f32 %v4660, %v5695
    %v5697 = vpop.f32.mrb[0].mxu0
    %v5698 = vadd.f32 %v4664, %v5697
    %5699 = vmatprep.mubr.bf16.mxu0 0
    %5700 = vmatmul.mubr.bf16.gmra.mrb[0].mxu0 %v4603
    %v5701 = vpop.f32.mrb[0].mxu0
    %v5702 = vadd.f32 %v4660, %v5701
    %v5703 = vpop.f32.mrb[0].mxu0
    %v5704 = vadd.f32 %v4664, %v5703
    %v5705 = vpop.f32.mrb[0].mxu0
    %v5706 = vadd.f32 %v4660, %v5705
    %v5707 = vpop.f32.mrb[0].mxu0
    %v5708 = vadd.f32 %v4664, %v5707
    %5709 = vmatprep.mubr.bf16.mxu0 0
    %5710 = vmatmul.mubr.bf16.gmra.mrb[0].mxu0 %v4604
    %v5711 = vpop.f32.mrb[0].mxu0
    %v5712 = vadd.f32 %v4660, %v5711
    %v5713 = vpop.f32.mrb[0].mxu0
    %v5714 = vadd.f32 %v4664, %v5713
    %v5715 = vpop.f32.mrb[0].mxu0
    %v5716 = vadd.f32 %v4660, %v5715
    %v5717 = vpop.f32.mrb[0].mxu0
    %v5718 = vadd.f32 %v4664, %v5717
    %5719 = vmatprep.mubr.bf16.mxu0 0
    %5720 = vmatmul.mubr.bf16.gmra.mrb[0].mxu0 %v4605
    %v5721 = vpop.f32.mrb[0].mxu0
    %v5722 = vadd.f32 %v4660, %v5721
    %v5723 = vpop.f32.mrb[0].mxu0
    %v5724 = vadd.f32 %v4664, %v5723
    %v5725 = vpop.f32.mrb[0].mxu0
    %v5726 = vadd.f32 %v4660, %v5725
    %v5727 = vpop.f32.mrb[0].mxu0
    %v5728 = vadd.f32 %v4664, %v5727
    %5729 = vmatprep.mubr.bf16.mxu0 0
    %5730 = vmatmul.mubr.bf16.gmra.mrb[0].mxu0 %v4606
    %v5731 = vpop.f32.mrb[0].mxu0
    %v5732 = vadd.f32 %v4660, %v5731
    %v5733 = vpop.f32.mrb[0].mxu0
    %v5734 = vadd.f32 %v4664, %v5733
    %v5735 = vpop.f32.mrb[0].mxu0
    %v5736 = vadd.f32 %v4660, %v5735
    %v5737 = vpop.f32.mrb[0].mxu0
    %v5738 = vadd.f32 %v4664, %v5737
    %5739 = vmatprep.mubr.bf16.mxu0 0
    %5740 = vmatmul.mubr.bf16.gmra.mrb[0].mxu0 %v4607
    %v5741 = vpop.f32.mrb[0].mxu0
    %v5742 = vadd.f32 %v4660, %v5741
    %v5743 = vpop.f32.mrb[0].mxu0
    %v5744 = vadd.f32 %v4664, %v5743
    %v5745 = vpop.f32.mrb[0].mxu0
    %v5746 = vadd.f32 %v4660, %v5745
    %v5747 = vpop.f32.mrb[0].mxu0
    %v5748 = vadd.f32 %v4664, %v5747
    %5749 = vmatprep.mubr.bf16.mxu0 0
    %5750 = vmatmul.mubr.bf16.gmra.mrb[0].mxu0 %v4608
    %v5751 = vpop.f32.mrb[0].mxu0
    %v5752 = vadd.f32 %v4660, %v5751
    %v5753 = vpop.f32.mrb[0].mxu0
    %v5754 = vadd.f32 %v4664, %v5753
    %v5755 = vpop.f32.mrb[0].mxu0
    %v5756 = vadd.f32 %v4660, %v5755
    %v5757 = vpop.f32.mrb[0].mxu0
    %v5758 = vadd.f32 %v4664, %v5757
    %5759 = vmatprep.mubr.bf16.mxu0 0
    %5760 = vmatmul.mubr.bf16.gmra.mrb[0].mxu0 %v4609
    %v5761 = vpop.f32.mrb[0].mxu0
    %v5762 = vadd.f32 %v4660, %v5761
    %v5763 = vpop.f32.mrb[0].mxu0
    %v5764 = vadd.f32 %v4664, %v5763
    %v5765 = vpop.f32.mrb[0].mxu0
    %v5766 = vadd.f32 %v4660, %v5765
    %v5767 = vpop.f32.mrb[0].mxu0
    %v5768 = vadd.f32 %v4664, %v5767
    %5769 = vmatprep.mubr.bf16.mxu0 0
    %5770 = vmatmul.mubr.bf16.gmra.mrb[0].mxu0 %v4610
    %v5771 = vpop.f32.mrb[0].mxu0
    %v5772 = vadd.f32 %v4660, %v5771
    %v5773 = vpop.f32.mrb[0].mxu0
    %v5774 = vadd.f32 %v4664, %v5773
    %v5775 = vpop.f32.mrb[0].mxu0
    %v5776 = vadd.f32 %v4660, %v5775
    %v5777 = vpop.f32.mrb[0].mxu0
    %v5778 = vadd.f32 %v4664, %v5777
    %5779 = vmatprep.mubr.bf16.mxu0 0
    %5780 = vmatmul.mubr.bf16.gmra.mrb[0].mxu0 %v4611
    %v5781 = vpop.f32.mrb[0].mxu0
    %v5782 = vadd.f32 %v4660, %v5781
    %v5783 = vpop.f32.mrb[0].mxu0
    %v5784 = vadd.f32 %v4664, %v5783
    %v5785 = vpop.f32.mrb[0].mxu0
    %v5786 = vadd.f32 %v4660, %v5785
    %v5787 = vpop.f32.mrb[0].mxu0
    %v5788 = vadd.f32 %v4664, %v5787
    %5789 = vmatprep.mubr.bf16.mxu0 0
    %5790 = vmatmul.mubr.bf16.gmra.mrb[0].mxu0 %v4612
    %v5791 = vpop.f32.mrb[0].mxu0
    %v5792 = vadd.f32 %v4660, %v5791
    %v5793 = vpop.f32.mrb[0].mxu0
    %v5794 = vadd.f32 %v4664, %v5793
    %v5795 = vpop.f32.mrb[0].mxu0
    %v5796 = vadd.f32 %v4660, %v5795
    %v5797 = vpop.f32.mrb[0].mxu0
    %v5798 = vadd.f32 %v4664, %v5797
    %5799 = vmatprep.mubr.bf16.mxu0 0
    %5800 = vmatmul.mubr.bf16.gmra.mrb[0].mxu0 %v4613
    %v5801 = vpop.f32.mrb[0].mxu0
    %v5802 = vadd.f32 %v4660, %v5801
    %v5803 = vpop.f32.mrb[0].mxu0
    %v5804 = vadd.f32 %v4664, %v5803
    %v5805 = vpop.f32.mrb[0].mxu0
    %v5806 = vadd.f32 %v4660, %v5805
    %v5807 = vpop.f32.mrb[0].mxu0
    %v5808 = vadd.f32 %v4664, %v5807
    %5809 = vmatprep.mubr.bf16.mxu0 0
    %5810 = vmatmul.mubr.bf16.gmra.mrb[0].mxu0 %v4614
    %v5811 = vpop.f32.mrb[0].mxu0
    %v5812 = vadd.f32 %v4660, %v5811
    %v5813 = vpop.f32.mrb[0].mxu0
    %v5814 = vadd.f32 %v4664, %v5813
    %v5815 = vpop.f32.mrb[0].mxu0
    %v5816 = vadd.f32 %v4660, %v5815
    %v5817 = vpop.f32.mrb[0].mxu0
    %v5818 = vadd.f32 %v4664, %v5817
    %5819 = vmatprep.mubr.bf16.mxu0 0
    %5820 = vmatmul.mubr.bf16.gmra.mrb[0].mxu0 %v4615
    %v5821 = vpop.f32.mrb[0].mxu0
    %v5822 = vadd.f32 %v4660, %v5821
    %v5823 = vpop.f32.mrb[0].mxu0
    %v5824 = vadd.f32 %v4664, %v5823
    %v5825 = vpop.f32.mrb[0].mxu0
    %v5826 = vadd.f32 %v4660, %v5825
    %v5827 = vpop.f32.mrb[0].mxu0
    %v5828 = vadd.f32 %v4664, %v5827
    %5829 = vmatprep.mubr.bf16.mxu0 0
    %5830 = vmatmul.mubr.bf16.gmra.mrb[0].mxu0 %v4616
    %v5831 = vpop.f32.mrb[0].mxu0
    %v5832 = vadd.f32 %v4660, %v5831
    %v5833 = vpop.f32.mrb[0].mxu0
    %v5834 = vadd.f32 %v4664, %v5833
    %v5835 = vpop.f32.mrb[0].mxu0
    %v5836 = vadd.f32 %v4660, %v5835
    %v5837 = vpop.f32.mrb[0].mxu0
    %v5838 = vadd.f32 %v4664, %v5837
    %5839 = vmatprep.mubr.bf16.mxu0 0
    %5840 = vmatmul.mubr.bf16.gmra.mrb[0].mxu0 %v4617
    %v5841 = vpop.f32.mrb[0].mxu0
    %v5842 = vadd.f32 %v4660, %v5841
    %v5843 = vpop.f32.mrb[0].mxu0
    %v5844 = vadd.f32 %v4664, %v5843
    %v5845 = vpop.f32.mrb[0].mxu0
    %v5846 = vadd.f32 %v4660, %v5845
    %v5847 = vpop.f32.mrb[0].mxu0
    %v5848 = vadd.f32 %v4664, %v5847
    %5849 = vmatprep.mubr.bf16.mxu0 0
    %5850 = vmatmul.mubr.bf16.gmra.mrb[0].mxu0 %v4618
    %v5851 = vpop.f32.mrb[0].mxu0
    %v5852 = vadd.f32 %v4660, %v5851
    %v5853 = vpop.f32.mrb[0].mxu0
    %v5854 = vadd.f32 %v4664, %v5853
    %v5855 = vpop.f32.mrb[0].mxu0
    %v5856 = vadd.f32 %v4660, %v5855
    %v5857 = vpop.f32.mrb[0].mxu0
    %v5858 = vadd.f32 %v4664, %v5857
    %5859 = vmatprep.mubr.bf16.mxu0 0
    %5860 = vmatmul.mubr.bf16.gmra.mrb[0].mxu0 %v4619
    %v5861 = vpop.f32.mrb[0].mxu0
    %v5862 = vadd.f32 %v4660, %v5861
    %v5863 = vpop.f32.mrb[0].mxu0
    %v5864 = vadd.f32 %v4664, %v5863
    %v5865 = vpop.f32.mrb[0].mxu0
    %v5866 = vadd.f32 %v4660, %v5865
    %v5867 = vpop.f32.mrb[0].mxu0
    %v5868 = vadd.f32 %v4664, %v5867
    %5869 = vmatprep.mubr.bf16.mxu0 0
    %5870 = vmatmul.mubr.bf16.gmra.mrb[0].mxu0 %v4620
    %v5871 = vpop.f32.mrb[0].mxu0
    %v5872 = vadd.f32 %v4660, %v5871
    %v5873 = vpop.f32.mrb[0].mxu0
    %v5874 = vadd.f32 %v4664, %v5873
    %v5875 = vpop.f32.mrb[0].mxu0
    %v5876 = vadd.f32 %v4660, %v5875
    %v5877 = vpop.f32.mrb[0].mxu0
    %v5878 = vadd.f32 %v4664, %v5877
    %5879 = vmatprep.mubr.bf16.mxu0 0
    %5880 = vmatmul.mubr.bf16.gmra.mrb[0].mxu0 %v4621
    %v5881 = vpop.f32.mrb[0].mxu0
    %v5882 = vadd.f32 %v4660, %v5881
    %v5883 = vpop.f32.mrb[0].mxu0
    %v5884 = vadd.f32 %v4664, %v5883
    %v5885 = vpop.f32.mrb[0].mxu0
    %v5886 = vadd.f32 %v4660, %v5885
    %v5887 = vpop.f32.mrb[0].mxu0
    %v5888 = vadd.f32 %v4664, %v5887
    %5889 = vmatprep.mubr.bf16.mxu0 0
    %5890 = vmatmul.mubr.bf16.gmra.mrb[0].mxu0 %v4622
    %v5891 = vpop.f32.mrb[0].mxu0
    %v5892 = vadd.f32 %v4660, %v5891
    %v5893 = vpop.f32.mrb[0].mxu0
    %v5894 = vadd.f32 %v4664, %v5893
    %v5895 = vpop.f32.mrb[0].mxu0
    %v5896 = vadd.f32 %v4660, %v5895
    %v5897 = vpop.f32.mrb[0].mxu0
    %v5898 = vadd.f32 %v4664, %v5897
    %5899 = vmatprep.mubr.bf16.mxu0 0
    %5900 = vmatmul.mubr.bf16.gmra.mrb[0].mxu0 %v4623
    %v5901 = vpop.f32.mrb[0].mxu0
    %v5902 = vadd.f32 %v4660, %v5901
    %v5903 = vpop.f32.mrb[0].mxu0
    %v5904 = vadd.f32 %v4664, %v5903
    %v5905 = vpop.f32.mrb[0].mxu0
    %v5906 = vadd.f32 %v4660, %v5905
    %v5907 = vpop.f32.mrb[0].mxu0
    %v5908 = vadd.f32 %v4664, %v5907
    %5909 = vmatprep.mubr.bf16.mxu0 0
    %5910 = vmatmul.mubr.bf16.gmra.mrb[0].mxu0 %v4624
    %v5911 = vpop.f32.mrb[0].mxu0
    %v5912 = vadd.f32 %v4660, %v5911
    %v5913 = vpop.f32.mrb[0].mxu0
    %v5914 = vadd.f32 %v4664, %v5913
    %v5915 = vpop.f32.mrb[0].mxu0
    %v5916 = vadd.f32 %v4660, %v5915
    %v5917 = vpop.f32.mrb[0].mxu0
    %v5918 = vadd.f32 %v4664, %v5917
    %5919 = vmatprep.mubr.bf16.mxu0 0
    %5920 = vmatmul.mubr.bf16.gmra.mrb[0].mxu0 %v4625
    %v5921 = vpop.f32.mrb[0].mxu0
    %v5922 = vadd.f32 %v4660, %v5921
    %v5923 = vpop.f32.mrb[0].mxu0
    %v5924 = vadd.f32 %v4664, %v5923
    %v5925 = vpop.f32.mrb[0].mxu0
    %v5926 = vadd.f32 %v4660, %v5925
    %v5927 = vpop.f32.mrb[0].mxu0
    %v5928 = vadd.f32 %v4664, %v5927
    %5929 = vmatprep.mubr.bf16.mxu0 0
    %5930 = vmatmul.mubr.bf16.gmra.mrb[0].mxu0 %v4626
    %v5931 = vpop.f32.mrb[0].mxu0
    %v5932 = vadd.f32 %v4660, %v5931
    %v5933 = vpop.f32.mrb[0].mxu0
    %v5934 = vadd.f32 %v4664, %v5933
    %v5935 = vpop.f32.mrb[0].mxu0
    %v5936 = vadd.f32 %v4660, %v5935
    %v5937 = vpop.f32.mrb[0].mxu0
    %v5938 = vadd.f32 %v4664, %v5937
    %5939 = vmatprep.mubr.bf16.mxu0 0
    %5940 = vmatmul.mubr.bf16.gmra.mrb[0].mxu0 %v4627
    %v5941 = vpop.f32.mrb[0].mxu0
    %v5942 = vadd.f32 %v4660, %v5941
    %v5943 = vpop.f32.mrb[0].mxu0
    %v5944 = vadd.f32 %v4664, %v5943
    %v5945 = vpop.f32.mrb[0].mxu0
    %v5946 = vadd.f32 %v4660, %v5945
    %v5947 = vpop.f32.mrb[0].mxu0
    %v5948 = vadd.f32 %v4664, %v5947
    %5949 = vmatprep.mubr.bf16.mxu0 0
    %5950 = vmatmul.mubr.bf16.gmra.mrb[0].mxu0 %v4628
    %v5951 = vpop.f32.mrb[0].mxu0
    %v5952 = vadd.f32 %v4660, %v5951
    %v5953 = vpop.f32.mrb[0].mxu0
    %v5954 = vadd.f32 %v4664, %v5953
    %v5955 = vpop.f32.mrb[0].mxu0
    %v5956 = vadd.f32 %v4660, %v5955
    %v5957 = vpop.f32.mrb[0].mxu0
    %v5958 = vadd.f32 %v4664, %v5957
    %5959 = vmatprep.mubr.bf16.mxu0 0
    %5960 = vmatmul.mubr.bf16.gmra.mrb[0].mxu0 %v4629
    %v5961 = vpop.f32.mrb[0].mxu0
    %v5962 = vadd.f32 %v4660, %v5961
    %v5963 = vpop.f32.mrb[0].mxu0
    %v5964 = vadd.f32 %v4664, %v5963
    %v5965 = vpop.f32.mrb[0].mxu0
    %v5966 = vadd.f32 %v4660, %v5965
    %v5967 = vpop.f32.mrb[0].mxu0
    %v5968 = vadd.f32 %v4664, %v5967
    %5969 = vmatprep.mubr.bf16.mxu0 0
    %5970 = vmatmul.mubr.bf16.gmra.mrb[0].mxu0 %v4630
    %v5971 = vpop.f32.mrb[0].mxu0
    %v5972 = vadd.f32 %v4660, %v5971
    %v5973 = vpop.f32.mrb[0].mxu0
    %v5974 = vadd.f32 %v4664, %v5973
    %v5975 = vpop.f32.mrb[0].mxu0
    %v5976 = vadd.f32 %v4660, %v5975
    %v5977 = vpop.f32.mrb[0].mxu0
    %v5978 = vadd.f32 %v4664, %v5977
    %5979 = vmatprep.mubr.bf16.mxu0 0
    %5980 = vmatmul.mubr.bf16.gmra.mrb[0].mxu0 %v4631
    %v5981 = vpop.f32.mrb[0].mxu0
    %v5982 = vadd.f32 %v4660, %v5981
    %v5983 = vpop.f32.mrb[0].mxu0
    %v5984 = vadd.f32 %v4664, %v5983
    %v5985 = vpop.f32.mrb[0].mxu0
    %v5986 = vadd.f32 %v4660, %v5985
    %v5987 = vpop.f32.mrb[0].mxu0
    %v5988 = vadd.f32 %v4664, %v5987
    %5989 = vmatprep.mubr.bf16.mxu0 0
    %5990 = vmatmul.mubr.bf16.gmra.mrb[0].mxu0 %v4632
    %v5991 = vpop.f32.mrb[0].mxu0
    %v5992 = vadd.f32 %v4660, %v5991
    %v5993 = vpop.f32.mrb[0].mxu0
    %v5994 = vadd.f32 %v4664, %v5993
    %v5995 = vpop.f32.mrb[0].mxu0
    %v5996 = vadd.f32 %v4660, %v5995
    %v5997 = vpop.f32.mrb[0].mxu0
    %v5998 = vadd.f32 %v4664, %v5997
    %5999 = vmatprep.mubr.bf16.mxu0 0
    %6000 = vmatmul.mubr.bf16.gmra.mrb[0].mxu0 %v4633
    %v6001 = vpop.f32.mrb[0].mxu0
    %v6002 = vadd.f32 %v4660, %v6001
    %v6003 = vpop.f32.mrb[0].mxu0
    %v6004 = vadd.f32 %v4664, %v6003
    %v6005 = vpop.f32.mrb[0].mxu0
    %v6006 = vadd.f32 %v4660, %v6005
    %v6007 = vpop.f32.mrb[0].mxu0
    %v6008 = vadd.f32 %v4664, %v6007
    %6009 = vmatprep.mubr.bf16.mxu0 0
    %6010 = vmatmul.mubr.bf16.gmra.mrb[0].mxu0 %v4634
    %v6011 = vpop.f32.mrb[0].mxu0
    %v6012 = vadd.f32 %v4660, %v6011
    %v6013 = vpop.f32.mrb[0].mxu0
    %v6014 = vadd.f32 %v4664, %v6013
    %v6015 = vpop.f32.mrb[0].mxu0
    %v6016 = vadd.f32 %v4660, %v6015
    %v6017 = vpop.f32.mrb[0].mxu0
    %v6018 = vadd.f32 %v4664, %v6017
    %6019 = vmatprep.mubr.bf16.mxu0 0
    %6020 = vmatmul.mubr.bf16.gmra.mrb[0].mxu0 %v4635
    %v6021 = vpop.f32.mrb[0].mxu0
    %v6022 = vadd.f32 %v4660, %v6021
    %v6023 = vpop.f32.mrb[0].mxu0
    %v6024 = vadd.f32 %v4664, %v6023
    %v6025 = vpop.f32.mrb[0].mxu0
    %v6026 = vadd.f32 %v4660, %v6025
    %v6027 = vpop.f32.mrb[0].mxu0
    %v6028 = vadd.f32 %v4664, %v6027
    %6029 = vmatprep.mubr.bf16.mxu0 0
    %6030 = vmatmul.mubr.bf16.gmra.mrb[0].mxu0 %v4636
    %v6031 = vpop.f32.mrb[0].mxu0
    %v6032 = vadd.f32 %v4660, %v6031
    %v6033 = vpop.f32.mrb[0].mxu0
    %v6034 = vadd.f32 %v4664, %v6033
    %v6035 = vpop.f32.mrb[0].mxu0
    %v6036 = vadd.f32 %v4660, %v6035
    %v6037 = vpop.f32.mrb[0].mxu0
    %v6038 = vadd.f32 %v4664, %v6037
    %6039 = vmatprep.mubr.bf16.mxu0 0
    %6040 = vmatmul.mubr.bf16.gmra.mrb[0].mxu0 %v4637
    %v6041 = vpop.f32.mrb[0].mxu0
    %v6042 = vadd.f32 %v4660, %v6041
    %v6043 = vpop.f32.mrb[0].mxu0
    %v6044 = vadd.f32 %v4664, %v6043
    %v6045 = vpop.f32.mrb[0].mxu0
    %v6046 = vadd.f32 %v4660, %v6045
    %v6047 = vpop.f32.mrb[0].mxu0
    %v6048 = vadd.f32 %v4664, %v6047
    %6049 = vmatprep.mubr.bf16.mxu0 0
    %6050 = vmatmul.mubr.bf16.gmra.mrb[0].mxu0 %v4638
    %v6051 = vpop.f32.mrb[0].mxu0
    %v6052 = vadd.f32 %v4660, %v6051
    %v6053 = vpop.f32.mrb[0].mxu0
    %v6054 = vadd.f32 %v4664, %v6053
    %v6055 = vpop.f32.mrb[0].mxu0
    %v6056 = vadd.f32 %v4660, %v6055
    %v6057 = vpop.f32.mrb[0].mxu0
    %v6058 = vadd.f32 %v4664, %v6057
    %6059 = vdwg.mxu0
    %v6060 = vmax.f32 %v4782, %v4786
    %v6061 = vmax.f32 %v6060, %v4792
    %v6062 = vmax.f32 %v6061, %v4796
    %v6063 = vmax.f32 %v6062, %v4802
    %v6064 = vmax.f32 %v6063, %v4806
    %v6065 = vmax.f32 %v6064, %v4812
    %v6066 = vmax.f32 %v6065, %v4816
    %v6067 = vmax.f32 %v6066, %v4822
    %v6068 = vmax.f32 %v6067, %v4826
    %v6069 = vmax.f32 %v6068, %v4832
    %v6070 = vmax.f32 %v6069, %v4836
    %v6071 = vmax.f32 %v6070, %v4842
    %v6072 = vmax.f32 %v6071, %v4846
    %v6073 = vmax.f32 %v6072, %v4852
    %v6074 = vmax.f32 %v6073, %v4856
    %v6075 = vrot.slane %v6074, 4
    %v6076 = vmax.f32 %v6074, %v6075
    %v6077 = vrot.slane %v6076, 2
    %v6078 = vmax.f32 %v6076, %v6077
    %v6079 = vrot.slane %v6078, 1
    %v6080 = vmax.f32 %v6078, %v6079
    %v6081 = vmax.f32 %v4784, %v4788
    %v6082 = vmax.f32 %v6081, %v4794
    %v6083 = vmax.f32 %v6082, %v4798
    %v6084 = vmax.f32 %v6083, %v4804
    %v6085 = vmax.f32 %v6084, %v4808
    %v6086 = vmax.f32 %v6085, %v4814
    %v6087 = vmax.f32 %v6086, %v4818
    %v6088 = vmax.f32 %v6087, %v4824
    %v6089 = vmax.f32 %v6088, %v4828
    %v6090 = vmax.f32 %v6089, %v4834
    %v6091 = vmax.f32 %v6090, %v4838
    %v6092 = vmax.f32 %v6091, %v4844
    %v6093 = vmax.f32 %v6092, %v4848
    %v6094 = vmax.f32 %v6093, %v4854
    %v6095 = vmax.f32 %v6094, %v4858
    %v6096 = vrot.slane %v6095, 4
    %v6097 = vmax.f32 %v6095, %v6096
    %v6098 = vrot.slane %v6097, 2
    %v6099 = vmax.f32 %v6097, %v6098
    %v6100 = vrot.slane %v6099, 1
    %v6101 = vmax.f32 %v6099, %v6100
    %v6102 = vmax.f32 %v4862, %v4866
    %v6103 = vmax.f32 %v6102, %v4872
    %v6104 = vmax.f32 %v6103, %v4876
    %v6105 = vmax.f32 %v6104, %v4882
    %v6106 = vmax.f32 %v6105, %v4886
    %v6107 = vmax.f32 %v6106, %v4892
    %v6108 = vmax.f32 %v6107, %v4896
    %v6109 = vmax.f32 %v6108, %v4902
    %v6110 = vmax.f32 %v6109, %v4906
    %v6111 = vmax.f32 %v6110, %v4912
    %v6112 = vmax.f32 %v6111, %v4916
    %v6113 = vmax.f32 %v6112, %v4922
    %v6114 = vmax.f32 %v6113, %v4926
    %v6115 = vmax.f32 %v6114, %v4932
    %v6116 = vmax.f32 %v6115, %v4936
    %v6117 = vrot.slane %v6116, 4
    %v6118 = vmax.f32 %v6116, %v6117
    %v6119 = vrot.slane %v6118, 2
    %v6120 = vmax.f32 %v6118, %v6119
    %v6121 = vrot.slane %v6120, 1
    %v6122 = vmax.f32 %v6120, %v6121
    %v6123 = vmax.f32 %v4864, %v4868
    %v6124 = vmax.f32 %v6123, %v4874
    %v6125 = vmax.f32 %v6124, %v4878
    %v6126 = vmax.f32 %v6125, %v4884
    %v6127 = vmax.f32 %v6126, %v4888
    %v6128 = vmax.f32 %v6127, %v4894
    %v6129 = vmax.f32 %v6128, %v4898
    %v6130 = vmax.f32 %v6129, %v4904
    %v6131 = vmax.f32 %v6130, %v4908
    %v6132 = vmax.f32 %v6131, %v4914
    %v6133 = vmax.f32 %v6132, %v4918
    %v6134 = vmax.f32 %v6133, %v4924
    %v6135 = vmax.f32 %v6134, %v4928
    %v6136 = vmax.f32 %v6135, %v4934
    %v6137 = vmax.f32 %v6136, %v4938
    %v6138 = vrot.slane %v6137, 4
    %v6139 = vmax.f32 %v6137, %v6138
    %v6140 = vrot.slane %v6139, 2
    %v6141 = vmax.f32 %v6139, %v6140
    %v6142 = vrot.slane %v6141, 1
    %v6143 = vmax.f32 %v6141, %v6142
    %v6144 = vmax.f32 %v4942, %v4946
    %v6145 = vmax.f32 %v6144, %v4952
    %v6146 = vmax.f32 %v6145, %v4956
    %v6147 = vmax.f32 %v6146, %v4962
    %v6148 = vmax.f32 %v6147, %v4966
    %v6149 = vmax.f32 %v6148, %v4972
    %v6150 = vmax.f32 %v6149, %v4976
    %v6151 = vmax.f32 %v6150, %v4982
    %v6152 = vmax.f32 %v6151, %v4986
    %v6153 = vmax.f32 %v6152, %v4992
    %v6154 = vmax.f32 %v6153, %v4996
    %v6155 = vmax.f32 %v6154, %v5002
    %v6156 = vmax.f32 %v6155, %v5006
    %v6157 = vmax.f32 %v6156, %v5012
    %v6158 = vmax.f32 %v6157, %v5016
    %v6159 = vrot.slane %v6158, 4
    %v6160 = vmax.f32 %v6158, %v6159
    %v6161 = vrot.slane %v6160, 2
    %v6162 = vmax.f32 %v6160, %v6161
    %v6163 = vrot.slane %v6162, 1
    %v6164 = vmax.f32 %v6162, %v6163
    %v6165 = vmax.f32 %v4944, %v4948
    %v6166 = vmax.f32 %v6165, %v4954
    %v6167 = vmax.f32 %v6166, %v4958
    %v6168 = vmax.f32 %v6167, %v4964
    %v6169 = vmax.f32 %v6168, %v4968
    %v6170 = vmax.f32 %v6169, %v4974
    %v6171 = vmax.f32 %v6170, %v4978
    %v6172 = vmax.f32 %v6171, %v4984
    %v6173 = vmax.f32 %v6172, %v4988
    %v6174 = vmax.f32 %v6173, %v4994
    %v6175 = vmax.f32 %v6174, %v4998
    %v6176 = vmax.f32 %v6175, %v5004
    %v6177 = vmax.f32 %v6176, %v5008
    %v6178 = vmax.f32 %v6177, %v5014
    %v6179 = vmax.f32 %v6178, %v5018
    %v6180 = vrot.slane %v6179, 4
    %v6181 = vmax.f32 %v6179, %v6180
    %v6182 = vrot.slane %v6181, 2
    %v6183 = vmax.f32 %v6181, %v6182
    %v6184 = vrot.slane %v6183, 1
    %v6185 = vmax.f32 %v6183, %v6184
    %v6186 = vmax.f32 %v5022, %v5026
    %v6187 = vmax.f32 %v6186, %v5032
    %v6188 = vmax.f32 %v6187, %v5036
    %v6189 = vmax.f32 %v6188, %v5042
    %v6190 = vmax.f32 %v6189, %v5046
    %v6191 = vmax.f32 %v6190, %v5052
    %v6192 = vmax.f32 %v6191, %v5056
    %v6193 = vmax.f32 %v6192, %v5062
    %v6194 = vmax.f32 %v6193, %v5066
    %v6195 = vmax.f32 %v6194, %v5072
    %v6196 = vmax.f32 %v6195, %v5076
    %v6197 = vmax.f32 %v6196, %v5082
    %v6198 = vmax.f32 %v6197, %v5086
    %v6199 = vmax.f32 %v6198, %v5092
    %v6200 = vmax.f32 %v6199, %v5096
    %v6201 = vrot.slane %v6200, 4
    %v6202 = vmax.f32 %v6200, %v6201
    %v6203 = vrot.slane %v6202, 2
    %v6204 = vmax.f32 %v6202, %v6203
    %v6205 = vrot.slane %v6204, 1
    %v6206 = vmax.f32 %v6204, %v6205
    %v6207 = vmax.f32 %v5024, %v5028
    %v6208 = vmax.f32 %v6207, %v5034
    %v6209 = vmax.f32 %v6208, %v5038
    %v6210 = vmax.f32 %v6209, %v5044
    %v6211 = vmax.f32 %v6210, %v5048
    %v6212 = vmax.f32 %v6211, %v5054
    %v6213 = vmax.f32 %v6212, %v5058
    %v6214 = vmax.f32 %v6213, %v5064
    %v6215 = vmax.f32 %v6214, %v5068
    %v6216 = vmax.f32 %v6215, %v5074
    %v6217 = vmax.f32 %v6216, %v5078
    %v6218 = vmax.f32 %v6217, %v5084
    %v6219 = vmax.f32 %v6218, %v5088
    %v6220 = vmax.f32 %v6219, %v5094
    %v6221 = vmax.f32 %v6220, %v5098
    %v6222 = vrot.slane %v6221, 4
    %v6223 = vmax.f32 %v6221, %v6222
    %v6224 = vrot.slane %v6223, 2
    %v6225 = vmax.f32 %v6223, %v6224
    %v6226 = vrot.slane %v6225, 1
    %v6227 = vmax.f32 %v6225, %v6226
    %v6228 = vmax.f32 %v5102, %v5106
    %v6229 = vmax.f32 %v6228, %v5112
    %v6230 = vmax.f32 %v6229, %v5116
    %v6231 = vmax.f32 %v6230, %v5122
    %v6232 = vmax.f32 %v6231, %v5126
    %v6233 = vmax.f32 %v6232, %v5132
    %v6234 = vmax.f32 %v6233, %v5136
    %v6235 = vmax.f32 %v6234, %v5142
    %v6236 = vmax.f32 %v6235, %v5146
    %v6237 = vmax.f32 %v6236, %v5152
    %v6238 = vmax.f32 %v6237, %v5156
    %v6239 = vmax.f32 %v6238, %v5162
    %v6240 = vmax.f32 %v6239, %v5166
    %v6241 = vmax.f32 %v6240, %v5172
    %v6242 = vmax.f32 %v6241, %v5176
    %v6243 = vrot.slane %v6242, 4
    %v6244 = vmax.f32 %v6242, %v6243
    %v6245 = vrot.slane %v6244, 2
    %v6246 = vmax.f32 %v6244, %v6245
    %v6247 = vrot.slane %v6246, 1
    %v6248 = vmax.f32 %v6246, %v6247
    %v6249 = vmax.f32 %v5104, %v5108
    %v6250 = vmax.f32 %v6249, %v5114
    %v6251 = vmax.f32 %v6250, %v5118
    %v6252 = vmax.f32 %v6251, %v5124
    %v6253 = vmax.f32 %v6252, %v5128
    %v6254 = vmax.f32 %v6253, %v5134
    %v6255 = vmax.f32 %v6254, %v5138
    %v6256 = vmax.f32 %v6255, %v5144
    %v6257 = vmax.f32 %v6256, %v5148
    %v6258 = vmax.f32 %v6257, %v5154
    %v6259 = vmax.f32 %v6258, %v5158
    %v6260 = vmax.f32 %v6259, %v5164
    %v6261 = vmax.f32 %v6260, %v5168
    %v6262 = vmax.f32 %v6261, %v5174
    %v6263 = vmax.f32 %v6262, %v5178
    %v6264 = vrot.slane %v6263, 4
    %v6265 = vmax.f32 %v6263, %v6264
    %v6266 = vrot.slane %v6265, 2
    %v6267 = vmax.f32 %v6265, %v6266
    %v6268 = vrot.slane %v6267, 1
    %v6269 = vmax.f32 %v6267, %v6268
    %v6270 = vmax.f32 %v5182, %v5186
    %v6271 = vmax.f32 %v6270, %v5192
    %v6272 = vmax.f32 %v6271, %v5196
    %v6273 = vmax.f32 %v6272, %v5202
    %v6274 = vmax.f32 %v6273, %v5206
    %v6275 = vmax.f32 %v6274, %v5212
    %v6276 = vmax.f32 %v6275, %v5216
    %v6277 = vmax.f32 %v6276, %v5222
    %v6278 = vmax.f32 %v6277, %v5226
    %v6279 = vmax.f32 %v6278, %v5232
    %v6280 = vmax.f32 %v6279, %v5236
    %v6281 = vmax.f32 %v6280, %v5242
    %v6282 = vmax.f32 %v6281, %v5246
    %v6283 = vmax.f32 %v6282, %v5252
    %v6284 = vmax.f32 %v6283, %v5256
    %v6285 = vrot.slane %v6284, 4
    %v6286 = vmax.f32 %v6284, %v6285
    %v6287 = vrot.slane %v6286, 2
    %v6288 = vmax.f32 %v6286, %v6287
    %v6289 = vrot.slane %v6288, 1
    %v6290 = vmax.f32 %v6288, %v6289
    %v6291 = vmax.f32 %v5184, %v5188
    %v6292 = vmax.f32 %v6291, %v5194
    %v6293 = vmax.f32 %v6292, %v5198
    %v6294 = vmax.f32 %v6293, %v5204
    %v6295 = vmax.f32 %v6294, %v5208
    %v6296 = vmax.f32 %v6295, %v5214
    %v6297 = vmax.f32 %v6296, %v5218
    %v6298 = vmax.f32 %v6297, %v5224
    %v6299 = vmax.f32 %v6298, %v5228
    %v6300 = vmax.f32 %v6299, %v5234
    %v6301 = vmax.f32 %v6300, %v5238
    %v6302 = vmax.f32 %v6301, %v5244
    %v6303 = vmax.f32 %v6302, %v5248
    %v6304 = vmax.f32 %v6303, %v5254
    %v6305 = vmax.f32 %v6304, %v5258
    %v6306 = vrot.slane %v6305, 4
    %v6307 = vmax.f32 %v6305, %v6306
    %v6308 = vrot.slane %v6307, 2
    %v6309 = vmax.f32 %v6307, %v6308
    %v6310 = vrot.slane %v6309, 1
    %v6311 = vmax.f32 %v6309, %v6310
    %v6312 = vmax.f32 %v5262, %v5266
    %v6313 = vmax.f32 %v6312, %v5272
    %v6314 = vmax.f32 %v6313, %v5276
    %v6315 = vmax.f32 %v6314, %v5282
    %v6316 = vmax.f32 %v6315, %v5286
    %v6317 = vmax.f32 %v6316, %v5292
    %v6318 = vmax.f32 %v6317, %v5296
    %v6319 = vmax.f32 %v6318, %v5302
    %v6320 = vmax.f32 %v6319, %v5306
    %v6321 = vmax.f32 %v6320, %v5312
    %v6322 = vmax.f32 %v6321, %v5316
    %v6323 = vmax.f32 %v6322, %v5322
    %v6324 = vmax.f32 %v6323, %v5326
    %v6325 = vmax.f32 %v6324, %v5332
    %v6326 = vmax.f32 %v6325, %v5336
    %v6327 = vrot.slane %v6326, 4
    %v6328 = vmax.f32 %v6326, %v6327
    %v6329 = vrot.slane %v6328, 2
    %v6330 = vmax.f32 %v6328, %v6329
    %v6331 = vrot.slane %v6330, 1
    %v6332 = vmax.f32 %v6330, %v6331
    %v6333 = vmax.f32 %v5264, %v5268
    %v6334 = vmax.f32 %v6333, %v5274
    %v6335 = vmax.f32 %v6334, %v5278
    %v6336 = vmax.f32 %v6335, %v5284
    %v6337 = vmax.f32 %v6336, %v5288
    %v6338 = vmax.f32 %v6337, %v5294
    %v6339 = vmax.f32 %v6338, %v5298
    %v6340 = vmax.f32 %v6339, %v5304
    %v6341 = vmax.f32 %v6340, %v5308
    %v6342 = vmax.f32 %v6341, %v5314
    %v6343 = vmax.f32 %v6342, %v5318
    %v6344 = vmax.f32 %v6343, %v5324
    %v6345 = vmax.f32 %v6344, %v5328
    %v6346 = vmax.f32 %v6345, %v5334
    %v6347 = vmax.f32 %v6346, %v5338
    %v6348 = vrot.slane %v6347, 4
    %v6349 = vmax.f32 %v6347, %v6348
    %v6350 = vrot.slane %v6349, 2
    %v6351 = vmax.f32 %v6349, %v6350
    %v6352 = vrot.slane %v6351, 1
    %v6353 = vmax.f32 %v6351, %v6352
    %v6354 = vmax.f32 %v5342, %v5346
    %v6355 = vmax.f32 %v6354, %v5352
    %v6356 = vmax.f32 %v6355, %v5356
    %v6357 = vmax.f32 %v6356, %v5362
    %v6358 = vmax.f32 %v6357, %v5366
    %v6359 = vmax.f32 %v6358, %v5372
    %v6360 = vmax.f32 %v6359, %v5376
    %v6361 = vmax.f32 %v6360, %v5382
    %v6362 = vmax.f32 %v6361, %v5386
    %v6363 = vmax.f32 %v6362, %v5392
    %v6364 = vmax.f32 %v6363, %v5396
    %v6365 = vmax.f32 %v6364, %v5402
    %v6366 = vmax.f32 %v6365, %v5406
    %v6367 = vmax.f32 %v6366, %v5412
    %v6368 = vmax.f32 %v6367, %v5416
    %v6369 = vrot.slane %v6368, 4
    %v6370 = vmax.f32 %v6368, %v6369
    %v6371 = vrot.slane %v6370, 2
    %v6372 = vmax.f32 %v6370, %v6371
    %v6373 = vrot.slane %v6372, 1
    %v6374 = vmax.f32 %v6372, %v6373
    %v6375 = vmax.f32 %v5344, %v5348
    %v6376 = vmax.f32 %v6375, %v5354
    %v6377 = vmax.f32 %v6376, %v5358
    %v6378 = vmax.f32 %v6377, %v5364
    %v6379 = vmax.f32 %v6378, %v5368
    %v6380 = vmax.f32 %v6379, %v5374
    %v6381 = vmax.f32 %v6380, %v5378
    %v6382 = vmax.f32 %v6381, %v5384
    %v6383 = vmax.f32 %v6382, %v5388
    %v6384 = vmax.f32 %v6383, %v5394
    %v6385 = vmax.f32 %v6384, %v5398
    %v6386 = vmax.f32 %v6385, %v5404
    %v6387 = vmax.f32 %v6386, %v5408
    %v6388 = vmax.f32 %v6387, %v5414
    %v6389 = vmax.f32 %v6388, %v5418
    %v6390 = vrot.slane %v6389, 4
    %v6391 = vmax.f32 %v6389, %v6390
    %v6392 = vrot.slane %v6391, 2
    %v6393 = vmax.f32 %v6391, %v6392
    %v6394 = vrot.slane %v6393, 1
    %v6395 = vmax.f32 %v6393, %v6394
    %v6396 = vmax.f32 %v5422, %v5426
    %v6397 = vmax.f32 %v6396, %v5432
    %v6398 = vmax.f32 %v6397, %v5436
    %v6399 = vmax.f32 %v6398, %v5442
    %v6400 = vmax.f32 %v6399, %v5446
    %v6401 = vmax.f32 %v6400, %v5452
    %v6402 = vmax.f32 %v6401, %v5456
    %v6403 = vmax.f32 %v6402, %v5462
    %v6404 = vmax.f32 %v6403, %v5466
    %v6405 = vmax.f32 %v6404, %v5472
    %v6406 = vmax.f32 %v6405, %v5476
    %v6407 = vmax.f32 %v6406, %v5482
    %v6408 = vmax.f32 %v6407, %v5486
    %v6409 = vmax.f32 %v6408, %v5492
    %v6410 = vmax.f32 %v6409, %v5496
    %v6411 = vrot.slane %v6410, 4
    %v6412 = vmax.f32 %v6410, %v6411
    %v6413 = vrot.slane %v6412, 2
    %v6414 = vmax.f32 %v6412, %v6413
    %v6415 = vrot.slane %v6414, 1
    %v6416 = vmax.f32 %v6414, %v6415
    %v6417 = vmax.f32 %v5424, %v5428
    %v6418 = vmax.f32 %v6417, %v5434
    %v6419 = vmax.f32 %v6418, %v5438
    %v6420 = vmax.f32 %v6419, %v5444
    %v6421 = vmax.f32 %v6420, %v5448
    %v6422 = vmax.f32 %v6421, %v5454
    %v6423 = vmax.f32 %v6422, %v5458
    %v6424 = vmax.f32 %v6423, %v5464
    %v6425 = vmax.f32 %v6424, %v5468
    %v6426 = vmax.f32 %v6425, %v5474
    %v6427 = vmax.f32 %v6426, %v5478
    %v6428 = vmax.f32 %v6427, %v5484
    %v6429 = vmax.f32 %v6428, %v5488
    %v6430 = vmax.f32 %v6429, %v5494
    %v6431 = vmax.f32 %v6430, %v5498
    %v6432 = vrot.slane %v6431, 4
    %v6433 = vmax.f32 %v6431, %v6432
    %v6434 = vrot.slane %v6433, 2
    %v6435 = vmax.f32 %v6433, %v6434
    %v6436 = vrot.slane %v6435, 1
    %v6437 = vmax.f32 %v6435, %v6436
    %v6438 = vmax.f32 %v5502, %v5506
    %v6439 = vmax.f32 %v6438, %v5512
    %v6440 = vmax.f32 %v6439, %v5516
    %v6441 = vmax.f32 %v6440, %v5522
    %v6442 = vmax.f32 %v6441, %v5526
    %v6443 = vmax.f32 %v6442, %v5532
    %v6444 = vmax.f32 %v6443, %v5536
    %v6445 = vmax.f32 %v6444, %v5542
    %v6446 = vmax.f32 %v6445, %v5546
    %v6447 = vmax.f32 %v6446, %v5552
    %v6448 = vmax.f32 %v6447, %v5556
    %v6449 = vmax.f32 %v6448, %v5562
    %v6450 = vmax.f32 %v6449, %v5566
    %v6451 = vmax.f32 %v6450, %v5572
    %v6452 = vmax.f32 %v6451, %v5576
    %v6453 = vrot.slane %v6452, 4
    %v6454 = vmax.f32 %v6452, %v6453
    %v6455 = vrot.slane %v6454, 2
    %v6456 = vmax.f32 %v6454, %v6455
    %v6457 = vrot.slane %v6456, 1
    %v6458 = vmax.f32 %v6456, %v6457
    %v6459 = vmax.f32 %v5504, %v5508
    %v6460 = vmax.f32 %v6459, %v5514
    %v6461 = vmax.f32 %v6460, %v5518
    %v6462 = vmax.f32 %v6461, %v5524
    %v6463 = vmax.f32 %v6462, %v5528
    %v6464 = vmax.f32 %v6463, %v5534
    %v6465 = vmax.f32 %v6464, %v5538
    %v6466 = vmax.f32 %v6465, %v5544
    %v6467 = vmax.f32 %v6466, %v5548
    %v6468 = vmax.f32 %v6467, %v5554
    %v6469 = vmax.f32 %v6468, %v5558
    %v6470 = vmax.f32 %v6469, %v5564
    %v6471 = vmax.f32 %v6470, %v5568
    %v6472 = vmax.f32 %v6471, %v5574
    %v6473 = vmax.f32 %v6472, %v5578
    %v6474 = vrot.slane %v6473, 4
    %v6475 = vmax.f32 %v6473, %v6474
    %v6476 = vrot.slane %v6475, 2
    %v6477 = vmax.f32 %v6475, %v6476
    %v6478 = vrot.slane %v6477, 1
    %v6479 = vmax.f32 %v6477, %v6478
    %v6480 = vmax.f32 %v5582, %v5586
    %v6481 = vmax.f32 %v6480, %v5592
    %v6482 = vmax.f32 %v6481, %v5596
    %v6483 = vmax.f32 %v6482, %v5602
    %v6484 = vmax.f32 %v6483, %v5606
    %v6485 = vmax.f32 %v6484, %v5612
    %v6486 = vmax.f32 %v6485, %v5616
    %v6487 = vmax.f32 %v6486, %v5622
    %v6488 = vmax.f32 %v6487, %v5626
    %v6489 = vmax.f32 %v6488, %v5632
    %v6490 = vmax.f32 %v6489, %v5636
    %v6491 = vmax.f32 %v6490, %v5642
    %v6492 = vmax.f32 %v6491, %v5646
    %v6493 = vmax.f32 %v6492, %v5652
    %v6494 = vmax.f32 %v6493, %v5656
    %v6495 = vrot.slane %v6494, 4
    %v6496 = vmax.f32 %v6494, %v6495
    %v6497 = vrot.slane %v6496, 2
    %v6498 = vmax.f32 %v6496, %v6497
    %v6499 = vrot.slane %v6498, 1
    %v6500 = vmax.f32 %v6498, %v6499
    %v6501 = vmax.f32 %v5584, %v5588
    %v6502 = vmax.f32 %v6501, %v5594
    %v6503 = vmax.f32 %v6502, %v5598
    %v6504 = vmax.f32 %v6503, %v5604
    %v6505 = vmax.f32 %v6504, %v5608
    %v6506 = vmax.f32 %v6505, %v5614
    %v6507 = vmax.f32 %v6506, %v5618
    %v6508 = vmax.f32 %v6507, %v5624
    %v6509 = vmax.f32 %v6508, %v5628
    %v6510 = vmax.f32 %v6509, %v5634
    %v6511 = vmax.f32 %v6510, %v5638
    %v6512 = vmax.f32 %v6511, %v5644
    %v6513 = vmax.f32 %v6512, %v5648
    %v6514 = vmax.f32 %v6513, %v5654
    %v6515 = vmax.f32 %v6514, %v5658
    %v6516 = vrot.slane %v6515, 4
    %v6517 = vmax.f32 %v6515, %v6516
    %v6518 = vrot.slane %v6517, 2
    %v6519 = vmax.f32 %v6517, %v6518
    %v6520 = vrot.slane %v6519, 1
    %v6521 = vmax.f32 %v6519, %v6520
    %v6522 = vmax.f32 %v5662, %v5666
    %v6523 = vmax.f32 %v6522, %v5672
    %v6524 = vmax.f32 %v6523, %v5676
    %v6525 = vmax.f32 %v6524, %v5682
    %v6526 = vmax.f32 %v6525, %v5686
    %v6527 = vmax.f32 %v6526, %v5692
    %v6528 = vmax.f32 %v6527, %v5696
    %v6529 = vmax.f32 %v6528, %v5702
    %v6530 = vmax.f32 %v6529, %v5706
    %v6531 = vmax.f32 %v6530, %v5712
    %v6532 = vmax.f32 %v6531, %v5716
    %v6533 = vmax.f32 %v6532, %v5722
    %v6534 = vmax.f32 %v6533, %v5726
    %v6535 = vmax.f32 %v6534, %v5732
    %v6536 = vmax.f32 %v6535, %v5736
    %v6537 = vrot.slane %v6536, 4
    %v6538 = vmax.f32 %v6536, %v6537
    %v6539 = vrot.slane %v6538, 2
    %v6540 = vmax.f32 %v6538, %v6539
    %v6541 = vrot.slane %v6540, 1
    %v6542 = vmax.f32 %v6540, %v6541
    %v6543 = vmax.f32 %v5664, %v5668
    %v6544 = vmax.f32 %v6543, %v5674
    %v6545 = vmax.f32 %v6544, %v5678
    %v6546 = vmax.f32 %v6545, %v5684
    %v6547 = vmax.f32 %v6546, %v5688
    %v6548 = vmax.f32 %v6547, %v5694
    %v6549 = vmax.f32 %v6548, %v5698
    %v6550 = vmax.f32 %v6549, %v5704
    %v6551 = vmax.f32 %v6550, %v5708
    %v6552 = vmax.f32 %v6551, %v5714
    %v6553 = vmax.f32 %v6552, %v5718
    %v6554 = vmax.f32 %v6553, %v5724
    %v6555 = vmax.f32 %v6554, %v5728
    %v6556 = vmax.f32 %v6555, %v5734
    %v6557 = vmax.f32 %v6556, %v5738
    %v6558 = vrot.slane %v6557, 4
    %v6559 = vmax.f32 %v6557, %v6558
    %v6560 = vrot.slane %v6559, 2
    %v6561 = vmax.f32 %v6559, %v6560
    %v6562 = vrot.slane %v6561, 1
    %v6563 = vmax.f32 %v6561, %v6562
    %v6564 = vmax.f32 %v5742, %v5746
    %v6565 = vmax.f32 %v6564, %v5752
    %v6566 = vmax.f32 %v6565, %v5756
    %v6567 = vmax.f32 %v6566, %v5762
    %v6568 = vmax.f32 %v6567, %v5766
    %v6569 = vmax.f32 %v6568, %v5772
    %v6570 = vmax.f32 %v6569, %v5776
    %v6571 = vmax.f32 %v6570, %v5782
    %v6572 = vmax.f32 %v6571, %v5786
    %v6573 = vmax.f32 %v6572, %v5792
    %v6574 = vmax.f32 %v6573, %v5796
    %v6575 = vmax.f32 %v6574, %v5802
    %v6576 = vmax.f32 %v6575, %v5806
    %v6577 = vmax.f32 %v6576, %v5812
    %v6578 = vmax.f32 %v6577, %v5816
    %v6579 = vrot.slane %v6578, 4
    %v6580 = vmax.f32 %v6578, %v6579
    %v6581 = vrot.slane %v6580, 2
    %v6582 = vmax.f32 %v6580, %v6581
    %v6583 = vrot.slane %v6582, 1
    %v6584 = vmax.f32 %v6582, %v6583
    %v6585 = vmax.f32 %v5744, %v5748
    %v6586 = vmax.f32 %v6585, %v5754
    %v6587 = vmax.f32 %v6586, %v5758
    %v6588 = vmax.f32 %v6587, %v5764
    %v6589 = vmax.f32 %v6588, %v5768
    %v6590 = vmax.f32 %v6589, %v5774
    %v6591 = vmax.f32 %v6590, %v5778
    %v6592 = vmax.f32 %v6591, %v5784
    %v6593 = vmax.f32 %v6592, %v5788
    %v6594 = vmax.f32 %v6593, %v5794
    %v6595 = vmax.f32 %v6594, %v5798
    %v6596 = vmax.f32 %v6595, %v5804
    %v6597 = vmax.f32 %v6596, %v5808
    %v6598 = vmax.f32 %v6597, %v5814
    %v6599 = vmax.f32 %v6598, %v5818
    %v6600 = vrot.slane %v6599, 4
    %v6601 = vmax.f32 %v6599, %v6600
    %v6602 = vrot.slane %v6601, 2
    %v6603 = vmax.f32 %v6601, %v6602
    %v6604 = vrot.slane %v6603, 1
    %v6605 = vmax.f32 %v6603, %v6604
    %v6606 = vmax.f32 %v5822, %v5826
    %v6607 = vmax.f32 %v6606, %v5832
    %v6608 = vmax.f32 %v6607, %v5836
    %v6609 = vmax.f32 %v6608, %v5842
    %v6610 = vmax.f32 %v6609, %v5846
    %v6611 = vmax.f32 %v6610, %v5852
    %v6612 = vmax.f32 %v6611, %v5856
    %v6613 = vmax.f32 %v6612, %v5862
    %v6614 = vmax.f32 %v6613, %v5866
    %v6615 = vmax.f32 %v6614, %v5872
    %v6616 = vmax.f32 %v6615, %v5876
    %v6617 = vmax.f32 %v6616, %v5882
    %v6618 = vmax.f32 %v6617, %v5886
    %v6619 = vmax.f32 %v6618, %v5892
    %v6620 = vmax.f32 %v6619, %v5896
    %v6621 = vrot.slane %v6620, 4
    %v6622 = vmax.f32 %v6620, %v6621
    %v6623 = vrot.slane %v6622, 2
    %v6624 = vmax.f32 %v6622, %v6623
    %v6625 = vrot.slane %v6624, 1
    %v6626 = vmax.f32 %v6624, %v6625
    %v6627 = vmax.f32 %v5824, %v5828
    %v6628 = vmax.f32 %v6627, %v5834
    %v6629 = vmax.f32 %v6628, %v5838
    %v6630 = vmax.f32 %v6629, %v5844
    %v6631 = vmax.f32 %v6630, %v5848
    %v6632 = vmax.f32 %v6631, %v5854
    %v6633 = vmax.f32 %v6632, %v5858
    %v6634 = vmax.f32 %v6633, %v5864
    %v6635 = vmax.f32 %v6634, %v5868
    %v6636 = vmax.f32 %v6635, %v5874
    %v6637 = vmax.f32 %v6636, %v5878
    %v6638 = vmax.f32 %v6637, %v5884
    %v6639 = vmax.f32 %v6638, %v5888
    %v6640 = vmax.f32 %v6639, %v5894
    %v6641 = vmax.f32 %v6640, %v5898
    %v6642 = vrot.slane %v6641, 4
    %v6643 = vmax.f32 %v6641, %v6642
    %v6644 = vrot.slane %v6643, 2
    %v6645 = vmax.f32 %v6643, %v6644
    %v6646 = vrot.slane %v6645, 1
    %v6647 = vmax.f32 %v6645, %v6646
    %v6648 = vmax.f32 %v5902, %v5906
    %v6649 = vmax.f32 %v6648, %v5912
    %v6650 = vmax.f32 %v6649, %v5916
    %v6651 = vmax.f32 %v6650, %v5922
    %v6652 = vmax.f32 %v6651, %v5926
    %v6653 = vmax.f32 %v6652, %v5932
    %v6654 = vmax.f32 %v6653, %v5936
    %v6655 = vmax.f32 %v6654, %v5942
    %v6656 = vmax.f32 %v6655, %v5946
    %v6657 = vmax.f32 %v6656, %v5952
    %v6658 = vmax.f32 %v6657, %v5956
    %v6659 = vmax.f32 %v6658, %v5962
    %v6660 = vmax.f32 %v6659, %v5966
    %v6661 = vmax.f32 %v6660, %v5972
    %v6662 = vmax.f32 %v6661, %v5976
    %v6663 = vrot.slane %v6662, 4
    %v6664 = vmax.f32 %v6662, %v6663
    %v6665 = vrot.slane %v6664, 2
    %v6666 = vmax.f32 %v6664, %v6665
    %v6667 = vrot.slane %v6666, 1
    %v6668 = vmax.f32 %v6666, %v6667
    %v6669 = vmax.f32 %v5904, %v5908
    %v6670 = vmax.f32 %v6669, %v5914
    %v6671 = vmax.f32 %v6670, %v5918
    %v6672 = vmax.f32 %v6671, %v5924
    %v6673 = vmax.f32 %v6672, %v5928
    %v6674 = vmax.f32 %v6673, %v5934
    %v6675 = vmax.f32 %v6674, %v5938
    %v6676 = vmax.f32 %v6675, %v5944
    %v6677 = vmax.f32 %v6676, %v5948
    %v6678 = vmax.f32 %v6677, %v5954
    %v6679 = vmax.f32 %v6678, %v5958
    %v6680 = vmax.f32 %v6679, %v5964
    %v6681 = vmax.f32 %v6680, %v5968
    %v6682 = vmax.f32 %v6681, %v5974
    %v6683 = vmax.f32 %v6682, %v5978
    %v6684 = vrot.slane %v6683, 4
    %v6685 = vmax.f32 %v6683, %v6684
    %v6686 = vrot.slane %v6685, 2
    %v6687 = vmax.f32 %v6685, %v6686
    %v6688 = vrot.slane %v6687, 1
    %v6689 = vmax.f32 %v6687, %v6688
    %v6690 = vmax.f32 %v5982, %v5986
    %v6691 = vmax.f32 %v6690, %v5992
    %v6692 = vmax.f32 %v6691, %v5996
    %v6693 = vmax.f32 %v6692, %v6002
    %v6694 = vmax.f32 %v6693, %v6006
    %v6695 = vmax.f32 %v6694, %v6012
    %v6696 = vmax.f32 %v6695, %v6016
    %v6697 = vmax.f32 %v6696, %v6022
    %v6698 = vmax.f32 %v6697, %v6026
    %v6699 = vmax.f32 %v6698, %v6032
    %v6700 = vmax.f32 %v6699, %v6036
    %v6701 = vmax.f32 %v6700, %v6042
    %v6702 = vmax.f32 %v6701, %v6046
    %v6703 = vmax.f32 %v6702, %v6052
    %v6704 = vmax.f32 %v6703, %v6056
    %v6705 = vrot.slane %v6704, 4
    %v6706 = vmax.f32 %v6704, %v6705
    %v6707 = vrot.slane %v6706, 2
    %v6708 = vmax.f32 %v6706, %v6707
    %v6709 = vrot.slane %v6708, 1
    %v6710 = vmax.f32 %v6708, %v6709
    %v6711 = vmax.f32 %v5984, %v5988
    %v6712 = vmax.f32 %v6711, %v5994
    %v6713 = vmax.f32 %v6712, %v5998
    %v6714 = vmax.f32 %v6713, %v6004
    %v6715 = vmax.f32 %v6714, %v6008
    %v6716 = vmax.f32 %v6715, %v6014
    %v6717 = vmax.f32 %v6716, %v6018
    %v6718 = vmax.f32 %v6717, %v6024
    %v6719 = vmax.f32 %v6718, %v6028
    %v6720 = vmax.f32 %v6719, %v6034
    %v6721 = vmax.f32 %v6720, %v6038
    %v6722 = vmax.f32 %v6721, %v6044
    %v6723 = vmax.f32 %v6722, %v6048
    %v6724 = vmax.f32 %v6723, %v6054
    %v6725 = vmax.f32 %v6724, %v6058
    %v6726 = vrot.slane %v6725, 4
    %v6727 = vmax.f32 %v6725, %v6726
    %v6728 = vrot.slane %v6727, 2
    %v6729 = vmax.f32 %v6727, %v6728
    %v6730 = vrot.slane %v6729, 1
    %v6731 = vmax.f32 %v6729, %v6730
    %v6732 = vpack.c.bf16 %v6080, %v6080
    %v6733 = vpack.c.bf16 %v6101, %v6101
    %v6734 = vpack.c.bf16 %v6122, %v6122
    %v6735 = vpack.c.bf16 %v6143, %v6143
    %v6736 = vpack.c.bf16 %v6164, %v6164
    %v6737 = vpack.c.bf16 %v6185, %v6185
    %v6738 = vpack.c.bf16 %v6206, %v6206
    %v6739 = vpack.c.bf16 %v6227, %v6227
    %v6740 = vpack.c.bf16 %v6248, %v6248
    %v6741 = vpack.c.bf16 %v6269, %v6269
    %v6742 = vpack.c.bf16 %v6290, %v6290
    %v6743 = vpack.c.bf16 %v6311, %v6311
    %v6744 = vpack.c.bf16 %v6332, %v6332
    %v6745 = vpack.c.bf16 %v6353, %v6353
    %v6746 = vpack.c.bf16 %v6374, %v6374
    %v6747 = vpack.c.bf16 %v6395, %v6395
    %v6748 = vpack.c.bf16 %v6416, %v6416
    %v6749 = vpack.c.bf16 %v6437, %v6437
    %v6750 = vpack.c.bf16 %v6458, %v6458
    %v6751 = vpack.c.bf16 %v6479, %v6479
    %v6752 = vpack.c.bf16 %v6500, %v6500
    %v6753 = vpack.c.bf16 %v6521, %v6521
    %v6754 = vpack.c.bf16 %v6542, %v6542
    %v6755 = vpack.c.bf16 %v6563, %v6563
    %v6756 = vpack.c.bf16 %v6584, %v6584
    %v6757 = vpack.c.bf16 %v6605, %v6605
    %v6758 = vpack.c.bf16 %v6626, %v6626
    %v6759 = vpack.c.bf16 %v6647, %v6647
    %v6760 = vpack.c.bf16 %v6668, %v6668
    %v6761 = vpack.c.bf16 %v6689, %v6689
    %v6762 = vpack.c.bf16 %v6710, %v6710
    %v6763 = vpack.c.bf16 %v6731, %v6731
    %v6764 = vld [vmem:[%s7] sm:$0xf]
    %v6765 = vld [vmem:[%s7 + $0x4] sm:$0xf]
    %v6766 = vld [vmem:[%s7 + $0x8] sm:$0xf]
    %v6767 = vld [vmem:[%s7 + $0xc] sm:$0xf]
    %v6768 = vld [vmem:[%s7 + $0x10] sm:$0xf]
    %v6769 = vld [vmem:[%s7 + $0x14] sm:$0xf]
    %v6770 = vld [vmem:[%s7 + $0x18] sm:$0xf]
    %v6771 = vld [vmem:[%s7 + $0x1c] sm:$0xf]
    %v6772 = vld [vmem:[%s7 + $0x20] sm:$0xf]
    %v6773 = vld [vmem:[%s7 + $0x24] sm:$0xf]
    %v6774 = vld [vmem:[%s7 + $0x28] sm:$0xf]
    %v6775 = vld [vmem:[%s7 + $0x2c] sm:$0xf]
    %v6776 = vld [vmem:[%s7 + $0x30] sm:$0xf]
    %v6777 = vld [vmem:[%s7 + $0x34] sm:$0xf]
    %v6778 = vld [vmem:[%s7 + $0x38] sm:$0xf]
    %v6779 = vld [vmem:[%s7 + $0x3c] sm:$0xf]
    %v6780 = vld [vmem:[%s7 + $0x40] sm:$0xf]
    %v6781 = vld [vmem:[%s7 + $0x44] sm:$0xf]
    %v6782 = vld [vmem:[%s7 + $0x48] sm:$0xf]
    %v6783 = vld [vmem:[%s7 + $0x4c] sm:$0xf]
    %v6784 = vld [vmem:[%s7 + $0x50] sm:$0xf]
    %v6785 = vld [vmem:[%s7 + $0x54] sm:$0xf]
    %v6786 = vld [vmem:[%s7 + $0x58] sm:$0xf]
    %v6787 = vld [vmem:[%s7 + $0x5c] sm:$0xf]
    %v6788 = vld [vmem:[%s7 + $0x60] sm:$0xf]
    %v6789 = vld [vmem:[%s7 + $0x64] sm:$0xf]
    %v6790 = vld [vmem:[%s7 + $0x68] sm:$0xf]
    %v6791 = vld [vmem:[%s7 + $0x6c] sm:$0xf]
    %v6792 = vld [vmem:[%s7 + $0x70] sm:$0xf]
    %v6793 = vld [vmem:[%s7 + $0x74] sm:$0xf]
    %v6794 = vld [vmem:[%s7 + $0x78] sm:$0xf]
    %v6795 = vld [vmem:[%s7 + $0x7c] sm:$0xf]
    %v6796 = vld [vmem:[%s8] sm:$0x1]
    %v6798 = vlaneseq
    %v6799 = vshrl.u32 %v6798, 7
    %v6800 = vsub.s32 0, %v6799
    %v6801 = vrot.slane %v6796, %v6800
    %v6835 = vunpack.c.l.b16 %v6732
    %v6836 = vunpack.c.l.b16 %v6733
    %v6837 = vunpack.c.l.b16 %v6734
    %v6838 = vunpack.c.l.b16 %v6735
    %v6839 = vunpack.c.l.b16 %v6736
    %v6840 = vunpack.c.l.b16 %v6737
    %v6841 = vunpack.c.l.b16 %v6738
    %v6842 = vunpack.c.l.b16 %v6739
    %v6843 = vunpack.c.l.b16 %v6740
    %v6844 = vunpack.c.l.b16 %v6741
    %v6845 = vunpack.c.l.b16 %v6742
    %v6846 = vunpack.c.l.b16 %v6743
    %v6847 = vunpack.c.l.b16 %v6744
    %v6848 = vunpack.c.l.b16 %v6745
    %v6849 = vunpack.c.l.b16 %v6746
    %v6850 = vunpack.c.l.b16 %v6747
    %v6851 = vunpack.c.l.b16 %v6748
    %v6852 = vunpack.c.l.b16 %v6749
    %v6853 = vunpack.c.l.b16 %v6750
    %v6854 = vunpack.c.l.b16 %v6751
    %v6855 = vunpack.c.l.b16 %v6752
    %v6856 = vunpack.c.l.b16 %v6753
    %v6857 = vunpack.c.l.b16 %v6754
    %v6858 = vunpack.c.l.b16 %v6755
    %v6859 = vunpack.c.l.b16 %v6756
    %v6860 = vunpack.c.l.b16 %v6757
    %v6861 = vunpack.c.l.b16 %v6758
    %v6862 = vunpack.c.l.b16 %v6759
    %v6863 = vunpack.c.l.b16 %v6760
    %v6864 = vunpack.c.l.b16 %v6761
    %v6865 = vunpack.c.l.b16 %v6762
    %v6866 = vunpack.c.l.b16 %v6763
    %vm6867 = vcmask 1041409
    %v6868 = vsel %vm6867, %v6837, %v6835
    %vm6869 = vcmask 1042434
    %v6870 = vsel %vm6869, %v6839, %v6868
    %vm6871 = vcmask 1043459
    %v6872 = vsel %vm6871, %v6841, %v6870
    %vm6873 = vcmask 1044484
    %v6874 = vsel %vm6873, %v6843, %v6872
    %vm6875 = vcmask 1045509
    %v6876 = vsel %vm6875, %v6845, %v6874
    %vm6877 = vcmask 1046534
    %v6878 = vsel %vm6877, %v6847, %v6876
    %vm6879 = vcmask 1047559
    %v6880 = vsel %vm6879, %v6849, %v6878
    %v6881 = vsel %vm6867, %v6838, %v6836
    %v6882 = vsel %vm6869, %v6840, %v6881
    %v6883 = vsel %vm6871, %v6842, %v6882
    %v6884 = vsel %vm6873, %v6844, %v6883
    %v6885 = vsel %vm6875, %v6846, %v6884
    %v6886 = vsel %vm6877, %v6848, %v6885
    %v6887 = vsel %vm6879, %v6850, %v6886
    %v6888 = vsel %vm6867, %v6853, %v6851
    %v6889 = vsel %vm6869, %v6855, %v6888
    %v6890 = vsel %vm6871, %v6857, %v6889
    %v6891 = vsel %vm6873, %v6859, %v6890
    %v6892 = vsel %vm6875, %v6861, %v6891
    %v6893 = vsel %vm6877, %v6863, %v6892
    %v6894 = vsel %vm6879, %v6865, %v6893
    %v6895 = vsel %vm6867, %v6854, %v6852
    %v6896 = vsel %vm6869, %v6856, %v6895
    %v6897 = vsel %vm6871, %v6858, %v6896
    %v6898 = vsel %vm6873, %v6860, %v6897
    %v6899 = vsel %vm6875, %v6862, %v6898
    %v6900 = vsel %vm6877, %v6864, %v6899
    %v6901 = vsel %vm6879, %v6866, %v6900
    %v6902 = vpack.c.b16 %v6894, %v6880
    %v6903 = vpack.c.b16 %v6901, %v6887
    %v6938 = vunpack.c.l.b16 %v6764
    %v6939 = vunpack.c.l.b16 %v6765
    %v6940 = vunpack.c.l.b16 %v6766
    %v6941 = vunpack.c.l.b16 %v6767
    %v6942 = vunpack.c.l.b16 %v6768
    %v6943 = vunpack.c.l.b16 %v6769
    %v6944 = vunpack.c.l.b16 %v6770
    %v6945 = vunpack.c.l.b16 %v6771
    %v6946 = vunpack.c.l.b16 %v6772
    %v6947 = vunpack.c.l.b16 %v6773
    %v6948 = vunpack.c.l.b16 %v6774
    %v6949 = vunpack.c.l.b16 %v6775
    %v6950 = vunpack.c.l.b16 %v6776
    %v6951 = vunpack.c.l.b16 %v6777
    %v6952 = vunpack.c.l.b16 %v6778
    %v6953 = vunpack.c.l.b16 %v6779
    %v6954 = vunpack.c.l.b16 %v6780
    %v6955 = vunpack.c.l.b16 %v6781
    %v6956 = vunpack.c.l.b16 %v6782
    %v6957 = vunpack.c.l.b16 %v6783
    %v6958 = vunpack.c.l.b16 %v6784
    %v6959 = vunpack.c.l.b16 %v6785
    %v6960 = vunpack.c.l.b16 %v6786
    %v6961 = vunpack.c.l.b16 %v6787
    %v6962 = vunpack.c.l.b16 %v6788
    %v6963 = vunpack.c.l.b16 %v6789
    %v6964 = vunpack.c.l.b16 %v6790
    %v6965 = vunpack.c.l.b16 %v6791
    %v6966 = vunpack.c.l.b16 %v6792
    %v6967 = vunpack.c.l.b16 %v6793
    %v6968 = vunpack.c.l.b16 %v6794
    %v6969 = vunpack.c.l.b16 %v6795
    %v6970 = vpack.c.b16 %v6939, %v6938
    %v6971 = vpack.c.b16 %v6941, %v6940
    %v6972 = vpack.c.b16 %v6943, %v6942
    %v6973 = vpack.c.b16 %v6945, %v6944
    %v6974 = vpack.c.b16 %v6947, %v6946
    %v6975 = vpack.c.b16 %v6949, %v6948
    %v6976 = vpack.c.b16 %v6951, %v6950
    %v6977 = vpack.c.b16 %v6953, %v6952
    %v6978 = vpack.c.b16 %v6955, %v6954
    %v6979 = vpack.c.b16 %v6957, %v6956
    %v6980 = vpack.c.b16 %v6959, %v6958
    %v6981 = vpack.c.b16 %v6961, %v6960
    %v6982 = vpack.c.b16 %v6963, %v6962
    %v6983 = vpack.c.b16 %v6965, %v6964
    %v6984 = vpack.c.b16 %v6967, %v6966
    %v6985 = vpack.c.b16 %v6969, %v6968
    %7002 = vmatprep.subr.bf16.mxu0 0
    %7003 = vmatpush1.bf16.msra.mxu0 %v6970
    %7004 = vmatprep.subr.bf16.mxu0 0
    %7005 = vmatpush1.bf16.msra.mxu0 %v6971
    %7006 = vmatprep.subr.bf16.mxu0 0
    %7007 = vmatpush1.bf16.msra.mxu0 %v6972
    %7008 = vmatprep.subr.bf16.mxu0 0
    %7009 = vmatpush1.bf16.msra.mxu0 %v6973
    %7010 = vmatprep.subr.bf16.mxu0 0
    %7011 = vmatpush1.bf16.msra.mxu0 %v6974
    %7012 = vmatprep.subr.bf16.mxu0 0
    %7013 = vmatpush1.bf16.msra.mxu0 %v6975
    %7014 = vmatprep.subr.bf16.mxu0 0
    %7015 = vmatpush1.bf16.msra.mxu0 %v6976
    %7016 = vmatprep.subr.bf16.mxu0 0
    %7017 = vmatpush1.bf16.msra.mxu0 %v6977
    %7018 = vmatprep.subr.bf16.mxu0 0
    %7019 = vmatpush1.bf16.msra.mxu0 %v6978
    %7020 = vmatprep.subr.bf16.mxu0 0
    %7021 = vmatpush1.bf16.msra.mxu0 %v6979
    %7022 = vmatprep.subr.bf16.mxu0 0
    %7023 = vmatpush1.bf16.msra.mxu0 %v6980
    %7024 = vmatprep.subr.bf16.mxu0 0
    %7025 = vmatpush1.bf16.msra.mxu0 %v6981
    %7026 = vmatprep.subr.bf16.mxu0 0
    %7027 = vmatpush1.bf16.msra.mxu0 %v6982
    %7028 = vmatprep.subr.bf16.mxu0 0
    %7029 = vmatpush1.bf16.msra.mxu0 %v6983
    %7030 = vmatprep.subr.bf16.mxu0 0
    %7031 = vmatpush1.bf16.msra.mxu0 %v6984
    %7032 = vmatprep.subr.bf16.mxu0 0
    %7033 = vmatpush1.bf16.msra.mxu0 %v6985
    %7034 = vmatprep.mubr.bf16.mxu0 %v6903
    %7035 = vmatmul.mubr.bf16.gmra.mrb[0].mxu0 %v6902
    %v7036 = vpop.f32.mrb[0].mxu0
    %v7037 = vadd.f32 %v6801, %v7036
    %v7038 = vpop.f32.mrb[0].mxu0
    %v7039 = vpop.f32.mrb[0].mxu0
    %v7040 = vadd.f32 %v6801, %v7039
    %v7041 = vpop.f32.mrb[0].mxu0
    %7042 = vdwg.mxu0
    %v7043 = vmax.f32 %v7037, 0.0
    %v7044 = vmax.f32 %v7040, 0.0
    %v7045 = vpack.c.bf16 %v7044, %v7043
    %v7046 = vld [vmem:[%s9] sm:$0xf]
    %v7047 = vld [vmem:[%s9 + $0x4] sm:$0xf]
    %v7048 = vld [vmem:[%s9 + $0x8] sm:$0xf]
    %v7049 = vld [vmem:[%s9 + $0xc] sm:$0xf]
    %v7050 = vld [vmem:[%s9 + $0x10] sm:$0xf]
    %v7051 = vld [vmem:[%s9 + $0x14] sm:$0xf]
    %v7052 = vld [vmem:[%s9 + $0x18] sm:$0xf]
    %v7053 = vld [vmem:[%s9 + $0x1c] sm:$0xf]
    %v7054 = vld [vmem:[%s9 + $0x20] sm:$0xf]
    %v7055 = vld [vmem:[%s9 + $0x24] sm:$0xf]
    %v7056 = vld [vmem:[%s9 + $0x28] sm:$0xf]
    %v7057 = vld [vmem:[%s9 + $0x2c] sm:$0xf]
    %v7058 = vld [vmem:[%s9 + $0x30] sm:$0xf]
    %v7059 = vld [vmem:[%s9 + $0x34] sm:$0xf]
    %v7060 = vld [vmem:[%s9 + $0x38] sm:$0xf]
    %v7061 = vld [vmem:[%s9 + $0x3c] sm:$0xf]
    %v7062 = vld [vmem:[%s10] sm:$0x1]
    %v7064 = vlaneseq
    %v7065 = vshrl.u32 %v7064, 7
    %v7066 = vsub.s32 0, %v7065
    %v7067 = vrot.slane %v7062, %v7066
    %v7085 = vunpack.c.l.b16 %v7046
    %v7086 = vunpack.c.l.b16 %v7047
    %v7087 = vunpack.c.l.b16 %v7048
    %v7088 = vunpack.c.l.b16 %v7049
    %v7089 = vunpack.c.l.b16 %v7050
    %v7090 = vunpack.c.l.b16 %v7051
    %v7091 = vunpack.c.l.b16 %v7052
    %v7092 = vunpack.c.l.b16 %v7053
    %v7093 = vunpack.c.l.b16 %v7054
    %v7094 = vunpack.c.l.b16 %v7055
    %v7095 = vunpack.c.l.b16 %v7056
    %v7096 = vunpack.c.l.b16 %v7057
    %v7097 = vunpack.c.l.b16 %v7058
    %v7098 = vunpack.c.l.b16 %v7059
    %v7099 = vunpack.c.l.b16 %v7060
    %v7100 = vunpack.c.l.b16 %v7061
    %v7101 = vpack.c.b16 %v7086, %v7085
    %v7102 = vpack.c.b16 %v7088, %v7087
    %v7103 = vpack.c.b16 %v7090, %v7089
    %v7104 = vpack.c.b16 %v7092, %v7091
    %v7105 = vpack.c.b16 %v7094, %v7093
    %v7106 = vpack.c.b16 %v7096, %v7095
    %v7107 = vpack.c.b16 %v7098, %v7097
    %v7108 = vpack.c.b16 %v7100, %v7099
    %7117 = vmatprep.subr.bf16.mxu0 0
    %7118 = vmatpush1.bf16.msra.mxu0 %v7101
    %7119 = vmatprep.subr.bf16.mxu0 0
    %7120 = vmatpush1.bf16.msra.mxu0 %v7102
    %7121 = vmatprep.subr.bf16.mxu0 0
    %7122 = vmatpush1.bf16.msra.mxu0 %v7103
    %7123 = vmatprep.subr.bf16.mxu0 0
    %7124 = vmatpush1.bf16.msra.mxu0 %v7104
    %7125 = vmatprep.subr.bf16.mxu0 0
    %7126 = vmatpush1.bf16.msra.mxu0 %v7105
    %7127 = vmatprep.subr.bf16.mxu0 0
    %7128 = vmatpush1.bf16.msra.mxu0 %v7106
    %7129 = vmatprep.subr.bf16.mxu0 0
    %7130 = vmatpush1.bf16.msra.mxu0 %v7107
    %7131 = vmatprep.subr.bf16.mxu0 0
    %7132 = vmatpush1.bf16.msra.mxu0 %v7108
    %7133 = vmatprep.subr.bf16.mxu0 0
    %7134 = vmatpush1.bf16.msra.mxu0 0
    %7135 = vmatprep.subr.bf16.mxu0 0
    %7136 = vmatpush1.bf16.msra.mxu0 0
    %7137 = vmatprep.subr.bf16.mxu0 0
    %7138 = vmatpush1.bf16.msra.mxu0 0
    %7139 = vmatprep.subr.bf16.mxu0 0
    %7140 = vmatpush1.bf16.msra.mxu0 0
    %7141 = vmatprep.subr.bf16.mxu0 0
    %7142 = vmatpush1.bf16.msra.mxu0 0
    %7143 = vmatprep.subr.bf16.mxu0 0
    %7144 = vmatpush1.bf16.msra.mxu0 0
    %7145 = vmatprep.subr.bf16.mxu0 0
    %7146 = vmatpush1.bf16.msra.mxu0 0
    %7147 = vmatprep.subr.bf16.mxu0 0
    %7148 = vmatpush1.bf16.msra.mxu0 0
    %7149 = vmatprep.mubr.bf16.mxu0 0
    %7150 = vmatmul.mubr.bf16.gmra.mrb[0].mxu0 %v7045
    %v7151 = vpop.f32.mrb[0].mxu0
    %v7152 = vadd.f32 %v7067, %v7151
    %v7153 = vpop.f32.mrb[0].mxu0
    %v7154 = vpop.f32.mrb[0].mxu0
    %v7155 = vadd.f32 %v7067, %v7154
    %v7156 = vpop.f32.mrb[0].mxu0
    %7157 = vdwg.mxu0
    %7158 = vst [vmem:[#allocation2] sm:$0xff] %v7152
    %7159 = vst [vmem:[#allocation2 + $0x8] sm:$0xff] %v7155
    // Predicated region
    $region46: #{tpu_custom_call.1} parent=1 // pred_check
      _
    $region47: #{tpu_custom_call.1} parent=1 // pred_check_branch
      %7161 = sbr.rel (0) target = $region49
    $region48: #{tpu_custom_call.1} parent=1 // pred_region
      %s7163 = ssub.s32 256, 256
      %7164 = vsyncadd [#allocation3], %s7163
      %s7165 = sshll.u32 [#allocation2], 4
      %s7166 = int_to_ptr.vmem [resolvable:$true] %s7165
      %7171 = dma.vmem_to_hbm [thread:$0]  %s7166, 256, %s11, [#allocation3], 128, 128, 8
    $region49: #{tpu_custom_call.1} parent=1 // pred_fallthru
      _
    // Predicated region
    $region50: #{tpu_custom_call.1} parent=1 // pred_check
      _
    $region51: #{tpu_custom_call.1} parent=1 // pred_check_branch
      %7173 = sbr.rel (0) target = $region53
    $region52: #{tpu_custom_call.1} parent=1 // pred_region
      %7174 = dma.done [#allocation3], 256
    $region53: #{tpu_custom_call.1} parent=1 // pred_fallthru
      _
    %7175 = vsyncpa [#allocation3], 1

</llo_original>
